<compile_context>
chip_gen: v7x
topology: tpu7x:2x2x1
jax: 0.10.0
libtpu: 0.0.40
codegen_flags: <defaults>
</compile_context>

<pallas_src>
import functools
import math

import numpy as np

import jax
import jax.numpy as jnp
from jax.experimental import pallas as pl
from jax.experimental.pallas import tpu as pltpu


_SEL_BUDGET_BYTES = 2 * 1024 * 1024      # cap for the resident selection matrix


def _vmem_capacity_bytes():
    try:
        return int(pltpu.get_tpu_info().vmem_capacity_bytes)
    except Exception:
        return 64 * 1024 * 1024          # conservative fallback: v7x per-TC VMEM


def _packing_factor(asd, states):
    """Molecules packed per row: smallest g with (g*asd) % 128 == 0 (a power of
    two), halved while the (g*asd, g*S) selection matrix would exceed budget."""
    g = 128 // math.gcd(asd, 128)
    while g > 1 and (g * asd) * (g * states) * 4 > _SEL_BUDGET_BYTES:
        g //= 2
    return g


def _choose_block_rows(rows, lanes, itemsize, requested=None):
    """Packed rows per grid step, budgeted with the 128-lane-padded footprint."""
    lanes_padded = ((lanes + 127) // 128) * 128
    cap = _vmem_capacity_bytes()
    budget = min(cap // 3, 32 * 1024 * 1024)          # ~21 MiB on v7x, 32 MiB on v5e/v6e
    # 2 inputs x 2 pipeline buffers (input dtype) + |t+x|, |t-x| f32 temporaries.
    per_row = lanes_padded * (4 * itemsize + 16)
    tb = max(1, budget // per_row) if requested is None else int(requested)
    if rows > 8:
        # Keep >= 2 grid tiles so v7x can shard the parallel axis over its 2 TCs.
        half_up8 = ((-(-rows // 2)) + 7) // 8 * 8
        tb = min(tb, half_up8)
    if tb >= rows:
        return rows
    return min(rows, max(8, (tb // 8) * 8))           # Mosaic sublane rule


def _phase_loss_kernel(t_ref, x_ref, sel_ref, o_ref, *, rows, block_rows):
    """One grid step: `block_rows` packed rows, each row = g molecules on lanes."""
    i = pl.program_id(0)

    t = t_ref[...]                                    # (block_rows, g*asd)
    x = x_ref[...]

    if rows % block_rows != 0:
        # Pallas pads the last block with garbage rows; zero them *before* the
        # matmul so NaN/Inf garbage cannot poison the MXU accumulation.
        r = jax.lax.broadcasted_iota(jnp.int32, (block_rows, 1), 0) + i * block_rows
        valid = r < rows
        t = jnp.where(valid, t, 0.0)
        x = jnp.where(valid, x, 0.0)

    ap = jnp.abs(t + x)                               # (block_rows, g*asd)
    am = jnp.abs(t - x)

    sel = sel_ref[...]                                # (g*asd, g*S) block-diag 0/1
    # Grouped (atoms, xyz) sums on the MXU.  HIGHEST keeps f32 accuracy for f32
    # inputs (sel entries are 0/1, exact in any dtype); accumulation is f32.
    pos = jnp.dot(ap, sel, preferred_element_type=jnp.float32,
                  precision=jax.lax.Precision.HIGHEST)    # (block_rows, g*S)
    neg = jnp.dot(am, sel, preferred_element_type=jnp.float32,
                  precision=jax.lax.Precision.HIGHEST)

    partial = jnp.sum(jnp.minimum(pos, neg))
    # Lane-dense per-tile partial (full-width unmasked store); wrapper reads col 0.
    o_ref[...] = jnp.full((1, 128), partial, dtype=jnp.float32)


@functools.partial(jax.jit, static_argnames=("atoms", "block_rows"))
def phase_loss_nac(inputs, targets, *, atoms, block_rows=None):
    """Pallas implementation of PhaseLossNac.forward.

    inputs, targets: (N, S, D) with N = B * atoms (PyTorch layout).
    Returns a scalar float32 loss.
    """
    N, S, D = targets.shape
    assert inputs.shape == targets.shape
    assert N % atoms == 0
    B = N // atoms
    asd = atoms * S * D

    g = _packing_factor(asd, S)
    B_pad = ((B + g - 1) // g) * g
    R = B_pad // g                       # packed rows
    L = g * asd                          # lanes per packed row
    gS = g * S

    # Free, contiguous reshape (row-major): no HBM data movement.
    t2 = targets.reshape(B, asd)
    x2 = inputs.reshape(B, asd)
    if B_pad != B:
        # One extra HBM pass; zero molecules contribute exactly 0 to the loss.
        pad = ((0, B_pad - B), (0, 0))
        t2 = jnp.pad(t2, pad)
        x2 = jnp.pad(x2, pad)
    t2 = t2.reshape(R, L)
    x2 = x2.reshape(R, L)

    itemsize = jnp.dtype(targets.dtype).itemsize
    tb = _choose_block_rows(R, L, itemsize, block_rows)
    num_tiles = (R + tb - 1) // tb

    # Block-diagonal selection matrix: sel[l, j*S + s] = 1 iff lane l belongs to
    # molecule j of its group and has state index s (l = j*asd + a*S*D + s*D + d).
    lane = np.arange(L)
    mol = lane // asd
    state = (lane % asd) // D % S
    sel_np = np.zeros((L, gS), dtype=np.float32)
    sel_np[lane, mol * S + state] = 1.0
    sel = jnp.asarray(sel_np, dtype=targets.dtype)

    cap = _vmem_capacity_bytes()
    vmem_limit = 48 * 1024 * 1024 if cap <= 64 * 1024 * 1024 else 64 * 1024 * 1024

    kernel = functools.partial(_phase_loss_kernel, rows=R, block_rows=tb)

    partials = pl.pallas_call(
        kernel,
        out_shape=jax.ShapeDtypeStruct((num_tiles, 128), jnp.float32),
        grid=(num_tiles,),
        in_specs=[
            pl.BlockSpec((tb, L), lambda i: (i, 0)),
            pl.BlockSpec((tb, L), lambda i: (i, 0)),
            pl.BlockSpec((L, gS), lambda i: (0, 0)),   # resident, tiny
        ],
        out_specs=pl.BlockSpec((1, 128), lambda i: (i, 0)),
        compiler_params=pltpu.CompilerParams(
            dimension_semantics=("parallel",),         # independent per-tile partials
            vmem_limit_bytes=vmem_limit,
        ),
    )(t2, x2, sel)

    total = jnp.sum(partials[:, 0])
    return total / jnp.float32(N * S * D)


def _reference(inputs, targets, *, atoms):
    """Pure-JAX reference mirroring the PyTorch code."""
    N, S, D = targets.shape
    t = targets.reshape(-1, atoms, S, D)
    x = inputs.reshape(-1, atoms, S, D)
    pos = jnp.sum(jnp.abs(t + x), axis=(1, 3))
    neg = jnp.sum(jnp.abs(t - x), axis=(1, 3))
    return jnp.sum(jnp.minimum(pos, neg)) / (N * S * D)


if __name__ == "__main__":
    atoms, S, D = 4, 6, 3          # asd = 72 -> packing factor g = 16
    key = jax.random.PRNGKey(0)
    k1, k2, k3, k4, k5, k6 = jax.random.split(key, 6)

    # Case 1: B=20 molecules (N=80 rows): B % g != 0 -> zero-pad path, 1 tile.
    inp1 = jax.random.normal(k1, (20 * atoms, S, D), dtype=jnp.float32)
    tgt1 = jax.random.normal(k2, (20 * atoms, S, D), dtype=jnp.float32)
    ref1 = _reference(inp1, tgt1, atoms=atoms)
    out1 = jax.block_until_ready(phase_loss_nac(inp1, tgt1, atoms=atoms))
    assert jnp.allclose(out1, ref1, rtol=1e-5, atol=1e-6), (out1, ref1)

    # Case 2: B=32 (N=128): exact packing (no pad), auto block size.
    inp2 = jax.random.normal(k3, (32 * atoms, S, D), dtype=jnp.float32)
    tgt2 = jax.random.normal(k4, (32 * atoms, S, D), dtype=jnp.float32)
    ref2 = _reference(inp2, tgt2, atoms=atoms)
    out2 = jax.block_until_ready(phase_loss_nac(inp2, tgt2, atoms=atoms))
    assert jnp.allclose(out2, ref2, rtol=1e-5, atol=1e-6), (out2, ref2)

    # Case 3: B=200 (N=800) with forced 8-row blocks: multi-tile grid plus a
    # masked partial tail block (13 packed rows -> tiles of 8 + 5).
    inp3 = jax.random.normal(k5, (200 * atoms, S, D), dtype=jnp.float32)
    tgt3 = jax.random.normal(k6, (200 * atoms, S, D), dtype=jnp.float32)
    ref3 = _reference(inp3, tgt3, atoms=atoms)
    out3 = jax.block_until_ready(
        phase_loss_nac(inp3, tgt3, atoms=atoms, block_rows=8))
    assert jnp.allclose(out3, ref3, rtol=1e-5, atol=1e-6), (out3, ref3)

    print("KERNEL_OK")
</pallas_src>

<mosaic_0001>
module attributes {stable_mosaic.version = 11 : i64} {
  func.func @_phase_loss_kernel(%arg0: i32, %arg1: memref<2x1152xf32, #tpu.memory_space<vmem>>, %arg2: memref<2x1152xf32, #tpu.memory_space<vmem>>, %arg3: memref<1152x96xf32, #tpu.memory_space<vmem>>, %arg4: memref<1x128xf32, #tpu.memory_space<vmem>>) attributes {dimension_semantics = [#tpu.dimension_semantics<parallel>], iteration_bounds = array<i64: 1>, scalar_prefetch = 0 : i64, scratch_operands = 0 : i64, tpu.core_type = #tpu.core_type<tc>, window_params = [{transform_indices = @transform_0, window_bounds = array<i64: 2, 1152>}, {transform_indices = @transform_1, window_bounds = array<i64: 2, 1152>}, {pipeline_mode = #tpu.pipeline_mode<synchronous>, transform_indices = @transform_2, window_bounds = array<i64: 1152, 96>}, {transform_indices = @transform_3, window_bounds = array<i64: 1, 128>}]} {
    %c0 = arith.constant 0 : index
    %c0_0 = arith.constant 0 : index
    %0 = vector.load %arg1[%c0, %c0_0] : memref<2x1152xf32, #tpu.memory_space<vmem>>, vector<2x1152xf32>
    %c0_1 = arith.constant 0 : index
    %c0_2 = arith.constant 0 : index
    %1 = vector.load %arg2[%c0_1, %c0_2] : memref<2x1152xf32, #tpu.memory_space<vmem>>, vector<2x1152xf32>
    %2 = arith.addf %0, %1 : vector<2x1152xf32>
    %3 = math.absf %2 : vector<2x1152xf32>
    %4 = arith.subf %0, %1 : vector<2x1152xf32>
    %5 = math.absf %4 : vector<2x1152xf32>
    %c0_3 = arith.constant 0 : index
    %c0_4 = arith.constant 0 : index
    %6 = vector.load %arg3[%c0_3, %c0_4] : memref<1152x96xf32, #tpu.memory_space<vmem>>, vector<1152x96xf32>
    %cst = arith.constant dense<0.000000e+00> : vector<2x96xf32>
    %7 = tpu.matmul %3, %6, %cst {dimension_numbers = #tpu.dot_dimension_numbers<[1], [0], [0], [1], [0, 0, 1, 1], [], []>, precision = #tpu.contract_precision<fp32>} : vector<2x1152xf32>, vector<1152x96xf32>, vector<2x96xf32> -> vector<2x96xf32>
    %cst_5 = arith.constant dense<0.000000e+00> : vector<2x96xf32>
    %8 = tpu.matmul %5, %6, %cst_5 {dimension_numbers = #tpu.dot_dimension_numbers<[1], [0], [0], [1], [0, 0, 1, 1], [], []>, precision = #tpu.contract_precision<fp32>} : vector<2x1152xf32>, vector<1152x96xf32>, vector<2x96xf32> -> vector<2x96xf32>
    %9 = arith.minimumf %7, %8 : vector<2x96xf32>
    %10 = vector.shape_cast %9 : vector<2x96xf32> to vector<1x2x96xf32>
    %cst_6 = arith.constant dense<0.000000e+00> : vector<1xf32>
    %11 = vector.multi_reduction <add>, %10, %cst_6 [1, 2] : vector<1x2x96xf32> to vector<1xf32>
    %12 = vector.shape_cast %11 : vector<1xf32> to vector<1x1x1xf32>
    %13 = vector.extract %12[0, 0, 0] : f32 from vector<1x1x1xf32>
    %14 = vector.broadcast %13 : f32 to vector<1x128xf32>
    %c0_7 = arith.constant 0 : index
    %c0_8 = arith.constant 0 : index
    %15 = vector.load %arg4[%c0_7, %c0_8] : memref<1x128xf32, #tpu.memory_space<vmem>>, vector<1x128xf32>
    tpu.vector_store %arg4[%c0_7, %c0_8], %14 {strides = array<i32>} : memref<1x128xf32, #tpu.memory_space<vmem>>, vector<1x128xf32>,
    return
  }
  func.func @transform_0(%arg0: i32) -> (i32, i32) {
    %c0_i32 = arith.constant 0 : i32
    %c0_i32_0 = arith.constant 0 : i32
    return %arg0, %c0_i32 : i32, i32
  }
  func.func @transform_1(%arg0: i32) -> (i32, i32) {
    %c0_i32 = arith.constant 0 : i32
    %c0_i32_0 = arith.constant 0 : i32
    return %arg0, %c0_i32 : i32, i32
  }
  func.func @transform_2(%arg0: i32) -> (i32, i32) {
    %c0_i32 = arith.constant 0 : i32
    %c0_i32_0 = arith.constant 0 : i32
    %c0_i32_1 = arith.constant 0 : i32
    return %c0_i32, %c0_i32_0 : i32, i32
  }
  func.func @transform_3(%arg0: i32) -> (i32, i32) {
    %c0_i32 = arith.constant 0 : i32
    %c0_i32_0 = arith.constant 0 : i32
    return %arg0, %c0_i32 : i32, i32
  }
}

</mosaic_0001>

<llo_original>
// kernel: phase_loss_nac.1
$region0: #{phase_loss_nac.1}
  #allocation0 [shape = 'u32[]', space=smem, size = 0x4, offset = 0x4, fixed_abs, tag = 'smem constant byte address 0x4 - core index']
  #allocation1 [shape = 'u32[144,128]{1,0:T(1,128)}', space=vmem, size = 0x12000, scoped, tag = 'internal scratch']
  %s0 = inlined_call_operand.vmem [shape: f32[2,1152], index: 0, kind: input, shape index: {}]
  %s1 = inlined_call_operand.vmem [shape: f32[2,1152], index: 1, kind: input, shape index: {}]
  %s2 = inlined_call_operand.vmem [shape: f32[1152,96], index: 2, kind: input, shape index: {}]
  %s3 = inlined_call_operand.vmem [shape: f32[1,128], index: 3, kind: output, shape index: {}]
  %s4 = sld [smem:[#allocation0]]
  $region22: #{phase_loss_nac.1} parent=0
    _
  %s6 = ssub.s32 1, %s4
  %s7 = scalar_select 0, %s6, %s4
  // Predicated region
  $region2: #{phase_loss_nac.1} parent=0 // pred_check
    _
  $region3: #{phase_loss_nac.1} parent=0 // pred_check_branch
    %9 = sbr.rel (0) target = $region5
  $region4: #{phase_loss_nac.1} parent=0 // pred_region
    _
  $region5: #{phase_loss_nac.1} parent=0 // pred_fallthru
    _
  // Predicated region
  $region6: #{phase_loss_nac.1} parent=0 // pred_check
    _
  $region7: #{phase_loss_nac.1} parent=0 // pred_check_branch
    %11 = sbr.rel (0) target = $region9
  $region8: #{phase_loss_nac.1} parent=0 // pred_region
    _
  $region9: #{phase_loss_nac.1} parent=0 // pred_fallthru
    _
  // Predicated region
  $region10: #{phase_loss_nac.1} parent=0 // pred_check
    _
  $region11: #{phase_loss_nac.1} parent=0 // pred_check_branch
    %13 = sbr.rel (0) target = $region13
  $region12: #{phase_loss_nac.1} parent=0 // pred_region
    _
  $region13: #{phase_loss_nac.1} parent=0 // pred_fallthru
    _
  %v14 = vld [vmem:[%s0] sm:$0xff]
  %v15 = vld [vmem:[%s0 + $0x8] sm:$0xff]
  %v16 = vld [vmem:[%s0 + $0x10] sm:$0x3]
  %v17 = vld [vmem:[%s1] sm:$0xff]
  %v18 = vld [vmem:[%s1 + $0x8] sm:$0xff]
  %v19 = vld [vmem:[%s1 + $0x10] sm:$0x3]
  %v20 = vadd.f32 %v14, %v17
  %v21 = vadd.f32 %v15, %v18
  %v22 = vadd.f32 %v16, %v19
  %v23 = vand.u32 2147483647, %v20
  %v24 = vand.u32 2147483647, %v21
  %v25 = vand.u32 2147483647, %v22
  %v26 = vsub.f32 %v14, %v17
  %v27 = vsub.f32 %v15, %v18
  %v28 = vsub.f32 %v16, %v19
  %v29 = vand.u32 2147483647, %v26
  %v30 = vand.u32 2147483647, %v27
  %v31 = vand.u32 2147483647, %v28
  %v32 = vld [vmem:[%s2] sm:$0xff]
  %v33 = vld [vmem:[%s2 + $0x8] sm:$0xff]
  %v34 = vld [vmem:[%s2 + $0x10] sm:$0xff]
  %v35 = vld [vmem:[%s2 + $0x18] sm:$0xff]
  %v36 = vld [vmem:[%s2 + $0x20] sm:$0xff]
  %v37 = vld [vmem:[%s2 + $0x28] sm:$0xff]
  %v38 = vld [vmem:[%s2 + $0x30] sm:$0xff]
  %v39 = vld [vmem:[%s2 + $0x38] sm:$0xff]
  %v40 = vld [vmem:[%s2 + $0x40] sm:$0xff]
  %v41 = vld [vmem:[%s2 + $0x48] sm:$0xff]
  %v42 = vld [vmem:[%s2 + $0x50] sm:$0xff]
  %v43 = vld [vmem:[%s2 + $0x58] sm:$0xff]
  %v44 = vld [vmem:[%s2 + $0x60] sm:$0xff]
  %v45 = vld [vmem:[%s2 + $0x68] sm:$0xff]
  %v46 = vld [vmem:[%s2 + $0x70] sm:$0xff]
  %v47 = vld [vmem:[%s2 + $0x78] sm:$0xff]
  %v48 = vld [vmem:[%s2 + $0x80] sm:$0xff]
  %v49 = vld [vmem:[%s2 + $0x88] sm:$0xff]
  %v50 = vld [vmem:[%s2 + $0x90] sm:$0xff]
  %v51 = vld [vmem:[%s2 + $0x98] sm:$0xff]
  %v52 = vld [vmem:[%s2 + $0xa0] sm:$0xff]
  %v53 = vld [vmem:[%s2 + $0xa8] sm:$0xff]
  %v54 = vld [vmem:[%s2 + $0xb0] sm:$0xff]
  %v55 = vld [vmem:[%s2 + $0xb8] sm:$0xff]
  %v56 = vld [vmem:[%s2 + $0xc0] sm:$0xff]
  %v57 = vld [vmem:[%s2 + $0xc8] sm:$0xff]
  %v58 = vld [vmem:[%s2 + $0xd0] sm:$0xff]
  %v59 = vld [vmem:[%s2 + $0xd8] sm:$0xff]
  %v60 = vld [vmem:[%s2 + $0xe0] sm:$0xff]
  %v61 = vld [vmem:[%s2 + $0xe8] sm:$0xff]
  %v62 = vld [vmem:[%s2 + $0xf0] sm:$0xff]
  %v63 = vld [vmem:[%s2 + $0xf8] sm:$0xff]
  %v64 = vld [vmem:[%s2 + $0x100] sm:$0xff]
  %v65 = vld [vmem:[%s2 + $0x108] sm:$0xff]
  %v66 = vld [vmem:[%s2 + $0x110] sm:$0xff]
  %v67 = vld [vmem:[%s2 + $0x118] sm:$0xff]
  %v68 = vld [vmem:[%s2 + $0x120] sm:$0xff]
  %v69 = vld [vmem:[%s2 + $0x128] sm:$0xff]
  %v70 = vld [vmem:[%s2 + $0x130] sm:$0xff]
  %v71 = vld [vmem:[%s2 + $0x138] sm:$0xff]
  %v72 = vld [vmem:[%s2 + $0x140] sm:$0xff]
  %v73 = vld [vmem:[%s2 + $0x148] sm:$0xff]
  %v74 = vld [vmem:[%s2 + $0x150] sm:$0xff]
  %v75 = vld [vmem:[%s2 + $0x158] sm:$0xff]
  %v76 = vld [vmem:[%s2 + $0x160] sm:$0xff]
  %v77 = vld [vmem:[%s2 + $0x168] sm:$0xff]
  %v78 = vld [vmem:[%s2 + $0x170] sm:$0xff]
  %v79 = vld [vmem:[%s2 + $0x178] sm:$0xff]
  %v80 = vld [vmem:[%s2 + $0x180] sm:$0xff]
  %v81 = vld [vmem:[%s2 + $0x188] sm:$0xff]
  %v82 = vld [vmem:[%s2 + $0x190] sm:$0xff]
  %v83 = vld [vmem:[%s2 + $0x198] sm:$0xff]
  %v84 = vld [vmem:[%s2 + $0x1a0] sm:$0xff]
  %v85 = vld [vmem:[%s2 + $0x1a8] sm:$0xff]
  %v86 = vld [vmem:[%s2 + $0x1b0] sm:$0xff]
  %v87 = vld [vmem:[%s2 + $0x1b8] sm:$0xff]
  %v88 = vld [vmem:[%s2 + $0x1c0] sm:$0xff]
  %v89 = vld [vmem:[%s2 + $0x1c8] sm:$0xff]
  %v90 = vld [vmem:[%s2 + $0x1d0] sm:$0xff]
  %v91 = vld [vmem:[%s2 + $0x1d8] sm:$0xff]
  %v92 = vld [vmem:[%s2 + $0x1e0] sm:$0xff]
  %v93 = vld [vmem:[%s2 + $0x1e8] sm:$0xff]
  %v94 = vld [vmem:[%s2 + $0x1f0] sm:$0xff]
  %v95 = vld [vmem:[%s2 + $0x1f8] sm:$0xff]
  %v96 = vld [vmem:[%s2 + $0x200] sm:$0xff]
  %v97 = vld [vmem:[%s2 + $0x208] sm:$0xff]
  %v98 = vld [vmem:[%s2 + $0x210] sm:$0xff]
  %v99 = vld [vmem:[%s2 + $0x218] sm:$0xff]
  %v100 = vld [vmem:[%s2 + $0x220] sm:$0xff]
  %v101 = vld [vmem:[%s2 + $0x228] sm:$0xff]
  %v102 = vld [vmem:[%s2 + $0x230] sm:$0xff]
  %v103 = vld [vmem:[%s2 + $0x238] sm:$0xff]
  %v104 = vld [vmem:[%s2 + $0x240] sm:$0xff]
  %v105 = vld [vmem:[%s2 + $0x248] sm:$0xff]
  %v106 = vld [vmem:[%s2 + $0x250] sm:$0xff]
  %v107 = vld [vmem:[%s2 + $0x258] sm:$0xff]
  %v108 = vld [vmem:[%s2 + $0x260] sm:$0xff]
  %v109 = vld [vmem:[%s2 + $0x268] sm:$0xff]
  %v110 = vld [vmem:[%s2 + $0x270] sm:$0xff]
  %v111 = vld [vmem:[%s2 + $0x278] sm:$0xff]
  %v112 = vld [vmem:[%s2 + $0x280] sm:$0xff]
  %v113 = vld [vmem:[%s2 + $0x288] sm:$0xff]
  %v114 = vld [vmem:[%s2 + $0x290] sm:$0xff]
  %v115 = vld [vmem:[%s2 + $0x298] sm:$0xff]
  %v116 = vld [vmem:[%s2 + $0x2a0] sm:$0xff]
  %v117 = vld [vmem:[%s2 + $0x2a8] sm:$0xff]
  %v118 = vld [vmem:[%s2 + $0x2b0] sm:$0xff]
  %v119 = vld [vmem:[%s2 + $0x2b8] sm:$0xff]
  %v120 = vld [vmem:[%s2 + $0x2c0] sm:$0xff]
  %v121 = vld [vmem:[%s2 + $0x2c8] sm:$0xff]
  %v122 = vld [vmem:[%s2 + $0x2d0] sm:$0xff]
  %v123 = vld [vmem:[%s2 + $0x2d8] sm:$0xff]
  %v124 = vld [vmem:[%s2 + $0x2e0] sm:$0xff]
  %v125 = vld [vmem:[%s2 + $0x2e8] sm:$0xff]
  %v126 = vld [vmem:[%s2 + $0x2f0] sm:$0xff]
  %v127 = vld [vmem:[%s2 + $0x2f8] sm:$0xff]
  %v128 = vld [vmem:[%s2 + $0x300] sm:$0xff]
  %v129 = vld [vmem:[%s2 + $0x308] sm:$0xff]
  %v130 = vld [vmem:[%s2 + $0x310] sm:$0xff]
  %v131 = vld [vmem:[%s2 + $0x318] sm:$0xff]
  %v132 = vld [vmem:[%s2 + $0x320] sm:$0xff]
  %v133 = vld [vmem:[%s2 + $0x328] sm:$0xff]
  %v134 = vld [vmem:[%s2 + $0x330] sm:$0xff]
  %v135 = vld [vmem:[%s2 + $0x338] sm:$0xff]
  %v136 = vld [vmem:[%s2 + $0x340] sm:$0xff]
  %v137 = vld [vmem:[%s2 + $0x348] sm:$0xff]
  %v138 = vld [vmem:[%s2 + $0x350] sm:$0xff]
  %v139 = vld [vmem:[%s2 + $0x358] sm:$0xff]
  %v140 = vld [vmem:[%s2 + $0x360] sm:$0xff]
  %v141 = vld [vmem:[%s2 + $0x368] sm:$0xff]
  %v142 = vld [vmem:[%s2 + $0x370] sm:$0xff]
  %v143 = vld [vmem:[%s2 + $0x378] sm:$0xff]
  %v144 = vld [vmem:[%s2 + $0x380] sm:$0xff]
  %v145 = vld [vmem:[%s2 + $0x388] sm:$0xff]
  %v146 = vld [vmem:[%s2 + $0x390] sm:$0xff]
  %v147 = vld [vmem:[%s2 + $0x398] sm:$0xff]
  %v148 = vld [vmem:[%s2 + $0x3a0] sm:$0xff]
  %v149 = vld [vmem:[%s2 + $0x3a8] sm:$0xff]
  %v150 = vld [vmem:[%s2 + $0x3b0] sm:$0xff]
  %v151 = vld [vmem:[%s2 + $0x3b8] sm:$0xff]
  %v152 = vld [vmem:[%s2 + $0x3c0] sm:$0xff]
  %v153 = vld [vmem:[%s2 + $0x3c8] sm:$0xff]
  %v154 = vld [vmem:[%s2 + $0x3d0] sm:$0xff]
  %v155 = vld [vmem:[%s2 + $0x3d8] sm:$0xff]
  %v156 = vld [vmem:[%s2 + $0x3e0] sm:$0xff]
  %v157 = vld [vmem:[%s2 + $0x3e8] sm:$0xff]
  %v158 = vld [vmem:[%s2 + $0x3f0] sm:$0xff]
  %v159 = vld [vmem:[%s2 + $0x3f8] sm:$0xff]
  %v160 = vld [vmem:[%s2 + $0x400] sm:$0xff]
  %v161 = vld [vmem:[%s2 + $0x408] sm:$0xff]
  %v162 = vld [vmem:[%s2 + $0x410] sm:$0xff]
  %v163 = vld [vmem:[%s2 + $0x418] sm:$0xff]
  %v164 = vld [vmem:[%s2 + $0x420] sm:$0xff]
  %v165 = vld [vmem:[%s2 + $0x428] sm:$0xff]
  %v166 = vld [vmem:[%s2 + $0x430] sm:$0xff]
  %v167 = vld [vmem:[%s2 + $0x438] sm:$0xff]
  %v168 = vld [vmem:[%s2 + $0x440] sm:$0xff]
  %v169 = vld [vmem:[%s2 + $0x448] sm:$0xff]
  %v170 = vld [vmem:[%s2 + $0x450] sm:$0xff]
  %v171 = vld [vmem:[%s2 + $0x458] sm:$0xff]
  %v172 = vld [vmem:[%s2 + $0x460] sm:$0xff]
  %v173 = vld [vmem:[%s2 + $0x468] sm:$0xff]
  %v174 = vld [vmem:[%s2 + $0x470] sm:$0xff]
  %v175 = vld [vmem:[%s2 + $0x478] sm:$0xff]
  %v179 = vcombine.high %v23, %v23
  %v181 = vunpack.c.l.s4 1983009808
  %v182 = vunpack.c.0.s8 %v181
  %v183 = vlaneseq
  %v184 = vshrl.u32 %v183, 7
  %v185 = vsub.s32 %v182, %v184
  %v186 = vrot.slane %v23, %v185
  %v188 = vunpack.c.l.s4 1983009808
  %v189 = vunpack.c.0.s8 %v188
  %v190 = vlaneseq
  %v191 = vshrl.u32 %v190, 7
  %v192 = vsub.s32 %v189, %v191
  %v193 = vrot.slane %v179, %v192
  %v194 = vcombine.high %v186, %v186
  %v195 = vcombine.high %v193, %v193
  %v196 = vcombine.high %v24, %v24
  %v198 = vunpack.c.l.s4 1983009808
  %v199 = vunpack.c.0.s8 %v198
  %v200 = vlaneseq
  %v201 = vshrl.u32 %v200, 7
  %v202 = vsub.s32 %v199, %v201
  %v203 = vrot.slane %v24, %v202
  %v205 = vunpack.c.l.s4 1983009808
  %v206 = vunpack.c.0.s8 %v205
  %v207 = vlaneseq
  %v208 = vshrl.u32 %v207, 7
  %v209 = vsub.s32 %v206, %v208
  %v210 = vrot.slane %v196, %v209
  %v211 = vcombine.high %v203, %v203
  %v212 = vcombine.high %v210, %v210
  %v214 = vunpack.c.l.s4 1983009808
  %v215 = vunpack.c.0.s8 %v214
  %v216 = vlaneseq
  %v217 = vshrl.u32 %v216, 7
  %v218 = vsub.s32 %v215, %v217
  %v219 = vrot.slane %v25, %v218
  %229 = vmatprep.subr.mxu0 0.0
  %v230 = vand.u32 %v32, 4294901760
  %231 = vmatpush1.msra.mxu0 %v230
  %232 = vmatprep.subr.mxu0 0.0
  %v233 = vand.u32 %v33, 4294901760
  %234 = vmatpush1.msra.mxu0 %v233
  %235 = vmatprep.subr.mxu0 0.0
  %v236 = vand.u32 %v34, 4294901760
  %237 = vmatpush1.msra.mxu0 %v236
  %238 = vmatprep.subr.mxu0 0.0
  %v239 = vand.u32 %v35, 4294901760
  %240 = vmatpush1.msra.mxu0 %v239
  %241 = vmatprep.subr.mxu0 0.0
  %v242 = vand.u32 %v36, 4294901760
  %243 = vmatpush1.msra.mxu0 %v242
  %244 = vmatprep.subr.mxu0 0.0
  %v245 = vand.u32 %v37, 4294901760
  %246 = vmatpush1.msra.mxu0 %v245
  %247 = vmatprep.subr.mxu0 0.0
  %v248 = vand.u32 %v38, 4294901760
  %249 = vmatpush1.msra.mxu0 %v248
  %250 = vmatprep.subr.mxu0 0.0
  %v251 = vand.u32 %v39, 4294901760
  %252 = vmatpush1.msra.mxu0 %v251
  %253 = vmatprep.subr.mxu0 0.0
  %v254 = vand.u32 %v40, 4294901760
  %255 = vmatpush1.msra.mxu0 %v254
  %256 = vmatprep.subr.mxu0 0.0
  %v257 = vand.u32 %v41, 4294901760
  %258 = vmatpush1.msra.mxu0 %v257
  %259 = vmatprep.subr.mxu0 0.0
  %v260 = vand.u32 %v42, 4294901760
  %261 = vmatpush1.msra.mxu0 %v260
  %262 = vmatprep.subr.mxu0 0.0
  %v263 = vand.u32 %v43, 4294901760
  %264 = vmatpush1.msra.mxu0 %v263
  %265 = vmatprep.subr.mxu0 0.0
  %v266 = vand.u32 %v44, 4294901760
  %267 = vmatpush1.msra.mxu0 %v266
  %268 = vmatprep.subr.mxu0 0.0
  %v269 = vand.u32 %v45, 4294901760
  %270 = vmatpush1.msra.mxu0 %v269
  %271 = vmatprep.subr.mxu0 0.0
  %v272 = vand.u32 %v46, 4294901760
  %273 = vmatpush1.msra.mxu0 %v272
  %274 = vmatprep.subr.mxu0 0.0
  %v275 = vand.u32 %v47, 4294901760
  %276 = vmatpush1.msra.mxu0 %v275
  %277 = vmatprep.subr.mxu0 0.0
  %v278 = vand.u32 %v48, 4294901760
  %279 = vmatpush1.msra.mxu0 %v278
  %280 = vmatprep.subr.mxu0 0.0
  %v281 = vand.u32 %v49, 4294901760
  %282 = vmatpush1.msra.mxu0 %v281
  %283 = vmatprep.subr.mxu0 0.0
  %v284 = vand.u32 %v50, 4294901760
  %285 = vmatpush1.msra.mxu0 %v284
  %286 = vmatprep.subr.mxu0 0.0
  %v287 = vand.u32 %v51, 4294901760
  %288 = vmatpush1.msra.mxu0 %v287
  %289 = vmatprep.subr.mxu0 0.0
  %v290 = vand.u32 %v52, 4294901760
  %291 = vmatpush1.msra.mxu0 %v290
  %292 = vmatprep.subr.mxu0 0.0
  %v293 = vand.u32 %v53, 4294901760
  %294 = vmatpush1.msra.mxu0 %v293
  %295 = vmatprep.subr.mxu0 0.0
  %v296 = vand.u32 %v54, 4294901760
  %297 = vmatpush1.msra.mxu0 %v296
  %298 = vmatprep.subr.mxu0 0.0
  %v299 = vand.u32 %v55, 4294901760
  %300 = vmatpush1.msra.mxu0 %v299
  %301 = vmatprep.subr.mxu0 0.0
  %v302 = vand.u32 %v56, 4294901760
  %303 = vmatpush1.msra.mxu0 %v302
  %304 = vmatprep.subr.mxu0 0.0
  %v305 = vand.u32 %v57, 4294901760
  %306 = vmatpush1.msra.mxu0 %v305
  %307 = vmatprep.subr.mxu0 0.0
  %v308 = vand.u32 %v58, 4294901760
  %309 = vmatpush1.msra.mxu0 %v308
  %310 = vmatprep.subr.mxu0 0.0
  %v311 = vand.u32 %v59, 4294901760
  %312 = vmatpush1.msra.mxu0 %v311
  %313 = vmatprep.subr.mxu0 0.0
  %v314 = vand.u32 %v60, 4294901760
  %315 = vmatpush1.msra.mxu0 %v314
  %316 = vmatprep.subr.mxu0 0.0
  %v317 = vand.u32 %v61, 4294901760
  %318 = vmatpush1.msra.mxu0 %v317
  %319 = vmatprep.subr.mxu0 0.0
  %v320 = vand.u32 %v62, 4294901760
  %321 = vmatpush1.msra.mxu0 %v320
  %322 = vmatprep.subr.mxu0 0.0
  %v323 = vand.u32 %v63, 4294901760
  %324 = vmatpush1.msra.mxu0 %v323
  %v325 = vand.u32 %v194, 4294901760
  %v326 = vsub.f32 %v194, %v325
  %v327 = vand.u32 %v326, 4294901760
  %v328 = vsub.f32 %v326, %v327
  %v329 = vand.u32 %v328, 4294901760
  %330 = vmatprep.mubr.f32.mxu0 %v329
  %v331 = vand.u32 %v186, 4294901760
  %v332 = vsub.f32 %v186, %v331
  %v333 = vand.u32 %v332, 4294901760
  %v334 = vsub.f32 %v332, %v333
  %v335 = vand.u32 %v334, 4294901760
  %336 = vmatmul.mubr.f32.gmra.mrb[0].mxu0 %v335
  %v337 = vpop.f32.mrb[0].mxu0
  %v338 = vadd.f32 0.0, %v337
  %v339 = vpop.f32.mrb[0].mxu0
  %340 = vdwg.mxu0
  %341 = vmatprep.subr.mxu0 0.0
  %v342 = vand.u32 %v32, 4294901760
  %v343 = vsub.f32 %v32, %v342
  %v344 = vand.u32 %v343, 4294901760
  %v345 = vsub.f32 %v343, %v344
  %v346 = vand.u32 %v345, 4294901760
  %347 = vmatpush1.msra.mxu0 %v346
  %348 = vmatprep.subr.mxu0 0.0
  %v349 = vand.u32 %v33, 4294901760
  %v350 = vsub.f32 %v33, %v349
  %v351 = vand.u32 %v350, 4294901760
  %v352 = vsub.f32 %v350, %v351
  %v353 = vand.u32 %v352, 4294901760
  %354 = vmatpush1.msra.mxu0 %v353
  %355 = vmatprep.subr.mxu0 0.0
  %v356 = vand.u32 %v34, 4294901760
  %v357 = vsub.f32 %v34, %v356
  %v358 = vand.u32 %v357, 4294901760
  %v359 = vsub.f32 %v357, %v358
  %v360 = vand.u32 %v359, 4294901760
  %361 = vmatpush1.msra.mxu0 %v360
  %362 = vmatprep.subr.mxu0 0.0
  %v363 = vand.u32 %v35, 4294901760
  %v364 = vsub.f32 %v35, %v363
  %v365 = vand.u32 %v364, 4294901760
  %v366 = vsub.f32 %v364, %v365
  %v367 = vand.u32 %v366, 4294901760
  %368 = vmatpush1.msra.mxu0 %v367
  %369 = vmatprep.subr.mxu0 0.0
  %v370 = vand.u32 %v36, 4294901760
  %v371 = vsub.f32 %v36, %v370
  %v372 = vand.u32 %v371, 4294901760
  %v373 = vsub.f32 %v371, %v372
  %v374 = vand.u32 %v373, 4294901760
  %375 = vmatpush1.msra.mxu0 %v374
  %376 = vmatprep.subr.mxu0 0.0
  %v377 = vand.u32 %v37, 4294901760
  %v378 = vsub.f32 %v37, %v377
  %v379 = vand.u32 %v378, 4294901760
  %v380 = vsub.f32 %v378, %v379
  %v381 = vand.u32 %v380, 4294901760
  %382 = vmatpush1.msra.mxu0 %v381
  %383 = vmatprep.subr.mxu0 0.0
  %v384 = vand.u32 %v38, 4294901760
  %v385 = vsub.f32 %v38, %v384
  %v386 = vand.u32 %v385, 4294901760
  %v387 = vsub.f32 %v385, %v386
  %v388 = vand.u32 %v387, 4294901760
  %389 = vmatpush1.msra.mxu0 %v388
  %390 = vmatprep.subr.mxu0 0.0
  %v391 = vand.u32 %v39, 4294901760
  %v392 = vsub.f32 %v39, %v391
  %v393 = vand.u32 %v392, 4294901760
  %v394 = vsub.f32 %v392, %v393
  %v395 = vand.u32 %v394, 4294901760
  %396 = vmatpush1.msra.mxu0 %v395
  %397 = vmatprep.subr.mxu0 0.0
  %v398 = vand.u32 %v40, 4294901760
  %v399 = vsub.f32 %v40, %v398
  %v400 = vand.u32 %v399, 4294901760
  %v401 = vsub.f32 %v399, %v400
  %v402 = vand.u32 %v401, 4294901760
  %403 = vmatpush1.msra.mxu0 %v402
  %404 = vmatprep.subr.mxu0 0.0
  %v405 = vand.u32 %v41, 4294901760
  %v406 = vsub.f32 %v41, %v405
  %v407 = vand.u32 %v406, 4294901760
  %v408 = vsub.f32 %v406, %v407
  %v409 = vand.u32 %v408, 4294901760
  %410 = vmatpush1.msra.mxu0 %v409
  %411 = vmatprep.subr.mxu0 0.0
  %v412 = vand.u32 %v42, 4294901760
  %v413 = vsub.f32 %v42, %v412
  %v414 = vand.u32 %v413, 4294901760
  %v415 = vsub.f32 %v413, %v414
  %v416 = vand.u32 %v415, 4294901760
  %417 = vmatpush1.msra.mxu0 %v416
  %418 = vmatprep.subr.mxu0 0.0
  %v419 = vand.u32 %v43, 4294901760
  %v420 = vsub.f32 %v43, %v419
  %v421 = vand.u32 %v420, 4294901760
  %v422 = vsub.f32 %v420, %v421
  %v423 = vand.u32 %v422, 4294901760
  %424 = vmatpush1.msra.mxu0 %v423
  %425 = vmatprep.subr.mxu0 0.0
  %v426 = vand.u32 %v44, 4294901760
  %v427 = vsub.f32 %v44, %v426
  %v428 = vand.u32 %v427, 4294901760
  %v429 = vsub.f32 %v427, %v428
  %v430 = vand.u32 %v429, 4294901760
  %431 = vmatpush1.msra.mxu0 %v430
  %432 = vmatprep.subr.mxu0 0.0
  %v433 = vand.u32 %v45, 4294901760
  %v434 = vsub.f32 %v45, %v433
  %v435 = vand.u32 %v434, 4294901760
  %v436 = vsub.f32 %v434, %v435
  %v437 = vand.u32 %v436, 4294901760
  %438 = vmatpush1.msra.mxu0 %v437
  %439 = vmatprep.subr.mxu0 0.0
  %v440 = vand.u32 %v46, 4294901760
  %v441 = vsub.f32 %v46, %v440
  %v442 = vand.u32 %v441, 4294901760
  %v443 = vsub.f32 %v441, %v442
  %v444 = vand.u32 %v443, 4294901760
  %445 = vmatpush1.msra.mxu0 %v444
  %446 = vmatprep.subr.mxu0 0.0
  %v447 = vand.u32 %v47, 4294901760
  %v448 = vsub.f32 %v47, %v447
  %v449 = vand.u32 %v448, 4294901760
  %v450 = vsub.f32 %v448, %v449
  %v451 = vand.u32 %v450, 4294901760
  %452 = vmatpush1.msra.mxu0 %v451
  %453 = vmatprep.subr.mxu0 0.0
  %v454 = vand.u32 %v48, 4294901760
  %v455 = vsub.f32 %v48, %v454
  %v456 = vand.u32 %v455, 4294901760
  %v457 = vsub.f32 %v455, %v456
  %v458 = vand.u32 %v457, 4294901760
  %459 = vmatpush1.msra.mxu0 %v458
  %460 = vmatprep.subr.mxu0 0.0
  %v461 = vand.u32 %v49, 4294901760
  %v462 = vsub.f32 %v49, %v461
  %v463 = vand.u32 %v462, 4294901760
  %v464 = vsub.f32 %v462, %v463
  %v465 = vand.u32 %v464, 4294901760
  %466 = vmatpush1.msra.mxu0 %v465
  %467 = vmatprep.subr.mxu0 0.0
  %v468 = vand.u32 %v50, 4294901760
  %v469 = vsub.f32 %v50, %v468
  %v470 = vand.u32 %v469, 4294901760
  %v471 = vsub.f32 %v469, %v470
  %v472 = vand.u32 %v471, 4294901760
  %473 = vmatpush1.msra.mxu0 %v472
  %474 = vmatprep.subr.mxu0 0.0
  %v475 = vand.u32 %v51, 4294901760
  %v476 = vsub.f32 %v51, %v475
  %v477 = vand.u32 %v476, 4294901760
  %v478 = vsub.f32 %v476, %v477
  %v479 = vand.u32 %v478, 4294901760
  %480 = vmatpush1.msra.mxu0 %v479
  %481 = vmatprep.subr.mxu0 0.0
  %v482 = vand.u32 %v52, 4294901760
  %v483 = vsub.f32 %v52, %v482
  %v484 = vand.u32 %v483, 4294901760
  %v485 = vsub.f32 %v483, %v484
  %v486 = vand.u32 %v485, 4294901760
  %487 = vmatpush1.msra.mxu0 %v486
  %488 = vmatprep.subr.mxu0 0.0
  %v489 = vand.u32 %v53, 4294901760
  %v490 = vsub.f32 %v53, %v489
  %v491 = vand.u32 %v490, 4294901760
  %v492 = vsub.f32 %v490, %v491
  %v493 = vand.u32 %v492, 4294901760
  %494 = vmatpush1.msra.mxu0 %v493
  %495 = vmatprep.subr.mxu0 0.0
  %v496 = vand.u32 %v54, 4294901760
  %v497 = vsub.f32 %v54, %v496
  %v498 = vand.u32 %v497, 4294901760
  %v499 = vsub.f32 %v497, %v498
  %v500 = vand.u32 %v499, 4294901760
  %501 = vmatpush1.msra.mxu0 %v500
  %502 = vmatprep.subr.mxu0 0.0
  %v503 = vand.u32 %v55, 4294901760
  %v504 = vsub.f32 %v55, %v503
  %v505 = vand.u32 %v504, 4294901760
  %v506 = vsub.f32 %v504, %v505
  %v507 = vand.u32 %v506, 4294901760
  %508 = vmatpush1.msra.mxu0 %v507
  %509 = vmatprep.subr.mxu0 0.0
  %v510 = vand.u32 %v56, 4294901760
  %v511 = vsub.f32 %v56, %v510
  %v512 = vand.u32 %v511, 4294901760
  %v513 = vsub.f32 %v511, %v512
  %v514 = vand.u32 %v513, 4294901760
  %515 = vmatpush1.msra.mxu0 %v514
  %516 = vmatprep.subr.mxu0 0.0
  %v517 = vand.u32 %v57, 4294901760
  %v518 = vsub.f32 %v57, %v517
  %v519 = vand.u32 %v518, 4294901760
  %v520 = vsub.f32 %v518, %v519
  %v521 = vand.u32 %v520, 4294901760
  %522 = vmatpush1.msra.mxu0 %v521
  %523 = vmatprep.subr.mxu0 0.0
  %v524 = vand.u32 %v58, 4294901760
  %v525 = vsub.f32 %v58, %v524
  %v526 = vand.u32 %v525, 4294901760
  %v527 = vsub.f32 %v525, %v526
  %v528 = vand.u32 %v527, 4294901760
  %529 = vmatpush1.msra.mxu0 %v528
  %530 = vmatprep.subr.mxu0 0.0
  %v531 = vand.u32 %v59, 4294901760
  %v532 = vsub.f32 %v59, %v531
  %v533 = vand.u32 %v532, 4294901760
  %v534 = vsub.f32 %v532, %v533
  %v535 = vand.u32 %v534, 4294901760
  %536 = vmatpush1.msra.mxu0 %v535
  %537 = vmatprep.subr.mxu0 0.0
  %v538 = vand.u32 %v60, 4294901760
  %v539 = vsub.f32 %v60, %v538
  %v540 = vand.u32 %v539, 4294901760
  %v541 = vsub.f32 %v539, %v540
  %v542 = vand.u32 %v541, 4294901760
  %543 = vmatpush1.msra.mxu0 %v542
  %544 = vmatprep.subr.mxu0 0.0
  %v545 = vand.u32 %v61, 4294901760
  %v546 = vsub.f32 %v61, %v545
  %v547 = vand.u32 %v546, 4294901760
  %v548 = vsub.f32 %v546, %v547
  %v549 = vand.u32 %v548, 4294901760
  %550 = vmatpush1.msra.mxu0 %v549
  %551 = vmatprep.subr.mxu0 0.0
  %v552 = vand.u32 %v62, 4294901760
  %v553 = vsub.f32 %v62, %v552
  %v554 = vand.u32 %v553, 4294901760
  %v555 = vsub.f32 %v553, %v554
  %v556 = vand.u32 %v555, 4294901760
  %557 = vmatpush1.msra.mxu0 %v556
  %558 = vmatprep.subr.mxu0 0.0
  %v559 = vand.u32 %v63, 4294901760
  %v560 = vsub.f32 %v63, %v559
  %v561 = vand.u32 %v560, 4294901760
  %v562 = vsub.f32 %v560, %v561
  %v563 = vand.u32 %v562, 4294901760
  %564 = vmatpush1.msra.mxu0 %v563
  %v565 = vand.u32 %v194, 4294901760
  %566 = vmatprep.mubr.f32.mxu0 %v565
  %v567 = vand.u32 %v186, 4294901760
  %568 = vmatmul.mubr.f32.gmra.mrb[0].mxu0 %v567
  %v569 = vpop.f32.mrb[0].mxu0
  %v570 = vadd.f32 %v338, %v569
  %v571 = vpop.f32.mrb[0].mxu0
  %572 = vdwg.mxu0
  %573 = vmatprep.subr.mxu0 0.0
  %v574 = vand.u32 %v32, 4294901760
  %v575 = vsub.f32 %v32, %v574
  %576 = vmatpush1.msra.mxu0 %v575
  %577 = vmatprep.subr.mxu0 0.0
  %v578 = vand.u32 %v33, 4294901760
  %v579 = vsub.f32 %v33, %v578
  %580 = vmatpush1.msra.mxu0 %v579
  %581 = vmatprep.subr.mxu0 0.0
  %v582 = vand.u32 %v34, 4294901760
  %v583 = vsub.f32 %v34, %v582
  %584 = vmatpush1.msra.mxu0 %v583
  %585 = vmatprep.subr.mxu0 0.0
  %v586 = vand.u32 %v35, 4294901760
  %v587 = vsub.f32 %v35, %v586
  %588 = vmatpush1.msra.mxu0 %v587
  %589 = vmatprep.subr.mxu0 0.0
  %v590 = vand.u32 %v36, 4294901760
  %v591 = vsub.f32 %v36, %v590
  %592 = vmatpush1.msra.mxu0 %v591
  %593 = vmatprep.subr.mxu0 0.0
  %v594 = vand.u32 %v37, 4294901760
  %v595 = vsub.f32 %v37, %v594
  %596 = vmatpush1.msra.mxu0 %v595
  %597 = vmatprep.subr.mxu0 0.0
  %v598 = vand.u32 %v38, 4294901760
  %v599 = vsub.f32 %v38, %v598
  %600 = vmatpush1.msra.mxu0 %v599
  %601 = vmatprep.subr.mxu0 0.0
  %v602 = vand.u32 %v39, 4294901760
  %v603 = vsub.f32 %v39, %v602
  %604 = vmatpush1.msra.mxu0 %v603
  %605 = vmatprep.subr.mxu0 0.0
  %v606 = vand.u32 %v40, 4294901760
  %v607 = vsub.f32 %v40, %v606
  %608 = vmatpush1.msra.mxu0 %v607
  %609 = vmatprep.subr.mxu0 0.0
  %v610 = vand.u32 %v41, 4294901760
  %v611 = vsub.f32 %v41, %v610
  %612 = vmatpush1.msra.mxu0 %v611
  %613 = vmatprep.subr.mxu0 0.0
  %v614 = vand.u32 %v42, 4294901760
  %v615 = vsub.f32 %v42, %v614
  %616 = vmatpush1.msra.mxu0 %v615
  %617 = vmatprep.subr.mxu0 0.0
  %v618 = vand.u32 %v43, 4294901760
  %v619 = vsub.f32 %v43, %v618
  %620 = vmatpush1.msra.mxu0 %v619
  %621 = vmatprep.subr.mxu0 0.0
  %v622 = vand.u32 %v44, 4294901760
  %v623 = vsub.f32 %v44, %v622
  %624 = vmatpush1.msra.mxu0 %v623
  %625 = vmatprep.subr.mxu0 0.0
  %v626 = vand.u32 %v45, 4294901760
  %v627 = vsub.f32 %v45, %v626
  %628 = vmatpush1.msra.mxu0 %v627
  %629 = vmatprep.subr.mxu0 0.0
  %v630 = vand.u32 %v46, 4294901760
  %v631 = vsub.f32 %v46, %v630
  %632 = vmatpush1.msra.mxu0 %v631
  %633 = vmatprep.subr.mxu0 0.0
  %v634 = vand.u32 %v47, 4294901760
  %v635 = vsub.f32 %v47, %v634
  %636 = vmatpush1.msra.mxu0 %v635
  %637 = vmatprep.subr.mxu0 0.0
  %v638 = vand.u32 %v48, 4294901760
  %v639 = vsub.f32 %v48, %v638
  %640 = vmatpush1.msra.mxu0 %v639
  %641 = vmatprep.subr.mxu0 0.0
  %v642 = vand.u32 %v49, 4294901760
  %v643 = vsub.f32 %v49, %v642
  %644 = vmatpush1.msra.mxu0 %v643
  %645 = vmatprep.subr.mxu0 0.0
  %v646 = vand.u32 %v50, 4294901760
  %v647 = vsub.f32 %v50, %v646
  %648 = vmatpush1.msra.mxu0 %v647
  %649 = vmatprep.subr.mxu0 0.0
  %v650 = vand.u32 %v51, 4294901760
  %v651 = vsub.f32 %v51, %v650
  %652 = vmatpush1.msra.mxu0 %v651
  %653 = vmatprep.subr.mxu0 0.0
  %v654 = vand.u32 %v52, 4294901760
  %v655 = vsub.f32 %v52, %v654
  %656 = vmatpush1.msra.mxu0 %v655
  %657 = vmatprep.subr.mxu0 0.0
  %v658 = vand.u32 %v53, 4294901760
  %v659 = vsub.f32 %v53, %v658
  %660 = vmatpush1.msra.mxu0 %v659
  %661 = vmatprep.subr.mxu0 0.0
  %v662 = vand.u32 %v54, 4294901760
  %v663 = vsub.f32 %v54, %v662
  %664 = vmatpush1.msra.mxu0 %v663
  %665 = vmatprep.subr.mxu0 0.0
  %v666 = vand.u32 %v55, 4294901760
  %v667 = vsub.f32 %v55, %v666
  %668 = vmatpush1.msra.mxu0 %v667
  %669 = vmatprep.subr.mxu0 0.0
  %v670 = vand.u32 %v56, 4294901760
  %v671 = vsub.f32 %v56, %v670
  %672 = vmatpush1.msra.mxu0 %v671
  %673 = vmatprep.subr.mxu0 0.0
  %v674 = vand.u32 %v57, 4294901760
  %v675 = vsub.f32 %v57, %v674
  %676 = vmatpush1.msra.mxu0 %v675
  %677 = vmatprep.subr.mxu0 0.0
  %v678 = vand.u32 %v58, 4294901760
  %v679 = vsub.f32 %v58, %v678
  %680 = vmatpush1.msra.mxu0 %v679
  %681 = vmatprep.subr.mxu0 0.0
  %v682 = vand.u32 %v59, 4294901760
  %v683 = vsub.f32 %v59, %v682
  %684 = vmatpush1.msra.mxu0 %v683
  %685 = vmatprep.subr.mxu0 0.0
  %v686 = vand.u32 %v60, 4294901760
  %v687 = vsub.f32 %v60, %v686
  %688 = vmatpush1.msra.mxu0 %v687
  %689 = vmatprep.subr.mxu0 0.0
  %v690 = vand.u32 %v61, 4294901760
  %v691 = vsub.f32 %v61, %v690
  %692 = vmatpush1.msra.mxu0 %v691
  %693 = vmatprep.subr.mxu0 0.0
  %v694 = vand.u32 %v62, 4294901760
  %v695 = vsub.f32 %v62, %v694
  %696 = vmatpush1.msra.mxu0 %v695
  %697 = vmatprep.subr.mxu0 0.0
  %v698 = vand.u32 %v63, 4294901760
  %v699 = vsub.f32 %v63, %v698
  %700 = vmatpush1.msra.mxu0 %v699
  %v701 = vand.u32 %v194, 4294901760
  %v702 = vsub.f32 %v194, %v701
  %703 = vmatprep.mubr.f32.mxu0 %v702
  %v704 = vand.u32 %v186, 4294901760
  %v705 = vsub.f32 %v186, %v704
  %706 = vmatmul.mubr.f32.gmra.mrb[0].mxu0 %v705
  %v707 = vpop.f32.mrb[0].mxu0
  %v708 = vadd.f32 %v570, %v707
  %v709 = vpop.f32.mrb[0].mxu0
  %710 = vdwg.mxu0
  %711 = vmatprep.subr.mxu0 0.0
  %v712 = vand.u32 %v32, 4294901760
  %713 = vmatpush1.msra.mxu0 %v712
  %714 = vmatprep.subr.mxu0 0.0
  %v715 = vand.u32 %v33, 4294901760
  %716 = vmatpush1.msra.mxu0 %v715
  %717 = vmatprep.subr.mxu0 0.0
  %v718 = vand.u32 %v34, 4294901760
  %719 = vmatpush1.msra.mxu0 %v718
  %720 = vmatprep.subr.mxu0 0.0
  %v721 = vand.u32 %v35, 4294901760
  %722 = vmatpush1.msra.mxu0 %v721
  %723 = vmatprep.subr.mxu0 0.0
  %v724 = vand.u32 %v36, 4294901760
  %725 = vmatpush1.msra.mxu0 %v724
  %726 = vmatprep.subr.mxu0 0.0
  %v727 = vand.u32 %v37, 4294901760
  %728 = vmatpush1.msra.mxu0 %v727
  %729 = vmatprep.subr.mxu0 0.0
  %v730 = vand.u32 %v38, 4294901760
  %731 = vmatpush1.msra.mxu0 %v730
  %732 = vmatprep.subr.mxu0 0.0
  %v733 = vand.u32 %v39, 4294901760
  %734 = vmatpush1.msra.mxu0 %v733
  %735 = vmatprep.subr.mxu0 0.0
  %v736 = vand.u32 %v40, 4294901760
  %737 = vmatpush1.msra.mxu0 %v736
  %738 = vmatprep.subr.mxu0 0.0
  %v739 = vand.u32 %v41, 4294901760
  %740 = vmatpush1.msra.mxu0 %v739
  %741 = vmatprep.subr.mxu0 0.0
  %v742 = vand.u32 %v42, 4294901760
  %743 = vmatpush1.msra.mxu0 %v742
  %744 = vmatprep.subr.mxu0 0.0
  %v745 = vand.u32 %v43, 4294901760
  %746 = vmatpush1.msra.mxu0 %v745
  %747 = vmatprep.subr.mxu0 0.0
  %v748 = vand.u32 %v44, 4294901760
  %749 = vmatpush1.msra.mxu0 %v748
  %750 = vmatprep.subr.mxu0 0.0
  %v751 = vand.u32 %v45, 4294901760
  %752 = vmatpush1.msra.mxu0 %v751
  %753 = vmatprep.subr.mxu0 0.0
  %v754 = vand.u32 %v46, 4294901760
  %755 = vmatpush1.msra.mxu0 %v754
  %756 = vmatprep.subr.mxu0 0.0
  %v757 = vand.u32 %v47, 4294901760
  %758 = vmatpush1.msra.mxu0 %v757
  %759 = vmatprep.subr.mxu0 0.0
  %v760 = vand.u32 %v48, 4294901760
  %761 = vmatpush1.msra.mxu0 %v760
  %762 = vmatprep.subr.mxu0 0.0
  %v763 = vand.u32 %v49, 4294901760
  %764 = vmatpush1.msra.mxu0 %v763
  %765 = vmatprep.subr.mxu0 0.0
  %v766 = vand.u32 %v50, 4294901760
  %767 = vmatpush1.msra.mxu0 %v766
  %768 = vmatprep.subr.mxu0 0.0
  %v769 = vand.u32 %v51, 4294901760
  %770 = vmatpush1.msra.mxu0 %v769
  %771 = vmatprep.subr.mxu0 0.0
  %v772 = vand.u32 %v52, 4294901760
  %773 = vmatpush1.msra.mxu0 %v772
  %774 = vmatprep.subr.mxu0 0.0
  %v775 = vand.u32 %v53, 4294901760
  %776 = vmatpush1.msra.mxu0 %v775
  %777 = vmatprep.subr.mxu0 0.0
  %v778 = vand.u32 %v54, 4294901760
  %779 = vmatpush1.msra.mxu0 %v778
  %780 = vmatprep.subr.mxu0 0.0
  %v781 = vand.u32 %v55, 4294901760
  %782 = vmatpush1.msra.mxu0 %v781
  %783 = vmatprep.subr.mxu0 0.0
  %v784 = vand.u32 %v56, 4294901760
  %785 = vmatpush1.msra.mxu0 %v784
  %786 = vmatprep.subr.mxu0 0.0
  %v787 = vand.u32 %v57, 4294901760
  %788 = vmatpush1.msra.mxu0 %v787
  %789 = vmatprep.subr.mxu0 0.0
  %v790 = vand.u32 %v58, 4294901760
  %791 = vmatpush1.msra.mxu0 %v790
  %792 = vmatprep.subr.mxu0 0.0
  %v793 = vand.u32 %v59, 4294901760
  %794 = vmatpush1.msra.mxu0 %v793
  %795 = vmatprep.subr.mxu0 0.0
  %v796 = vand.u32 %v60, 4294901760
  %797 = vmatpush1.msra.mxu0 %v796
  %798 = vmatprep.subr.mxu0 0.0
  %v799 = vand.u32 %v61, 4294901760
  %800 = vmatpush1.msra.mxu0 %v799
  %801 = vmatprep.subr.mxu0 0.0
  %v802 = vand.u32 %v62, 4294901760
  %803 = vmatpush1.msra.mxu0 %v802
  %804 = vmatprep.subr.mxu0 0.0
  %v805 = vand.u32 %v63, 4294901760
  %806 = vmatpush1.msra.mxu0 %v805
  %v807 = vand.u32 %v194, 4294901760
  %v808 = vsub.f32 %v194, %v807
  %v809 = vand.u32 %v808, 4294901760
  %810 = vmatprep.mubr.f32.mxu0 %v809
  %v811 = vand.u32 %v186, 4294901760
  %v812 = vsub.f32 %v186, %v811
  %v813 = vand.u32 %v812, 4294901760
  %814 = vmatmul.mubr.f32.gmra.mrb[0].mxu0 %v813
  %v815 = vpop.f32.mrb[0].mxu0
  %v816 = vadd.f32 %v708, %v815
  %v817 = vpop.f32.mrb[0].mxu0
  %818 = vdwg.mxu0
  %819 = vmatprep.subr.mxu0 0.0
  %v820 = vand.u32 %v32, 4294901760
  %v821 = vsub.f32 %v32, %v820
  %v822 = vand.u32 %v821, 4294901760
  %823 = vmatpush1.msra.mxu0 %v822
  %824 = vmatprep.subr.mxu0 0.0
  %v825 = vand.u32 %v33, 4294901760
  %v826 = vsub.f32 %v33, %v825
  %v827 = vand.u32 %v826, 4294901760
  %828 = vmatpush1.msra.mxu0 %v827
  %829 = vmatprep.subr.mxu0 0.0
  %v830 = vand.u32 %v34, 4294901760
  %v831 = vsub.f32 %v34, %v830
  %v832 = vand.u32 %v831, 4294901760
  %833 = vmatpush1.msra.mxu0 %v832
  %834 = vmatprep.subr.mxu0 0.0
  %v835 = vand.u32 %v35, 4294901760
  %v836 = vsub.f32 %v35, %v835
  %v837 = vand.u32 %v836, 4294901760
  %838 = vmatpush1.msra.mxu0 %v837
  %839 = vmatprep.subr.mxu0 0.0
  %v840 = vand.u32 %v36, 4294901760
  %v841 = vsub.f32 %v36, %v840
  %v842 = vand.u32 %v841, 4294901760
  %843 = vmatpush1.msra.mxu0 %v842
  %844 = vmatprep.subr.mxu0 0.0
  %v845 = vand.u32 %v37, 4294901760
  %v846 = vsub.f32 %v37, %v845
  %v847 = vand.u32 %v846, 4294901760
  %848 = vmatpush1.msra.mxu0 %v847
  %849 = vmatprep.subr.mxu0 0.0
  %v850 = vand.u32 %v38, 4294901760
  %v851 = vsub.f32 %v38, %v850
  %v852 = vand.u32 %v851, 4294901760
  %853 = vmatpush1.msra.mxu0 %v852
  %854 = vmatprep.subr.mxu0 0.0
  %v855 = vand.u32 %v39, 4294901760
  %v856 = vsub.f32 %v39, %v855
  %v857 = vand.u32 %v856, 4294901760
  %858 = vmatpush1.msra.mxu0 %v857
  %859 = vmatprep.subr.mxu0 0.0
  %v860 = vand.u32 %v40, 4294901760
  %v861 = vsub.f32 %v40, %v860
  %v862 = vand.u32 %v861, 4294901760
  %863 = vmatpush1.msra.mxu0 %v862
  %864 = vmatprep.subr.mxu0 0.0
  %v865 = vand.u32 %v41, 4294901760
  %v866 = vsub.f32 %v41, %v865
  %v867 = vand.u32 %v866, 4294901760
  %868 = vmatpush1.msra.mxu0 %v867
  %869 = vmatprep.subr.mxu0 0.0
  %v870 = vand.u32 %v42, 4294901760
  %v871 = vsub.f32 %v42, %v870
  %v872 = vand.u32 %v871, 4294901760
  %873 = vmatpush1.msra.mxu0 %v872
  %874 = vmatprep.subr.mxu0 0.0
  %v875 = vand.u32 %v43, 4294901760
  %v876 = vsub.f32 %v43, %v875
  %v877 = vand.u32 %v876, 4294901760
  %878 = vmatpush1.msra.mxu0 %v877
  %879 = vmatprep.subr.mxu0 0.0
  %v880 = vand.u32 %v44, 4294901760
  %v881 = vsub.f32 %v44, %v880
  %v882 = vand.u32 %v881, 4294901760
  %883 = vmatpush1.msra.mxu0 %v882
  %884 = vmatprep.subr.mxu0 0.0
  %v885 = vand.u32 %v45, 4294901760
  %v886 = vsub.f32 %v45, %v885
  %v887 = vand.u32 %v886, 4294901760
  %888 = vmatpush1.msra.mxu0 %v887
  %889 = vmatprep.subr.mxu0 0.0
  %v890 = vand.u32 %v46, 4294901760
  %v891 = vsub.f32 %v46, %v890
  %v892 = vand.u32 %v891, 4294901760
  %893 = vmatpush1.msra.mxu0 %v892
  %894 = vmatprep.subr.mxu0 0.0
  %v895 = vand.u32 %v47, 4294901760
  %v896 = vsub.f32 %v47, %v895
  %v897 = vand.u32 %v896, 4294901760
  %898 = vmatpush1.msra.mxu0 %v897
  %899 = vmatprep.subr.mxu0 0.0
  %v900 = vand.u32 %v48, 4294901760
  %v901 = vsub.f32 %v48, %v900
  %v902 = vand.u32 %v901, 4294901760
  %903 = vmatpush1.msra.mxu0 %v902
  %904 = vmatprep.subr.mxu0 0.0
  %v905 = vand.u32 %v49, 4294901760
  %v906 = vsub.f32 %v49, %v905
  %v907 = vand.u32 %v906, 4294901760
  %908 = vmatpush1.msra.mxu0 %v907
  %909 = vmatprep.subr.mxu0 0.0
  %v910 = vand.u32 %v50, 4294901760
  %v911 = vsub.f32 %v50, %v910
  %v912 = vand.u32 %v911, 4294901760
  %913 = vmatpush1.msra.mxu0 %v912
  %914 = vmatprep.subr.mxu0 0.0
  %v915 = vand.u32 %v51, 4294901760
  %v916 = vsub.f32 %v51, %v915
  %v917 = vand.u32 %v916, 4294901760
  %918 = vmatpush1.msra.mxu0 %v917
  %919 = vmatprep.subr.mxu0 0.0
  %v920 = vand.u32 %v52, 4294901760
  %v921 = vsub.f32 %v52, %v920
  %v922 = vand.u32 %v921, 4294901760
  %923 = vmatpush1.msra.mxu0 %v922
  %924 = vmatprep.subr.mxu0 0.0
  %v925 = vand.u32 %v53, 4294901760
  %v926 = vsub.f32 %v53, %v925
  %v927 = vand.u32 %v926, 4294901760
  %928 = vmatpush1.msra.mxu0 %v927
  %929 = vmatprep.subr.mxu0 0.0
  %v930 = vand.u32 %v54, 4294901760
  %v931 = vsub.f32 %v54, %v930
  %v932 = vand.u32 %v931, 4294901760
  %933 = vmatpush1.msra.mxu0 %v932
  %934 = vmatprep.subr.mxu0 0.0
  %v935 = vand.u32 %v55, 4294901760
  %v936 = vsub.f32 %v55, %v935
  %v937 = vand.u32 %v936, 4294901760
  %938 = vmatpush1.msra.mxu0 %v937
  %939 = vmatprep.subr.mxu0 0.0
  %v940 = vand.u32 %v56, 4294901760
  %v941 = vsub.f32 %v56, %v940
  %v942 = vand.u32 %v941, 4294901760
  %943 = vmatpush1.msra.mxu0 %v942
  %944 = vmatprep.subr.mxu0 0.0
  %v945 = vand.u32 %v57, 4294901760
  %v946 = vsub.f32 %v57, %v945
  %v947 = vand.u32 %v946, 4294901760
  %948 = vmatpush1.msra.mxu0 %v947
  %949 = vmatprep.subr.mxu0 0.0
  %v950 = vand.u32 %v58, 4294901760
  %v951 = vsub.f32 %v58, %v950
  %v952 = vand.u32 %v951, 4294901760
  %953 = vmatpush1.msra.mxu0 %v952
  %954 = vmatprep.subr.mxu0 0.0
  %v955 = vand.u32 %v59, 4294901760
  %v956 = vsub.f32 %v59, %v955
  %v957 = vand.u32 %v956, 4294901760
  %958 = vmatpush1.msra.mxu0 %v957
  %959 = vmatprep.subr.mxu0 0.0
  %v960 = vand.u32 %v60, 4294901760
  %v961 = vsub.f32 %v60, %v960
  %v962 = vand.u32 %v961, 4294901760
  %963 = vmatpush1.msra.mxu0 %v962
  %964 = vmatprep.subr.mxu0 0.0
  %v965 = vand.u32 %v61, 4294901760
  %v966 = vsub.f32 %v61, %v965
  %v967 = vand.u32 %v966, 4294901760
  %968 = vmatpush1.msra.mxu0 %v967
  %969 = vmatprep.subr.mxu0 0.0
  %v970 = vand.u32 %v62, 4294901760
  %v971 = vsub.f32 %v62, %v970
  %v972 = vand.u32 %v971, 4294901760
  %973 = vmatpush1.msra.mxu0 %v972
  %974 = vmatprep.subr.mxu0 0.0
  %v975 = vand.u32 %v63, 4294901760
  %v976 = vsub.f32 %v63, %v975
  %v977 = vand.u32 %v976, 4294901760
  %978 = vmatpush1.msra.mxu0 %v977
  %v979 = vand.u32 %v194, 4294901760
  %980 = vmatprep.mubr.f32.mxu0 %v979
  %v981 = vand.u32 %v186, 4294901760
  %982 = vmatmul.mubr.f32.gmra.mrb[0].mxu0 %v981
  %v983 = vpop.f32.mrb[0].mxu0
  %v984 = vadd.f32 %v816, %v983
  %v985 = vpop.f32.mrb[0].mxu0
  %986 = vdwg.mxu0
  %987 = vmatprep.subr.mxu0 0.0
  %v988 = vand.u32 %v32, 4294901760
  %989 = vmatpush1.msra.mxu0 %v988
  %990 = vmatprep.subr.mxu0 0.0
  %v991 = vand.u32 %v33, 4294901760
  %992 = vmatpush1.msra.mxu0 %v991
  %993 = vmatprep.subr.mxu0 0.0
  %v994 = vand.u32 %v34, 4294901760
  %995 = vmatpush1.msra.mxu0 %v994
  %996 = vmatprep.subr.mxu0 0.0
  %v997 = vand.u32 %v35, 4294901760
  %998 = vmatpush1.msra.mxu0 %v997
  %999 = vmatprep.subr.mxu0 0.0
  %v1000 = vand.u32 %v36, 4294901760
  %1001 = vmatpush1.msra.mxu0 %v1000
  %1002 = vmatprep.subr.mxu0 0.0
  %v1003 = vand.u32 %v37, 4294901760
  %1004 = vmatpush1.msra.mxu0 %v1003
  %1005 = vmatprep.subr.mxu0 0.0
  %v1006 = vand.u32 %v38, 4294901760
  %1007 = vmatpush1.msra.mxu0 %v1006
  %1008 = vmatprep.subr.mxu0 0.0
  %v1009 = vand.u32 %v39, 4294901760
  %1010 = vmatpush1.msra.mxu0 %v1009
  %1011 = vmatprep.subr.mxu0 0.0
  %v1012 = vand.u32 %v40, 4294901760
  %1013 = vmatpush1.msra.mxu0 %v1012
  %1014 = vmatprep.subr.mxu0 0.0
  %v1015 = vand.u32 %v41, 4294901760
  %1016 = vmatpush1.msra.mxu0 %v1015
  %1017 = vmatprep.subr.mxu0 0.0
  %v1018 = vand.u32 %v42, 4294901760
  %1019 = vmatpush1.msra.mxu0 %v1018
  %1020 = vmatprep.subr.mxu0 0.0
  %v1021 = vand.u32 %v43, 4294901760
  %1022 = vmatpush1.msra.mxu0 %v1021
  %1023 = vmatprep.subr.mxu0 0.0
  %v1024 = vand.u32 %v44, 4294901760
  %1025 = vmatpush1.msra.mxu0 %v1024
  %1026 = vmatprep.subr.mxu0 0.0
  %v1027 = vand.u32 %v45, 4294901760
  %1028 = vmatpush1.msra.mxu0 %v1027
  %1029 = vmatprep.subr.mxu0 0.0
  %v1030 = vand.u32 %v46, 4294901760
  %1031 = vmatpush1.msra.mxu0 %v1030
  %1032 = vmatprep.subr.mxu0 0.0
  %v1033 = vand.u32 %v47, 4294901760
  %1034 = vmatpush1.msra.mxu0 %v1033
  %1035 = vmatprep.subr.mxu0 0.0
  %v1036 = vand.u32 %v48, 4294901760
  %1037 = vmatpush1.msra.mxu0 %v1036
  %1038 = vmatprep.subr.mxu0 0.0
  %v1039 = vand.u32 %v49, 4294901760
  %1040 = vmatpush1.msra.mxu0 %v1039
  %1041 = vmatprep.subr.mxu0 0.0
  %v1042 = vand.u32 %v50, 4294901760
  %1043 = vmatpush1.msra.mxu0 %v1042
  %1044 = vmatprep.subr.mxu0 0.0
  %v1045 = vand.u32 %v51, 4294901760
  %1046 = vmatpush1.msra.mxu0 %v1045
  %1047 = vmatprep.subr.mxu0 0.0
  %v1048 = vand.u32 %v52, 4294901760
  %1049 = vmatpush1.msra.mxu0 %v1048
  %1050 = vmatprep.subr.mxu0 0.0
  %v1051 = vand.u32 %v53, 4294901760
  %1052 = vmatpush1.msra.mxu0 %v1051
  %1053 = vmatprep.subr.mxu0 0.0
  %v1054 = vand.u32 %v54, 4294901760
  %1055 = vmatpush1.msra.mxu0 %v1054
  %1056 = vmatprep.subr.mxu0 0.0
  %v1057 = vand.u32 %v55, 4294901760
  %1058 = vmatpush1.msra.mxu0 %v1057
  %1059 = vmatprep.subr.mxu0 0.0
  %v1060 = vand.u32 %v56, 4294901760
  %1061 = vmatpush1.msra.mxu0 %v1060
  %1062 = vmatprep.subr.mxu0 0.0
  %v1063 = vand.u32 %v57, 4294901760
  %1064 = vmatpush1.msra.mxu0 %v1063
  %1065 = vmatprep.subr.mxu0 0.0
  %v1066 = vand.u32 %v58, 4294901760
  %1067 = vmatpush1.msra.mxu0 %v1066
  %1068 = vmatprep.subr.mxu0 0.0
  %v1069 = vand.u32 %v59, 4294901760
  %1070 = vmatpush1.msra.mxu0 %v1069
  %1071 = vmatprep.subr.mxu0 0.0
  %v1072 = vand.u32 %v60, 4294901760
  %1073 = vmatpush1.msra.mxu0 %v1072
  %1074 = vmatprep.subr.mxu0 0.0
  %v1075 = vand.u32 %v61, 4294901760
  %1076 = vmatpush1.msra.mxu0 %v1075
  %1077 = vmatprep.subr.mxu0 0.0
  %v1078 = vand.u32 %v62, 4294901760
  %1079 = vmatpush1.msra.mxu0 %v1078
  %1080 = vmatprep.subr.mxu0 0.0
  %v1081 = vand.u32 %v63, 4294901760
  %1082 = vmatpush1.msra.mxu0 %v1081
  %v1083 = vand.u32 %v194, 4294901760
  %1084 = vmatprep.mubr.f32.mxu0 %v1083
  %v1085 = vand.u32 %v186, 4294901760
  %1086 = vmatmul.mubr.f32.gmra.mrb[0].mxu0 %v1085
  %v1087 = vpop.f32.mrb[0].mxu0
  %v1088 = vadd.f32 %v984, %v1087
  %v1089 = vpop.f32.mrb[0].mxu0
  %1090 = vdwg.mxu0
  %1091 = vmatprep.subr.mxu0 0.0
  %v1092 = vand.u32 %v64, 4294901760
  %1093 = vmatpush1.msra.mxu0 %v1092
  %1094 = vmatprep.subr.mxu0 0.0
  %v1095 = vand.u32 %v65, 4294901760
  %1096 = vmatpush1.msra.mxu0 %v1095
  %1097 = vmatprep.subr.mxu0 0.0
  %v1098 = vand.u32 %v66, 4294901760
  %1099 = vmatpush1.msra.mxu0 %v1098
  %1100 = vmatprep.subr.mxu0 0.0
  %v1101 = vand.u32 %v67, 4294901760
  %1102 = vmatpush1.msra.mxu0 %v1101
  %1103 = vmatprep.subr.mxu0 0.0
  %v1104 = vand.u32 %v68, 4294901760
  %1105 = vmatpush1.msra.mxu0 %v1104
  %1106 = vmatprep.subr.mxu0 0.0
  %v1107 = vand.u32 %v69, 4294901760
  %1108 = vmatpush1.msra.mxu0 %v1107
  %1109 = vmatprep.subr.mxu0 0.0
  %v1110 = vand.u32 %v70, 4294901760
  %1111 = vmatpush1.msra.mxu0 %v1110
  %1112 = vmatprep.subr.mxu0 0.0
  %v1113 = vand.u32 %v71, 4294901760
  %1114 = vmatpush1.msra.mxu0 %v1113
  %1115 = vmatprep.subr.mxu0 0.0
  %v1116 = vand.u32 %v72, 4294901760
  %1117 = vmatpush1.msra.mxu0 %v1116
  %1118 = vmatprep.subr.mxu0 0.0
  %v1119 = vand.u32 %v73, 4294901760
  %1120 = vmatpush1.msra.mxu0 %v1119
  %1121 = vmatprep.subr.mxu0 0.0
  %v1122 = vand.u32 %v74, 4294901760
  %1123 = vmatpush1.msra.mxu0 %v1122
  %1124 = vmatprep.subr.mxu0 0.0
  %v1125 = vand.u32 %v75, 4294901760
  %1126 = vmatpush1.msra.mxu0 %v1125
  %1127 = vmatprep.subr.mxu0 0.0
  %v1128 = vand.u32 %v76, 4294901760
  %1129 = vmatpush1.msra.mxu0 %v1128
  %1130 = vmatprep.subr.mxu0 0.0
  %v1131 = vand.u32 %v77, 4294901760
  %1132 = vmatpush1.msra.mxu0 %v1131
  %1133 = vmatprep.subr.mxu0 0.0
  %v1134 = vand.u32 %v78, 4294901760
  %1135 = vmatpush1.msra.mxu0 %v1134
  %1136 = vmatprep.subr.mxu0 0.0
  %v1137 = vand.u32 %v79, 4294901760
  %1138 = vmatpush1.msra.mxu0 %v1137
  %1139 = vmatprep.subr.mxu0 0.0
  %v1140 = vand.u32 %v80, 4294901760
  %1141 = vmatpush1.msra.mxu0 %v1140
  %1142 = vmatprep.subr.mxu0 0.0
  %v1143 = vand.u32 %v81, 4294901760
  %1144 = vmatpush1.msra.mxu0 %v1143
  %1145 = vmatprep.subr.mxu0 0.0
  %v1146 = vand.u32 %v82, 4294901760
  %1147 = vmatpush1.msra.mxu0 %v1146
  %1148 = vmatprep.subr.mxu0 0.0
  %v1149 = vand.u32 %v83, 4294901760
  %1150 = vmatpush1.msra.mxu0 %v1149
  %1151 = vmatprep.subr.mxu0 0.0
  %v1152 = vand.u32 %v84, 4294901760
  %1153 = vmatpush1.msra.mxu0 %v1152
  %1154 = vmatprep.subr.mxu0 0.0
  %v1155 = vand.u32 %v85, 4294901760
  %1156 = vmatpush1.msra.mxu0 %v1155
  %1157 = vmatprep.subr.mxu0 0.0
  %v1158 = vand.u32 %v86, 4294901760
  %1159 = vmatpush1.msra.mxu0 %v1158
  %1160 = vmatprep.subr.mxu0 0.0
  %v1161 = vand.u32 %v87, 4294901760
  %1162 = vmatpush1.msra.mxu0 %v1161
  %1163 = vmatprep.subr.mxu0 0.0
  %v1164 = vand.u32 %v88, 4294901760
  %1165 = vmatpush1.msra.mxu0 %v1164
  %1166 = vmatprep.subr.mxu0 0.0
  %v1167 = vand.u32 %v89, 4294901760
  %1168 = vmatpush1.msra.mxu0 %v1167
  %1169 = vmatprep.subr.mxu0 0.0
  %v1170 = vand.u32 %v90, 4294901760
  %1171 = vmatpush1.msra.mxu0 %v1170
  %1172 = vmatprep.subr.mxu0 0.0
  %v1173 = vand.u32 %v91, 4294901760
  %1174 = vmatpush1.msra.mxu0 %v1173
  %1175 = vmatprep.subr.mxu0 0.0
  %v1176 = vand.u32 %v92, 4294901760
  %1177 = vmatpush1.msra.mxu0 %v1176
  %1178 = vmatprep.subr.mxu0 0.0
  %v1179 = vand.u32 %v93, 4294901760
  %1180 = vmatpush1.msra.mxu0 %v1179
  %1181 = vmatprep.subr.mxu0 0.0
  %v1182 = vand.u32 %v94, 4294901760
  %1183 = vmatpush1.msra.mxu0 %v1182
  %1184 = vmatprep.subr.mxu0 0.0
  %v1185 = vand.u32 %v95, 4294901760
  %1186 = vmatpush1.msra.mxu0 %v1185
  %v1187 = vand.u32 %v195, 4294901760
  %v1188 = vsub.f32 %v195, %v1187
  %v1189 = vand.u32 %v1188, 4294901760
  %v1190 = vsub.f32 %v1188, %v1189
  %v1191 = vand.u32 %v1190, 4294901760
  %1192 = vmatprep.mubr.f32.mxu0 %v1191
  %v1193 = vand.u32 %v193, 4294901760
  %v1194 = vsub.f32 %v193, %v1193
  %v1195 = vand.u32 %v1194, 4294901760
  %v1196 = vsub.f32 %v1194, %v1195
  %v1197 = vand.u32 %v1196, 4294901760
  %1198 = vmatmul.mubr.f32.gmra.mrb[0].mxu0 %v1197
  %v1199 = vpop.f32.mrb[0].mxu0
  %v1200 = vadd.f32 %v1088, %v1199
  %v1201 = vpop.f32.mrb[0].mxu0
  %1202 = vdwg.mxu0
  %1203 = vmatprep.subr.mxu0 0.0
  %v1204 = vand.u32 %v64, 4294901760
  %v1205 = vsub.f32 %v64, %v1204
  %v1206 = vand.u32 %v1205, 4294901760
  %v1207 = vsub.f32 %v1205, %v1206
  %v1208 = vand.u32 %v1207, 4294901760
  %1209 = vmatpush1.msra.mxu0 %v1208
  %1210 = vmatprep.subr.mxu0 0.0
  %v1211 = vand.u32 %v65, 4294901760
  %v1212 = vsub.f32 %v65, %v1211
  %v1213 = vand.u32 %v1212, 4294901760
  %v1214 = vsub.f32 %v1212, %v1213
  %v1215 = vand.u32 %v1214, 4294901760
  %1216 = vmatpush1.msra.mxu0 %v1215
  %1217 = vmatprep.subr.mxu0 0.0
  %v1218 = vand.u32 %v66, 4294901760
  %v1219 = vsub.f32 %v66, %v1218
  %v1220 = vand.u32 %v1219, 4294901760
  %v1221 = vsub.f32 %v1219, %v1220
  %v1222 = vand.u32 %v1221, 4294901760
  %1223 = vmatpush1.msra.mxu0 %v1222
  %1224 = vmatprep.subr.mxu0 0.0
  %v1225 = vand.u32 %v67, 4294901760
  %v1226 = vsub.f32 %v67, %v1225
  %v1227 = vand.u32 %v1226, 4294901760
  %v1228 = vsub.f32 %v1226, %v1227
  %v1229 = vand.u32 %v1228, 4294901760
  %1230 = vmatpush1.msra.mxu0 %v1229
  %1231 = vmatprep.subr.mxu0 0.0
  %v1232 = vand.u32 %v68, 4294901760
  %v1233 = vsub.f32 %v68, %v1232
  %v1234 = vand.u32 %v1233, 4294901760
  %v1235 = vsub.f32 %v1233, %v1234
  %v1236 = vand.u32 %v1235, 4294901760
  %1237 = vmatpush1.msra.mxu0 %v1236
  %1238 = vmatprep.subr.mxu0 0.0
  %v1239 = vand.u32 %v69, 4294901760
  %v1240 = vsub.f32 %v69, %v1239
  %v1241 = vand.u32 %v1240, 4294901760
  %v1242 = vsub.f32 %v1240, %v1241
  %v1243 = vand.u32 %v1242, 4294901760
  %1244 = vmatpush1.msra.mxu0 %v1243
  %1245 = vmatprep.subr.mxu0 0.0
  %v1246 = vand.u32 %v70, 4294901760
  %v1247 = vsub.f32 %v70, %v1246
  %v1248 = vand.u32 %v1247, 4294901760
  %v1249 = vsub.f32 %v1247, %v1248
  %v1250 = vand.u32 %v1249, 4294901760
  %1251 = vmatpush1.msra.mxu0 %v1250
  %1252 = vmatprep.subr.mxu0 0.0
  %v1253 = vand.u32 %v71, 4294901760
  %v1254 = vsub.f32 %v71, %v1253
  %v1255 = vand.u32 %v1254, 4294901760
  %v1256 = vsub.f32 %v1254, %v1255
  %v1257 = vand.u32 %v1256, 4294901760
  %1258 = vmatpush1.msra.mxu0 %v1257
  %1259 = vmatprep.subr.mxu0 0.0
  %v1260 = vand.u32 %v72, 4294901760
  %v1261 = vsub.f32 %v72, %v1260
  %v1262 = vand.u32 %v1261, 4294901760
  %v1263 = vsub.f32 %v1261, %v1262
  %v1264 = vand.u32 %v1263, 4294901760
  %1265 = vmatpush1.msra.mxu0 %v1264
  %1266 = vmatprep.subr.mxu0 0.0
  %v1267 = vand.u32 %v73, 4294901760
  %v1268 = vsub.f32 %v73, %v1267
  %v1269 = vand.u32 %v1268, 4294901760
  %v1270 = vsub.f32 %v1268, %v1269
  %v1271 = vand.u32 %v1270, 4294901760
  %1272 = vmatpush1.msra.mxu0 %v1271
  %1273 = vmatprep.subr.mxu0 0.0
  %v1274 = vand.u32 %v74, 4294901760
  %v1275 = vsub.f32 %v74, %v1274
  %v1276 = vand.u32 %v1275, 4294901760
  %v1277 = vsub.f32 %v1275, %v1276
  %v1278 = vand.u32 %v1277, 4294901760
  %1279 = vmatpush1.msra.mxu0 %v1278
  %1280 = vmatprep.subr.mxu0 0.0
  %v1281 = vand.u32 %v75, 4294901760
  %v1282 = vsub.f32 %v75, %v1281
  %v1283 = vand.u32 %v1282, 4294901760
  %v1284 = vsub.f32 %v1282, %v1283
  %v1285 = vand.u32 %v1284, 4294901760
  %1286 = vmatpush1.msra.mxu0 %v1285
  %1287 = vmatprep.subr.mxu0 0.0
  %v1288 = vand.u32 %v76, 4294901760
  %v1289 = vsub.f32 %v76, %v1288
  %v1290 = vand.u32 %v1289, 4294901760
  %v1291 = vsub.f32 %v1289, %v1290
  %v1292 = vand.u32 %v1291, 4294901760
  %1293 = vmatpush1.msra.mxu0 %v1292
  %1294 = vmatprep.subr.mxu0 0.0
  %v1295 = vand.u32 %v77, 4294901760
  %v1296 = vsub.f32 %v77, %v1295
  %v1297 = vand.u32 %v1296, 4294901760
  %v1298 = vsub.f32 %v1296, %v1297
  %v1299 = vand.u32 %v1298, 4294901760
  %1300 = vmatpush1.msra.mxu0 %v1299
  %1301 = vmatprep.subr.mxu0 0.0
  %v1302 = vand.u32 %v78, 4294901760
  %v1303 = vsub.f32 %v78, %v1302
  %v1304 = vand.u32 %v1303, 4294901760
  %v1305 = vsub.f32 %v1303, %v1304
  %v1306 = vand.u32 %v1305, 4294901760
  %1307 = vmatpush1.msra.mxu0 %v1306
  %1308 = vmatprep.subr.mxu0 0.0
  %v1309 = vand.u32 %v79, 4294901760
  %v1310 = vsub.f32 %v79, %v1309
  %v1311 = vand.u32 %v1310, 4294901760
  %v1312 = vsub.f32 %v1310, %v1311
  %v1313 = vand.u32 %v1312, 4294901760
  %1314 = vmatpush1.msra.mxu0 %v1313
  %1315 = vmatprep.subr.mxu0 0.0
  %v1316 = vand.u32 %v80, 4294901760
  %v1317 = vsub.f32 %v80, %v1316
  %v1318 = vand.u32 %v1317, 4294901760
  %v1319 = vsub.f32 %v1317, %v1318
  %v1320 = vand.u32 %v1319, 4294901760
  %1321 = vmatpush1.msra.mxu0 %v1320
  %1322 = vmatprep.subr.mxu0 0.0
  %v1323 = vand.u32 %v81, 4294901760
  %v1324 = vsub.f32 %v81, %v1323
  %v1325 = vand.u32 %v1324, 4294901760
  %v1326 = vsub.f32 %v1324, %v1325
  %v1327 = vand.u32 %v1326, 4294901760
  %1328 = vmatpush1.msra.mxu0 %v1327
  %1329 = vmatprep.subr.mxu0 0.0
  %v1330 = vand.u32 %v82, 4294901760
  %v1331 = vsub.f32 %v82, %v1330
  %v1332 = vand.u32 %v1331, 4294901760
  %v1333 = vsub.f32 %v1331, %v1332
  %v1334 = vand.u32 %v1333, 4294901760
  %1335 = vmatpush1.msra.mxu0 %v1334
  %1336 = vmatprep.subr.mxu0 0.0
  %v1337 = vand.u32 %v83, 4294901760
  %v1338 = vsub.f32 %v83, %v1337
  %v1339 = vand.u32 %v1338, 4294901760
  %v1340 = vsub.f32 %v1338, %v1339
  %v1341 = vand.u32 %v1340, 4294901760
  %1342 = vmatpush1.msra.mxu0 %v1341
  %1343 = vmatprep.subr.mxu0 0.0
  %v1344 = vand.u32 %v84, 4294901760
  %v1345 = vsub.f32 %v84, %v1344
  %v1346 = vand.u32 %v1345, 4294901760
  %v1347 = vsub.f32 %v1345, %v1346
  %v1348 = vand.u32 %v1347, 4294901760
  %1349 = vmatpush1.msra.mxu0 %v1348
  %1350 = vmatprep.subr.mxu0 0.0
  %v1351 = vand.u32 %v85, 4294901760
  %v1352 = vsub.f32 %v85, %v1351
  %v1353 = vand.u32 %v1352, 4294901760
  %v1354 = vsub.f32 %v1352, %v1353
  %v1355 = vand.u32 %v1354, 4294901760
  %1356 = vmatpush1.msra.mxu0 %v1355
  %1357 = vmatprep.subr.mxu0 0.0
  %v1358 = vand.u32 %v86, 4294901760
  %v1359 = vsub.f32 %v86, %v1358
  %v1360 = vand.u32 %v1359, 4294901760
  %v1361 = vsub.f32 %v1359, %v1360
  %v1362 = vand.u32 %v1361, 4294901760
  %1363 = vmatpush1.msra.mxu0 %v1362
  %1364 = vmatprep.subr.mxu0 0.0
  %v1365 = vand.u32 %v87, 4294901760
  %v1366 = vsub.f32 %v87, %v1365
  %v1367 = vand.u32 %v1366, 4294901760
  %v1368 = vsub.f32 %v1366, %v1367
  %v1369 = vand.u32 %v1368, 4294901760
  %1370 = vmatpush1.msra.mxu0 %v1369
  %1371 = vmatprep.subr.mxu0 0.0
  %v1372 = vand.u32 %v88, 4294901760
  %v1373 = vsub.f32 %v88, %v1372
  %v1374 = vand.u32 %v1373, 4294901760
  %v1375 = vsub.f32 %v1373, %v1374
  %v1376 = vand.u32 %v1375, 4294901760
  %1377 = vmatpush1.msra.mxu0 %v1376
  %1378 = vmatprep.subr.mxu0 0.0
  %v1379 = vand.u32 %v89, 4294901760
  %v1380 = vsub.f32 %v89, %v1379
  %v1381 = vand.u32 %v1380, 4294901760
  %v1382 = vsub.f32 %v1380, %v1381
  %v1383 = vand.u32 %v1382, 4294901760
  %1384 = vmatpush1.msra.mxu0 %v1383
  %1385 = vmatprep.subr.mxu0 0.0
  %v1386 = vand.u32 %v90, 4294901760
  %v1387 = vsub.f32 %v90, %v1386
  %v1388 = vand.u32 %v1387, 4294901760
  %v1389 = vsub.f32 %v1387, %v1388
  %v1390 = vand.u32 %v1389, 4294901760
  %1391 = vmatpush1.msra.mxu0 %v1390
  %1392 = vmatprep.subr.mxu0 0.0
  %v1393 = vand.u32 %v91, 4294901760
  %v1394 = vsub.f32 %v91, %v1393
  %v1395 = vand.u32 %v1394, 4294901760
  %v1396 = vsub.f32 %v1394, %v1395
  %v1397 = vand.u32 %v1396, 4294901760
  %1398 = vmatpush1.msra.mxu0 %v1397
  %1399 = vmatprep.subr.mxu0 0.0
  %v1400 = vand.u32 %v92, 4294901760
  %v1401 = vsub.f32 %v92, %v1400
  %v1402 = vand.u32 %v1401, 4294901760
  %v1403 = vsub.f32 %v1401, %v1402
  %v1404 = vand.u32 %v1403, 4294901760
  %1405 = vmatpush1.msra.mxu0 %v1404
  %1406 = vmatprep.subr.mxu0 0.0
  %v1407 = vand.u32 %v93, 4294901760
  %v1408 = vsub.f32 %v93, %v1407
  %v1409 = vand.u32 %v1408, 4294901760
  %v1410 = vsub.f32 %v1408, %v1409
  %v1411 = vand.u32 %v1410, 4294901760
  %1412 = vmatpush1.msra.mxu0 %v1411
  %1413 = vmatprep.subr.mxu0 0.0
  %v1414 = vand.u32 %v94, 4294901760
  %v1415 = vsub.f32 %v94, %v1414
  %v1416 = vand.u32 %v1415, 4294901760
  %v1417 = vsub.f32 %v1415, %v1416
  %v1418 = vand.u32 %v1417, 4294901760
  %1419 = vmatpush1.msra.mxu0 %v1418
  %1420 = vmatprep.subr.mxu0 0.0
  %v1421 = vand.u32 %v95, 4294901760
  %v1422 = vsub.f32 %v95, %v1421
  %v1423 = vand.u32 %v1422, 4294901760
  %v1424 = vsub.f32 %v1422, %v1423
  %v1425 = vand.u32 %v1424, 4294901760
  %1426 = vmatpush1.msra.mxu0 %v1425
  %v1427 = vand.u32 %v195, 4294901760
  %1428 = vmatprep.mubr.f32.mxu0 %v1427
  %v1429 = vand.u32 %v193, 4294901760
  %1430 = vmatmul.mubr.f32.gmra.mrb[0].mxu0 %v1429
  %v1431 = vpop.f32.mrb[0].mxu0
  %v1432 = vadd.f32 %v1200, %v1431
  %v1433 = vpop.f32.mrb[0].mxu0
  %1434 = vdwg.mxu0
  %1435 = vmatprep.subr.mxu0 0.0
  %v1436 = vand.u32 %v64, 4294901760
  %v1437 = vsub.f32 %v64, %v1436
  %1438 = vmatpush1.msra.mxu0 %v1437
  %1439 = vmatprep.subr.mxu0 0.0
  %v1440 = vand.u32 %v65, 4294901760
  %v1441 = vsub.f32 %v65, %v1440
  %1442 = vmatpush1.msra.mxu0 %v1441
  %1443 = vmatprep.subr.mxu0 0.0
  %v1444 = vand.u32 %v66, 4294901760
  %v1445 = vsub.f32 %v66, %v1444
  %1446 = vmatpush1.msra.mxu0 %v1445
  %1447 = vmatprep.subr.mxu0 0.0
  %v1448 = vand.u32 %v67, 4294901760
  %v1449 = vsub.f32 %v67, %v1448
  %1450 = vmatpush1.msra.mxu0 %v1449
  %1451 = vmatprep.subr.mxu0 0.0
  %v1452 = vand.u32 %v68, 4294901760
  %v1453 = vsub.f32 %v68, %v1452
  %1454 = vmatpush1.msra.mxu0 %v1453
  %1455 = vmatprep.subr.mxu0 0.0
  %v1456 = vand.u32 %v69, 4294901760
  %v1457 = vsub.f32 %v69, %v1456
  %1458 = vmatpush1.msra.mxu0 %v1457
  %1459 = vmatprep.subr.mxu0 0.0
  %v1460 = vand.u32 %v70, 4294901760
  %v1461 = vsub.f32 %v70, %v1460
  %1462 = vmatpush1.msra.mxu0 %v1461
  %1463 = vmatprep.subr.mxu0 0.0
  %v1464 = vand.u32 %v71, 4294901760
  %v1465 = vsub.f32 %v71, %v1464
  %1466 = vmatpush1.msra.mxu0 %v1465
  %1467 = vmatprep.subr.mxu0 0.0
  %v1468 = vand.u32 %v72, 4294901760
  %v1469 = vsub.f32 %v72, %v1468
  %1470 = vmatpush1.msra.mxu0 %v1469
  %1471 = vmatprep.subr.mxu0 0.0
  %v1472 = vand.u32 %v73, 4294901760
  %v1473 = vsub.f32 %v73, %v1472
  %1474 = vmatpush1.msra.mxu0 %v1473
  %1475 = vmatprep.subr.mxu0 0.0
  %v1476 = vand.u32 %v74, 4294901760
  %v1477 = vsub.f32 %v74, %v1476
  %1478 = vmatpush1.msra.mxu0 %v1477
  %1479 = vmatprep.subr.mxu0 0.0
  %v1480 = vand.u32 %v75, 4294901760
  %v1481 = vsub.f32 %v75, %v1480
  %1482 = vmatpush1.msra.mxu0 %v1481
  %1483 = vmatprep.subr.mxu0 0.0
  %v1484 = vand.u32 %v76, 4294901760
  %v1485 = vsub.f32 %v76, %v1484
  %1486 = vmatpush1.msra.mxu0 %v1485
  %1487 = vmatprep.subr.mxu0 0.0
  %v1488 = vand.u32 %v77, 4294901760
  %v1489 = vsub.f32 %v77, %v1488
  %1490 = vmatpush1.msra.mxu0 %v1489
  %1491 = vmatprep.subr.mxu0 0.0
  %v1492 = vand.u32 %v78, 4294901760
  %v1493 = vsub.f32 %v78, %v1492
  %1494 = vmatpush1.msra.mxu0 %v1493
  %1495 = vmatprep.subr.mxu0 0.0
  %v1496 = vand.u32 %v79, 4294901760
  %v1497 = vsub.f32 %v79, %v1496
  %1498 = vmatpush1.msra.mxu0 %v1497
  %1499 = vmatprep.subr.mxu0 0.0
  %v1500 = vand.u32 %v80, 4294901760
  %v1501 = vsub.f32 %v80, %v1500
  %1502 = vmatpush1.msra.mxu0 %v1501
  %1503 = vmatprep.subr.mxu0 0.0
  %v1504 = vand.u32 %v81, 4294901760
  %v1505 = vsub.f32 %v81, %v1504
  %1506 = vmatpush1.msra.mxu0 %v1505
  %1507 = vmatprep.subr.mxu0 0.0
  %v1508 = vand.u32 %v82, 4294901760
  %v1509 = vsub.f32 %v82, %v1508
  %1510 = vmatpush1.msra.mxu0 %v1509
  %1511 = vmatprep.subr.mxu0 0.0
  %v1512 = vand.u32 %v83, 4294901760
  %v1513 = vsub.f32 %v83, %v1512
  %1514 = vmatpush1.msra.mxu0 %v1513
  %1515 = vmatprep.subr.mxu0 0.0
  %v1516 = vand.u32 %v84, 4294901760
  %v1517 = vsub.f32 %v84, %v1516
  %1518 = vmatpush1.msra.mxu0 %v1517
  %1519 = vmatprep.subr.mxu0 0.0
  %v1520 = vand.u32 %v85, 4294901760
  %v1521 = vsub.f32 %v85, %v1520
  %1522 = vmatpush1.msra.mxu0 %v1521
  %1523 = vmatprep.subr.mxu0 0.0
  %v1524 = vand.u32 %v86, 4294901760
  %v1525 = vsub.f32 %v86, %v1524
  %1526 = vmatpush1.msra.mxu0 %v1525
  %1527 = vmatprep.subr.mxu0 0.0
  %v1528 = vand.u32 %v87, 4294901760
  %v1529 = vsub.f32 %v87, %v1528
  %1530 = vmatpush1.msra.mxu0 %v1529
  %1531 = vmatprep.subr.mxu0 0.0
  %v1532 = vand.u32 %v88, 4294901760
  %v1533 = vsub.f32 %v88, %v1532
  %1534 = vmatpush1.msra.mxu0 %v1533
  %1535 = vmatprep.subr.mxu0 0.0
  %v1536 = vand.u32 %v89, 4294901760
  %v1537 = vsub.f32 %v89, %v1536
  %1538 = vmatpush1.msra.mxu0 %v1537
  %1539 = vmatprep.subr.mxu0 0.0
  %v1540 = vand.u32 %v90, 4294901760
  %v1541 = vsub.f32 %v90, %v1540
  %1542 = vmatpush1.msra.mxu0 %v1541
  %1543 = vmatprep.subr.mxu0 0.0
  %v1544 = vand.u32 %v91, 4294901760
  %v1545 = vsub.f32 %v91, %v1544
  %1546 = vmatpush1.msra.mxu0 %v1545
  %1547 = vmatprep.subr.mxu0 0.0
  %v1548 = vand.u32 %v92, 4294901760
  %v1549 = vsub.f32 %v92, %v1548
  %1550 = vmatpush1.msra.mxu0 %v1549
  %1551 = vmatprep.subr.mxu0 0.0
  %v1552 = vand.u32 %v93, 4294901760
  %v1553 = vsub.f32 %v93, %v1552
  %1554 = vmatpush1.msra.mxu0 %v1553
  %1555 = vmatprep.subr.mxu0 0.0
  %v1556 = vand.u32 %v94, 4294901760
  %v1557 = vsub.f32 %v94, %v1556
  %1558 = vmatpush1.msra.mxu0 %v1557
  %1559 = vmatprep.subr.mxu0 0.0
  %v1560 = vand.u32 %v95, 4294901760
  %v1561 = vsub.f32 %v95, %v1560
  %1562 = vmatpush1.msra.mxu0 %v1561
  %v1563 = vand.u32 %v195, 4294901760
  %v1564 = vsub.f32 %v195, %v1563
  %1565 = vmatprep.mubr.f32.mxu0 %v1564
  %v1566 = vand.u32 %v193, 4294901760
  %v1567 = vsub.f32 %v193, %v1566
  %1568 = vmatmul.mubr.f32.gmra.mrb[0].mxu0 %v1567
  %v1569 = vpop.f32.mrb[0].mxu0
  %v1570 = vadd.f32 %v1432, %v1569
  %v1571 = vpop.f32.mrb[0].mxu0
  %1572 = vdwg.mxu0
  %1573 = vmatprep.subr.mxu0 0.0
  %v1574 = vand.u32 %v64, 4294901760
  %1575 = vmatpush1.msra.mxu0 %v1574
  %1576 = vmatprep.subr.mxu0 0.0
  %v1577 = vand.u32 %v65, 4294901760
  %1578 = vmatpush1.msra.mxu0 %v1577
  %1579 = vmatprep.subr.mxu0 0.0
  %v1580 = vand.u32 %v66, 4294901760
  %1581 = vmatpush1.msra.mxu0 %v1580
  %1582 = vmatprep.subr.mxu0 0.0
  %v1583 = vand.u32 %v67, 4294901760
  %1584 = vmatpush1.msra.mxu0 %v1583
  %1585 = vmatprep.subr.mxu0 0.0
  %v1586 = vand.u32 %v68, 4294901760
  %1587 = vmatpush1.msra.mxu0 %v1586
  %1588 = vmatprep.subr.mxu0 0.0
  %v1589 = vand.u32 %v69, 4294901760
  %1590 = vmatpush1.msra.mxu0 %v1589
  %1591 = vmatprep.subr.mxu0 0.0
  %v1592 = vand.u32 %v70, 4294901760
  %1593 = vmatpush1.msra.mxu0 %v1592
  %1594 = vmatprep.subr.mxu0 0.0
  %v1595 = vand.u32 %v71, 4294901760
  %1596 = vmatpush1.msra.mxu0 %v1595
  %1597 = vmatprep.subr.mxu0 0.0
  %v1598 = vand.u32 %v72, 4294901760
  %1599 = vmatpush1.msra.mxu0 %v1598
  %1600 = vmatprep.subr.mxu0 0.0
  %v1601 = vand.u32 %v73, 4294901760
  %1602 = vmatpush1.msra.mxu0 %v1601
  %1603 = vmatprep.subr.mxu0 0.0
  %v1604 = vand.u32 %v74, 4294901760
  %1605 = vmatpush1.msra.mxu0 %v1604
  %1606 = vmatprep.subr.mxu0 0.0
  %v1607 = vand.u32 %v75, 4294901760
  %1608 = vmatpush1.msra.mxu0 %v1607
  %1609 = vmatprep.subr.mxu0 0.0
  %v1610 = vand.u32 %v76, 4294901760
  %1611 = vmatpush1.msra.mxu0 %v1610
  %1612 = vmatprep.subr.mxu0 0.0
  %v1613 = vand.u32 %v77, 4294901760
  %1614 = vmatpush1.msra.mxu0 %v1613
  %1615 = vmatprep.subr.mxu0 0.0
  %v1616 = vand.u32 %v78, 4294901760
  %1617 = vmatpush1.msra.mxu0 %v1616
  %1618 = vmatprep.subr.mxu0 0.0
  %v1619 = vand.u32 %v79, 4294901760
  %1620 = vmatpush1.msra.mxu0 %v1619
  %1621 = vmatprep.subr.mxu0 0.0
  %v1622 = vand.u32 %v80, 4294901760
  %1623 = vmatpush1.msra.mxu0 %v1622
  %1624 = vmatprep.subr.mxu0 0.0
  %v1625 = vand.u32 %v81, 4294901760
  %1626 = vmatpush1.msra.mxu0 %v1625
  %1627 = vmatprep.subr.mxu0 0.0
  %v1628 = vand.u32 %v82, 4294901760
  %1629 = vmatpush1.msra.mxu0 %v1628
  %1630 = vmatprep.subr.mxu0 0.0
  %v1631 = vand.u32 %v83, 4294901760
  %1632 = vmatpush1.msra.mxu0 %v1631
  %1633 = vmatprep.subr.mxu0 0.0
  %v1634 = vand.u32 %v84, 4294901760
  %1635 = vmatpush1.msra.mxu0 %v1634
  %1636 = vmatprep.subr.mxu0 0.0
  %v1637 = vand.u32 %v85, 4294901760
  %1638 = vmatpush1.msra.mxu0 %v1637
  %1639 = vmatprep.subr.mxu0 0.0
  %v1640 = vand.u32 %v86, 4294901760
  %1641 = vmatpush1.msra.mxu0 %v1640
  %1642 = vmatprep.subr.mxu0 0.0
  %v1643 = vand.u32 %v87, 4294901760
  %1644 = vmatpush1.msra.mxu0 %v1643
  %1645 = vmatprep.subr.mxu0 0.0
  %v1646 = vand.u32 %v88, 4294901760
  %1647 = vmatpush1.msra.mxu0 %v1646
  %1648 = vmatprep.subr.mxu0 0.0
  %v1649 = vand.u32 %v89, 4294901760
  %1650 = vmatpush1.msra.mxu0 %v1649
  %1651 = vmatprep.subr.mxu0 0.0
  %v1652 = vand.u32 %v90, 4294901760
  %1653 = vmatpush1.msra.mxu0 %v1652
  %1654 = vmatprep.subr.mxu0 0.0
  %v1655 = vand.u32 %v91, 4294901760
  %1656 = vmatpush1.msra.mxu0 %v1655
  %1657 = vmatprep.subr.mxu0 0.0
  %v1658 = vand.u32 %v92, 4294901760
  %1659 = vmatpush1.msra.mxu0 %v1658
  %1660 = vmatprep.subr.mxu0 0.0
  %v1661 = vand.u32 %v93, 4294901760
  %1662 = vmatpush1.msra.mxu0 %v1661
  %1663 = vmatprep.subr.mxu0 0.0
  %v1664 = vand.u32 %v94, 4294901760
  %1665 = vmatpush1.msra.mxu0 %v1664
  %1666 = vmatprep.subr.mxu0 0.0
  %v1667 = vand.u32 %v95, 4294901760
  %1668 = vmatpush1.msra.mxu0 %v1667
  %v1669 = vand.u32 %v195, 4294901760
  %v1670 = vsub.f32 %v195, %v1669
  %v1671 = vand.u32 %v1670, 4294901760
  %1672 = vmatprep.mubr.f32.mxu0 %v1671
  %v1673 = vand.u32 %v193, 4294901760
  %v1674 = vsub.f32 %v193, %v1673
  %v1675 = vand.u32 %v1674, 4294901760
  %1676 = vmatmul.mubr.f32.gmra.mrb[0].mxu0 %v1675
  %v1677 = vpop.f32.mrb[0].mxu0
  %v1678 = vadd.f32 %v1570, %v1677
  %v1679 = vpop.f32.mrb[0].mxu0
  %1680 = vdwg.mxu0
  %1681 = vmatprep.subr.mxu0 0.0
  %v1682 = vand.u32 %v64, 4294901760
  %v1683 = vsub.f32 %v64, %v1682
  %v1684 = vand.u32 %v1683, 4294901760
  %1685 = vmatpush1.msra.mxu0 %v1684
  %1686 = vmatprep.subr.mxu0 0.0
  %v1687 = vand.u32 %v65, 4294901760
  %v1688 = vsub.f32 %v65, %v1687
  %v1689 = vand.u32 %v1688, 4294901760
  %1690 = vmatpush1.msra.mxu0 %v1689
  %1691 = vmatprep.subr.mxu0 0.0
  %v1692 = vand.u32 %v66, 4294901760
  %v1693 = vsub.f32 %v66, %v1692
  %v1694 = vand.u32 %v1693, 4294901760
  %1695 = vmatpush1.msra.mxu0 %v1694
  %1696 = vmatprep.subr.mxu0 0.0
  %v1697 = vand.u32 %v67, 4294901760
  %v1698 = vsub.f32 %v67, %v1697
  %v1699 = vand.u32 %v1698, 4294901760
  %1700 = vmatpush1.msra.mxu0 %v1699
  %1701 = vmatprep.subr.mxu0 0.0
  %v1702 = vand.u32 %v68, 4294901760
  %v1703 = vsub.f32 %v68, %v1702
  %v1704 = vand.u32 %v1703, 4294901760
  %1705 = vmatpush1.msra.mxu0 %v1704
  %1706 = vmatprep.subr.mxu0 0.0
  %v1707 = vand.u32 %v69, 4294901760
  %v1708 = vsub.f32 %v69, %v1707
  %v1709 = vand.u32 %v1708, 4294901760
  %1710 = vmatpush1.msra.mxu0 %v1709
  %1711 = vmatprep.subr.mxu0 0.0
  %v1712 = vand.u32 %v70, 4294901760
  %v1713 = vsub.f32 %v70, %v1712
  %v1714 = vand.u32 %v1713, 4294901760
  %1715 = vmatpush1.msra.mxu0 %v1714
  %1716 = vmatprep.subr.mxu0 0.0
  %v1717 = vand.u32 %v71, 4294901760
  %v1718 = vsub.f32 %v71, %v1717
  %v1719 = vand.u32 %v1718, 4294901760
  %1720 = vmatpush1.msra.mxu0 %v1719
  %1721 = vmatprep.subr.mxu0 0.0
  %v1722 = vand.u32 %v72, 4294901760
  %v1723 = vsub.f32 %v72, %v1722
  %v1724 = vand.u32 %v1723, 4294901760
  %1725 = vmatpush1.msra.mxu0 %v1724
  %1726 = vmatprep.subr.mxu0 0.0
  %v1727 = vand.u32 %v73, 4294901760
  %v1728 = vsub.f32 %v73, %v1727
  %v1729 = vand.u32 %v1728, 4294901760
  %1730 = vmatpush1.msra.mxu0 %v1729
  %1731 = vmatprep.subr.mxu0 0.0
  %v1732 = vand.u32 %v74, 4294901760
  %v1733 = vsub.f32 %v74, %v1732
  %v1734 = vand.u32 %v1733, 4294901760
  %1735 = vmatpush1.msra.mxu0 %v1734
  %1736 = vmatprep.subr.mxu0 0.0
  %v1737 = vand.u32 %v75, 4294901760
  %v1738 = vsub.f32 %v75, %v1737
  %v1739 = vand.u32 %v1738, 4294901760
  %1740 = vmatpush1.msra.mxu0 %v1739
  %1741 = vmatprep.subr.mxu0 0.0
  %v1742 = vand.u32 %v76, 4294901760
  %v1743 = vsub.f32 %v76, %v1742
  %v1744 = vand.u32 %v1743, 4294901760
  %1745 = vmatpush1.msra.mxu0 %v1744
  %1746 = vmatprep.subr.mxu0 0.0
  %v1747 = vand.u32 %v77, 4294901760
  %v1748 = vsub.f32 %v77, %v1747
  %v1749 = vand.u32 %v1748, 4294901760
  %1750 = vmatpush1.msra.mxu0 %v1749
  %1751 = vmatprep.subr.mxu0 0.0
  %v1752 = vand.u32 %v78, 4294901760
  %v1753 = vsub.f32 %v78, %v1752
  %v1754 = vand.u32 %v1753, 4294901760
  %1755 = vmatpush1.msra.mxu0 %v1754
  %1756 = vmatprep.subr.mxu0 0.0
  %v1757 = vand.u32 %v79, 4294901760
  %v1758 = vsub.f32 %v79, %v1757
  %v1759 = vand.u32 %v1758, 4294901760
  %1760 = vmatpush1.msra.mxu0 %v1759
  %1761 = vmatprep.subr.mxu0 0.0
  %v1762 = vand.u32 %v80, 4294901760
  %v1763 = vsub.f32 %v80, %v1762
  %v1764 = vand.u32 %v1763, 4294901760
  %1765 = vmatpush1.msra.mxu0 %v1764
  %1766 = vmatprep.subr.mxu0 0.0
  %v1767 = vand.u32 %v81, 4294901760
  %v1768 = vsub.f32 %v81, %v1767
  %v1769 = vand.u32 %v1768, 4294901760
  %1770 = vmatpush1.msra.mxu0 %v1769
  %1771 = vmatprep.subr.mxu0 0.0
  %v1772 = vand.u32 %v82, 4294901760
  %v1773 = vsub.f32 %v82, %v1772
  %v1774 = vand.u32 %v1773, 4294901760
  %1775 = vmatpush1.msra.mxu0 %v1774
  %1776 = vmatprep.subr.mxu0 0.0
  %v1777 = vand.u32 %v83, 4294901760
  %v1778 = vsub.f32 %v83, %v1777
  %v1779 = vand.u32 %v1778, 4294901760
  %1780 = vmatpush1.msra.mxu0 %v1779
  %1781 = vmatprep.subr.mxu0 0.0
  %v1782 = vand.u32 %v84, 4294901760
  %v1783 = vsub.f32 %v84, %v1782
  %v1784 = vand.u32 %v1783, 4294901760
  %1785 = vmatpush1.msra.mxu0 %v1784
  %1786 = vmatprep.subr.mxu0 0.0
  %v1787 = vand.u32 %v85, 4294901760
  %v1788 = vsub.f32 %v85, %v1787
  %v1789 = vand.u32 %v1788, 4294901760
  %1790 = vmatpush1.msra.mxu0 %v1789
  %1791 = vmatprep.subr.mxu0 0.0
  %v1792 = vand.u32 %v86, 4294901760
  %v1793 = vsub.f32 %v86, %v1792
  %v1794 = vand.u32 %v1793, 4294901760
  %1795 = vmatpush1.msra.mxu0 %v1794
  %1796 = vmatprep.subr.mxu0 0.0
  %v1797 = vand.u32 %v87, 4294901760
  %v1798 = vsub.f32 %v87, %v1797
  %v1799 = vand.u32 %v1798, 4294901760
  %1800 = vmatpush1.msra.mxu0 %v1799
  %1801 = vmatprep.subr.mxu0 0.0
  %v1802 = vand.u32 %v88, 4294901760
  %v1803 = vsub.f32 %v88, %v1802
  %v1804 = vand.u32 %v1803, 4294901760
  %1805 = vmatpush1.msra.mxu0 %v1804
  %1806 = vmatprep.subr.mxu0 0.0
  %v1807 = vand.u32 %v89, 4294901760
  %v1808 = vsub.f32 %v89, %v1807
  %v1809 = vand.u32 %v1808, 4294901760
  %1810 = vmatpush1.msra.mxu0 %v1809
  %1811 = vmatprep.subr.mxu0 0.0
  %v1812 = vand.u32 %v90, 4294901760
  %v1813 = vsub.f32 %v90, %v1812
  %v1814 = vand.u32 %v1813, 4294901760
  %1815 = vmatpush1.msra.mxu0 %v1814
  %1816 = vmatprep.subr.mxu0 0.0
  %v1817 = vand.u32 %v91, 4294901760
  %v1818 = vsub.f32 %v91, %v1817
  %v1819 = vand.u32 %v1818, 4294901760
  %1820 = vmatpush1.msra.mxu0 %v1819
  %1821 = vmatprep.subr.mxu0 0.0
  %v1822 = vand.u32 %v92, 4294901760
  %v1823 = vsub.f32 %v92, %v1822
  %v1824 = vand.u32 %v1823, 4294901760
  %1825 = vmatpush1.msra.mxu0 %v1824
  %1826 = vmatprep.subr.mxu0 0.0
  %v1827 = vand.u32 %v93, 4294901760
  %v1828 = vsub.f32 %v93, %v1827
  %v1829 = vand.u32 %v1828, 4294901760
  %1830 = vmatpush1.msra.mxu0 %v1829
  %1831 = vmatprep.subr.mxu0 0.0
  %v1832 = vand.u32 %v94, 4294901760
  %v1833 = vsub.f32 %v94, %v1832
  %v1834 = vand.u32 %v1833, 4294901760
  %1835 = vmatpush1.msra.mxu0 %v1834
  %1836 = vmatprep.subr.mxu0 0.0
  %v1837 = vand.u32 %v95, 4294901760
  %v1838 = vsub.f32 %v95, %v1837
  %v1839 = vand.u32 %v1838, 4294901760
  %1840 = vmatpush1.msra.mxu0 %v1839
  %v1841 = vand.u32 %v195, 4294901760
  %1842 = vmatprep.mubr.f32.mxu0 %v1841
  %v1843 = vand.u32 %v193, 4294901760
  %1844 = vmatmul.mubr.f32.gmra.mrb[0].mxu0 %v1843
  %v1845 = vpop.f32.mrb[0].mxu0
  %v1846 = vadd.f32 %v1678, %v1845
  %v1847 = vpop.f32.mrb[0].mxu0
  %1848 = vdwg.mxu0
  %1849 = vmatprep.subr.mxu0 0.0
  %v1850 = vand.u32 %v64, 4294901760
  %1851 = vmatpush1.msra.mxu0 %v1850
  %1852 = vmatprep.subr.mxu0 0.0
  %v1853 = vand.u32 %v65, 4294901760
  %1854 = vmatpush1.msra.mxu0 %v1853
  %1855 = vmatprep.subr.mxu0 0.0
  %v1856 = vand.u32 %v66, 4294901760
  %1857 = vmatpush1.msra.mxu0 %v1856
  %1858 = vmatprep.subr.mxu0 0.0
  %v1859 = vand.u32 %v67, 4294901760
  %1860 = vmatpush1.msra.mxu0 %v1859
  %1861 = vmatprep.subr.mxu0 0.0
  %v1862 = vand.u32 %v68, 4294901760
  %1863 = vmatpush1.msra.mxu0 %v1862
  %1864 = vmatprep.subr.mxu0 0.0
  %v1865 = vand.u32 %v69, 4294901760
  %1866 = vmatpush1.msra.mxu0 %v1865
  %1867 = vmatprep.subr.mxu0 0.0
  %v1868 = vand.u32 %v70, 4294901760
  %1869 = vmatpush1.msra.mxu0 %v1868
  %1870 = vmatprep.subr.mxu0 0.0
  %v1871 = vand.u32 %v71, 4294901760
  %1872 = vmatpush1.msra.mxu0 %v1871
  %1873 = vmatprep.subr.mxu0 0.0
  %v1874 = vand.u32 %v72, 4294901760
  %1875 = vmatpush1.msra.mxu0 %v1874
  %1876 = vmatprep.subr.mxu0 0.0
  %v1877 = vand.u32 %v73, 4294901760
  %1878 = vmatpush1.msra.mxu0 %v1877
  %1879 = vmatprep.subr.mxu0 0.0
  %v1880 = vand.u32 %v74, 4294901760
  %1881 = vmatpush1.msra.mxu0 %v1880
  %1882 = vmatprep.subr.mxu0 0.0
  %v1883 = vand.u32 %v75, 4294901760
  %1884 = vmatpush1.msra.mxu0 %v1883
  %1885 = vmatprep.subr.mxu0 0.0
  %v1886 = vand.u32 %v76, 4294901760
  %1887 = vmatpush1.msra.mxu0 %v1886
  %1888 = vmatprep.subr.mxu0 0.0
  %v1889 = vand.u32 %v77, 4294901760
  %1890 = vmatpush1.msra.mxu0 %v1889
  %1891 = vmatprep.subr.mxu0 0.0
  %v1892 = vand.u32 %v78, 4294901760
  %1893 = vmatpush1.msra.mxu0 %v1892
  %1894 = vmatprep.subr.mxu0 0.0
  %v1895 = vand.u32 %v79, 4294901760
  %1896 = vmatpush1.msra.mxu0 %v1895
  %1897 = vmatprep.subr.mxu0 0.0
  %v1898 = vand.u32 %v80, 4294901760
  %1899 = vmatpush1.msra.mxu0 %v1898
  %1900 = vmatprep.subr.mxu0 0.0
  %v1901 = vand.u32 %v81, 4294901760
  %1902 = vmatpush1.msra.mxu0 %v1901
  %1903 = vmatprep.subr.mxu0 0.0
  %v1904 = vand.u32 %v82, 4294901760
  %1905 = vmatpush1.msra.mxu0 %v1904
  %1906 = vmatprep.subr.mxu0 0.0
  %v1907 = vand.u32 %v83, 4294901760
  %1908 = vmatpush1.msra.mxu0 %v1907
  %1909 = vmatprep.subr.mxu0 0.0
  %v1910 = vand.u32 %v84, 4294901760
  %1911 = vmatpush1.msra.mxu0 %v1910
  %1912 = vmatprep.subr.mxu0 0.0
  %v1913 = vand.u32 %v85, 4294901760
  %1914 = vmatpush1.msra.mxu0 %v1913
  %1915 = vmatprep.subr.mxu0 0.0
  %v1916 = vand.u32 %v86, 4294901760
  %1917 = vmatpush1.msra.mxu0 %v1916
  %1918 = vmatprep.subr.mxu0 0.0
  %v1919 = vand.u32 %v87, 4294901760
  %1920 = vmatpush1.msra.mxu0 %v1919
  %1921 = vmatprep.subr.mxu0 0.0
  %v1922 = vand.u32 %v88, 4294901760
  %1923 = vmatpush1.msra.mxu0 %v1922
  %1924 = vmatprep.subr.mxu0 0.0
  %v1925 = vand.u32 %v89, 4294901760
  %1926 = vmatpush1.msra.mxu0 %v1925
  %1927 = vmatprep.subr.mxu0 0.0
  %v1928 = vand.u32 %v90, 4294901760
  %1929 = vmatpush1.msra.mxu0 %v1928
  %1930 = vmatprep.subr.mxu0 0.0
  %v1931 = vand.u32 %v91, 4294901760
  %1932 = vmatpush1.msra.mxu0 %v1931
  %1933 = vmatprep.subr.mxu0 0.0
  %v1934 = vand.u32 %v92, 4294901760
  %1935 = vmatpush1.msra.mxu0 %v1934
  %1936 = vmatprep.subr.mxu0 0.0
  %v1937 = vand.u32 %v93, 4294901760
  %1938 = vmatpush1.msra.mxu0 %v1937
  %1939 = vmatprep.subr.mxu0 0.0
  %v1940 = vand.u32 %v94, 4294901760
  %1941 = vmatpush1.msra.mxu0 %v1940
  %1942 = vmatprep.subr.mxu0 0.0
  %v1943 = vand.u32 %v95, 4294901760
  %1944 = vmatpush1.msra.mxu0 %v1943
  %v1945 = vand.u32 %v195, 4294901760
  %1946 = vmatprep.mubr.f32.mxu0 %v1945
  %v1947 = vand.u32 %v193, 4294901760
  %1948 = vmatmul.mubr.f32.gmra.mrb[0].mxu0 %v1947
  %v1949 = vpop.f32.mrb[0].mxu0
  %v1950 = vadd.f32 %v1846, %v1949
  %v1951 = vpop.f32.mrb[0].mxu0
  %1952 = vdwg.mxu0
  %1953 = vmatprep.subr.mxu0 0.0
  %v1954 = vand.u32 %v96, 4294901760
  %1955 = vmatpush1.msra.mxu0 %v1954
  %1956 = vmatprep.subr.mxu0 0.0
  %v1957 = vand.u32 %v97, 4294901760
  %1958 = vmatpush1.msra.mxu0 %v1957
  %1959 = vmatprep.subr.mxu0 0.0
  %v1960 = vand.u32 %v98, 4294901760
  %1961 = vmatpush1.msra.mxu0 %v1960
  %1962 = vmatprep.subr.mxu0 0.0
  %v1963 = vand.u32 %v99, 4294901760
  %1964 = vmatpush1.msra.mxu0 %v1963
  %1965 = vmatprep.subr.mxu0 0.0
  %v1966 = vand.u32 %v100, 4294901760
  %1967 = vmatpush1.msra.mxu0 %v1966
  %1968 = vmatprep.subr.mxu0 0.0
  %v1969 = vand.u32 %v101, 4294901760
  %1970 = vmatpush1.msra.mxu0 %v1969
  %1971 = vmatprep.subr.mxu0 0.0
  %v1972 = vand.u32 %v102, 4294901760
  %1973 = vmatpush1.msra.mxu0 %v1972
  %1974 = vmatprep.subr.mxu0 0.0
  %v1975 = vand.u32 %v103, 4294901760
  %1976 = vmatpush1.msra.mxu0 %v1975
  %1977 = vmatprep.subr.mxu0 0.0
  %v1978 = vand.u32 %v104, 4294901760
  %1979 = vmatpush1.msra.mxu0 %v1978
  %1980 = vmatprep.subr.mxu0 0.0
  %v1981 = vand.u32 %v105, 4294901760
  %1982 = vmatpush1.msra.mxu0 %v1981
  %1983 = vmatprep.subr.mxu0 0.0
  %v1984 = vand.u32 %v106, 4294901760
  %1985 = vmatpush1.msra.mxu0 %v1984
  %1986 = vmatprep.subr.mxu0 0.0
  %v1987 = vand.u32 %v107, 4294901760
  %1988 = vmatpush1.msra.mxu0 %v1987
  %1989 = vmatprep.subr.mxu0 0.0
  %v1990 = vand.u32 %v108, 4294901760
  %1991 = vmatpush1.msra.mxu0 %v1990
  %1992 = vmatprep.subr.mxu0 0.0
  %v1993 = vand.u32 %v109, 4294901760
  %1994 = vmatpush1.msra.mxu0 %v1993
  %1995 = vmatprep.subr.mxu0 0.0
  %v1996 = vand.u32 %v110, 4294901760
  %1997 = vmatpush1.msra.mxu0 %v1996
  %1998 = vmatprep.subr.mxu0 0.0
  %v1999 = vand.u32 %v111, 4294901760
  %2000 = vmatpush1.msra.mxu0 %v1999
  %2001 = vmatprep.subr.mxu0 0.0
  %v2002 = vand.u32 %v112, 4294901760
  %2003 = vmatpush1.msra.mxu0 %v2002
  %2004 = vmatprep.subr.mxu0 0.0
  %v2005 = vand.u32 %v113, 4294901760
  %2006 = vmatpush1.msra.mxu0 %v2005
  %2007 = vmatprep.subr.mxu0 0.0
  %v2008 = vand.u32 %v114, 4294901760
  %2009 = vmatpush1.msra.mxu0 %v2008
  %2010 = vmatprep.subr.mxu0 0.0
  %v2011 = vand.u32 %v115, 4294901760
  %2012 = vmatpush1.msra.mxu0 %v2011
  %2013 = vmatprep.subr.mxu0 0.0
  %v2014 = vand.u32 %v116, 4294901760
  %2015 = vmatpush1.msra.mxu0 %v2014
  %2016 = vmatprep.subr.mxu0 0.0
  %v2017 = vand.u32 %v117, 4294901760
  %2018 = vmatpush1.msra.mxu0 %v2017
  %2019 = vmatprep.subr.mxu0 0.0
  %v2020 = vand.u32 %v118, 4294901760
  %2021 = vmatpush1.msra.mxu0 %v2020
  %2022 = vmatprep.subr.mxu0 0.0
  %v2023 = vand.u32 %v119, 4294901760
  %2024 = vmatpush1.msra.mxu0 %v2023
  %2025 = vmatprep.subr.mxu0 0.0
  %v2026 = vand.u32 %v120, 4294901760
  %2027 = vmatpush1.msra.mxu0 %v2026
  %2028 = vmatprep.subr.mxu0 0.0
  %v2029 = vand.u32 %v121, 4294901760
  %2030 = vmatpush1.msra.mxu0 %v2029
  %2031 = vmatprep.subr.mxu0 0.0
  %v2032 = vand.u32 %v122, 4294901760
  %2033 = vmatpush1.msra.mxu0 %v2032
  %2034 = vmatprep.subr.mxu0 0.0
  %v2035 = vand.u32 %v123, 4294901760
  %2036 = vmatpush1.msra.mxu0 %v2035
  %2037 = vmatprep.subr.mxu0 0.0
  %v2038 = vand.u32 %v124, 4294901760
  %2039 = vmatpush1.msra.mxu0 %v2038
  %2040 = vmatprep.subr.mxu0 0.0
  %v2041 = vand.u32 %v125, 4294901760
  %2042 = vmatpush1.msra.mxu0 %v2041
  %2043 = vmatprep.subr.mxu0 0.0
  %v2044 = vand.u32 %v126, 4294901760
  %2045 = vmatpush1.msra.mxu0 %v2044
  %2046 = vmatprep.subr.mxu0 0.0
  %v2047 = vand.u32 %v127, 4294901760
  %2048 = vmatpush1.msra.mxu0 %v2047
  %v2049 = vand.u32 %v211, 4294901760
  %v2050 = vsub.f32 %v211, %v2049
  %v2051 = vand.u32 %v2050, 4294901760
  %v2052 = vsub.f32 %v2050, %v2051
  %v2053 = vand.u32 %v2052, 4294901760
  %2054 = vmatprep.mubr.f32.mxu0 %v2053
  %v2055 = vand.u32 %v203, 4294901760
  %v2056 = vsub.f32 %v203, %v2055
  %v2057 = vand.u32 %v2056, 4294901760
  %v2058 = vsub.f32 %v2056, %v2057
  %v2059 = vand.u32 %v2058, 4294901760
  %2060 = vmatmul.mubr.f32.gmra.mrb[0].mxu0 %v2059
  %v2061 = vpop.f32.mrb[0].mxu0
  %v2062 = vadd.f32 %v1950, %v2061
  %v2063 = vpop.f32.mrb[0].mxu0
  %2064 = vdwg.mxu0
  %2065 = vmatprep.subr.mxu0 0.0
  %v2066 = vand.u32 %v96, 4294901760
  %v2067 = vsub.f32 %v96, %v2066
  %v2068 = vand.u32 %v2067, 4294901760
  %v2069 = vsub.f32 %v2067, %v2068
  %v2070 = vand.u32 %v2069, 4294901760
  %2071 = vmatpush1.msra.mxu0 %v2070
  %2072 = vmatprep.subr.mxu0 0.0
  %v2073 = vand.u32 %v97, 4294901760
  %v2074 = vsub.f32 %v97, %v2073
  %v2075 = vand.u32 %v2074, 4294901760
  %v2076 = vsub.f32 %v2074, %v2075
  %v2077 = vand.u32 %v2076, 4294901760
  %2078 = vmatpush1.msra.mxu0 %v2077
  %2079 = vmatprep.subr.mxu0 0.0
  %v2080 = vand.u32 %v98, 4294901760
  %v2081 = vsub.f32 %v98, %v2080
  %v2082 = vand.u32 %v2081, 4294901760
  %v2083 = vsub.f32 %v2081, %v2082
  %v2084 = vand.u32 %v2083, 4294901760
  %2085 = vmatpush1.msra.mxu0 %v2084
  %2086 = vmatprep.subr.mxu0 0.0
  %v2087 = vand.u32 %v99, 4294901760
  %v2088 = vsub.f32 %v99, %v2087
  %v2089 = vand.u32 %v2088, 4294901760
  %v2090 = vsub.f32 %v2088, %v2089
  %v2091 = vand.u32 %v2090, 4294901760
  %2092 = vmatpush1.msra.mxu0 %v2091
  %2093 = vmatprep.subr.mxu0 0.0
  %v2094 = vand.u32 %v100, 4294901760
  %v2095 = vsub.f32 %v100, %v2094
  %v2096 = vand.u32 %v2095, 4294901760
  %v2097 = vsub.f32 %v2095, %v2096
  %v2098 = vand.u32 %v2097, 4294901760
  %2099 = vmatpush1.msra.mxu0 %v2098
  %2100 = vmatprep.subr.mxu0 0.0
  %v2101 = vand.u32 %v101, 4294901760
  %v2102 = vsub.f32 %v101, %v2101
  %v2103 = vand.u32 %v2102, 4294901760
  %v2104 = vsub.f32 %v2102, %v2103
  %v2105 = vand.u32 %v2104, 4294901760
  %2106 = vmatpush1.msra.mxu0 %v2105
  %2107 = vmatprep.subr.mxu0 0.0
  %v2108 = vand.u32 %v102, 4294901760
  %v2109 = vsub.f32 %v102, %v2108
  %v2110 = vand.u32 %v2109, 4294901760
  %v2111 = vsub.f32 %v2109, %v2110
  %v2112 = vand.u32 %v2111, 4294901760
  %2113 = vmatpush1.msra.mxu0 %v2112
  %2114 = vmatprep.subr.mxu0 0.0
  %v2115 = vand.u32 %v103, 4294901760
  %v2116 = vsub.f32 %v103, %v2115
  %v2117 = vand.u32 %v2116, 4294901760
  %v2118 = vsub.f32 %v2116, %v2117
  %v2119 = vand.u32 %v2118, 4294901760
  %2120 = vmatpush1.msra.mxu0 %v2119
  %2121 = vmatprep.subr.mxu0 0.0
  %v2122 = vand.u32 %v104, 4294901760
  %v2123 = vsub.f32 %v104, %v2122
  %v2124 = vand.u32 %v2123, 4294901760
  %v2125 = vsub.f32 %v2123, %v2124
  %v2126 = vand.u32 %v2125, 4294901760
  %2127 = vmatpush1.msra.mxu0 %v2126
  %2128 = vmatprep.subr.mxu0 0.0
  %v2129 = vand.u32 %v105, 4294901760
  %v2130 = vsub.f32 %v105, %v2129
  %v2131 = vand.u32 %v2130, 4294901760
  %v2132 = vsub.f32 %v2130, %v2131
  %v2133 = vand.u32 %v2132, 4294901760
  %2134 = vmatpush1.msra.mxu0 %v2133
  %2135 = vmatprep.subr.mxu0 0.0
  %v2136 = vand.u32 %v106, 4294901760
  %v2137 = vsub.f32 %v106, %v2136
  %v2138 = vand.u32 %v2137, 4294901760
  %v2139 = vsub.f32 %v2137, %v2138
  %v2140 = vand.u32 %v2139, 4294901760
  %2141 = vmatpush1.msra.mxu0 %v2140
  %2142 = vmatprep.subr.mxu0 0.0
  %v2143 = vand.u32 %v107, 4294901760
  %v2144 = vsub.f32 %v107, %v2143
  %v2145 = vand.u32 %v2144, 4294901760
  %v2146 = vsub.f32 %v2144, %v2145
  %v2147 = vand.u32 %v2146, 4294901760
  %2148 = vmatpush1.msra.mxu0 %v2147
  %2149 = vmatprep.subr.mxu0 0.0
  %v2150 = vand.u32 %v108, 4294901760
  %v2151 = vsub.f32 %v108, %v2150
  %v2152 = vand.u32 %v2151, 4294901760
  %v2153 = vsub.f32 %v2151, %v2152
  %v2154 = vand.u32 %v2153, 4294901760
  %2155 = vmatpush1.msra.mxu0 %v2154
  %2156 = vmatprep.subr.mxu0 0.0
  %v2157 = vand.u32 %v109, 4294901760
  %v2158 = vsub.f32 %v109, %v2157
  %v2159 = vand.u32 %v2158, 4294901760
  %v2160 = vsub.f32 %v2158, %v2159
  %v2161 = vand.u32 %v2160, 4294901760
  %2162 = vmatpush1.msra.mxu0 %v2161
  %2163 = vmatprep.subr.mxu0 0.0
  %v2164 = vand.u32 %v110, 4294901760
  %v2165 = vsub.f32 %v110, %v2164
  %v2166 = vand.u32 %v2165, 4294901760
  %v2167 = vsub.f32 %v2165, %v2166
  %v2168 = vand.u32 %v2167, 4294901760
  %2169 = vmatpush1.msra.mxu0 %v2168
  %2170 = vmatprep.subr.mxu0 0.0
  %v2171 = vand.u32 %v111, 4294901760
  %v2172 = vsub.f32 %v111, %v2171
  %v2173 = vand.u32 %v2172, 4294901760
  %v2174 = vsub.f32 %v2172, %v2173
  %v2175 = vand.u32 %v2174, 4294901760
  %2176 = vmatpush1.msra.mxu0 %v2175
  %2177 = vmatprep.subr.mxu0 0.0
  %v2178 = vand.u32 %v112, 4294901760
  %v2179 = vsub.f32 %v112, %v2178
  %v2180 = vand.u32 %v2179, 4294901760
  %v2181 = vsub.f32 %v2179, %v2180
  %v2182 = vand.u32 %v2181, 4294901760
  %2183 = vmatpush1.msra.mxu0 %v2182
  %2184 = vmatprep.subr.mxu0 0.0
  %v2185 = vand.u32 %v113, 4294901760
  %v2186 = vsub.f32 %v113, %v2185
  %v2187 = vand.u32 %v2186, 4294901760
  %v2188 = vsub.f32 %v2186, %v2187
  %v2189 = vand.u32 %v2188, 4294901760
  %2190 = vmatpush1.msra.mxu0 %v2189
  %2191 = vmatprep.subr.mxu0 0.0
  %v2192 = vand.u32 %v114, 4294901760
  %v2193 = vsub.f32 %v114, %v2192
  %v2194 = vand.u32 %v2193, 4294901760
  %v2195 = vsub.f32 %v2193, %v2194
  %v2196 = vand.u32 %v2195, 4294901760
  %2197 = vmatpush1.msra.mxu0 %v2196
  %2198 = vmatprep.subr.mxu0 0.0
  %v2199 = vand.u32 %v115, 4294901760
  %v2200 = vsub.f32 %v115, %v2199
  %v2201 = vand.u32 %v2200, 4294901760
  %v2202 = vsub.f32 %v2200, %v2201
  %v2203 = vand.u32 %v2202, 4294901760
  %2204 = vmatpush1.msra.mxu0 %v2203
  %2205 = vmatprep.subr.mxu0 0.0
  %v2206 = vand.u32 %v116, 4294901760
  %v2207 = vsub.f32 %v116, %v2206
  %v2208 = vand.u32 %v2207, 4294901760
  %v2209 = vsub.f32 %v2207, %v2208
  %v2210 = vand.u32 %v2209, 4294901760
  %2211 = vmatpush1.msra.mxu0 %v2210
  %2212 = vmatprep.subr.mxu0 0.0
  %v2213 = vand.u32 %v117, 4294901760
  %v2214 = vsub.f32 %v117, %v2213
  %v2215 = vand.u32 %v2214, 4294901760
  %v2216 = vsub.f32 %v2214, %v2215
  %v2217 = vand.u32 %v2216, 4294901760
  %2218 = vmatpush1.msra.mxu0 %v2217
  %2219 = vmatprep.subr.mxu0 0.0
  %v2220 = vand.u32 %v118, 4294901760
  %v2221 = vsub.f32 %v118, %v2220
  %v2222 = vand.u32 %v2221, 4294901760
  %v2223 = vsub.f32 %v2221, %v2222
  %v2224 = vand.u32 %v2223, 4294901760
  %2225 = vmatpush1.msra.mxu0 %v2224
  %2226 = vmatprep.subr.mxu0 0.0
  %v2227 = vand.u32 %v119, 4294901760
  %v2228 = vsub.f32 %v119, %v2227
  %v2229 = vand.u32 %v2228, 4294901760
  %v2230 = vsub.f32 %v2228, %v2229
  %v2231 = vand.u32 %v2230, 4294901760
  %2232 = vmatpush1.msra.mxu0 %v2231
  %2233 = vmatprep.subr.mxu0 0.0
  %v2234 = vand.u32 %v120, 4294901760
  %v2235 = vsub.f32 %v120, %v2234
  %v2236 = vand.u32 %v2235, 4294901760
  %v2237 = vsub.f32 %v2235, %v2236
  %v2238 = vand.u32 %v2237, 4294901760
  %2239 = vmatpush1.msra.mxu0 %v2238
  %2240 = vmatprep.subr.mxu0 0.0
  %v2241 = vand.u32 %v121, 4294901760
  %v2242 = vsub.f32 %v121, %v2241
  %v2243 = vand.u32 %v2242, 4294901760
  %v2244 = vsub.f32 %v2242, %v2243
  %v2245 = vand.u32 %v2244, 4294901760
  %2246 = vmatpush1.msra.mxu0 %v2245
  %2247 = vmatprep.subr.mxu0 0.0
  %v2248 = vand.u32 %v122, 4294901760
  %v2249 = vsub.f32 %v122, %v2248
  %v2250 = vand.u32 %v2249, 4294901760
  %v2251 = vsub.f32 %v2249, %v2250
  %v2252 = vand.u32 %v2251, 4294901760
  %2253 = vmatpush1.msra.mxu0 %v2252
  %2254 = vmatprep.subr.mxu0 0.0
  %v2255 = vand.u32 %v123, 4294901760
  %v2256 = vsub.f32 %v123, %v2255
  %v2257 = vand.u32 %v2256, 4294901760
  %v2258 = vsub.f32 %v2256, %v2257
  %v2259 = vand.u32 %v2258, 4294901760
  %2260 = vmatpush1.msra.mxu0 %v2259
  %2261 = vmatprep.subr.mxu0 0.0
  %v2262 = vand.u32 %v124, 4294901760
  %v2263 = vsub.f32 %v124, %v2262
  %v2264 = vand.u32 %v2263, 4294901760
  %v2265 = vsub.f32 %v2263, %v2264
  %v2266 = vand.u32 %v2265, 4294901760
  %2267 = vmatpush1.msra.mxu0 %v2266
  %2268 = vmatprep.subr.mxu0 0.0
  %v2269 = vand.u32 %v125, 4294901760
  %v2270 = vsub.f32 %v125, %v2269
  %v2271 = vand.u32 %v2270, 4294901760
  %v2272 = vsub.f32 %v2270, %v2271
  %v2273 = vand.u32 %v2272, 4294901760
  %2274 = vmatpush1.msra.mxu0 %v2273
  %2275 = vmatprep.subr.mxu0 0.0
  %v2276 = vand.u32 %v126, 4294901760
  %v2277 = vsub.f32 %v126, %v2276
  %v2278 = vand.u32 %v2277, 4294901760
  %v2279 = vsub.f32 %v2277, %v2278
  %v2280 = vand.u32 %v2279, 4294901760
  %2281 = vmatpush1.msra.mxu0 %v2280
  %2282 = vmatprep.subr.mxu0 0.0
  %v2283 = vand.u32 %v127, 4294901760
  %v2284 = vsub.f32 %v127, %v2283
  %v2285 = vand.u32 %v2284, 4294901760
  %v2286 = vsub.f32 %v2284, %v2285
  %v2287 = vand.u32 %v2286, 4294901760
  %2288 = vmatpush1.msra.mxu0 %v2287
  %v2289 = vand.u32 %v211, 4294901760
  %2290 = vmatprep.mubr.f32.mxu0 %v2289
  %v2291 = vand.u32 %v203, 4294901760
  %2292 = vmatmul.mubr.f32.gmra.mrb[0].mxu0 %v2291
  %v2293 = vpop.f32.mrb[0].mxu0
  %v2294 = vadd.f32 %v2062, %v2293
  %v2295 = vpop.f32.mrb[0].mxu0
  %2296 = vdwg.mxu0
  %2297 = vmatprep.subr.mxu0 0.0
  %v2298 = vand.u32 %v96, 4294901760
  %v2299 = vsub.f32 %v96, %v2298
  %2300 = vmatpush1.msra.mxu0 %v2299
  %2301 = vmatprep.subr.mxu0 0.0
  %v2302 = vand.u32 %v97, 4294901760
  %v2303 = vsub.f32 %v97, %v2302
  %2304 = vmatpush1.msra.mxu0 %v2303
  %2305 = vmatprep.subr.mxu0 0.0
  %v2306 = vand.u32 %v98, 4294901760
  %v2307 = vsub.f32 %v98, %v2306
  %2308 = vmatpush1.msra.mxu0 %v2307
  %2309 = vmatprep.subr.mxu0 0.0
  %v2310 = vand.u32 %v99, 4294901760
  %v2311 = vsub.f32 %v99, %v2310
  %2312 = vmatpush1.msra.mxu0 %v2311
  %2313 = vmatprep.subr.mxu0 0.0
  %v2314 = vand.u32 %v100, 4294901760
  %v2315 = vsub.f32 %v100, %v2314
  %2316 = vmatpush1.msra.mxu0 %v2315
  %2317 = vmatprep.subr.mxu0 0.0
  %v2318 = vand.u32 %v101, 4294901760
  %v2319 = vsub.f32 %v101, %v2318
  %2320 = vmatpush1.msra.mxu0 %v2319
  %2321 = vmatprep.subr.mxu0 0.0
  %v2322 = vand.u32 %v102, 4294901760
  %v2323 = vsub.f32 %v102, %v2322
  %2324 = vmatpush1.msra.mxu0 %v2323
  %2325 = vmatprep.subr.mxu0 0.0
  %v2326 = vand.u32 %v103, 4294901760
  %v2327 = vsub.f32 %v103, %v2326
  %2328 = vmatpush1.msra.mxu0 %v2327
  %2329 = vmatprep.subr.mxu0 0.0
  %v2330 = vand.u32 %v104, 4294901760
  %v2331 = vsub.f32 %v104, %v2330
  %2332 = vmatpush1.msra.mxu0 %v2331
  %2333 = vmatprep.subr.mxu0 0.0
  %v2334 = vand.u32 %v105, 4294901760
  %v2335 = vsub.f32 %v105, %v2334
  %2336 = vmatpush1.msra.mxu0 %v2335
  %2337 = vmatprep.subr.mxu0 0.0
  %v2338 = vand.u32 %v106, 4294901760
  %v2339 = vsub.f32 %v106, %v2338
  %2340 = vmatpush1.msra.mxu0 %v2339
  %2341 = vmatprep.subr.mxu0 0.0
  %v2342 = vand.u32 %v107, 4294901760
  %v2343 = vsub.f32 %v107, %v2342
  %2344 = vmatpush1.msra.mxu0 %v2343
  %2345 = vmatprep.subr.mxu0 0.0
  %v2346 = vand.u32 %v108, 4294901760
  %v2347 = vsub.f32 %v108, %v2346
  %2348 = vmatpush1.msra.mxu0 %v2347
  %2349 = vmatprep.subr.mxu0 0.0
  %v2350 = vand.u32 %v109, 4294901760
  %v2351 = vsub.f32 %v109, %v2350
  %2352 = vmatpush1.msra.mxu0 %v2351
  %2353 = vmatprep.subr.mxu0 0.0
  %v2354 = vand.u32 %v110, 4294901760
  %v2355 = vsub.f32 %v110, %v2354
  %2356 = vmatpush1.msra.mxu0 %v2355
  %2357 = vmatprep.subr.mxu0 0.0
  %v2358 = vand.u32 %v111, 4294901760
  %v2359 = vsub.f32 %v111, %v2358
  %2360 = vmatpush1.msra.mxu0 %v2359
  %2361 = vmatprep.subr.mxu0 0.0
  %v2362 = vand.u32 %v112, 4294901760
  %v2363 = vsub.f32 %v112, %v2362
  %2364 = vmatpush1.msra.mxu0 %v2363
  %2365 = vmatprep.subr.mxu0 0.0
  %v2366 = vand.u32 %v113, 4294901760
  %v2367 = vsub.f32 %v113, %v2366
  %2368 = vmatpush1.msra.mxu0 %v2367
  %2369 = vmatprep.subr.mxu0 0.0
  %v2370 = vand.u32 %v114, 4294901760
  %v2371 = vsub.f32 %v114, %v2370
  %2372 = vmatpush1.msra.mxu0 %v2371
  %2373 = vmatprep.subr.mxu0 0.0
  %v2374 = vand.u32 %v115, 4294901760
  %v2375 = vsub.f32 %v115, %v2374
  %2376 = vmatpush1.msra.mxu0 %v2375
  %2377 = vmatprep.subr.mxu0 0.0
  %v2378 = vand.u32 %v116, 4294901760
  %v2379 = vsub.f32 %v116, %v2378
  %2380 = vmatpush1.msra.mxu0 %v2379
  %2381 = vmatprep.subr.mxu0 0.0
  %v2382 = vand.u32 %v117, 4294901760
  %v2383 = vsub.f32 %v117, %v2382
  %2384 = vmatpush1.msra.mxu0 %v2383
  %2385 = vmatprep.subr.mxu0 0.0
  %v2386 = vand.u32 %v118, 4294901760
  %v2387 = vsub.f32 %v118, %v2386
  %2388 = vmatpush1.msra.mxu0 %v2387
  %2389 = vmatprep.subr.mxu0 0.0
  %v2390 = vand.u32 %v119, 4294901760
  %v2391 = vsub.f32 %v119, %v2390
  %2392 = vmatpush1.msra.mxu0 %v2391
  %2393 = vmatprep.subr.mxu0 0.0
  %v2394 = vand.u32 %v120, 4294901760
  %v2395 = vsub.f32 %v120, %v2394
  %2396 = vmatpush1.msra.mxu0 %v2395
  %2397 = vmatprep.subr.mxu0 0.0
  %v2398 = vand.u32 %v121, 4294901760
  %v2399 = vsub.f32 %v121, %v2398
  %2400 = vmatpush1.msra.mxu0 %v2399
  %2401 = vmatprep.subr.mxu0 0.0
  %v2402 = vand.u32 %v122, 4294901760
  %v2403 = vsub.f32 %v122, %v2402
  %2404 = vmatpush1.msra.mxu0 %v2403
  %2405 = vmatprep.subr.mxu0 0.0
  %v2406 = vand.u32 %v123, 4294901760
  %v2407 = vsub.f32 %v123, %v2406
  %2408 = vmatpush1.msra.mxu0 %v2407
  %2409 = vmatprep.subr.mxu0 0.0
  %v2410 = vand.u32 %v124, 4294901760
  %v2411 = vsub.f32 %v124, %v2410
  %2412 = vmatpush1.msra.mxu0 %v2411
  %2413 = vmatprep.subr.mxu0 0.0
  %v2414 = vand.u32 %v125, 4294901760
  %v2415 = vsub.f32 %v125, %v2414
  %2416 = vmatpush1.msra.mxu0 %v2415
  %2417 = vmatprep.subr.mxu0 0.0
  %v2418 = vand.u32 %v126, 4294901760
  %v2419 = vsub.f32 %v126, %v2418
  %2420 = vmatpush1.msra.mxu0 %v2419
  %2421 = vmatprep.subr.mxu0 0.0
  %v2422 = vand.u32 %v127, 4294901760
  %v2423 = vsub.f32 %v127, %v2422
  %2424 = vmatpush1.msra.mxu0 %v2423
  %v2425 = vand.u32 %v211, 4294901760
  %v2426 = vsub.f32 %v211, %v2425
  %2427 = vmatprep.mubr.f32.mxu0 %v2426
  %v2428 = vand.u32 %v203, 4294901760
  %v2429 = vsub.f32 %v203, %v2428
  %2430 = vmatmul.mubr.f32.gmra.mrb[0].mxu0 %v2429
  %v2431 = vpop.f32.mrb[0].mxu0
  %v2432 = vadd.f32 %v2294, %v2431
  %v2433 = vpop.f32.mrb[0].mxu0
  %2434 = vdwg.mxu0
  %2435 = vmatprep.subr.mxu0 0.0
  %v2436 = vand.u32 %v96, 4294901760
  %2437 = vmatpush1.msra.mxu0 %v2436
  %2438 = vmatprep.subr.mxu0 0.0
  %v2439 = vand.u32 %v97, 4294901760
  %2440 = vmatpush1.msra.mxu0 %v2439
  %2441 = vmatprep.subr.mxu0 0.0
  %v2442 = vand.u32 %v98, 4294901760
  %2443 = vmatpush1.msra.mxu0 %v2442
  %2444 = vmatprep.subr.mxu0 0.0
  %v2445 = vand.u32 %v99, 4294901760
  %2446 = vmatpush1.msra.mxu0 %v2445
  %2447 = vmatprep.subr.mxu0 0.0
  %v2448 = vand.u32 %v100, 4294901760
  %2449 = vmatpush1.msra.mxu0 %v2448
  %2450 = vmatprep.subr.mxu0 0.0
  %v2451 = vand.u32 %v101, 4294901760
  %2452 = vmatpush1.msra.mxu0 %v2451
  %2453 = vmatprep.subr.mxu0 0.0
  %v2454 = vand.u32 %v102, 4294901760
  %2455 = vmatpush1.msra.mxu0 %v2454
  %2456 = vmatprep.subr.mxu0 0.0
  %v2457 = vand.u32 %v103, 4294901760
  %2458 = vmatpush1.msra.mxu0 %v2457
  %2459 = vmatprep.subr.mxu0 0.0
  %v2460 = vand.u32 %v104, 4294901760
  %2461 = vmatpush1.msra.mxu0 %v2460
  %2462 = vmatprep.subr.mxu0 0.0
  %v2463 = vand.u32 %v105, 4294901760
  %2464 = vmatpush1.msra.mxu0 %v2463
  %2465 = vmatprep.subr.mxu0 0.0
  %v2466 = vand.u32 %v106, 4294901760
  %2467 = vmatpush1.msra.mxu0 %v2466
  %2468 = vmatprep.subr.mxu0 0.0
  %v2469 = vand.u32 %v107, 4294901760
  %2470 = vmatpush1.msra.mxu0 %v2469
  %2471 = vmatprep.subr.mxu0 0.0
  %v2472 = vand.u32 %v108, 4294901760
  %2473 = vmatpush1.msra.mxu0 %v2472
  %2474 = vmatprep.subr.mxu0 0.0
  %v2475 = vand.u32 %v109, 4294901760
  %2476 = vmatpush1.msra.mxu0 %v2475
  %2477 = vmatprep.subr.mxu0 0.0
  %v2478 = vand.u32 %v110, 4294901760
  %2479 = vmatpush1.msra.mxu0 %v2478
  %2480 = vmatprep.subr.mxu0 0.0
  %v2481 = vand.u32 %v111, 4294901760
  %2482 = vmatpush1.msra.mxu0 %v2481
  %2483 = vmatprep.subr.mxu0 0.0
  %v2484 = vand.u32 %v112, 4294901760
  %2485 = vmatpush1.msra.mxu0 %v2484
  %2486 = vmatprep.subr.mxu0 0.0
  %v2487 = vand.u32 %v113, 4294901760
  %2488 = vmatpush1.msra.mxu0 %v2487
  %2489 = vmatprep.subr.mxu0 0.0
  %v2490 = vand.u32 %v114, 4294901760
  %2491 = vmatpush1.msra.mxu0 %v2490
  %2492 = vmatprep.subr.mxu0 0.0
  %v2493 = vand.u32 %v115, 4294901760
  %2494 = vmatpush1.msra.mxu0 %v2493
  %2495 = vmatprep.subr.mxu0 0.0
  %v2496 = vand.u32 %v116, 4294901760
  %2497 = vmatpush1.msra.mxu0 %v2496
  %2498 = vmatprep.subr.mxu0 0.0
  %v2499 = vand.u32 %v117, 4294901760
  %2500 = vmatpush1.msra.mxu0 %v2499
  %2501 = vmatprep.subr.mxu0 0.0
  %v2502 = vand.u32 %v118, 4294901760
  %2503 = vmatpush1.msra.mxu0 %v2502
  %2504 = vmatprep.subr.mxu0 0.0
  %v2505 = vand.u32 %v119, 4294901760
  %2506 = vmatpush1.msra.mxu0 %v2505
  %2507 = vmatprep.subr.mxu0 0.0
  %v2508 = vand.u32 %v120, 4294901760
  %2509 = vmatpush1.msra.mxu0 %v2508
  %2510 = vmatprep.subr.mxu0 0.0
  %v2511 = vand.u32 %v121, 4294901760
  %2512 = vmatpush1.msra.mxu0 %v2511
  %2513 = vmatprep.subr.mxu0 0.0
  %v2514 = vand.u32 %v122, 4294901760
  %2515 = vmatpush1.msra.mxu0 %v2514
  %2516 = vmatprep.subr.mxu0 0.0
  %v2517 = vand.u32 %v123, 4294901760
  %2518 = vmatpush1.msra.mxu0 %v2517
  %2519 = vmatprep.subr.mxu0 0.0
  %v2520 = vand.u32 %v124, 4294901760
  %2521 = vmatpush1.msra.mxu0 %v2520
  %2522 = vmatprep.subr.mxu0 0.0
  %v2523 = vand.u32 %v125, 4294901760
  %2524 = vmatpush1.msra.mxu0 %v2523
  %2525 = vmatprep.subr.mxu0 0.0
  %v2526 = vand.u32 %v126, 4294901760
  %2527 = vmatpush1.msra.mxu0 %v2526
  %2528 = vmatprep.subr.mxu0 0.0
  %v2529 = vand.u32 %v127, 4294901760
  %2530 = vmatpush1.msra.mxu0 %v2529
  %v2531 = vand.u32 %v211, 4294901760
  %v2532 = vsub.f32 %v211, %v2531
  %v2533 = vand.u32 %v2532, 4294901760
  %2534 = vmatprep.mubr.f32.mxu0 %v2533
  %v2535 = vand.u32 %v203, 4294901760
  %v2536 = vsub.f32 %v203, %v2535
  %v2537 = vand.u32 %v2536, 4294901760
  %2538 = vmatmul.mubr.f32.gmra.mrb[0].mxu0 %v2537
  %v2539 = vpop.f32.mrb[0].mxu0
  %v2540 = vadd.f32 %v2432, %v2539
  %v2541 = vpop.f32.mrb[0].mxu0
  %2542 = vdwg.mxu0
  %2543 = vmatprep.subr.mxu0 0.0
  %v2544 = vand.u32 %v96, 4294901760
  %v2545 = vsub.f32 %v96, %v2544
  %v2546 = vand.u32 %v2545, 4294901760
  %2547 = vmatpush1.msra.mxu0 %v2546
  %2548 = vmatprep.subr.mxu0 0.0
  %v2549 = vand.u32 %v97, 4294901760
  %v2550 = vsub.f32 %v97, %v2549
  %v2551 = vand.u32 %v2550, 4294901760
  %2552 = vmatpush1.msra.mxu0 %v2551
  %2553 = vmatprep.subr.mxu0 0.0
  %v2554 = vand.u32 %v98, 4294901760
  %v2555 = vsub.f32 %v98, %v2554
  %v2556 = vand.u32 %v2555, 4294901760
  %2557 = vmatpush1.msra.mxu0 %v2556
  %2558 = vmatprep.subr.mxu0 0.0
  %v2559 = vand.u32 %v99, 4294901760
  %v2560 = vsub.f32 %v99, %v2559
  %v2561 = vand.u32 %v2560, 4294901760
  %2562 = vmatpush1.msra.mxu0 %v2561
  %2563 = vmatprep.subr.mxu0 0.0
  %v2564 = vand.u32 %v100, 4294901760
  %v2565 = vsub.f32 %v100, %v2564
  %v2566 = vand.u32 %v2565, 4294901760
  %2567 = vmatpush1.msra.mxu0 %v2566
  %2568 = vmatprep.subr.mxu0 0.0
  %v2569 = vand.u32 %v101, 4294901760
  %v2570 = vsub.f32 %v101, %v2569
  %v2571 = vand.u32 %v2570, 4294901760
  %2572 = vmatpush1.msra.mxu0 %v2571
  %2573 = vmatprep.subr.mxu0 0.0
  %v2574 = vand.u32 %v102, 4294901760
  %v2575 = vsub.f32 %v102, %v2574
  %v2576 = vand.u32 %v2575, 4294901760
  %2577 = vmatpush1.msra.mxu0 %v2576
  %2578 = vmatprep.subr.mxu0 0.0
  %v2579 = vand.u32 %v103, 4294901760
  %v2580 = vsub.f32 %v103, %v2579
  %v2581 = vand.u32 %v2580, 4294901760
  %2582 = vmatpush1.msra.mxu0 %v2581
  %2583 = vmatprep.subr.mxu0 0.0
  %v2584 = vand.u32 %v104, 4294901760
  %v2585 = vsub.f32 %v104, %v2584
  %v2586 = vand.u32 %v2585, 4294901760
  %2587 = vmatpush1.msra.mxu0 %v2586
  %2588 = vmatprep.subr.mxu0 0.0
  %v2589 = vand.u32 %v105, 4294901760
  %v2590 = vsub.f32 %v105, %v2589
  %v2591 = vand.u32 %v2590, 4294901760
  %2592 = vmatpush1.msra.mxu0 %v2591
  %2593 = vmatprep.subr.mxu0 0.0
  %v2594 = vand.u32 %v106, 4294901760
  %v2595 = vsub.f32 %v106, %v2594
  %v2596 = vand.u32 %v2595, 4294901760
  %2597 = vmatpush1.msra.mxu0 %v2596
  %2598 = vmatprep.subr.mxu0 0.0
  %v2599 = vand.u32 %v107, 4294901760
  %v2600 = vsub.f32 %v107, %v2599
  %v2601 = vand.u32 %v2600, 4294901760
  %2602 = vmatpush1.msra.mxu0 %v2601
  %2603 = vmatprep.subr.mxu0 0.0
  %v2604 = vand.u32 %v108, 4294901760
  %v2605 = vsub.f32 %v108, %v2604
  %v2606 = vand.u32 %v2605, 4294901760
  %2607 = vmatpush1.msra.mxu0 %v2606
  %2608 = vmatprep.subr.mxu0 0.0
  %v2609 = vand.u32 %v109, 4294901760
  %v2610 = vsub.f32 %v109, %v2609
  %v2611 = vand.u32 %v2610, 4294901760
  %2612 = vmatpush1.msra.mxu0 %v2611
  %2613 = vmatprep.subr.mxu0 0.0
  %v2614 = vand.u32 %v110, 4294901760
  %v2615 = vsub.f32 %v110, %v2614
  %v2616 = vand.u32 %v2615, 4294901760
  %2617 = vmatpush1.msra.mxu0 %v2616
  %2618 = vmatprep.subr.mxu0 0.0
  %v2619 = vand.u32 %v111, 4294901760
  %v2620 = vsub.f32 %v111, %v2619
  %v2621 = vand.u32 %v2620, 4294901760
  %2622 = vmatpush1.msra.mxu0 %v2621
  %2623 = vmatprep.subr.mxu0 0.0
  %v2624 = vand.u32 %v112, 4294901760
  %v2625 = vsub.f32 %v112, %v2624
  %v2626 = vand.u32 %v2625, 4294901760
  %2627 = vmatpush1.msra.mxu0 %v2626
  %2628 = vmatprep.subr.mxu0 0.0
  %v2629 = vand.u32 %v113, 4294901760
  %v2630 = vsub.f32 %v113, %v2629
  %v2631 = vand.u32 %v2630, 4294901760
  %2632 = vmatpush1.msra.mxu0 %v2631
  %2633 = vmatprep.subr.mxu0 0.0
  %v2634 = vand.u32 %v114, 4294901760
  %v2635 = vsub.f32 %v114, %v2634
  %v2636 = vand.u32 %v2635, 4294901760
  %2637 = vmatpush1.msra.mxu0 %v2636
  %2638 = vmatprep.subr.mxu0 0.0
  %v2639 = vand.u32 %v115, 4294901760
  %v2640 = vsub.f32 %v115, %v2639
  %v2641 = vand.u32 %v2640, 4294901760
  %2642 = vmatpush1.msra.mxu0 %v2641
  %2643 = vmatprep.subr.mxu0 0.0
  %v2644 = vand.u32 %v116, 4294901760
  %v2645 = vsub.f32 %v116, %v2644
  %v2646 = vand.u32 %v2645, 4294901760
  %2647 = vmatpush1.msra.mxu0 %v2646
  %2648 = vmatprep.subr.mxu0 0.0
  %v2649 = vand.u32 %v117, 4294901760
  %v2650 = vsub.f32 %v117, %v2649
  %v2651 = vand.u32 %v2650, 4294901760
  %2652 = vmatpush1.msra.mxu0 %v2651
  %2653 = vmatprep.subr.mxu0 0.0
  %v2654 = vand.u32 %v118, 4294901760
  %v2655 = vsub.f32 %v118, %v2654
  %v2656 = vand.u32 %v2655, 4294901760
  %2657 = vmatpush1.msra.mxu0 %v2656
  %2658 = vmatprep.subr.mxu0 0.0
  %v2659 = vand.u32 %v119, 4294901760
  %v2660 = vsub.f32 %v119, %v2659
  %v2661 = vand.u32 %v2660, 4294901760
  %2662 = vmatpush1.msra.mxu0 %v2661
  %2663 = vmatprep.subr.mxu0 0.0
  %v2664 = vand.u32 %v120, 4294901760
  %v2665 = vsub.f32 %v120, %v2664
  %v2666 = vand.u32 %v2665, 4294901760
  %2667 = vmatpush1.msra.mxu0 %v2666
  %2668 = vmatprep.subr.mxu0 0.0
  %v2669 = vand.u32 %v121, 4294901760
  %v2670 = vsub.f32 %v121, %v2669
  %v2671 = vand.u32 %v2670, 4294901760
  %2672 = vmatpush1.msra.mxu0 %v2671
  %2673 = vmatprep.subr.mxu0 0.0
  %v2674 = vand.u32 %v122, 4294901760
  %v2675 = vsub.f32 %v122, %v2674
  %v2676 = vand.u32 %v2675, 4294901760
  %2677 = vmatpush1.msra.mxu0 %v2676
  %2678 = vmatprep.subr.mxu0 0.0
  %v2679 = vand.u32 %v123, 4294901760
  %v2680 = vsub.f32 %v123, %v2679
  %v2681 = vand.u32 %v2680, 4294901760
  %2682 = vmatpush1.msra.mxu0 %v2681
  %2683 = vmatprep.subr.mxu0 0.0
  %v2684 = vand.u32 %v124, 4294901760
  %v2685 = vsub.f32 %v124, %v2684
  %v2686 = vand.u32 %v2685, 4294901760
  %2687 = vmatpush1.msra.mxu0 %v2686
  %2688 = vmatprep.subr.mxu0 0.0
  %v2689 = vand.u32 %v125, 4294901760
  %v2690 = vsub.f32 %v125, %v2689
  %v2691 = vand.u32 %v2690, 4294901760
  %2692 = vmatpush1.msra.mxu0 %v2691
  %2693 = vmatprep.subr.mxu0 0.0
  %v2694 = vand.u32 %v126, 4294901760
  %v2695 = vsub.f32 %v126, %v2694
  %v2696 = vand.u32 %v2695, 4294901760
  %2697 = vmatpush1.msra.mxu0 %v2696
  %2698 = vmatprep.subr.mxu0 0.0
  %v2699 = vand.u32 %v127, 4294901760
  %v2700 = vsub.f32 %v127, %v2699
  %v2701 = vand.u32 %v2700, 4294901760
  %2702 = vmatpush1.msra.mxu0 %v2701
  %v2703 = vand.u32 %v211, 4294901760
  %2704 = vmatprep.mubr.f32.mxu0 %v2703
  %v2705 = vand.u32 %v203, 4294901760
  %2706 = vmatmul.mubr.f32.gmra.mrb[0].mxu0 %v2705
  %v2707 = vpop.f32.mrb[0].mxu0
  %v2708 = vadd.f32 %v2540, %v2707
  %v2709 = vpop.f32.mrb[0].mxu0
  %2710 = vdwg.mxu0
  %2711 = vmatprep.subr.mxu0 0.0
  %v2712 = vand.u32 %v96, 4294901760
  %2713 = vmatpush1.msra.mxu0 %v2712
  %2714 = vmatprep.subr.mxu0 0.0
  %v2715 = vand.u32 %v97, 4294901760
  %2716 = vmatpush1.msra.mxu0 %v2715
  %2717 = vmatprep.subr.mxu0 0.0
  %v2718 = vand.u32 %v98, 4294901760
  %2719 = vmatpush1.msra.mxu0 %v2718
  %2720 = vmatprep.subr.mxu0 0.0
  %v2721 = vand.u32 %v99, 4294901760
  %2722 = vmatpush1.msra.mxu0 %v2721
  %2723 = vmatprep.subr.mxu0 0.0
  %v2724 = vand.u32 %v100, 4294901760
  %2725 = vmatpush1.msra.mxu0 %v2724
  %2726 = vmatprep.subr.mxu0 0.0
  %v2727 = vand.u32 %v101, 4294901760
  %2728 = vmatpush1.msra.mxu0 %v2727
  %2729 = vmatprep.subr.mxu0 0.0
  %v2730 = vand.u32 %v102, 4294901760
  %2731 = vmatpush1.msra.mxu0 %v2730
  %2732 = vmatprep.subr.mxu0 0.0
  %v2733 = vand.u32 %v103, 4294901760
  %2734 = vmatpush1.msra.mxu0 %v2733
  %2735 = vmatprep.subr.mxu0 0.0
  %v2736 = vand.u32 %v104, 4294901760
  %2737 = vmatpush1.msra.mxu0 %v2736
  %2738 = vmatprep.subr.mxu0 0.0
  %v2739 = vand.u32 %v105, 4294901760
  %2740 = vmatpush1.msra.mxu0 %v2739
  %2741 = vmatprep.subr.mxu0 0.0
  %v2742 = vand.u32 %v106, 4294901760
  %2743 = vmatpush1.msra.mxu0 %v2742
  %2744 = vmatprep.subr.mxu0 0.0
  %v2745 = vand.u32 %v107, 4294901760
  %2746 = vmatpush1.msra.mxu0 %v2745
  %2747 = vmatprep.subr.mxu0 0.0
  %v2748 = vand.u32 %v108, 4294901760
  %2749 = vmatpush1.msra.mxu0 %v2748
  %2750 = vmatprep.subr.mxu0 0.0
  %v2751 = vand.u32 %v109, 4294901760
  %2752 = vmatpush1.msra.mxu0 %v2751
  %2753 = vmatprep.subr.mxu0 0.0
  %v2754 = vand.u32 %v110, 4294901760
  %2755 = vmatpush1.msra.mxu0 %v2754
  %2756 = vmatprep.subr.mxu0 0.0
  %v2757 = vand.u32 %v111, 4294901760
  %2758 = vmatpush1.msra.mxu0 %v2757
  %2759 = vmatprep.subr.mxu0 0.0
  %v2760 = vand.u32 %v112, 4294901760
  %2761 = vmatpush1.msra.mxu0 %v2760
  %2762 = vmatprep.subr.mxu0 0.0
  %v2763 = vand.u32 %v113, 4294901760
  %2764 = vmatpush1.msra.mxu0 %v2763
  %2765 = vmatprep.subr.mxu0 0.0
  %v2766 = vand.u32 %v114, 4294901760
  %2767 = vmatpush1.msra.mxu0 %v2766
  %2768 = vmatprep.subr.mxu0 0.0
  %v2769 = vand.u32 %v115, 4294901760
  %2770 = vmatpush1.msra.mxu0 %v2769
  %2771 = vmatprep.subr.mxu0 0.0
  %v2772 = vand.u32 %v116, 4294901760
  %2773 = vmatpush1.msra.mxu0 %v2772
  %2774 = vmatprep.subr.mxu0 0.0
  %v2775 = vand.u32 %v117, 4294901760
  %2776 = vmatpush1.msra.mxu0 %v2775
  %2777 = vmatprep.subr.mxu0 0.0
  %v2778 = vand.u32 %v118, 4294901760
  %2779 = vmatpush1.msra.mxu0 %v2778
  %2780 = vmatprep.subr.mxu0 0.0
  %v2781 = vand.u32 %v119, 4294901760
  %2782 = vmatpush1.msra.mxu0 %v2781
  %2783 = vmatprep.subr.mxu0 0.0
  %v2784 = vand.u32 %v120, 4294901760
  %2785 = vmatpush1.msra.mxu0 %v2784
  %2786 = vmatprep.subr.mxu0 0.0
  %v2787 = vand.u32 %v121, 4294901760
  %2788 = vmatpush1.msra.mxu0 %v2787
  %2789 = vmatprep.subr.mxu0 0.0
  %v2790 = vand.u32 %v122, 4294901760
  %2791 = vmatpush1.msra.mxu0 %v2790
  %2792 = vmatprep.subr.mxu0 0.0
  %v2793 = vand.u32 %v123, 4294901760
  %2794 = vmatpush1.msra.mxu0 %v2793
  %2795 = vmatprep.subr.mxu0 0.0
  %v2796 = vand.u32 %v124, 4294901760
  %2797 = vmatpush1.msra.mxu0 %v2796
  %2798 = vmatprep.subr.mxu0 0.0
  %v2799 = vand.u32 %v125, 4294901760
  %2800 = vmatpush1.msra.mxu0 %v2799
  %2801 = vmatprep.subr.mxu0 0.0
  %v2802 = vand.u32 %v126, 4294901760
  %2803 = vmatpush1.msra.mxu0 %v2802
  %2804 = vmatprep.subr.mxu0 0.0
  %v2805 = vand.u32 %v127, 4294901760
  %2806 = vmatpush1.msra.mxu0 %v2805
  %v2807 = vand.u32 %v211, 4294901760
  %2808 = vmatprep.mubr.f32.mxu0 %v2807
  %v2809 = vand.u32 %v203, 4294901760
  %2810 = vmatmul.mubr.f32.gmra.mrb[0].mxu0 %v2809
  %v2811 = vpop.f32.mrb[0].mxu0
  %v2812 = vadd.f32 %v2708, %v2811
  %v2813 = vpop.f32.mrb[0].mxu0
  %2814 = vdwg.mxu0
  %2815 = vmatprep.subr.mxu0 0.0
  %v2816 = vand.u32 %v128, 4294901760
  %2817 = vmatpush1.msra.mxu0 %v2816
  %2818 = vmatprep.subr.mxu0 0.0
  %v2819 = vand.u32 %v129, 4294901760
  %2820 = vmatpush1.msra.mxu0 %v2819
  %2821 = vmatprep.subr.mxu0 0.0
  %v2822 = vand.u32 %v130, 4294901760
  %2823 = vmatpush1.msra.mxu0 %v2822
  %2824 = vmatprep.subr.mxu0 0.0
  %v2825 = vand.u32 %v131, 4294901760
  %2826 = vmatpush1.msra.mxu0 %v2825
  %2827 = vmatprep.subr.mxu0 0.0
  %v2828 = vand.u32 %v132, 4294901760
  %2829 = vmatpush1.msra.mxu0 %v2828
  %2830 = vmatprep.subr.mxu0 0.0
  %v2831 = vand.u32 %v133, 4294901760
  %2832 = vmatpush1.msra.mxu0 %v2831
  %2833 = vmatprep.subr.mxu0 0.0
  %v2834 = vand.u32 %v134, 4294901760
  %2835 = vmatpush1.msra.mxu0 %v2834
  %2836 = vmatprep.subr.mxu0 0.0
  %v2837 = vand.u32 %v135, 4294901760
  %2838 = vmatpush1.msra.mxu0 %v2837
  %2839 = vmatprep.subr.mxu0 0.0
  %v2840 = vand.u32 %v136, 4294901760
  %2841 = vmatpush1.msra.mxu0 %v2840
  %2842 = vmatprep.subr.mxu0 0.0
  %v2843 = vand.u32 %v137, 4294901760
  %2844 = vmatpush1.msra.mxu0 %v2843
  %2845 = vmatprep.subr.mxu0 0.0
  %v2846 = vand.u32 %v138, 4294901760
  %2847 = vmatpush1.msra.mxu0 %v2846
  %2848 = vmatprep.subr.mxu0 0.0
  %v2849 = vand.u32 %v139, 4294901760
  %2850 = vmatpush1.msra.mxu0 %v2849
  %2851 = vmatprep.subr.mxu0 0.0
  %v2852 = vand.u32 %v140, 4294901760
  %2853 = vmatpush1.msra.mxu0 %v2852
  %2854 = vmatprep.subr.mxu0 0.0
  %v2855 = vand.u32 %v141, 4294901760
  %2856 = vmatpush1.msra.mxu0 %v2855
  %2857 = vmatprep.subr.mxu0 0.0
  %v2858 = vand.u32 %v142, 4294901760
  %2859 = vmatpush1.msra.mxu0 %v2858
  %2860 = vmatprep.subr.mxu0 0.0
  %v2861 = vand.u32 %v143, 4294901760
  %2862 = vmatpush1.msra.mxu0 %v2861
  %2863 = vmatprep.subr.mxu0 0.0
  %v2864 = vand.u32 %v144, 4294901760
  %2865 = vmatpush1.msra.mxu0 %v2864
  %2866 = vmatprep.subr.mxu0 0.0
  %v2867 = vand.u32 %v145, 4294901760
  %2868 = vmatpush1.msra.mxu0 %v2867
  %2869 = vmatprep.subr.mxu0 0.0
  %v2870 = vand.u32 %v146, 4294901760
  %2871 = vmatpush1.msra.mxu0 %v2870
  %2872 = vmatprep.subr.mxu0 0.0
  %v2873 = vand.u32 %v147, 4294901760
  %2874 = vmatpush1.msra.mxu0 %v2873
  %2875 = vmatprep.subr.mxu0 0.0
  %v2876 = vand.u32 %v148, 4294901760
  %2877 = vmatpush1.msra.mxu0 %v2876
  %2878 = vmatprep.subr.mxu0 0.0
  %v2879 = vand.u32 %v149, 4294901760
  %2880 = vmatpush1.msra.mxu0 %v2879
  %2881 = vmatprep.subr.mxu0 0.0
  %v2882 = vand.u32 %v150, 4294901760
  %2883 = vmatpush1.msra.mxu0 %v2882
  %2884 = vmatprep.subr.mxu0 0.0
  %v2885 = vand.u32 %v151, 4294901760
  %2886 = vmatpush1.msra.mxu0 %v2885
  %2887 = vmatprep.subr.mxu0 0.0
  %v2888 = vand.u32 %v152, 4294901760
  %2889 = vmatpush1.msra.mxu0 %v2888
  %2890 = vmatprep.subr.mxu0 0.0
  %v2891 = vand.u32 %v153, 4294901760
  %2892 = vmatpush1.msra.mxu0 %v2891
  %2893 = vmatprep.subr.mxu0 0.0
  %v2894 = vand.u32 %v154, 4294901760
  %2895 = vmatpush1.msra.mxu0 %v2894
  %2896 = vmatprep.subr.mxu0 0.0
  %v2897 = vand.u32 %v155, 4294901760
  %2898 = vmatpush1.msra.mxu0 %v2897
  %2899 = vmatprep.subr.mxu0 0.0
  %v2900 = vand.u32 %v156, 4294901760
  %2901 = vmatpush1.msra.mxu0 %v2900
  %2902 = vmatprep.subr.mxu0 0.0
  %v2903 = vand.u32 %v157, 4294901760
  %2904 = vmatpush1.msra.mxu0 %v2903
  %2905 = vmatprep.subr.mxu0 0.0
  %v2906 = vand.u32 %v158, 4294901760
  %2907 = vmatpush1.msra.mxu0 %v2906
  %2908 = vmatprep.subr.mxu0 0.0
  %v2909 = vand.u32 %v159, 4294901760
  %2910 = vmatpush1.msra.mxu0 %v2909
  %v2911 = vand.u32 %v212, 4294901760
  %v2912 = vsub.f32 %v212, %v2911
  %v2913 = vand.u32 %v2912, 4294901760
  %v2914 = vsub.f32 %v2912, %v2913
  %v2915 = vand.u32 %v2914, 4294901760
  %2916 = vmatprep.mubr.f32.mxu0 %v2915
  %v2917 = vand.u32 %v210, 4294901760
  %v2918 = vsub.f32 %v210, %v2917
  %v2919 = vand.u32 %v2918, 4294901760
  %v2920 = vsub.f32 %v2918, %v2919
  %v2921 = vand.u32 %v2920, 4294901760
  %2922 = vmatmul.mubr.f32.gmra.mrb[0].mxu0 %v2921
  %v2923 = vpop.f32.mrb[0].mxu0
  %v2924 = vadd.f32 %v2812, %v2923
  %v2925 = vpop.f32.mrb[0].mxu0
  %2926 = vdwg.mxu0
  %2927 = vmatprep.subr.mxu0 0.0
  %v2928 = vand.u32 %v128, 4294901760
  %v2929 = vsub.f32 %v128, %v2928
  %v2930 = vand.u32 %v2929, 4294901760
  %v2931 = vsub.f32 %v2929, %v2930
  %v2932 = vand.u32 %v2931, 4294901760
  %2933 = vmatpush1.msra.mxu0 %v2932
  %2934 = vmatprep.subr.mxu0 0.0
  %v2935 = vand.u32 %v129, 4294901760
  %v2936 = vsub.f32 %v129, %v2935
  %v2937 = vand.u32 %v2936, 4294901760
  %v2938 = vsub.f32 %v2936, %v2937
  %v2939 = vand.u32 %v2938, 4294901760
  %2940 = vmatpush1.msra.mxu0 %v2939
  %2941 = vmatprep.subr.mxu0 0.0
  %v2942 = vand.u32 %v130, 4294901760
  %v2943 = vsub.f32 %v130, %v2942
  %v2944 = vand.u32 %v2943, 4294901760
  %v2945 = vsub.f32 %v2943, %v2944
  %v2946 = vand.u32 %v2945, 4294901760
  %2947 = vmatpush1.msra.mxu0 %v2946
  %2948 = vmatprep.subr.mxu0 0.0
  %v2949 = vand.u32 %v131, 4294901760
  %v2950 = vsub.f32 %v131, %v2949
  %v2951 = vand.u32 %v2950, 4294901760
  %v2952 = vsub.f32 %v2950, %v2951
  %v2953 = vand.u32 %v2952, 4294901760
  %2954 = vmatpush1.msra.mxu0 %v2953
  %2955 = vmatprep.subr.mxu0 0.0
  %v2956 = vand.u32 %v132, 4294901760
  %v2957 = vsub.f32 %v132, %v2956
  %v2958 = vand.u32 %v2957, 4294901760
  %v2959 = vsub.f32 %v2957, %v2958
  %v2960 = vand.u32 %v2959, 4294901760
  %2961 = vmatpush1.msra.mxu0 %v2960
  %2962 = vmatprep.subr.mxu0 0.0
  %v2963 = vand.u32 %v133, 4294901760
  %v2964 = vsub.f32 %v133, %v2963
  %v2965 = vand.u32 %v2964, 4294901760
  %v2966 = vsub.f32 %v2964, %v2965
  %v2967 = vand.u32 %v2966, 4294901760
  %2968 = vmatpush1.msra.mxu0 %v2967
  %2969 = vmatprep.subr.mxu0 0.0
  %v2970 = vand.u32 %v134, 4294901760
  %v2971 = vsub.f32 %v134, %v2970
  %v2972 = vand.u32 %v2971, 4294901760
  %v2973 = vsub.f32 %v2971, %v2972
  %v2974 = vand.u32 %v2973, 4294901760
  %2975 = vmatpush1.msra.mxu0 %v2974
  %2976 = vmatprep.subr.mxu0 0.0
  %v2977 = vand.u32 %v135, 4294901760
  %v2978 = vsub.f32 %v135, %v2977
  %v2979 = vand.u32 %v2978, 4294901760
  %v2980 = vsub.f32 %v2978, %v2979
  %v2981 = vand.u32 %v2980, 4294901760
  %2982 = vmatpush1.msra.mxu0 %v2981
  %2983 = vmatprep.subr.mxu0 0.0
  %v2984 = vand.u32 %v136, 4294901760
  %v2985 = vsub.f32 %v136, %v2984
  %v2986 = vand.u32 %v2985, 4294901760
  %v2987 = vsub.f32 %v2985, %v2986
  %v2988 = vand.u32 %v2987, 4294901760
  %2989 = vmatpush1.msra.mxu0 %v2988
  %2990 = vmatprep.subr.mxu0 0.0
  %v2991 = vand.u32 %v137, 4294901760
  %v2992 = vsub.f32 %v137, %v2991
  %v2993 = vand.u32 %v2992, 4294901760
  %v2994 = vsub.f32 %v2992, %v2993
  %v2995 = vand.u32 %v2994, 4294901760
  %2996 = vmatpush1.msra.mxu0 %v2995
  %2997 = vmatprep.subr.mxu0 0.0
  %v2998 = vand.u32 %v138, 4294901760
  %v2999 = vsub.f32 %v138, %v2998
  %v3000 = vand.u32 %v2999, 4294901760
  %v3001 = vsub.f32 %v2999, %v3000
  %v3002 = vand.u32 %v3001, 4294901760
  %3003 = vmatpush1.msra.mxu0 %v3002
  %3004 = vmatprep.subr.mxu0 0.0
  %v3005 = vand.u32 %v139, 4294901760
  %v3006 = vsub.f32 %v139, %v3005
  %v3007 = vand.u32 %v3006, 4294901760
  %v3008 = vsub.f32 %v3006, %v3007
  %v3009 = vand.u32 %v3008, 4294901760
  %3010 = vmatpush1.msra.mxu0 %v3009
  %3011 = vmatprep.subr.mxu0 0.0
  %v3012 = vand.u32 %v140, 4294901760
  %v3013 = vsub.f32 %v140, %v3012
  %v3014 = vand.u32 %v3013, 4294901760
  %v3015 = vsub.f32 %v3013, %v3014
  %v3016 = vand.u32 %v3015, 4294901760
  %3017 = vmatpush1.msra.mxu0 %v3016
  %3018 = vmatprep.subr.mxu0 0.0
  %v3019 = vand.u32 %v141, 4294901760
  %v3020 = vsub.f32 %v141, %v3019
  %v3021 = vand.u32 %v3020, 4294901760
  %v3022 = vsub.f32 %v3020, %v3021
  %v3023 = vand.u32 %v3022, 4294901760
  %3024 = vmatpush1.msra.mxu0 %v3023
  %3025 = vmatprep.subr.mxu0 0.0
  %v3026 = vand.u32 %v142, 4294901760
  %v3027 = vsub.f32 %v142, %v3026
  %v3028 = vand.u32 %v3027, 4294901760
  %v3029 = vsub.f32 %v3027, %v3028
  %v3030 = vand.u32 %v3029, 4294901760
  %3031 = vmatpush1.msra.mxu0 %v3030
  %3032 = vmatprep.subr.mxu0 0.0
  %v3033 = vand.u32 %v143, 4294901760
  %v3034 = vsub.f32 %v143, %v3033
  %v3035 = vand.u32 %v3034, 4294901760
  %v3036 = vsub.f32 %v3034, %v3035
  %v3037 = vand.u32 %v3036, 4294901760
  %3038 = vmatpush1.msra.mxu0 %v3037
  %3039 = vmatprep.subr.mxu0 0.0
  %v3040 = vand.u32 %v144, 4294901760
  %v3041 = vsub.f32 %v144, %v3040
  %v3042 = vand.u32 %v3041, 4294901760
  %v3043 = vsub.f32 %v3041, %v3042
  %v3044 = vand.u32 %v3043, 4294901760
  %3045 = vmatpush1.msra.mxu0 %v3044
  %3046 = vmatprep.subr.mxu0 0.0
  %v3047 = vand.u32 %v145, 4294901760
  %v3048 = vsub.f32 %v145, %v3047
  %v3049 = vand.u32 %v3048, 4294901760
  %v3050 = vsub.f32 %v3048, %v3049
  %v3051 = vand.u32 %v3050, 4294901760
  %3052 = vmatpush1.msra.mxu0 %v3051
  %3053 = vmatprep.subr.mxu0 0.0
  %v3054 = vand.u32 %v146, 4294901760
  %v3055 = vsub.f32 %v146, %v3054
  %v3056 = vand.u32 %v3055, 4294901760
  %v3057 = vsub.f32 %v3055, %v3056
  %v3058 = vand.u32 %v3057, 4294901760
  %3059 = vmatpush1.msra.mxu0 %v3058
  %3060 = vmatprep.subr.mxu0 0.0
  %v3061 = vand.u32 %v147, 4294901760
  %v3062 = vsub.f32 %v147, %v3061
  %v3063 = vand.u32 %v3062, 4294901760
  %v3064 = vsub.f32 %v3062, %v3063
  %v3065 = vand.u32 %v3064, 4294901760
  %3066 = vmatpush1.msra.mxu0 %v3065
  %3067 = vmatprep.subr.mxu0 0.0
  %v3068 = vand.u32 %v148, 4294901760
  %v3069 = vsub.f32 %v148, %v3068
  %v3070 = vand.u32 %v3069, 4294901760
  %v3071 = vsub.f32 %v3069, %v3070
  %v3072 = vand.u32 %v3071, 4294901760
  %3073 = vmatpush1.msra.mxu0 %v3072
  %3074 = vmatprep.subr.mxu0 0.0
  %v3075 = vand.u32 %v149, 4294901760
  %v3076 = vsub.f32 %v149, %v3075
  %v3077 = vand.u32 %v3076, 4294901760
  %v3078 = vsub.f32 %v3076, %v3077
  %v3079 = vand.u32 %v3078, 4294901760
  %3080 = vmatpush1.msra.mxu0 %v3079
  %3081 = vmatprep.subr.mxu0 0.0
  %v3082 = vand.u32 %v150, 4294901760
  %v3083 = vsub.f32 %v150, %v3082
  %v3084 = vand.u32 %v3083, 4294901760
  %v3085 = vsub.f32 %v3083, %v3084
  %v3086 = vand.u32 %v3085, 4294901760
  %3087 = vmatpush1.msra.mxu0 %v3086
  %3088 = vmatprep.subr.mxu0 0.0
  %v3089 = vand.u32 %v151, 4294901760
  %v3090 = vsub.f32 %v151, %v3089
  %v3091 = vand.u32 %v3090, 4294901760
  %v3092 = vsub.f32 %v3090, %v3091
  %v3093 = vand.u32 %v3092, 4294901760
  %3094 = vmatpush1.msra.mxu0 %v3093
  %3095 = vmatprep.subr.mxu0 0.0
  %v3096 = vand.u32 %v152, 4294901760
  %v3097 = vsub.f32 %v152, %v3096
  %v3098 = vand.u32 %v3097, 4294901760
  %v3099 = vsub.f32 %v3097, %v3098
  %v3100 = vand.u32 %v3099, 4294901760
  %3101 = vmatpush1.msra.mxu0 %v3100
  %3102 = vmatprep.subr.mxu0 0.0
  %v3103 = vand.u32 %v153, 4294901760
  %v3104 = vsub.f32 %v153, %v3103
  %v3105 = vand.u32 %v3104, 4294901760
  %v3106 = vsub.f32 %v3104, %v3105
  %v3107 = vand.u32 %v3106, 4294901760
  %3108 = vmatpush1.msra.mxu0 %v3107
  %3109 = vmatprep.subr.mxu0 0.0
  %v3110 = vand.u32 %v154, 4294901760
  %v3111 = vsub.f32 %v154, %v3110
  %v3112 = vand.u32 %v3111, 4294901760
  %v3113 = vsub.f32 %v3111, %v3112
  %v3114 = vand.u32 %v3113, 4294901760
  %3115 = vmatpush1.msra.mxu0 %v3114
  %3116 = vmatprep.subr.mxu0 0.0
  %v3117 = vand.u32 %v155, 4294901760
  %v3118 = vsub.f32 %v155, %v3117
  %v3119 = vand.u32 %v3118, 4294901760
  %v3120 = vsub.f32 %v3118, %v3119
  %v3121 = vand.u32 %v3120, 4294901760
  %3122 = vmatpush1.msra.mxu0 %v3121
  %3123 = vmatprep.subr.mxu0 0.0
  %v3124 = vand.u32 %v156, 4294901760
  %v3125 = vsub.f32 %v156, %v3124
  %v3126 = vand.u32 %v3125, 4294901760
  %v3127 = vsub.f32 %v3125, %v3126
  %v3128 = vand.u32 %v3127, 4294901760
  %3129 = vmatpush1.msra.mxu0 %v3128
  %3130 = vmatprep.subr.mxu0 0.0
  %v3131 = vand.u32 %v157, 4294901760
  %v3132 = vsub.f32 %v157, %v3131
  %v3133 = vand.u32 %v3132, 4294901760
  %v3134 = vsub.f32 %v3132, %v3133
  %v3135 = vand.u32 %v3134, 4294901760
  %3136 = vmatpush1.msra.mxu0 %v3135
  %3137 = vmatprep.subr.mxu0 0.0
  %v3138 = vand.u32 %v158, 4294901760
  %v3139 = vsub.f32 %v158, %v3138
  %v3140 = vand.u32 %v3139, 4294901760
  %v3141 = vsub.f32 %v3139, %v3140
  %v3142 = vand.u32 %v3141, 4294901760
  %3143 = vmatpush1.msra.mxu0 %v3142
  %3144 = vmatprep.subr.mxu0 0.0
  %v3145 = vand.u32 %v159, 4294901760
  %v3146 = vsub.f32 %v159, %v3145
  %v3147 = vand.u32 %v3146, 4294901760
  %v3148 = vsub.f32 %v3146, %v3147
  %v3149 = vand.u32 %v3148, 4294901760
  %3150 = vmatpush1.msra.mxu0 %v3149
  %v3151 = vand.u32 %v212, 4294901760
  %3152 = vmatprep.mubr.f32.mxu0 %v3151
  %v3153 = vand.u32 %v210, 4294901760
  %3154 = vmatmul.mubr.f32.gmra.mrb[0].mxu0 %v3153
  %v3155 = vpop.f32.mrb[0].mxu0
  %v3156 = vadd.f32 %v2924, %v3155
  %v3157 = vpop.f32.mrb[0].mxu0
  %3158 = vdwg.mxu0
  %3159 = vmatprep.subr.mxu0 0.0
  %v3160 = vand.u32 %v128, 4294901760
  %v3161 = vsub.f32 %v128, %v3160
  %3162 = vmatpush1.msra.mxu0 %v3161
  %3163 = vmatprep.subr.mxu0 0.0
  %v3164 = vand.u32 %v129, 4294901760
  %v3165 = vsub.f32 %v129, %v3164
  %3166 = vmatpush1.msra.mxu0 %v3165
  %3167 = vmatprep.subr.mxu0 0.0
  %v3168 = vand.u32 %v130, 4294901760
  %v3169 = vsub.f32 %v130, %v3168
  %3170 = vmatpush1.msra.mxu0 %v3169
  %3171 = vmatprep.subr.mxu0 0.0
  %v3172 = vand.u32 %v131, 4294901760
  %v3173 = vsub.f32 %v131, %v3172
  %3174 = vmatpush1.msra.mxu0 %v3173
  %3175 = vmatprep.subr.mxu0 0.0
  %v3176 = vand.u32 %v132, 4294901760
  %v3177 = vsub.f32 %v132, %v3176
  %3178 = vmatpush1.msra.mxu0 %v3177
  %3179 = vmatprep.subr.mxu0 0.0
  %v3180 = vand.u32 %v133, 4294901760
  %v3181 = vsub.f32 %v133, %v3180
  %3182 = vmatpush1.msra.mxu0 %v3181
  %3183 = vmatprep.subr.mxu0 0.0
  %v3184 = vand.u32 %v134, 4294901760
  %v3185 = vsub.f32 %v134, %v3184
  %3186 = vmatpush1.msra.mxu0 %v3185
  %3187 = vmatprep.subr.mxu0 0.0
  %v3188 = vand.u32 %v135, 4294901760
  %v3189 = vsub.f32 %v135, %v3188
  %3190 = vmatpush1.msra.mxu0 %v3189
  %3191 = vmatprep.subr.mxu0 0.0
  %v3192 = vand.u32 %v136, 4294901760
  %v3193 = vsub.f32 %v136, %v3192
  %3194 = vmatpush1.msra.mxu0 %v3193
  %3195 = vmatprep.subr.mxu0 0.0
  %v3196 = vand.u32 %v137, 4294901760
  %v3197 = vsub.f32 %v137, %v3196
  %3198 = vmatpush1.msra.mxu0 %v3197
  %3199 = vmatprep.subr.mxu0 0.0
  %v3200 = vand.u32 %v138, 4294901760
  %v3201 = vsub.f32 %v138, %v3200
  %3202 = vmatpush1.msra.mxu0 %v3201
  %3203 = vmatprep.subr.mxu0 0.0
  %v3204 = vand.u32 %v139, 4294901760
  %v3205 = vsub.f32 %v139, %v3204
  %3206 = vmatpush1.msra.mxu0 %v3205
  %3207 = vmatprep.subr.mxu0 0.0
  %v3208 = vand.u32 %v140, 4294901760
  %v3209 = vsub.f32 %v140, %v3208
  %3210 = vmatpush1.msra.mxu0 %v3209
  %3211 = vmatprep.subr.mxu0 0.0
  %v3212 = vand.u32 %v141, 4294901760
  %v3213 = vsub.f32 %v141, %v3212
  %3214 = vmatpush1.msra.mxu0 %v3213
  %3215 = vmatprep.subr.mxu0 0.0
  %v3216 = vand.u32 %v142, 4294901760
  %v3217 = vsub.f32 %v142, %v3216
  %3218 = vmatpush1.msra.mxu0 %v3217
  %3219 = vmatprep.subr.mxu0 0.0
  %v3220 = vand.u32 %v143, 4294901760
  %v3221 = vsub.f32 %v143, %v3220
  %3222 = vmatpush1.msra.mxu0 %v3221
  %3223 = vmatprep.subr.mxu0 0.0
  %v3224 = vand.u32 %v144, 4294901760
  %v3225 = vsub.f32 %v144, %v3224
  %3226 = vmatpush1.msra.mxu0 %v3225
  %3227 = vmatprep.subr.mxu0 0.0
  %v3228 = vand.u32 %v145, 4294901760
  %v3229 = vsub.f32 %v145, %v3228
  %3230 = vmatpush1.msra.mxu0 %v3229
  %3231 = vmatprep.subr.mxu0 0.0
  %v3232 = vand.u32 %v146, 4294901760
  %v3233 = vsub.f32 %v146, %v3232
  %3234 = vmatpush1.msra.mxu0 %v3233
  %3235 = vmatprep.subr.mxu0 0.0
  %v3236 = vand.u32 %v147, 4294901760
  %v3237 = vsub.f32 %v147, %v3236
  %3238 = vmatpush1.msra.mxu0 %v3237
  %3239 = vmatprep.subr.mxu0 0.0
  %v3240 = vand.u32 %v148, 4294901760
  %v3241 = vsub.f32 %v148, %v3240
  %3242 = vmatpush1.msra.mxu0 %v3241
  %3243 = vmatprep.subr.mxu0 0.0
  %v3244 = vand.u32 %v149, 4294901760
  %v3245 = vsub.f32 %v149, %v3244
  %3246 = vmatpush1.msra.mxu0 %v3245
  %3247 = vmatprep.subr.mxu0 0.0
  %v3248 = vand.u32 %v150, 4294901760
  %v3249 = vsub.f32 %v150, %v3248
  %3250 = vmatpush1.msra.mxu0 %v3249
  %3251 = vmatprep.subr.mxu0 0.0
  %v3252 = vand.u32 %v151, 4294901760
  %v3253 = vsub.f32 %v151, %v3252
  %3254 = vmatpush1.msra.mxu0 %v3253
  %3255 = vmatprep.subr.mxu0 0.0
  %v3256 = vand.u32 %v152, 4294901760
  %v3257 = vsub.f32 %v152, %v3256
  %3258 = vmatpush1.msra.mxu0 %v3257
  %3259 = vmatprep.subr.mxu0 0.0
  %v3260 = vand.u32 %v153, 4294901760
  %v3261 = vsub.f32 %v153, %v3260
  %3262 = vmatpush1.msra.mxu0 %v3261
  %3263 = vmatprep.subr.mxu0 0.0
  %v3264 = vand.u32 %v154, 4294901760
  %v3265 = vsub.f32 %v154, %v3264
  %3266 = vmatpush1.msra.mxu0 %v3265
  %3267 = vmatprep.subr.mxu0 0.0
  %v3268 = vand.u32 %v155, 4294901760
  %v3269 = vsub.f32 %v155, %v3268
  %3270 = vmatpush1.msra.mxu0 %v3269
  %3271 = vmatprep.subr.mxu0 0.0
  %v3272 = vand.u32 %v156, 4294901760
  %v3273 = vsub.f32 %v156, %v3272
  %3274 = vmatpush1.msra.mxu0 %v3273
  %3275 = vmatprep.subr.mxu0 0.0
  %v3276 = vand.u32 %v157, 4294901760
  %v3277 = vsub.f32 %v157, %v3276
  %3278 = vmatpush1.msra.mxu0 %v3277
  %3279 = vmatprep.subr.mxu0 0.0
  %v3280 = vand.u32 %v158, 4294901760
  %v3281 = vsub.f32 %v158, %v3280
  %3282 = vmatpush1.msra.mxu0 %v3281
  %3283 = vmatprep.subr.mxu0 0.0
  %v3284 = vand.u32 %v159, 4294901760
  %v3285 = vsub.f32 %v159, %v3284
  %3286 = vmatpush1.msra.mxu0 %v3285
  %v3287 = vand.u32 %v212, 4294901760
  %v3288 = vsub.f32 %v212, %v3287
  %3289 = vmatprep.mubr.f32.mxu0 %v3288
  %v3290 = vand.u32 %v210, 4294901760
  %v3291 = vsub.f32 %v210, %v3290
  %3292 = vmatmul.mubr.f32.gmra.mrb[0].mxu0 %v3291
  %v3293 = vpop.f32.mrb[0].mxu0
  %v3294 = vadd.f32 %v3156, %v3293
  %v3295 = vpop.f32.mrb[0].mxu0
  %3296 = vdwg.mxu0
  %3297 = vmatprep.subr.mxu0 0.0
  %v3298 = vand.u32 %v128, 4294901760
  %3299 = vmatpush1.msra.mxu0 %v3298
  %3300 = vmatprep.subr.mxu0 0.0
  %v3301 = vand.u32 %v129, 4294901760
  %3302 = vmatpush1.msra.mxu0 %v3301
  %3303 = vmatprep.subr.mxu0 0.0
  %v3304 = vand.u32 %v130, 4294901760
  %3305 = vmatpush1.msra.mxu0 %v3304
  %3306 = vmatprep.subr.mxu0 0.0
  %v3307 = vand.u32 %v131, 4294901760
  %3308 = vmatpush1.msra.mxu0 %v3307
  %3309 = vmatprep.subr.mxu0 0.0
  %v3310 = vand.u32 %v132, 4294901760
  %3311 = vmatpush1.msra.mxu0 %v3310
  %3312 = vmatprep.subr.mxu0 0.0
  %v3313 = vand.u32 %v133, 4294901760
  %3314 = vmatpush1.msra.mxu0 %v3313
  %3315 = vmatprep.subr.mxu0 0.0
  %v3316 = vand.u32 %v134, 4294901760
  %3317 = vmatpush1.msra.mxu0 %v3316
  %3318 = vmatprep.subr.mxu0 0.0
  %v3319 = vand.u32 %v135, 4294901760
  %3320 = vmatpush1.msra.mxu0 %v3319
  %3321 = vmatprep.subr.mxu0 0.0
  %v3322 = vand.u32 %v136, 4294901760
  %3323 = vmatpush1.msra.mxu0 %v3322
  %3324 = vmatprep.subr.mxu0 0.0
  %v3325 = vand.u32 %v137, 4294901760
  %3326 = vmatpush1.msra.mxu0 %v3325
  %3327 = vmatprep.subr.mxu0 0.0
  %v3328 = vand.u32 %v138, 4294901760
  %3329 = vmatpush1.msra.mxu0 %v3328
  %3330 = vmatprep.subr.mxu0 0.0
  %v3331 = vand.u32 %v139, 4294901760
  %3332 = vmatpush1.msra.mxu0 %v3331
  %3333 = vmatprep.subr.mxu0 0.0
  %v3334 = vand.u32 %v140, 4294901760
  %3335 = vmatpush1.msra.mxu0 %v3334
  %3336 = vmatprep.subr.mxu0 0.0
  %v3337 = vand.u32 %v141, 4294901760
  %3338 = vmatpush1.msra.mxu0 %v3337
  %3339 = vmatprep.subr.mxu0 0.0
  %v3340 = vand.u32 %v142, 4294901760
  %3341 = vmatpush1.msra.mxu0 %v3340
  %3342 = vmatprep.subr.mxu0 0.0
  %v3343 = vand.u32 %v143, 4294901760
  %3344 = vmatpush1.msra.mxu0 %v3343
  %3345 = vmatprep.subr.mxu0 0.0
  %v3346 = vand.u32 %v144, 4294901760
  %3347 = vmatpush1.msra.mxu0 %v3346
  %3348 = vmatprep.subr.mxu0 0.0
  %v3349 = vand.u32 %v145, 4294901760
  %3350 = vmatpush1.msra.mxu0 %v3349
  %3351 = vmatprep.subr.mxu0 0.0
  %v3352 = vand.u32 %v146, 4294901760
  %3353 = vmatpush1.msra.mxu0 %v3352
  %3354 = vmatprep.subr.mxu0 0.0
  %v3355 = vand.u32 %v147, 4294901760
  %3356 = vmatpush1.msra.mxu0 %v3355
  %3357 = vmatprep.subr.mxu0 0.0
  %v3358 = vand.u32 %v148, 4294901760
  %3359 = vmatpush1.msra.mxu0 %v3358
  %3360 = vmatprep.subr.mxu0 0.0
  %v3361 = vand.u32 %v149, 4294901760
  %3362 = vmatpush1.msra.mxu0 %v3361
  %3363 = vmatprep.subr.mxu0 0.0
  %v3364 = vand.u32 %v150, 4294901760
  %3365 = vmatpush1.msra.mxu0 %v3364
  %3366 = vmatprep.subr.mxu0 0.0
  %v3367 = vand.u32 %v151, 4294901760
  %3368 = vmatpush1.msra.mxu0 %v3367
  %3369 = vmatprep.subr.mxu0 0.0
  %v3370 = vand.u32 %v152, 4294901760
  %3371 = vmatpush1.msra.mxu0 %v3370
  %3372 = vmatprep.subr.mxu0 0.0
  %v3373 = vand.u32 %v153, 4294901760
  %3374 = vmatpush1.msra.mxu0 %v3373
  %3375 = vmatprep.subr.mxu0 0.0
  %v3376 = vand.u32 %v154, 4294901760
  %3377 = vmatpush1.msra.mxu0 %v3376
  %3378 = vmatprep.subr.mxu0 0.0
  %v3379 = vand.u32 %v155, 4294901760
  %3380 = vmatpush1.msra.mxu0 %v3379
  %3381 = vmatprep.subr.mxu0 0.0
  %v3382 = vand.u32 %v156, 4294901760
  %3383 = vmatpush1.msra.mxu0 %v3382
  %3384 = vmatprep.subr.mxu0 0.0
  %v3385 = vand.u32 %v157, 4294901760
  %3386 = vmatpush1.msra.mxu0 %v3385
  %3387 = vmatprep.subr.mxu0 0.0
  %v3388 = vand.u32 %v158, 4294901760
  %3389 = vmatpush1.msra.mxu0 %v3388
  %3390 = vmatprep.subr.mxu0 0.0
  %v3391 = vand.u32 %v159, 4294901760
  %3392 = vmatpush1.msra.mxu0 %v3391
  %v3393 = vand.u32 %v212, 4294901760
  %v3394 = vsub.f32 %v212, %v3393
  %v3395 = vand.u32 %v3394, 4294901760
  %3396 = vmatprep.mubr.f32.mxu0 %v3395
  %v3397 = vand.u32 %v210, 4294901760
  %v3398 = vsub.f32 %v210, %v3397
  %v3399 = vand.u32 %v3398, 4294901760
  %3400 = vmatmul.mubr.f32.gmra.mrb[0].mxu0 %v3399
  %v3401 = vpop.f32.mrb[0].mxu0
  %v3402 = vadd.f32 %v3294, %v3401
  %v3403 = vpop.f32.mrb[0].mxu0
  %3404 = vdwg.mxu0
  %3405 = vmatprep.subr.mxu0 0.0
  %v3406 = vand.u32 %v128, 4294901760
  %v3407 = vsub.f32 %v128, %v3406
  %v3408 = vand.u32 %v3407, 4294901760
  %3409 = vmatpush1.msra.mxu0 %v3408
  %3410 = vmatprep.subr.mxu0 0.0
  %v3411 = vand.u32 %v129, 4294901760
  %v3412 = vsub.f32 %v129, %v3411
  %v3413 = vand.u32 %v3412, 4294901760
  %3414 = vmatpush1.msra.mxu0 %v3413
  %3415 = vmatprep.subr.mxu0 0.0
  %v3416 = vand.u32 %v130, 4294901760
  %v3417 = vsub.f32 %v130, %v3416
  %v3418 = vand.u32 %v3417, 4294901760
  %3419 = vmatpush1.msra.mxu0 %v3418
  %3420 = vmatprep.subr.mxu0 0.0
  %v3421 = vand.u32 %v131, 4294901760
  %v3422 = vsub.f32 %v131, %v3421
  %v3423 = vand.u32 %v3422, 4294901760
  %3424 = vmatpush1.msra.mxu0 %v3423
  %3425 = vmatprep.subr.mxu0 0.0
  %v3426 = vand.u32 %v132, 4294901760
  %v3427 = vsub.f32 %v132, %v3426
  %v3428 = vand.u32 %v3427, 4294901760
  %3429 = vmatpush1.msra.mxu0 %v3428
  %3430 = vmatprep.subr.mxu0 0.0
  %v3431 = vand.u32 %v133, 4294901760
  %v3432 = vsub.f32 %v133, %v3431
  %v3433 = vand.u32 %v3432, 4294901760
  %3434 = vmatpush1.msra.mxu0 %v3433
  %3435 = vmatprep.subr.mxu0 0.0
  %v3436 = vand.u32 %v134, 4294901760
  %v3437 = vsub.f32 %v134, %v3436
  %v3438 = vand.u32 %v3437, 4294901760
  %3439 = vmatpush1.msra.mxu0 %v3438
  %3440 = vmatprep.subr.mxu0 0.0
  %v3441 = vand.u32 %v135, 4294901760
  %v3442 = vsub.f32 %v135, %v3441
  %v3443 = vand.u32 %v3442, 4294901760
  %3444 = vmatpush1.msra.mxu0 %v3443
  %3445 = vmatprep.subr.mxu0 0.0
  %v3446 = vand.u32 %v136, 4294901760
  %v3447 = vsub.f32 %v136, %v3446
  %v3448 = vand.u32 %v3447, 4294901760
  %3449 = vmatpush1.msra.mxu0 %v3448
  %3450 = vmatprep.subr.mxu0 0.0
  %v3451 = vand.u32 %v137, 4294901760
  %v3452 = vsub.f32 %v137, %v3451
  %v3453 = vand.u32 %v3452, 4294901760
  %3454 = vmatpush1.msra.mxu0 %v3453
  %3455 = vmatprep.subr.mxu0 0.0
  %v3456 = vand.u32 %v138, 4294901760
  %v3457 = vsub.f32 %v138, %v3456
  %v3458 = vand.u32 %v3457, 4294901760
  %3459 = vmatpush1.msra.mxu0 %v3458
  %3460 = vmatprep.subr.mxu0 0.0
  %v3461 = vand.u32 %v139, 4294901760
  %v3462 = vsub.f32 %v139, %v3461
  %v3463 = vand.u32 %v3462, 4294901760
  %3464 = vmatpush1.msra.mxu0 %v3463
  %3465 = vmatprep.subr.mxu0 0.0
  %v3466 = vand.u32 %v140, 4294901760
  %v3467 = vsub.f32 %v140, %v3466
  %v3468 = vand.u32 %v3467, 4294901760
  %3469 = vmatpush1.msra.mxu0 %v3468
  %3470 = vmatprep.subr.mxu0 0.0
  %v3471 = vand.u32 %v141, 4294901760
  %v3472 = vsub.f32 %v141, %v3471
  %v3473 = vand.u32 %v3472, 4294901760
  %3474 = vmatpush1.msra.mxu0 %v3473
  %3475 = vmatprep.subr.mxu0 0.0
  %v3476 = vand.u32 %v142, 4294901760
  %v3477 = vsub.f32 %v142, %v3476
  %v3478 = vand.u32 %v3477, 4294901760
  %3479 = vmatpush1.msra.mxu0 %v3478
  %3480 = vmatprep.subr.mxu0 0.0
  %v3481 = vand.u32 %v143, 4294901760
  %v3482 = vsub.f32 %v143, %v3481
  %v3483 = vand.u32 %v3482, 4294901760
  %3484 = vmatpush1.msra.mxu0 %v3483
  %3485 = vmatprep.subr.mxu0 0.0
  %v3486 = vand.u32 %v144, 4294901760
  %v3487 = vsub.f32 %v144, %v3486
  %v3488 = vand.u32 %v3487, 4294901760
  %3489 = vmatpush1.msra.mxu0 %v3488
  %3490 = vmatprep.subr.mxu0 0.0
  %v3491 = vand.u32 %v145, 4294901760
  %v3492 = vsub.f32 %v145, %v3491
  %v3493 = vand.u32 %v3492, 4294901760
  %3494 = vmatpush1.msra.mxu0 %v3493
  %3495 = vmatprep.subr.mxu0 0.0
  %v3496 = vand.u32 %v146, 4294901760
  %v3497 = vsub.f32 %v146, %v3496
  %v3498 = vand.u32 %v3497, 4294901760
  %3499 = vmatpush1.msra.mxu0 %v3498
  %3500 = vmatprep.subr.mxu0 0.0
  %v3501 = vand.u32 %v147, 4294901760
  %v3502 = vsub.f32 %v147, %v3501
  %v3503 = vand.u32 %v3502, 4294901760
  %3504 = vmatpush1.msra.mxu0 %v3503
  %3505 = vmatprep.subr.mxu0 0.0
  %v3506 = vand.u32 %v148, 4294901760
  %v3507 = vsub.f32 %v148, %v3506
  %v3508 = vand.u32 %v3507, 4294901760
  %3509 = vmatpush1.msra.mxu0 %v3508
  %3510 = vmatprep.subr.mxu0 0.0
  %v3511 = vand.u32 %v149, 4294901760
  %v3512 = vsub.f32 %v149, %v3511
  %v3513 = vand.u32 %v3512, 4294901760
  %3514 = vmatpush1.msra.mxu0 %v3513
  %3515 = vmatprep.subr.mxu0 0.0
  %v3516 = vand.u32 %v150, 4294901760
  %v3517 = vsub.f32 %v150, %v3516
  %v3518 = vand.u32 %v3517, 4294901760
  %3519 = vmatpush1.msra.mxu0 %v3518
  %3520 = vmatprep.subr.mxu0 0.0
  %v3521 = vand.u32 %v151, 4294901760
  %v3522 = vsub.f32 %v151, %v3521
  %v3523 = vand.u32 %v3522, 4294901760
  %3524 = vmatpush1.msra.mxu0 %v3523
  %3525 = vmatprep.subr.mxu0 0.0
  %v3526 = vand.u32 %v152, 4294901760
  %v3527 = vsub.f32 %v152, %v3526
  %v3528 = vand.u32 %v3527, 4294901760
  %3529 = vmatpush1.msra.mxu0 %v3528
  %3530 = vmatprep.subr.mxu0 0.0
  %v3531 = vand.u32 %v153, 4294901760
  %v3532 = vsub.f32 %v153, %v3531
  %v3533 = vand.u32 %v3532, 4294901760
  %3534 = vmatpush1.msra.mxu0 %v3533
  %3535 = vmatprep.subr.mxu0 0.0
  %v3536 = vand.u32 %v154, 4294901760
  %v3537 = vsub.f32 %v154, %v3536
  %v3538 = vand.u32 %v3537, 4294901760
  %3539 = vmatpush1.msra.mxu0 %v3538
  %3540 = vmatprep.subr.mxu0 0.0
  %v3541 = vand.u32 %v155, 4294901760
  %v3542 = vsub.f32 %v155, %v3541
  %v3543 = vand.u32 %v3542, 4294901760
  %3544 = vmatpush1.msra.mxu0 %v3543
  %3545 = vmatprep.subr.mxu0 0.0
  %v3546 = vand.u32 %v156, 4294901760
  %v3547 = vsub.f32 %v156, %v3546
  %v3548 = vand.u32 %v3547, 4294901760
  %3549 = vmatpush1.msra.mxu0 %v3548
  %3550 = vmatprep.subr.mxu0 0.0
  %v3551 = vand.u32 %v157, 4294901760
  %v3552 = vsub.f32 %v157, %v3551
  %v3553 = vand.u32 %v3552, 4294901760
  %3554 = vmatpush1.msra.mxu0 %v3553
  %3555 = vmatprep.subr.mxu0 0.0
  %v3556 = vand.u32 %v158, 4294901760
  %v3557 = vsub.f32 %v158, %v3556
  %v3558 = vand.u32 %v3557, 4294901760
  %3559 = vmatpush1.msra.mxu0 %v3558
  %3560 = vmatprep.subr.mxu0 0.0
  %v3561 = vand.u32 %v159, 4294901760
  %v3562 = vsub.f32 %v159, %v3561
  %v3563 = vand.u32 %v3562, 4294901760
  %3564 = vmatpush1.msra.mxu0 %v3563
  %v3565 = vand.u32 %v212, 4294901760
  %3566 = vmatprep.mubr.f32.mxu0 %v3565
  %v3567 = vand.u32 %v210, 4294901760
  %3568 = vmatmul.mubr.f32.gmra.mrb[0].mxu0 %v3567
  %v3569 = vpop.f32.mrb[0].mxu0
  %v3570 = vadd.f32 %v3402, %v3569
  %v3571 = vpop.f32.mrb[0].mxu0
  %3572 = vdwg.mxu0
  %3573 = vmatprep.subr.mxu0 0.0
  %v3574 = vand.u32 %v128, 4294901760
  %3575 = vmatpush1.msra.mxu0 %v3574
  %3576 = vmatprep.subr.mxu0 0.0
  %v3577 = vand.u32 %v129, 4294901760
  %3578 = vmatpush1.msra.mxu0 %v3577
  %3579 = vmatprep.subr.mxu0 0.0
  %v3580 = vand.u32 %v130, 4294901760
  %3581 = vmatpush1.msra.mxu0 %v3580
  %3582 = vmatprep.subr.mxu0 0.0
  %v3583 = vand.u32 %v131, 4294901760
  %3584 = vmatpush1.msra.mxu0 %v3583
  %3585 = vmatprep.subr.mxu0 0.0
  %v3586 = vand.u32 %v132, 4294901760
  %3587 = vmatpush1.msra.mxu0 %v3586
  %3588 = vmatprep.subr.mxu0 0.0
  %v3589 = vand.u32 %v133, 4294901760
  %3590 = vmatpush1.msra.mxu0 %v3589
  %3591 = vmatprep.subr.mxu0 0.0
  %v3592 = vand.u32 %v134, 4294901760
  %3593 = vmatpush1.msra.mxu0 %v3592
  %3594 = vmatprep.subr.mxu0 0.0
  %v3595 = vand.u32 %v135, 4294901760
  %3596 = vmatpush1.msra.mxu0 %v3595
  %3597 = vmatprep.subr.mxu0 0.0
  %v3598 = vand.u32 %v136, 4294901760
  %3599 = vmatpush1.msra.mxu0 %v3598
  %3600 = vmatprep.subr.mxu0 0.0
  %v3601 = vand.u32 %v137, 4294901760
  %3602 = vmatpush1.msra.mxu0 %v3601
  %3603 = vmatprep.subr.mxu0 0.0
  %v3604 = vand.u32 %v138, 4294901760
  %3605 = vmatpush1.msra.mxu0 %v3604
  %3606 = vmatprep.subr.mxu0 0.0
  %v3607 = vand.u32 %v139, 4294901760
  %3608 = vmatpush1.msra.mxu0 %v3607
  %3609 = vmatprep.subr.mxu0 0.0
  %v3610 = vand.u32 %v140, 4294901760
  %3611 = vmatpush1.msra.mxu0 %v3610
  %3612 = vmatprep.subr.mxu0 0.0
  %v3613 = vand.u32 %v141, 4294901760
  %3614 = vmatpush1.msra.mxu0 %v3613
  %3615 = vmatprep.subr.mxu0 0.0
  %v3616 = vand.u32 %v142, 4294901760
  %3617 = vmatpush1.msra.mxu0 %v3616
  %3618 = vmatprep.subr.mxu0 0.0
  %v3619 = vand.u32 %v143, 4294901760
  %3620 = vmatpush1.msra.mxu0 %v3619
  %3621 = vmatprep.subr.mxu0 0.0
  %v3622 = vand.u32 %v144, 4294901760
  %3623 = vmatpush1.msra.mxu0 %v3622
  %3624 = vmatprep.subr.mxu0 0.0
  %v3625 = vand.u32 %v145, 4294901760
  %3626 = vmatpush1.msra.mxu0 %v3625
  %3627 = vmatprep.subr.mxu0 0.0
  %v3628 = vand.u32 %v146, 4294901760
  %3629 = vmatpush1.msra.mxu0 %v3628
  %3630 = vmatprep.subr.mxu0 0.0
  %v3631 = vand.u32 %v147, 4294901760
  %3632 = vmatpush1.msra.mxu0 %v3631
  %3633 = vmatprep.subr.mxu0 0.0
  %v3634 = vand.u32 %v148, 4294901760
  %3635 = vmatpush1.msra.mxu0 %v3634
  %3636 = vmatprep.subr.mxu0 0.0
  %v3637 = vand.u32 %v149, 4294901760
  %3638 = vmatpush1.msra.mxu0 %v3637
  %3639 = vmatprep.subr.mxu0 0.0
  %v3640 = vand.u32 %v150, 4294901760
  %3641 = vmatpush1.msra.mxu0 %v3640
  %3642 = vmatprep.subr.mxu0 0.0
  %v3643 = vand.u32 %v151, 4294901760
  %3644 = vmatpush1.msra.mxu0 %v3643
  %3645 = vmatprep.subr.mxu0 0.0
  %v3646 = vand.u32 %v152, 4294901760
  %3647 = vmatpush1.msra.mxu0 %v3646
  %3648 = vmatprep.subr.mxu0 0.0
  %v3649 = vand.u32 %v153, 4294901760
  %3650 = vmatpush1.msra.mxu0 %v3649
  %3651 = vmatprep.subr.mxu0 0.0
  %v3652 = vand.u32 %v154, 4294901760
  %3653 = vmatpush1.msra.mxu0 %v3652
  %3654 = vmatprep.subr.mxu0 0.0
  %v3655 = vand.u32 %v155, 4294901760
  %3656 = vmatpush1.msra.mxu0 %v3655
  %3657 = vmatprep.subr.mxu0 0.0
  %v3658 = vand.u32 %v156, 4294901760
  %3659 = vmatpush1.msra.mxu0 %v3658
  %3660 = vmatprep.subr.mxu0 0.0
  %v3661 = vand.u32 %v157, 4294901760
  %3662 = vmatpush1.msra.mxu0 %v3661
  %3663 = vmatprep.subr.mxu0 0.0
  %v3664 = vand.u32 %v158, 4294901760
  %3665 = vmatpush1.msra.mxu0 %v3664
  %3666 = vmatprep.subr.mxu0 0.0
  %v3667 = vand.u32 %v159, 4294901760
  %3668 = vmatpush1.msra.mxu0 %v3667
  %v3669 = vand.u32 %v212, 4294901760
  %3670 = vmatprep.mubr.f32.mxu0 %v3669
  %v3671 = vand.u32 %v210, 4294901760
  %3672 = vmatmul.mubr.f32.gmra.mrb[0].mxu0 %v3671
  %v3673 = vpop.f32.mrb[0].mxu0
  %v3674 = vadd.f32 %v3570, %v3673
  %v3675 = vpop.f32.mrb[0].mxu0
  %3676 = vdwg.mxu0
  %3677 = vmatprep.subr.mxu0 0.0
  %v3678 = vand.u32 %v160, 4294901760
  %3679 = vmatpush1.msra.mxu0 %v3678
  %3680 = vmatprep.subr.mxu0 0.0
  %v3681 = vand.u32 %v161, 4294901760
  %3682 = vmatpush1.msra.mxu0 %v3681
  %3683 = vmatprep.subr.mxu0 0.0
  %v3684 = vand.u32 %v162, 4294901760
  %3685 = vmatpush1.msra.mxu0 %v3684
  %3686 = vmatprep.subr.mxu0 0.0
  %v3687 = vand.u32 %v163, 4294901760
  %3688 = vmatpush1.msra.mxu0 %v3687
  %3689 = vmatprep.subr.mxu0 0.0
  %v3690 = vand.u32 %v164, 4294901760
  %3691 = vmatpush1.msra.mxu0 %v3690
  %3692 = vmatprep.subr.mxu0 0.0
  %v3693 = vand.u32 %v165, 4294901760
  %3694 = vmatpush1.msra.mxu0 %v3693
  %3695 = vmatprep.subr.mxu0 0.0
  %v3696 = vand.u32 %v166, 4294901760
  %3697 = vmatpush1.msra.mxu0 %v3696
  %3698 = vmatprep.subr.mxu0 0.0
  %v3699 = vand.u32 %v167, 4294901760
  %3700 = vmatpush1.msra.mxu0 %v3699
  %3701 = vmatprep.subr.mxu0 0.0
  %v3702 = vand.u32 %v168, 4294901760
  %3703 = vmatpush1.msra.mxu0 %v3702
  %3704 = vmatprep.subr.mxu0 0.0
  %v3705 = vand.u32 %v169, 4294901760
  %3706 = vmatpush1.msra.mxu0 %v3705
  %3707 = vmatprep.subr.mxu0 0.0
  %v3708 = vand.u32 %v170, 4294901760
  %3709 = vmatpush1.msra.mxu0 %v3708
  %3710 = vmatprep.subr.mxu0 0.0
  %v3711 = vand.u32 %v171, 4294901760
  %3712 = vmatpush1.msra.mxu0 %v3711
  %3713 = vmatprep.subr.mxu0 0.0
  %v3714 = vand.u32 %v172, 4294901760
  %3715 = vmatpush1.msra.mxu0 %v3714
  %3716 = vmatprep.subr.mxu0 0.0
  %v3717 = vand.u32 %v173, 4294901760
  %3718 = vmatpush1.msra.mxu0 %v3717
  %3719 = vmatprep.subr.mxu0 0.0
  %v3720 = vand.u32 %v174, 4294901760
  %3721 = vmatpush1.msra.mxu0 %v3720
  %3722 = vmatprep.subr.mxu0 0.0
  %v3723 = vand.u32 %v175, 4294901760
  %3724 = vmatpush1.msra.mxu0 %v3723
  %3725 = vmatprep.subr.mxu0 0.0
  %3726 = vmatpush1.msra.mxu0 0.0
  %3727 = vmatprep.subr.mxu0 0.0
  %3728 = vmatpush1.msra.mxu0 0.0
  %3729 = vmatprep.subr.mxu0 0.0
  %3730 = vmatpush1.msra.mxu0 0.0
  %3731 = vmatprep.subr.mxu0 0.0
  %3732 = vmatpush1.msra.mxu0 0.0
  %3733 = vmatprep.subr.mxu0 0.0
  %3734 = vmatpush1.msra.mxu0 0.0
  %3735 = vmatprep.subr.mxu0 0.0
  %3736 = vmatpush1.msra.mxu0 0.0
  %3737 = vmatprep.subr.mxu0 0.0
  %3738 = vmatpush1.msra.mxu0 0.0
  %3739 = vmatprep.subr.mxu0 0.0
  %3740 = vmatpush1.msra.mxu0 0.0
  %3741 = vmatprep.subr.mxu0 0.0
  %3742 = vmatpush1.msra.mxu0 0.0
  %3743 = vmatprep.subr.mxu0 0.0
  %3744 = vmatpush1.msra.mxu0 0.0
  %3745 = vmatprep.subr.mxu0 0.0
  %3746 = vmatpush1.msra.mxu0 0.0
  %3747 = vmatprep.subr.mxu0 0.0
  %3748 = vmatpush1.msra.mxu0 0.0
  %3749 = vmatprep.subr.mxu0 0.0
  %3750 = vmatpush1.msra.mxu0 0.0
  %3751 = vmatprep.subr.mxu0 0.0
  %3752 = vmatpush1.msra.mxu0 0.0
  %3753 = vmatprep.subr.mxu0 0.0
  %3754 = vmatpush1.msra.mxu0 0.0
  %3755 = vmatprep.subr.mxu0 0.0
  %3756 = vmatpush1.msra.mxu0 0.0
  %3757 = vmatprep.mubr.f32.mxu0 0.0
  %v3758 = vand.u32 %v219, 4294901760
  %v3759 = vsub.f32 %v219, %v3758
  %v3760 = vand.u32 %v3759, 4294901760
  %v3761 = vsub.f32 %v3759, %v3760
  %v3762 = vand.u32 %v3761, 4294901760
  %3763 = vmatmul.mubr.f32.gmra.mrb[0].mxu0 %v3762
  %v3764 = vpop.f32.mrb[0].mxu0
  %v3765 = vadd.f32 %v3674, %v3764
  %v3766 = vpop.f32.mrb[0].mxu0
  %3767 = vdwg.mxu0
  %3768 = vmatprep.subr.mxu0 0.0
  %v3769 = vand.u32 %v160, 4294901760
  %v3770 = vsub.f32 %v160, %v3769
  %v3771 = vand.u32 %v3770, 4294901760
  %v3772 = vsub.f32 %v3770, %v3771
  %v3773 = vand.u32 %v3772, 4294901760
  %3774 = vmatpush1.msra.mxu0 %v3773
  %3775 = vmatprep.subr.mxu0 0.0
  %v3776 = vand.u32 %v161, 4294901760
  %v3777 = vsub.f32 %v161, %v3776
  %v3778 = vand.u32 %v3777, 4294901760
  %v3779 = vsub.f32 %v3777, %v3778
  %v3780 = vand.u32 %v3779, 4294901760
  %3781 = vmatpush1.msra.mxu0 %v3780
  %3782 = vmatprep.subr.mxu0 0.0
  %v3783 = vand.u32 %v162, 4294901760
  %v3784 = vsub.f32 %v162, %v3783
  %v3785 = vand.u32 %v3784, 4294901760
  %v3786 = vsub.f32 %v3784, %v3785
  %v3787 = vand.u32 %v3786, 4294901760
  %3788 = vmatpush1.msra.mxu0 %v3787
  %3789 = vmatprep.subr.mxu0 0.0
  %v3790 = vand.u32 %v163, 4294901760
  %v3791 = vsub.f32 %v163, %v3790
  %v3792 = vand.u32 %v3791, 4294901760
  %v3793 = vsub.f32 %v3791, %v3792
  %v3794 = vand.u32 %v3793, 4294901760
  %3795 = vmatpush1.msra.mxu0 %v3794
  %3796 = vmatprep.subr.mxu0 0.0
  %v3797 = vand.u32 %v164, 4294901760
  %v3798 = vsub.f32 %v164, %v3797
  %v3799 = vand.u32 %v3798, 4294901760
  %v3800 = vsub.f32 %v3798, %v3799
  %v3801 = vand.u32 %v3800, 4294901760
  %3802 = vmatpush1.msra.mxu0 %v3801
  %3803 = vmatprep.subr.mxu0 0.0
  %v3804 = vand.u32 %v165, 4294901760
  %v3805 = vsub.f32 %v165, %v3804
  %v3806 = vand.u32 %v3805, 4294901760
  %v3807 = vsub.f32 %v3805, %v3806
  %v3808 = vand.u32 %v3807, 4294901760
  %3809 = vmatpush1.msra.mxu0 %v3808
  %3810 = vmatprep.subr.mxu0 0.0
  %v3811 = vand.u32 %v166, 4294901760
  %v3812 = vsub.f32 %v166, %v3811
  %v3813 = vand.u32 %v3812, 4294901760
  %v3814 = vsub.f32 %v3812, %v3813
  %v3815 = vand.u32 %v3814, 4294901760
  %3816 = vmatpush1.msra.mxu0 %v3815
  %3817 = vmatprep.subr.mxu0 0.0
  %v3818 = vand.u32 %v167, 4294901760
  %v3819 = vsub.f32 %v167, %v3818
  %v3820 = vand.u32 %v3819, 4294901760
  %v3821 = vsub.f32 %v3819, %v3820
  %v3822 = vand.u32 %v3821, 4294901760
  %3823 = vmatpush1.msra.mxu0 %v3822
  %3824 = vmatprep.subr.mxu0 0.0
  %v3825 = vand.u32 %v168, 4294901760
  %v3826 = vsub.f32 %v168, %v3825
  %v3827 = vand.u32 %v3826, 4294901760
  %v3828 = vsub.f32 %v3826, %v3827
  %v3829 = vand.u32 %v3828, 4294901760
  %3830 = vmatpush1.msra.mxu0 %v3829
  %3831 = vmatprep.subr.mxu0 0.0
  %v3832 = vand.u32 %v169, 4294901760
  %v3833 = vsub.f32 %v169, %v3832
  %v3834 = vand.u32 %v3833, 4294901760
  %v3835 = vsub.f32 %v3833, %v3834
  %v3836 = vand.u32 %v3835, 4294901760
  %3837 = vmatpush1.msra.mxu0 %v3836
  %3838 = vmatprep.subr.mxu0 0.0
  %v3839 = vand.u32 %v170, 4294901760
  %v3840 = vsub.f32 %v170, %v3839
  %v3841 = vand.u32 %v3840, 4294901760
  %v3842 = vsub.f32 %v3840, %v3841
  %v3843 = vand.u32 %v3842, 4294901760
  %3844 = vmatpush1.msra.mxu0 %v3843
  %3845 = vmatprep.subr.mxu0 0.0
  %v3846 = vand.u32 %v171, 4294901760
  %v3847 = vsub.f32 %v171, %v3846
  %v3848 = vand.u32 %v3847, 4294901760
  %v3849 = vsub.f32 %v3847, %v3848
  %v3850 = vand.u32 %v3849, 4294901760
  %3851 = vmatpush1.msra.mxu0 %v3850
  %3852 = vmatprep.subr.mxu0 0.0
  %v3853 = vand.u32 %v172, 4294901760
  %v3854 = vsub.f32 %v172, %v3853
  %v3855 = vand.u32 %v3854, 4294901760
  %v3856 = vsub.f32 %v3854, %v3855
  %v3857 = vand.u32 %v3856, 4294901760
  %3858 = vmatpush1.msra.mxu0 %v3857
  %3859 = vmatprep.subr.mxu0 0.0
  %v3860 = vand.u32 %v173, 4294901760
  %v3861 = vsub.f32 %v173, %v3860
  %v3862 = vand.u32 %v3861, 4294901760
  %v3863 = vsub.f32 %v3861, %v3862
  %v3864 = vand.u32 %v3863, 4294901760
  %3865 = vmatpush1.msra.mxu0 %v3864
  %3866 = vmatprep.subr.mxu0 0.0
  %v3867 = vand.u32 %v174, 4294901760
  %v3868 = vsub.f32 %v174, %v3867
  %v3869 = vand.u32 %v3868, 4294901760
  %v3870 = vsub.f32 %v3868, %v3869
  %v3871 = vand.u32 %v3870, 4294901760
  %3872 = vmatpush1.msra.mxu0 %v3871
  %3873 = vmatprep.subr.mxu0 0.0
  %v3874 = vand.u32 %v175, 4294901760
  %v3875 = vsub.f32 %v175, %v3874
  %v3876 = vand.u32 %v3875, 4294901760
  %v3877 = vsub.f32 %v3875, %v3876
  %v3878 = vand.u32 %v3877, 4294901760
  %3879 = vmatpush1.msra.mxu0 %v3878
  %3880 = vmatprep.subr.mxu0 0.0
  %3881 = vmatpush1.msra.mxu0 0.0
  %3882 = vmatprep.subr.mxu0 0.0
  %3883 = vmatpush1.msra.mxu0 0.0
  %3884 = vmatprep.subr.mxu0 0.0
  %3885 = vmatpush1.msra.mxu0 0.0
  %3886 = vmatprep.subr.mxu0 0.0
  %3887 = vmatpush1.msra.mxu0 0.0
  %3888 = vmatprep.subr.mxu0 0.0
  %3889 = vmatpush1.msra.mxu0 0.0
  %3890 = vmatprep.subr.mxu0 0.0
  %3891 = vmatpush1.msra.mxu0 0.0
  %3892 = vmatprep.subr.mxu0 0.0
  %3893 = vmatpush1.msra.mxu0 0.0
  %3894 = vmatprep.subr.mxu0 0.0
  %3895 = vmatpush1.msra.mxu0 0.0
  %3896 = vmatprep.subr.mxu0 0.0
  %3897 = vmatpush1.msra.mxu0 0.0
  %3898 = vmatprep.subr.mxu0 0.0
  %3899 = vmatpush1.msra.mxu0 0.0
  %3900 = vmatprep.subr.mxu0 0.0
  %3901 = vmatpush1.msra.mxu0 0.0
  %3902 = vmatprep.subr.mxu0 0.0
  %3903 = vmatpush1.msra.mxu0 0.0
  %3904 = vmatprep.subr.mxu0 0.0
  %3905 = vmatpush1.msra.mxu0 0.0
  %3906 = vmatprep.subr.mxu0 0.0
  %3907 = vmatpush1.msra.mxu0 0.0
  %3908 = vmatprep.subr.mxu0 0.0
  %3909 = vmatpush1.msra.mxu0 0.0
  %3910 = vmatprep.subr.mxu0 0.0
  %3911 = vmatpush1.msra.mxu0 0.0
  %3912 = vmatprep.mubr.f32.mxu0 0.0
  %v3913 = vand.u32 %v219, 4294901760
  %3914 = vmatmul.mubr.f32.gmra.mrb[0].mxu0 %v3913
  %v3915 = vpop.f32.mrb[0].mxu0
  %v3916 = vadd.f32 %v3765, %v3915
  %v3917 = vpop.f32.mrb[0].mxu0
  %3918 = vdwg.mxu0
  %3919 = vmatprep.subr.mxu0 0.0
  %v3920 = vand.u32 %v160, 4294901760
  %v3921 = vsub.f32 %v160, %v3920
  %3922 = vmatpush1.msra.mxu0 %v3921
  %3923 = vmatprep.subr.mxu0 0.0
  %v3924 = vand.u32 %v161, 4294901760
  %v3925 = vsub.f32 %v161, %v3924
  %3926 = vmatpush1.msra.mxu0 %v3925
  %3927 = vmatprep.subr.mxu0 0.0
  %v3928 = vand.u32 %v162, 4294901760
  %v3929 = vsub.f32 %v162, %v3928
  %3930 = vmatpush1.msra.mxu0 %v3929
  %3931 = vmatprep.subr.mxu0 0.0
  %v3932 = vand.u32 %v163, 4294901760
  %v3933 = vsub.f32 %v163, %v3932
  %3934 = vmatpush1.msra.mxu0 %v3933
  %3935 = vmatprep.subr.mxu0 0.0
  %v3936 = vand.u32 %v164, 4294901760
  %v3937 = vsub.f32 %v164, %v3936
  %3938 = vmatpush1.msra.mxu0 %v3937
  %3939 = vmatprep.subr.mxu0 0.0
  %v3940 = vand.u32 %v165, 4294901760
  %v3941 = vsub.f32 %v165, %v3940
  %3942 = vmatpush1.msra.mxu0 %v3941
  %3943 = vmatprep.subr.mxu0 0.0
  %v3944 = vand.u32 %v166, 4294901760
  %v3945 = vsub.f32 %v166, %v3944
  %3946 = vmatpush1.msra.mxu0 %v3945
  %3947 = vmatprep.subr.mxu0 0.0
  %v3948 = vand.u32 %v167, 4294901760
  %v3949 = vsub.f32 %v167, %v3948
  %3950 = vmatpush1.msra.mxu0 %v3949
  %3951 = vmatprep.subr.mxu0 0.0
  %v3952 = vand.u32 %v168, 4294901760
  %v3953 = vsub.f32 %v168, %v3952
  %3954 = vmatpush1.msra.mxu0 %v3953
  %3955 = vmatprep.subr.mxu0 0.0
  %v3956 = vand.u32 %v169, 4294901760
  %v3957 = vsub.f32 %v169, %v3956
  %3958 = vmatpush1.msra.mxu0 %v3957
  %3959 = vmatprep.subr.mxu0 0.0
  %v3960 = vand.u32 %v170, 4294901760
  %v3961 = vsub.f32 %v170, %v3960
  %3962 = vmatpush1.msra.mxu0 %v3961
  %3963 = vmatprep.subr.mxu0 0.0
  %v3964 = vand.u32 %v171, 4294901760
  %v3965 = vsub.f32 %v171, %v3964
  %3966 = vmatpush1.msra.mxu0 %v3965
  %3967 = vmatprep.subr.mxu0 0.0
  %v3968 = vand.u32 %v172, 4294901760
  %v3969 = vsub.f32 %v172, %v3968
  %3970 = vmatpush1.msra.mxu0 %v3969
  %3971 = vmatprep.subr.mxu0 0.0
  %v3972 = vand.u32 %v173, 4294901760
  %v3973 = vsub.f32 %v173, %v3972
  %3974 = vmatpush1.msra.mxu0 %v3973
  %3975 = vmatprep.subr.mxu0 0.0
  %v3976 = vand.u32 %v174, 4294901760
  %v3977 = vsub.f32 %v174, %v3976
  %3978 = vmatpush1.msra.mxu0 %v3977
  %3979 = vmatprep.subr.mxu0 0.0
  %v3980 = vand.u32 %v175, 4294901760
  %v3981 = vsub.f32 %v175, %v3980
  %3982 = vmatpush1.msra.mxu0 %v3981
  %3983 = vmatprep.subr.mxu0 0.0
  %3984 = vmatpush1.msra.mxu0 0.0
  %3985 = vmatprep.subr.mxu0 0.0
  %3986 = vmatpush1.msra.mxu0 0.0
  %3987 = vmatprep.subr.mxu0 0.0
  %3988 = vmatpush1.msra.mxu0 0.0
  %3989 = vmatprep.subr.mxu0 0.0
  %3990 = vmatpush1.msra.mxu0 0.0
  %3991 = vmatprep.subr.mxu0 0.0
  %3992 = vmatpush1.msra.mxu0 0.0
  %3993 = vmatprep.subr.mxu0 0.0
  %3994 = vmatpush1.msra.mxu0 0.0
  %3995 = vmatprep.subr.mxu0 0.0
  %3996 = vmatpush1.msra.mxu0 0.0
  %3997 = vmatprep.subr.mxu0 0.0
  %3998 = vmatpush1.msra.mxu0 0.0
  %3999 = vmatprep.subr.mxu0 0.0
  %4000 = vmatpush1.msra.mxu0 0.0
  %4001 = vmatprep.subr.mxu0 0.0
  %4002 = vmatpush1.msra.mxu0 0.0
  %4003 = vmatprep.subr.mxu0 0.0
  %4004 = vmatpush1.msra.mxu0 0.0
  %4005 = vmatprep.subr.mxu0 0.0
  %4006 = vmatpush1.msra.mxu0 0.0
  %4007 = vmatprep.subr.mxu0 0.0
  %4008 = vmatpush1.msra.mxu0 0.0
  %4009 = vmatprep.subr.mxu0 0.0
  %4010 = vmatpush1.msra.mxu0 0.0
  %4011 = vmatprep.subr.mxu0 0.0
  %4012 = vmatpush1.msra.mxu0 0.0
  %4013 = vmatprep.subr.mxu0 0.0
  %4014 = vmatpush1.msra.mxu0 0.0
  %4015 = vmatprep.mubr.f32.mxu0 0.0
  %v4016 = vand.u32 %v219, 4294901760
  %v4017 = vsub.f32 %v219, %v4016
  %4018 = vmatmul.mubr.f32.gmra.mrb[0].mxu0 %v4017
  %v4019 = vpop.f32.mrb[0].mxu0
  %v4020 = vadd.f32 %v3916, %v4019
  %v4021 = vpop.f32.mrb[0].mxu0
  %4022 = vdwg.mxu0
  %4023 = vmatprep.subr.mxu0 0.0
  %v4024 = vand.u32 %v160, 4294901760
  %4025 = vmatpush1.msra.mxu0 %v4024
  %4026 = vmatprep.subr.mxu0 0.0
  %v4027 = vand.u32 %v161, 4294901760
  %4028 = vmatpush1.msra.mxu0 %v4027
  %4029 = vmatprep.subr.mxu0 0.0
  %v4030 = vand.u32 %v162, 4294901760
  %4031 = vmatpush1.msra.mxu0 %v4030
  %4032 = vmatprep.subr.mxu0 0.0
  %v4033 = vand.u32 %v163, 4294901760
  %4034 = vmatpush1.msra.mxu0 %v4033
  %4035 = vmatprep.subr.mxu0 0.0
  %v4036 = vand.u32 %v164, 4294901760
  %4037 = vmatpush1.msra.mxu0 %v4036
  %4038 = vmatprep.subr.mxu0 0.0
  %v4039 = vand.u32 %v165, 4294901760
  %4040 = vmatpush1.msra.mxu0 %v4039
  %4041 = vmatprep.subr.mxu0 0.0
  %v4042 = vand.u32 %v166, 4294901760
  %4043 = vmatpush1.msra.mxu0 %v4042
  %4044 = vmatprep.subr.mxu0 0.0
  %v4045 = vand.u32 %v167, 4294901760
  %4046 = vmatpush1.msra.mxu0 %v4045
  %4047 = vmatprep.subr.mxu0 0.0
  %v4048 = vand.u32 %v168, 4294901760
  %4049 = vmatpush1.msra.mxu0 %v4048
  %4050 = vmatprep.subr.mxu0 0.0
  %v4051 = vand.u32 %v169, 4294901760
  %4052 = vmatpush1.msra.mxu0 %v4051
  %4053 = vmatprep.subr.mxu0 0.0
  %v4054 = vand.u32 %v170, 4294901760
  %4055 = vmatpush1.msra.mxu0 %v4054
  %4056 = vmatprep.subr.mxu0 0.0
  %v4057 = vand.u32 %v171, 4294901760
  %4058 = vmatpush1.msra.mxu0 %v4057
  %4059 = vmatprep.subr.mxu0 0.0
  %v4060 = vand.u32 %v172, 4294901760
  %4061 = vmatpush1.msra.mxu0 %v4060
  %4062 = vmatprep.subr.mxu0 0.0
  %v4063 = vand.u32 %v173, 4294901760
  %4064 = vmatpush1.msra.mxu0 %v4063
  %4065 = vmatprep.subr.mxu0 0.0
  %v4066 = vand.u32 %v174, 4294901760
  %4067 = vmatpush1.msra.mxu0 %v4066
  %4068 = vmatprep.subr.mxu0 0.0
  %v4069 = vand.u32 %v175, 4294901760
  %4070 = vmatpush1.msra.mxu0 %v4069
  %4071 = vmatprep.subr.mxu0 0.0
  %4072 = vmatpush1.msra.mxu0 0.0
  %4073 = vmatprep.subr.mxu0 0.0
  %4074 = vmatpush1.msra.mxu0 0.0
  %4075 = vmatprep.subr.mxu0 0.0
  %4076 = vmatpush1.msra.mxu0 0.0
  %4077 = vmatprep.subr.mxu0 0.0
  %4078 = vmatpush1.msra.mxu0 0.0
  %4079 = vmatprep.subr.mxu0 0.0
  %4080 = vmatpush1.msra.mxu0 0.0
  %4081 = vmatprep.subr.mxu0 0.0
  %4082 = vmatpush1.msra.mxu0 0.0
  %4083 = vmatprep.subr.mxu0 0.0
  %4084 = vmatpush1.msra.mxu0 0.0
  %4085 = vmatprep.subr.mxu0 0.0
  %4086 = vmatpush1.msra.mxu0 0.0
  %4087 = vmatprep.subr.mxu0 0.0
  %4088 = vmatpush1.msra.mxu0 0.0
  %4089 = vmatprep.subr.mxu0 0.0
  %4090 = vmatpush1.msra.mxu0 0.0
  %4091 = vmatprep.subr.mxu0 0.0
  %4092 = vmatpush1.msra.mxu0 0.0
  %4093 = vmatprep.subr.mxu0 0.0
  %4094 = vmatpush1.msra.mxu0 0.0
  %4095 = vmatprep.subr.mxu0 0.0
  %4096 = vmatpush1.msra.mxu0 0.0
  %4097 = vmatprep.subr.mxu0 0.0
  %4098 = vmatpush1.msra.mxu0 0.0
  %4099 = vmatprep.subr.mxu0 0.0
  %4100 = vmatpush1.msra.mxu0 0.0
  %4101 = vmatprep.subr.mxu0 0.0
  %4102 = vmatpush1.msra.mxu0 0.0
  %4103 = vmatprep.mubr.f32.mxu0 0.0
  %v4104 = vand.u32 %v219, 4294901760
  %v4105 = vsub.f32 %v219, %v4104
  %v4106 = vand.u32 %v4105, 4294901760
  %4107 = vmatmul.mubr.f32.gmra.mrb[0].mxu0 %v4106
  %v4108 = vpop.f32.mrb[0].mxu0
  %v4109 = vadd.f32 %v4020, %v4108
  %v4110 = vpop.f32.mrb[0].mxu0
  %4111 = vdwg.mxu0
  %4112 = vmatprep.subr.mxu0 0.0
  %v4113 = vand.u32 %v160, 4294901760
  %v4114 = vsub.f32 %v160, %v4113
  %v4115 = vand.u32 %v4114, 4294901760
  %4116 = vmatpush1.msra.mxu0 %v4115
  %4117 = vmatprep.subr.mxu0 0.0
  %v4118 = vand.u32 %v161, 4294901760
  %v4119 = vsub.f32 %v161, %v4118
  %v4120 = vand.u32 %v4119, 4294901760
  %4121 = vmatpush1.msra.mxu0 %v4120
  %4122 = vmatprep.subr.mxu0 0.0
  %v4123 = vand.u32 %v162, 4294901760
  %v4124 = vsub.f32 %v162, %v4123
  %v4125 = vand.u32 %v4124, 4294901760
  %4126 = vmatpush1.msra.mxu0 %v4125
  %4127 = vmatprep.subr.mxu0 0.0
  %v4128 = vand.u32 %v163, 4294901760
  %v4129 = vsub.f32 %v163, %v4128
  %v4130 = vand.u32 %v4129, 4294901760
  %4131 = vmatpush1.msra.mxu0 %v4130
  %4132 = vmatprep.subr.mxu0 0.0
  %v4133 = vand.u32 %v164, 4294901760
  %v4134 = vsub.f32 %v164, %v4133
  %v4135 = vand.u32 %v4134, 4294901760
  %4136 = vmatpush1.msra.mxu0 %v4135
  %4137 = vmatprep.subr.mxu0 0.0
  %v4138 = vand.u32 %v165, 4294901760
  %v4139 = vsub.f32 %v165, %v4138
  %v4140 = vand.u32 %v4139, 4294901760
  %4141 = vmatpush1.msra.mxu0 %v4140
  %4142 = vmatprep.subr.mxu0 0.0
  %v4143 = vand.u32 %v166, 4294901760
  %v4144 = vsub.f32 %v166, %v4143
  %v4145 = vand.u32 %v4144, 4294901760
  %4146 = vmatpush1.msra.mxu0 %v4145
  %4147 = vmatprep.subr.mxu0 0.0
  %v4148 = vand.u32 %v167, 4294901760
  %v4149 = vsub.f32 %v167, %v4148
  %v4150 = vand.u32 %v4149, 4294901760
  %4151 = vmatpush1.msra.mxu0 %v4150
  %4152 = vmatprep.subr.mxu0 0.0
  %v4153 = vand.u32 %v168, 4294901760
  %v4154 = vsub.f32 %v168, %v4153
  %v4155 = vand.u32 %v4154, 4294901760
  %4156 = vmatpush1.msra.mxu0 %v4155
  %4157 = vmatprep.subr.mxu0 0.0
  %v4158 = vand.u32 %v169, 4294901760
  %v4159 = vsub.f32 %v169, %v4158
  %v4160 = vand.u32 %v4159, 4294901760
  %4161 = vmatpush1.msra.mxu0 %v4160
  %4162 = vmatprep.subr.mxu0 0.0
  %v4163 = vand.u32 %v170, 4294901760
  %v4164 = vsub.f32 %v170, %v4163
  %v4165 = vand.u32 %v4164, 4294901760
  %4166 = vmatpush1.msra.mxu0 %v4165
  %4167 = vmatprep.subr.mxu0 0.0
  %v4168 = vand.u32 %v171, 4294901760
  %v4169 = vsub.f32 %v171, %v4168
  %v4170 = vand.u32 %v4169, 4294901760
  %4171 = vmatpush1.msra.mxu0 %v4170
  %4172 = vmatprep.subr.mxu0 0.0
  %v4173 = vand.u32 %v172, 4294901760
  %v4174 = vsub.f32 %v172, %v4173
  %v4175 = vand.u32 %v4174, 4294901760
  %4176 = vmatpush1.msra.mxu0 %v4175
  %4177 = vmatprep.subr.mxu0 0.0
  %v4178 = vand.u32 %v173, 4294901760
  %v4179 = vsub.f32 %v173, %v4178
  %v4180 = vand.u32 %v4179, 4294901760
  %4181 = vmatpush1.msra.mxu0 %v4180
  %4182 = vmatprep.subr.mxu0 0.0
  %v4183 = vand.u32 %v174, 4294901760
  %v4184 = vsub.f32 %v174, %v4183
  %v4185 = vand.u32 %v4184, 4294901760
  %4186 = vmatpush1.msra.mxu0 %v4185
  %4187 = vmatprep.subr.mxu0 0.0
  %v4188 = vand.u32 %v175, 4294901760
  %v4189 = vsub.f32 %v175, %v4188
  %v4190 = vand.u32 %v4189, 4294901760
  %4191 = vmatpush1.msra.mxu0 %v4190
  %4192 = vmatprep.subr.mxu0 0.0
  %4193 = vmatpush1.msra.mxu0 0.0
  %4194 = vmatprep.subr.mxu0 0.0
  %4195 = vmatpush1.msra.mxu0 0.0
  %4196 = vmatprep.subr.mxu0 0.0
  %4197 = vmatpush1.msra.mxu0 0.0
  %4198 = vmatprep.subr.mxu0 0.0
  %4199 = vmatpush1.msra.mxu0 0.0
  %4200 = vmatprep.subr.mxu0 0.0
  %4201 = vmatpush1.msra.mxu0 0.0
  %4202 = vmatprep.subr.mxu0 0.0
  %4203 = vmatpush1.msra.mxu0 0.0
  %4204 = vmatprep.subr.mxu0 0.0
  %4205 = vmatpush1.msra.mxu0 0.0
  %4206 = vmatprep.subr.mxu0 0.0
  %4207 = vmatpush1.msra.mxu0 0.0
  %4208 = vmatprep.subr.mxu0 0.0
  %4209 = vmatpush1.msra.mxu0 0.0
  %4210 = vmatprep.subr.mxu0 0.0
  %4211 = vmatpush1.msra.mxu0 0.0
  %4212 = vmatprep.subr.mxu0 0.0
  %4213 = vmatpush1.msra.mxu0 0.0
  %4214 = vmatprep.subr.mxu0 0.0
  %4215 = vmatpush1.msra.mxu0 0.0
  %4216 = vmatprep.subr.mxu0 0.0
  %4217 = vmatpush1.msra.mxu0 0.0
  %4218 = vmatprep.subr.mxu0 0.0
  %4219 = vmatpush1.msra.mxu0 0.0
  %4220 = vmatprep.subr.mxu0 0.0
  %4221 = vmatpush1.msra.mxu0 0.0
  %4222 = vmatprep.subr.mxu0 0.0
  %4223 = vmatpush1.msra.mxu0 0.0
  %4224 = vmatprep.mubr.f32.mxu0 0.0
  %v4225 = vand.u32 %v219, 4294901760
  %4226 = vmatmul.mubr.f32.gmra.mrb[0].mxu0 %v4225
  %v4227 = vpop.f32.mrb[0].mxu0
  %v4228 = vadd.f32 %v4109, %v4227
  %v4229 = vpop.f32.mrb[0].mxu0
  %4230 = vdwg.mxu0
  %4231 = vmatprep.subr.mxu0 0.0
  %v4232 = vand.u32 %v160, 4294901760
  %4233 = vmatpush1.msra.mxu0 %v4232
  %4234 = vmatprep.subr.mxu0 0.0
  %v4235 = vand.u32 %v161, 4294901760
  %4236 = vmatpush1.msra.mxu0 %v4235
  %4237 = vmatprep.subr.mxu0 0.0
  %v4238 = vand.u32 %v162, 4294901760
  %4239 = vmatpush1.msra.mxu0 %v4238
  %4240 = vmatprep.subr.mxu0 0.0
  %v4241 = vand.u32 %v163, 4294901760
  %4242 = vmatpush1.msra.mxu0 %v4241
  %4243 = vmatprep.subr.mxu0 0.0
  %v4244 = vand.u32 %v164, 4294901760
  %4245 = vmatpush1.msra.mxu0 %v4244
  %4246 = vmatprep.subr.mxu0 0.0
  %v4247 = vand.u32 %v165, 4294901760
  %4248 = vmatpush1.msra.mxu0 %v4247
  %4249 = vmatprep.subr.mxu0 0.0
  %v4250 = vand.u32 %v166, 4294901760
  %4251 = vmatpush1.msra.mxu0 %v4250
  %4252 = vmatprep.subr.mxu0 0.0
  %v4253 = vand.u32 %v167, 4294901760
  %4254 = vmatpush1.msra.mxu0 %v4253
  %4255 = vmatprep.subr.mxu0 0.0
  %v4256 = vand.u32 %v168, 4294901760
  %4257 = vmatpush1.msra.mxu0 %v4256
  %4258 = vmatprep.subr.mxu0 0.0
  %v4259 = vand.u32 %v169, 4294901760
  %4260 = vmatpush1.msra.mxu0 %v4259
  %4261 = vmatprep.subr.mxu0 0.0
  %v4262 = vand.u32 %v170, 4294901760
  %4263 = vmatpush1.msra.mxu0 %v4262
  %4264 = vmatprep.subr.mxu0 0.0
  %v4265 = vand.u32 %v171, 4294901760
  %4266 = vmatpush1.msra.mxu0 %v4265
  %4267 = vmatprep.subr.mxu0 0.0
  %v4268 = vand.u32 %v172, 4294901760
  %4269 = vmatpush1.msra.mxu0 %v4268
  %4270 = vmatprep.subr.mxu0 0.0
  %v4271 = vand.u32 %v173, 4294901760
  %4272 = vmatpush1.msra.mxu0 %v4271
  %4273 = vmatprep.subr.mxu0 0.0
  %v4274 = vand.u32 %v174, 4294901760
  %4275 = vmatpush1.msra.mxu0 %v4274
  %4276 = vmatprep.subr.mxu0 0.0
  %v4277 = vand.u32 %v175, 4294901760
  %4278 = vmatpush1.msra.mxu0 %v4277
  %4279 = vmatprep.subr.mxu0 0.0
  %4280 = vmatpush1.msra.mxu0 0.0
  %4281 = vmatprep.subr.mxu0 0.0
  %4282 = vmatpush1.msra.mxu0 0.0
  %4283 = vmatprep.subr.mxu0 0.0
  %4284 = vmatpush1.msra.mxu0 0.0
  %4285 = vmatprep.subr.mxu0 0.0
  %4286 = vmatpush1.msra.mxu0 0.0
  %4287 = vmatprep.subr.mxu0 0.0
  %4288 = vmatpush1.msra.mxu0 0.0
  %4289 = vmatprep.subr.mxu0 0.0
  %4290 = vmatpush1.msra.mxu0 0.0
  %4291 = vmatprep.subr.mxu0 0.0
  %4292 = vmatpush1.msra.mxu0 0.0
  %4293 = vmatprep.subr.mxu0 0.0
  %4294 = vmatpush1.msra.mxu0 0.0
  %4295 = vmatprep.subr.mxu0 0.0
  %4296 = vmatpush1.msra.mxu0 0.0
  %4297 = vmatprep.subr.mxu0 0.0
  %4298 = vmatpush1.msra.mxu0 0.0
  %4299 = vmatprep.subr.mxu0 0.0
  %4300 = vmatpush1.msra.mxu0 0.0
  %4301 = vmatprep.subr.mxu0 0.0
  %4302 = vmatpush1.msra.mxu0 0.0
  %4303 = vmatprep.subr.mxu0 0.0
  %4304 = vmatpush1.msra.mxu0 0.0
  %4305 = vmatprep.subr.mxu0 0.0
  %4306 = vmatpush1.msra.mxu0 0.0
  %4307 = vmatprep.subr.mxu0 0.0
  %4308 = vmatpush1.msra.mxu0 0.0
  %4309 = vmatprep.subr.mxu0 0.0
  %4310 = vmatpush1.msra.mxu0 0.0
  %4311 = vmatprep.mubr.f32.mxu0 0.0
  %v4312 = vand.u32 %v219, 4294901760
  %4313 = vmatmul.mubr.f32.gmra.mrb[0].mxu0 %v4312
  %v4314 = vpop.f32.mrb[0].mxu0
  %v4315 = vadd.f32 %v4228, %v4314
  %v4316 = vpop.f32.mrb[0].mxu0
  %4317 = vdwg.mxu0
  %v4321 = vcombine.high %v29, %v29
  %v4323 = vunpack.c.l.s4 1983009808
  %v4324 = vunpack.c.0.s8 %v4323
  %v4325 = vlaneseq
  %v4326 = vshrl.u32 %v4325, 7
  %v4327 = vsub.s32 %v4324, %v4326
  %v4328 = vrot.slane %v29, %v4327
  %v4330 = vunpack.c.l.s4 1983009808
  %v4331 = vunpack.c.0.s8 %v4330
  %v4332 = vlaneseq
  %v4333 = vshrl.u32 %v4332, 7
  %v4334 = vsub.s32 %v4331, %v4333
  %v4335 = vrot.slane %v4321, %v4334
  %v4336 = vcombine.high %v4328, %v4328
  %v4337 = vcombine.high %v4335, %v4335
  %v4338 = vcombine.high %v30, %v30
  %v4340 = vunpack.c.l.s4 1983009808
  %v4341 = vunpack.c.0.s8 %v4340
  %v4342 = vlaneseq
  %v4343 = vshrl.u32 %v4342, 7
  %v4344 = vsub.s32 %v4341, %v4343
  %v4345 = vrot.slane %v30, %v4344
  %v4347 = vunpack.c.l.s4 1983009808
  %v4348 = vunpack.c.0.s8 %v4347
  %v4349 = vlaneseq
  %v4350 = vshrl.u32 %v4349, 7
  %v4351 = vsub.s32 %v4348, %v4350
  %v4352 = vrot.slane %v4338, %v4351
  %v4353 = vcombine.high %v4345, %v4345
  %v4354 = vcombine.high %v4352, %v4352
  %v4356 = vunpack.c.l.s4 1983009808
  %v4357 = vunpack.c.0.s8 %v4356
  %v4358 = vlaneseq
  %v4359 = vshrl.u32 %v4358, 7
  %v4360 = vsub.s32 %v4357, %v4359
  %v4361 = vrot.slane %v31, %v4360
  %4371 = vmatprep.subr.mxu0 0.0
  %v4372 = vand.u32 %v32, 4294901760
  %4373 = vmatpush1.msra.mxu0 %v4372
  %4374 = vmatprep.subr.mxu0 0.0
  %v4375 = vand.u32 %v33, 4294901760
  %4376 = vmatpush1.msra.mxu0 %v4375
  %4377 = vmatprep.subr.mxu0 0.0
  %v4378 = vand.u32 %v34, 4294901760
  %4379 = vmatpush1.msra.mxu0 %v4378
  %4380 = vmatprep.subr.mxu0 0.0
  %v4381 = vand.u32 %v35, 4294901760
  %4382 = vmatpush1.msra.mxu0 %v4381
  %4383 = vmatprep.subr.mxu0 0.0
  %v4384 = vand.u32 %v36, 4294901760
  %4385 = vmatpush1.msra.mxu0 %v4384
  %4386 = vmatprep.subr.mxu0 0.0
  %v4387 = vand.u32 %v37, 4294901760
  %4388 = vmatpush1.msra.mxu0 %v4387
  %4389 = vmatprep.subr.mxu0 0.0
  %v4390 = vand.u32 %v38, 4294901760
  %4391 = vmatpush1.msra.mxu0 %v4390
  %4392 = vmatprep.subr.mxu0 0.0
  %v4393 = vand.u32 %v39, 4294901760
  %4394 = vmatpush1.msra.mxu0 %v4393
  %4395 = vmatprep.subr.mxu0 0.0
  %v4396 = vand.u32 %v40, 4294901760
  %4397 = vmatpush1.msra.mxu0 %v4396
  %4398 = vmatprep.subr.mxu0 0.0
  %v4399 = vand.u32 %v41, 4294901760
  %4400 = vmatpush1.msra.mxu0 %v4399
  %4401 = vmatprep.subr.mxu0 0.0
  %v4402 = vand.u32 %v42, 4294901760
  %4403 = vmatpush1.msra.mxu0 %v4402
  %4404 = vmatprep.subr.mxu0 0.0
  %v4405 = vand.u32 %v43, 4294901760
  %4406 = vmatpush1.msra.mxu0 %v4405
  %4407 = vmatprep.subr.mxu0 0.0
  %v4408 = vand.u32 %v44, 4294901760
  %4409 = vmatpush1.msra.mxu0 %v4408
  %4410 = vmatprep.subr.mxu0 0.0
  %v4411 = vand.u32 %v45, 4294901760
  %4412 = vmatpush1.msra.mxu0 %v4411
  %4413 = vmatprep.subr.mxu0 0.0
  %v4414 = vand.u32 %v46, 4294901760
  %4415 = vmatpush1.msra.mxu0 %v4414
  %4416 = vmatprep.subr.mxu0 0.0
  %v4417 = vand.u32 %v47, 4294901760
  %4418 = vmatpush1.msra.mxu0 %v4417
  %4419 = vmatprep.subr.mxu0 0.0
  %v4420 = vand.u32 %v48, 4294901760
  %4421 = vmatpush1.msra.mxu0 %v4420
  %4422 = vmatprep.subr.mxu0 0.0
  %v4423 = vand.u32 %v49, 4294901760
  %4424 = vmatpush1.msra.mxu0 %v4423
  %4425 = vmatprep.subr.mxu0 0.0
  %v4426 = vand.u32 %v50, 4294901760
  %4427 = vmatpush1.msra.mxu0 %v4426
  %4428 = vmatprep.subr.mxu0 0.0
  %v4429 = vand.u32 %v51, 4294901760
  %4430 = vmatpush1.msra.mxu0 %v4429
  %4431 = vmatprep.subr.mxu0 0.0
  %v4432 = vand.u32 %v52, 4294901760
  %4433 = vmatpush1.msra.mxu0 %v4432
  %4434 = vmatprep.subr.mxu0 0.0
  %v4435 = vand.u32 %v53, 4294901760
  %4436 = vmatpush1.msra.mxu0 %v4435
  %4437 = vmatprep.subr.mxu0 0.0
  %v4438 = vand.u32 %v54, 4294901760
  %4439 = vmatpush1.msra.mxu0 %v4438
  %4440 = vmatprep.subr.mxu0 0.0
  %v4441 = vand.u32 %v55, 4294901760
  %4442 = vmatpush1.msra.mxu0 %v4441
  %4443 = vmatprep.subr.mxu0 0.0
  %v4444 = vand.u32 %v56, 4294901760
  %4445 = vmatpush1.msra.mxu0 %v4444
  %4446 = vmatprep.subr.mxu0 0.0
  %v4447 = vand.u32 %v57, 4294901760
  %4448 = vmatpush1.msra.mxu0 %v4447
  %4449 = vmatprep.subr.mxu0 0.0
  %v4450 = vand.u32 %v58, 4294901760
  %4451 = vmatpush1.msra.mxu0 %v4450
  %4452 = vmatprep.subr.mxu0 0.0
  %v4453 = vand.u32 %v59, 4294901760
  %4454 = vmatpush1.msra.mxu0 %v4453
  %4455 = vmatprep.subr.mxu0 0.0
  %v4456 = vand.u32 %v60, 4294901760
  %4457 = vmatpush1.msra.mxu0 %v4456
  %4458 = vmatprep.subr.mxu0 0.0
  %v4459 = vand.u32 %v61, 4294901760
  %4460 = vmatpush1.msra.mxu0 %v4459
  %4461 = vmatprep.subr.mxu0 0.0
  %v4462 = vand.u32 %v62, 4294901760
  %4463 = vmatpush1.msra.mxu0 %v4462
  %4464 = vmatprep.subr.mxu0 0.0
  %v4465 = vand.u32 %v63, 4294901760
  %4466 = vmatpush1.msra.mxu0 %v4465
  %v4467 = vand.u32 %v4336, 4294901760
  %v4468 = vsub.f32 %v4336, %v4467
  %v4469 = vand.u32 %v4468, 4294901760
  %v4470 = vsub.f32 %v4468, %v4469
  %v4471 = vand.u32 %v4470, 4294901760
  %4472 = vmatprep.mubr.f32.mxu0 %v4471
  %v4473 = vand.u32 %v4328, 4294901760
  %v4474 = vsub.f32 %v4328, %v4473
  %v4475 = vand.u32 %v4474, 4294901760
  %v4476 = vsub.f32 %v4474, %v4475
  %v4477 = vand.u32 %v4476, 4294901760
  %4478 = vmatmul.mubr.f32.gmra.mrb[0].mxu0 %v4477
  %v4479 = vpop.f32.mrb[0].mxu0
  %v4480 = vadd.f32 0.0, %v4479
  %v4481 = vpop.f32.mrb[0].mxu0
  %4482 = vdwg.mxu0
  %4483 = vmatprep.subr.mxu0 0.0
  %v4484 = vand.u32 %v32, 4294901760
  %v4485 = vsub.f32 %v32, %v4484
  %v4486 = vand.u32 %v4485, 4294901760
  %v4487 = vsub.f32 %v4485, %v4486
  %v4488 = vand.u32 %v4487, 4294901760
  %4489 = vmatpush1.msra.mxu0 %v4488
  %4490 = vmatprep.subr.mxu0 0.0
  %v4491 = vand.u32 %v33, 4294901760
  %v4492 = vsub.f32 %v33, %v4491
  %v4493 = vand.u32 %v4492, 4294901760
  %v4494 = vsub.f32 %v4492, %v4493
  %v4495 = vand.u32 %v4494, 4294901760
  %4496 = vmatpush1.msra.mxu0 %v4495
  %4497 = vmatprep.subr.mxu0 0.0
  %v4498 = vand.u32 %v34, 4294901760
  %v4499 = vsub.f32 %v34, %v4498
  %v4500 = vand.u32 %v4499, 4294901760
  %v4501 = vsub.f32 %v4499, %v4500
  %v4502 = vand.u32 %v4501, 4294901760
  %4503 = vmatpush1.msra.mxu0 %v4502
  %4504 = vmatprep.subr.mxu0 0.0
  %v4505 = vand.u32 %v35, 4294901760
  %v4506 = vsub.f32 %v35, %v4505
  %v4507 = vand.u32 %v4506, 4294901760
  %v4508 = vsub.f32 %v4506, %v4507
  %v4509 = vand.u32 %v4508, 4294901760
  %4510 = vmatpush1.msra.mxu0 %v4509
  %4511 = vmatprep.subr.mxu0 0.0
  %v4512 = vand.u32 %v36, 4294901760
  %v4513 = vsub.f32 %v36, %v4512
  %v4514 = vand.u32 %v4513, 4294901760
  %v4515 = vsub.f32 %v4513, %v4514
  %v4516 = vand.u32 %v4515, 4294901760
  %4517 = vmatpush1.msra.mxu0 %v4516
  %4518 = vmatprep.subr.mxu0 0.0
  %v4519 = vand.u32 %v37, 4294901760
  %v4520 = vsub.f32 %v37, %v4519
  %v4521 = vand.u32 %v4520, 4294901760
  %v4522 = vsub.f32 %v4520, %v4521
  %v4523 = vand.u32 %v4522, 4294901760
  %4524 = vmatpush1.msra.mxu0 %v4523
  %4525 = vmatprep.subr.mxu0 0.0
  %v4526 = vand.u32 %v38, 4294901760
  %v4527 = vsub.f32 %v38, %v4526
  %v4528 = vand.u32 %v4527, 4294901760
  %v4529 = vsub.f32 %v4527, %v4528
  %v4530 = vand.u32 %v4529, 4294901760
  %4531 = vmatpush1.msra.mxu0 %v4530
  %4532 = vmatprep.subr.mxu0 0.0
  %v4533 = vand.u32 %v39, 4294901760
  %v4534 = vsub.f32 %v39, %v4533
  %v4535 = vand.u32 %v4534, 4294901760
  %v4536 = vsub.f32 %v4534, %v4535
  %v4537 = vand.u32 %v4536, 4294901760
  %4538 = vmatpush1.msra.mxu0 %v4537
  %4539 = vmatprep.subr.mxu0 0.0
  %v4540 = vand.u32 %v40, 4294901760
  %v4541 = vsub.f32 %v40, %v4540
  %v4542 = vand.u32 %v4541, 4294901760
  %v4543 = vsub.f32 %v4541, %v4542
  %v4544 = vand.u32 %v4543, 4294901760
  %4545 = vmatpush1.msra.mxu0 %v4544
  %4546 = vmatprep.subr.mxu0 0.0
  %v4547 = vand.u32 %v41, 4294901760
  %v4548 = vsub.f32 %v41, %v4547
  %v4549 = vand.u32 %v4548, 4294901760
  %v4550 = vsub.f32 %v4548, %v4549
  %v4551 = vand.u32 %v4550, 4294901760
  %4552 = vmatpush1.msra.mxu0 %v4551
  %4553 = vmatprep.subr.mxu0 0.0
  %v4554 = vand.u32 %v42, 4294901760
  %v4555 = vsub.f32 %v42, %v4554
  %v4556 = vand.u32 %v4555, 4294901760
  %v4557 = vsub.f32 %v4555, %v4556
  %v4558 = vand.u32 %v4557, 4294901760
  %4559 = vmatpush1.msra.mxu0 %v4558
  %4560 = vmatprep.subr.mxu0 0.0
  %v4561 = vand.u32 %v43, 4294901760
  %v4562 = vsub.f32 %v43, %v4561
  %v4563 = vand.u32 %v4562, 4294901760
  %v4564 = vsub.f32 %v4562, %v4563
  %v4565 = vand.u32 %v4564, 4294901760
  %4566 = vmatpush1.msra.mxu0 %v4565
  %4567 = vmatprep.subr.mxu0 0.0
  %v4568 = vand.u32 %v44, 4294901760
  %v4569 = vsub.f32 %v44, %v4568
  %v4570 = vand.u32 %v4569, 4294901760
  %v4571 = vsub.f32 %v4569, %v4570
  %v4572 = vand.u32 %v4571, 4294901760
  %4573 = vmatpush1.msra.mxu0 %v4572
  %4574 = vmatprep.subr.mxu0 0.0
  %v4575 = vand.u32 %v45, 4294901760
  %v4576 = vsub.f32 %v45, %v4575
  %v4577 = vand.u32 %v4576, 4294901760
  %v4578 = vsub.f32 %v4576, %v4577
  %v4579 = vand.u32 %v4578, 4294901760
  %4580 = vmatpush1.msra.mxu0 %v4579
  %4581 = vmatprep.subr.mxu0 0.0
  %v4582 = vand.u32 %v46, 4294901760
  %v4583 = vsub.f32 %v46, %v4582
  %v4584 = vand.u32 %v4583, 4294901760
  %v4585 = vsub.f32 %v4583, %v4584
  %v4586 = vand.u32 %v4585, 4294901760
  %4587 = vmatpush1.msra.mxu0 %v4586
  %4588 = vmatprep.subr.mxu0 0.0
  %v4589 = vand.u32 %v47, 4294901760
  %v4590 = vsub.f32 %v47, %v4589
  %v4591 = vand.u32 %v4590, 4294901760
  %v4592 = vsub.f32 %v4590, %v4591
  %v4593 = vand.u32 %v4592, 4294901760
  %4594 = vmatpush1.msra.mxu0 %v4593
  %4595 = vmatprep.subr.mxu0 0.0
  %v4596 = vand.u32 %v48, 4294901760
  %v4597 = vsub.f32 %v48, %v4596
  %v4598 = vand.u32 %v4597, 4294901760
  %v4599 = vsub.f32 %v4597, %v4598
  %v4600 = vand.u32 %v4599, 4294901760
  %4601 = vmatpush1.msra.mxu0 %v4600
  %4602 = vmatprep.subr.mxu0 0.0
  %v4603 = vand.u32 %v49, 4294901760
  %v4604 = vsub.f32 %v49, %v4603
  %v4605 = vand.u32 %v4604, 4294901760
  %v4606 = vsub.f32 %v4604, %v4605
  %v4607 = vand.u32 %v4606, 4294901760
  %4608 = vmatpush1.msra.mxu0 %v4607
  %4609 = vmatprep.subr.mxu0 0.0
  %v4610 = vand.u32 %v50, 4294901760
  %v4611 = vsub.f32 %v50, %v4610
  %v4612 = vand.u32 %v4611, 4294901760
  %v4613 = vsub.f32 %v4611, %v4612
  %v4614 = vand.u32 %v4613, 4294901760
  %4615 = vmatpush1.msra.mxu0 %v4614
  %4616 = vmatprep.subr.mxu0 0.0
  %v4617 = vand.u32 %v51, 4294901760
  %v4618 = vsub.f32 %v51, %v4617
  %v4619 = vand.u32 %v4618, 4294901760
  %v4620 = vsub.f32 %v4618, %v4619
  %v4621 = vand.u32 %v4620, 4294901760
  %4622 = vmatpush1.msra.mxu0 %v4621
  %4623 = vmatprep.subr.mxu0 0.0
  %v4624 = vand.u32 %v52, 4294901760
  %v4625 = vsub.f32 %v52, %v4624
  %v4626 = vand.u32 %v4625, 4294901760
  %v4627 = vsub.f32 %v4625, %v4626
  %v4628 = vand.u32 %v4627, 4294901760
  %4629 = vmatpush1.msra.mxu0 %v4628
  %4630 = vmatprep.subr.mxu0 0.0
  %v4631 = vand.u32 %v53, 4294901760
  %v4632 = vsub.f32 %v53, %v4631
  %v4633 = vand.u32 %v4632, 4294901760
  %v4634 = vsub.f32 %v4632, %v4633
  %v4635 = vand.u32 %v4634, 4294901760
  %4636 = vmatpush1.msra.mxu0 %v4635
  %4637 = vmatprep.subr.mxu0 0.0
  %v4638 = vand.u32 %v54, 4294901760
  %v4639 = vsub.f32 %v54, %v4638
  %v4640 = vand.u32 %v4639, 4294901760
  %v4641 = vsub.f32 %v4639, %v4640
  %v4642 = vand.u32 %v4641, 4294901760
  %4643 = vmatpush1.msra.mxu0 %v4642
  %4644 = vmatprep.subr.mxu0 0.0
  %v4645 = vand.u32 %v55, 4294901760
  %v4646 = vsub.f32 %v55, %v4645
  %v4647 = vand.u32 %v4646, 4294901760
  %v4648 = vsub.f32 %v4646, %v4647
  %v4649 = vand.u32 %v4648, 4294901760
  %4650 = vmatpush1.msra.mxu0 %v4649
  %4651 = vmatprep.subr.mxu0 0.0
  %v4652 = vand.u32 %v56, 4294901760
  %v4653 = vsub.f32 %v56, %v4652
  %v4654 = vand.u32 %v4653, 4294901760
  %v4655 = vsub.f32 %v4653, %v4654
  %v4656 = vand.u32 %v4655, 4294901760
  %4657 = vmatpush1.msra.mxu0 %v4656
  %4658 = vmatprep.subr.mxu0 0.0
  %v4659 = vand.u32 %v57, 4294901760
  %v4660 = vsub.f32 %v57, %v4659
  %v4661 = vand.u32 %v4660, 4294901760
  %v4662 = vsub.f32 %v4660, %v4661
  %v4663 = vand.u32 %v4662, 4294901760
  %4664 = vmatpush1.msra.mxu0 %v4663
  %4665 = vmatprep.subr.mxu0 0.0
  %v4666 = vand.u32 %v58, 4294901760
  %v4667 = vsub.f32 %v58, %v4666
  %v4668 = vand.u32 %v4667, 4294901760
  %v4669 = vsub.f32 %v4667, %v4668
  %v4670 = vand.u32 %v4669, 4294901760
  %4671 = vmatpush1.msra.mxu0 %v4670
  %4672 = vmatprep.subr.mxu0 0.0
  %v4673 = vand.u32 %v59, 4294901760
  %v4674 = vsub.f32 %v59, %v4673
  %v4675 = vand.u32 %v4674, 4294901760
  %v4676 = vsub.f32 %v4674, %v4675
  %v4677 = vand.u32 %v4676, 4294901760
  %4678 = vmatpush1.msra.mxu0 %v4677
  %4679 = vmatprep.subr.mxu0 0.0
  %v4680 = vand.u32 %v60, 4294901760
  %v4681 = vsub.f32 %v60, %v4680
  %v4682 = vand.u32 %v4681, 4294901760
  %v4683 = vsub.f32 %v4681, %v4682
  %v4684 = vand.u32 %v4683, 4294901760
  %4685 = vmatpush1.msra.mxu0 %v4684
  %4686 = vmatprep.subr.mxu0 0.0
  %v4687 = vand.u32 %v61, 4294901760
  %v4688 = vsub.f32 %v61, %v4687
  %v4689 = vand.u32 %v4688, 4294901760
  %v4690 = vsub.f32 %v4688, %v4689
  %v4691 = vand.u32 %v4690, 4294901760
  %4692 = vmatpush1.msra.mxu0 %v4691
  %4693 = vmatprep.subr.mxu0 0.0
  %v4694 = vand.u32 %v62, 4294901760
  %v4695 = vsub.f32 %v62, %v4694
  %v4696 = vand.u32 %v4695, 4294901760
  %v4697 = vsub.f32 %v4695, %v4696
  %v4698 = vand.u32 %v4697, 4294901760
  %4699 = vmatpush1.msra.mxu0 %v4698
  %4700 = vmatprep.subr.mxu0 0.0
  %v4701 = vand.u32 %v63, 4294901760
  %v4702 = vsub.f32 %v63, %v4701
  %v4703 = vand.u32 %v4702, 4294901760
  %v4704 = vsub.f32 %v4702, %v4703
  %v4705 = vand.u32 %v4704, 4294901760
  %4706 = vmatpush1.msra.mxu0 %v4705
  %v4707 = vand.u32 %v4336, 4294901760
  %4708 = vmatprep.mubr.f32.mxu0 %v4707
  %v4709 = vand.u32 %v4328, 4294901760
  %4710 = vmatmul.mubr.f32.gmra.mrb[0].mxu0 %v4709
  %v4711 = vpop.f32.mrb[0].mxu0
  %v4712 = vadd.f32 %v4480, %v4711
  %v4713 = vpop.f32.mrb[0].mxu0
  %4714 = vdwg.mxu0
  %4715 = vmatprep.subr.mxu0 0.0
  %v4716 = vand.u32 %v32, 4294901760
  %v4717 = vsub.f32 %v32, %v4716
  %4718 = vmatpush1.msra.mxu0 %v4717
  %4719 = vmatprep.subr.mxu0 0.0
  %v4720 = vand.u32 %v33, 4294901760
  %v4721 = vsub.f32 %v33, %v4720
  %4722 = vmatpush1.msra.mxu0 %v4721
  %4723 = vmatprep.subr.mxu0 0.0
  %v4724 = vand.u32 %v34, 4294901760
  %v4725 = vsub.f32 %v34, %v4724
  %4726 = vmatpush1.msra.mxu0 %v4725
  %4727 = vmatprep.subr.mxu0 0.0
  %v4728 = vand.u32 %v35, 4294901760
  %v4729 = vsub.f32 %v35, %v4728
  %4730 = vmatpush1.msra.mxu0 %v4729
  %4731 = vmatprep.subr.mxu0 0.0
  %v4732 = vand.u32 %v36, 4294901760
  %v4733 = vsub.f32 %v36, %v4732
  %4734 = vmatpush1.msra.mxu0 %v4733
  %4735 = vmatprep.subr.mxu0 0.0
  %v4736 = vand.u32 %v37, 4294901760
  %v4737 = vsub.f32 %v37, %v4736
  %4738 = vmatpush1.msra.mxu0 %v4737
  %4739 = vmatprep.subr.mxu0 0.0
  %v4740 = vand.u32 %v38, 4294901760
  %v4741 = vsub.f32 %v38, %v4740
  %4742 = vmatpush1.msra.mxu0 %v4741
  %4743 = vmatprep.subr.mxu0 0.0
  %v4744 = vand.u32 %v39, 4294901760
  %v4745 = vsub.f32 %v39, %v4744
  %4746 = vmatpush1.msra.mxu0 %v4745
  %4747 = vmatprep.subr.mxu0 0.0
  %v4748 = vand.u32 %v40, 4294901760
  %v4749 = vsub.f32 %v40, %v4748
  %4750 = vmatpush1.msra.mxu0 %v4749
  %4751 = vmatprep.subr.mxu0 0.0
  %v4752 = vand.u32 %v41, 4294901760
  %v4753 = vsub.f32 %v41, %v4752
  %4754 = vmatpush1.msra.mxu0 %v4753
  %4755 = vmatprep.subr.mxu0 0.0
  %v4756 = vand.u32 %v42, 4294901760
  %v4757 = vsub.f32 %v42, %v4756
  %4758 = vmatpush1.msra.mxu0 %v4757
  %4759 = vmatprep.subr.mxu0 0.0
  %v4760 = vand.u32 %v43, 4294901760
  %v4761 = vsub.f32 %v43, %v4760
  %4762 = vmatpush1.msra.mxu0 %v4761
  %4763 = vmatprep.subr.mxu0 0.0
  %v4764 = vand.u32 %v44, 4294901760
  %v4765 = vsub.f32 %v44, %v4764
  %4766 = vmatpush1.msra.mxu0 %v4765
  %4767 = vmatprep.subr.mxu0 0.0
  %v4768 = vand.u32 %v45, 4294901760
  %v4769 = vsub.f32 %v45, %v4768
  %4770 = vmatpush1.msra.mxu0 %v4769
  %4771 = vmatprep.subr.mxu0 0.0
  %v4772 = vand.u32 %v46, 4294901760
  %v4773 = vsub.f32 %v46, %v4772
  %4774 = vmatpush1.msra.mxu0 %v4773
  %4775 = vmatprep.subr.mxu0 0.0
  %v4776 = vand.u32 %v47, 4294901760
  %v4777 = vsub.f32 %v47, %v4776
  %4778 = vmatpush1.msra.mxu0 %v4777
  %4779 = vmatprep.subr.mxu0 0.0
  %v4780 = vand.u32 %v48, 4294901760
  %v4781 = vsub.f32 %v48, %v4780
  %4782 = vmatpush1.msra.mxu0 %v4781
  %4783 = vmatprep.subr.mxu0 0.0
  %v4784 = vand.u32 %v49, 4294901760
  %v4785 = vsub.f32 %v49, %v4784
  %4786 = vmatpush1.msra.mxu0 %v4785
  %4787 = vmatprep.subr.mxu0 0.0
  %v4788 = vand.u32 %v50, 4294901760
  %v4789 = vsub.f32 %v50, %v4788
  %4790 = vmatpush1.msra.mxu0 %v4789
  %4791 = vmatprep.subr.mxu0 0.0
  %v4792 = vand.u32 %v51, 4294901760
  %v4793 = vsub.f32 %v51, %v4792
  %4794 = vmatpush1.msra.mxu0 %v4793
  %4795 = vmatprep.subr.mxu0 0.0
  %v4796 = vand.u32 %v52, 4294901760
  %v4797 = vsub.f32 %v52, %v4796
  %4798 = vmatpush1.msra.mxu0 %v4797
  %4799 = vmatprep.subr.mxu0 0.0
  %v4800 = vand.u32 %v53, 4294901760
  %v4801 = vsub.f32 %v53, %v4800
  %4802 = vmatpush1.msra.mxu0 %v4801
  %4803 = vmatprep.subr.mxu0 0.0
  %v4804 = vand.u32 %v54, 4294901760
  %v4805 = vsub.f32 %v54, %v4804
  %4806 = vmatpush1.msra.mxu0 %v4805
  %4807 = vmatprep.subr.mxu0 0.0
  %v4808 = vand.u32 %v55, 4294901760
  %v4809 = vsub.f32 %v55, %v4808
  %4810 = vmatpush1.msra.mxu0 %v4809
  %4811 = vmatprep.subr.mxu0 0.0
  %v4812 = vand.u32 %v56, 4294901760
  %v4813 = vsub.f32 %v56, %v4812
  %4814 = vmatpush1.msra.mxu0 %v4813
  %4815 = vmatprep.subr.mxu0 0.0
  %v4816 = vand.u32 %v57, 4294901760
  %v4817 = vsub.f32 %v57, %v4816
  %4818 = vmatpush1.msra.mxu0 %v4817
  %4819 = vmatprep.subr.mxu0 0.0
  %v4820 = vand.u32 %v58, 4294901760
  %v4821 = vsub.f32 %v58, %v4820
  %4822 = vmatpush1.msra.mxu0 %v4821
  %4823 = vmatprep.subr.mxu0 0.0
  %v4824 = vand.u32 %v59, 4294901760
  %v4825 = vsub.f32 %v59, %v4824
  %4826 = vmatpush1.msra.mxu0 %v4825
  %4827 = vmatprep.subr.mxu0 0.0
  %v4828 = vand.u32 %v60, 4294901760
  %v4829 = vsub.f32 %v60, %v4828
  %4830 = vmatpush1.msra.mxu0 %v4829
  %4831 = vmatprep.subr.mxu0 0.0
  %v4832 = vand.u32 %v61, 4294901760
  %v4833 = vsub.f32 %v61, %v4832
  %4834 = vmatpush1.msra.mxu0 %v4833
  %4835 = vmatprep.subr.mxu0 0.0
  %v4836 = vand.u32 %v62, 4294901760
  %v4837 = vsub.f32 %v62, %v4836
  %4838 = vmatpush1.msra.mxu0 %v4837
  %4839 = vmatprep.subr.mxu0 0.0
  %v4840 = vand.u32 %v63, 4294901760
  %v4841 = vsub.f32 %v63, %v4840
  %4842 = vmatpush1.msra.mxu0 %v4841
  %v4843 = vand.u32 %v4336, 4294901760
  %v4844 = vsub.f32 %v4336, %v4843
  %4845 = vmatprep.mubr.f32.mxu0 %v4844
  %v4846 = vand.u32 %v4328, 4294901760
  %v4847 = vsub.f32 %v4328, %v4846
  %4848 = vmatmul.mubr.f32.gmra.mrb[0].mxu0 %v4847
  %v4849 = vpop.f32.mrb[0].mxu0
  %v4850 = vadd.f32 %v4712, %v4849
  %v4851 = vpop.f32.mrb[0].mxu0
  %4852 = vdwg.mxu0
  %4853 = vmatprep.subr.mxu0 0.0
  %v4854 = vand.u32 %v32, 4294901760
  %4855 = vmatpush1.msra.mxu0 %v4854
  %4856 = vmatprep.subr.mxu0 0.0
  %v4857 = vand.u32 %v33, 4294901760
  %4858 = vmatpush1.msra.mxu0 %v4857
  %4859 = vmatprep.subr.mxu0 0.0
  %v4860 = vand.u32 %v34, 4294901760
  %4861 = vmatpush1.msra.mxu0 %v4860
  %4862 = vmatprep.subr.mxu0 0.0
  %v4863 = vand.u32 %v35, 4294901760
  %4864 = vmatpush1.msra.mxu0 %v4863
  %4865 = vmatprep.subr.mxu0 0.0
  %v4866 = vand.u32 %v36, 4294901760
  %4867 = vmatpush1.msra.mxu0 %v4866
  %4868 = vmatprep.subr.mxu0 0.0
  %v4869 = vand.u32 %v37, 4294901760
  %4870 = vmatpush1.msra.mxu0 %v4869
  %4871 = vmatprep.subr.mxu0 0.0
  %v4872 = vand.u32 %v38, 4294901760
  %4873 = vmatpush1.msra.mxu0 %v4872
  %4874 = vmatprep.subr.mxu0 0.0
  %v4875 = vand.u32 %v39, 4294901760
  %4876 = vmatpush1.msra.mxu0 %v4875
  %4877 = vmatprep.subr.mxu0 0.0
  %v4878 = vand.u32 %v40, 4294901760
  %4879 = vmatpush1.msra.mxu0 %v4878
  %4880 = vmatprep.subr.mxu0 0.0
  %v4881 = vand.u32 %v41, 4294901760
  %4882 = vmatpush1.msra.mxu0 %v4881
  %4883 = vmatprep.subr.mxu0 0.0
  %v4884 = vand.u32 %v42, 4294901760
  %4885 = vmatpush1.msra.mxu0 %v4884
  %4886 = vmatprep.subr.mxu0 0.0
  %v4887 = vand.u32 %v43, 4294901760
  %4888 = vmatpush1.msra.mxu0 %v4887
  %4889 = vmatprep.subr.mxu0 0.0
  %v4890 = vand.u32 %v44, 4294901760
  %4891 = vmatpush1.msra.mxu0 %v4890
  %4892 = vmatprep.subr.mxu0 0.0
  %v4893 = vand.u32 %v45, 4294901760
  %4894 = vmatpush1.msra.mxu0 %v4893
  %4895 = vmatprep.subr.mxu0 0.0
  %v4896 = vand.u32 %v46, 4294901760
  %4897 = vmatpush1.msra.mxu0 %v4896
  %4898 = vmatprep.subr.mxu0 0.0
  %v4899 = vand.u32 %v47, 4294901760
  %4900 = vmatpush1.msra.mxu0 %v4899
  %4901 = vmatprep.subr.mxu0 0.0
  %v4902 = vand.u32 %v48, 4294901760
  %4903 = vmatpush1.msra.mxu0 %v4902
  %4904 = vmatprep.subr.mxu0 0.0
  %v4905 = vand.u32 %v49, 4294901760
  %4906 = vmatpush1.msra.mxu0 %v4905
  %4907 = vmatprep.subr.mxu0 0.0
  %v4908 = vand.u32 %v50, 4294901760
  %4909 = vmatpush1.msra.mxu0 %v4908
  %4910 = vmatprep.subr.mxu0 0.0
  %v4911 = vand.u32 %v51, 4294901760
  %4912 = vmatpush1.msra.mxu0 %v4911
  %4913 = vmatprep.subr.mxu0 0.0
  %v4914 = vand.u32 %v52, 4294901760
  %4915 = vmatpush1.msra.mxu0 %v4914
  %4916 = vmatprep.subr.mxu0 0.0
  %v4917 = vand.u32 %v53, 4294901760
  %4918 = vmatpush1.msra.mxu0 %v4917
  %4919 = vmatprep.subr.mxu0 0.0
  %v4920 = vand.u32 %v54, 4294901760
  %4921 = vmatpush1.msra.mxu0 %v4920
  %4922 = vmatprep.subr.mxu0 0.0
  %v4923 = vand.u32 %v55, 4294901760
  %4924 = vmatpush1.msra.mxu0 %v4923
  %4925 = vmatprep.subr.mxu0 0.0
  %v4926 = vand.u32 %v56, 4294901760
  %4927 = vmatpush1.msra.mxu0 %v4926
  %4928 = vmatprep.subr.mxu0 0.0
  %v4929 = vand.u32 %v57, 4294901760
  %4930 = vmatpush1.msra.mxu0 %v4929
  %4931 = vmatprep.subr.mxu0 0.0
  %v4932 = vand.u32 %v58, 4294901760
  %4933 = vmatpush1.msra.mxu0 %v4932
  %4934 = vmatprep.subr.mxu0 0.0
  %v4935 = vand.u32 %v59, 4294901760
  %4936 = vmatpush1.msra.mxu0 %v4935
  %4937 = vmatprep.subr.mxu0 0.0
  %v4938 = vand.u32 %v60, 4294901760
  %4939 = vmatpush1.msra.mxu0 %v4938
  %4940 = vmatprep.subr.mxu0 0.0
  %v4941 = vand.u32 %v61, 4294901760
  %4942 = vmatpush1.msra.mxu0 %v4941
  %4943 = vmatprep.subr.mxu0 0.0
  %v4944 = vand.u32 %v62, 4294901760
  %4945 = vmatpush1.msra.mxu0 %v4944
  %4946 = vmatprep.subr.mxu0 0.0
  %v4947 = vand.u32 %v63, 4294901760
  %4948 = vmatpush1.msra.mxu0 %v4947
  %v4949 = vand.u32 %v4336, 4294901760
  %v4950 = vsub.f32 %v4336, %v4949
  %v4951 = vand.u32 %v4950, 4294901760
  %4952 = vmatprep.mubr.f32.mxu0 %v4951
  %v4953 = vand.u32 %v4328, 4294901760
  %v4954 = vsub.f32 %v4328, %v4953
  %v4955 = vand.u32 %v4954, 4294901760
  %4956 = vmatmul.mubr.f32.gmra.mrb[0].mxu0 %v4955
  %v4957 = vpop.f32.mrb[0].mxu0
  %v4958 = vadd.f32 %v4850, %v4957
  %v4959 = vpop.f32.mrb[0].mxu0
  %4960 = vdwg.mxu0
  %4961 = vmatprep.subr.mxu0 0.0
  %v4962 = vand.u32 %v32, 4294901760
  %v4963 = vsub.f32 %v32, %v4962
  %v4964 = vand.u32 %v4963, 4294901760
  %4965 = vmatpush1.msra.mxu0 %v4964
  %4966 = vmatprep.subr.mxu0 0.0
  %v4967 = vand.u32 %v33, 4294901760
  %v4968 = vsub.f32 %v33, %v4967
  %v4969 = vand.u32 %v4968, 4294901760
  %4970 = vmatpush1.msra.mxu0 %v4969
  %4971 = vmatprep.subr.mxu0 0.0
  %v4972 = vand.u32 %v34, 4294901760
  %v4973 = vsub.f32 %v34, %v4972
  %v4974 = vand.u32 %v4973, 4294901760
  %4975 = vmatpush1.msra.mxu0 %v4974
  %4976 = vmatprep.subr.mxu0 0.0
  %v4977 = vand.u32 %v35, 4294901760
  %v4978 = vsub.f32 %v35, %v4977
  %v4979 = vand.u32 %v4978, 4294901760
  %4980 = vmatpush1.msra.mxu0 %v4979
  %4981 = vmatprep.subr.mxu0 0.0
  %v4982 = vand.u32 %v36, 4294901760
  %v4983 = vsub.f32 %v36, %v4982
  %v4984 = vand.u32 %v4983, 4294901760
  %4985 = vmatpush1.msra.mxu0 %v4984
  %4986 = vmatprep.subr.mxu0 0.0
  %v4987 = vand.u32 %v37, 4294901760
  %v4988 = vsub.f32 %v37, %v4987
  %v4989 = vand.u32 %v4988, 4294901760
  %4990 = vmatpush1.msra.mxu0 %v4989
  %4991 = vmatprep.subr.mxu0 0.0
  %v4992 = vand.u32 %v38, 4294901760
  %v4993 = vsub.f32 %v38, %v4992
  %v4994 = vand.u32 %v4993, 4294901760
  %4995 = vmatpush1.msra.mxu0 %v4994
  %4996 = vmatprep.subr.mxu0 0.0
  %v4997 = vand.u32 %v39, 4294901760
  %v4998 = vsub.f32 %v39, %v4997
  %v4999 = vand.u32 %v4998, 4294901760
  %5000 = vmatpush1.msra.mxu0 %v4999
  %5001 = vmatprep.subr.mxu0 0.0
  %v5002 = vand.u32 %v40, 4294901760
  %v5003 = vsub.f32 %v40, %v5002
  %v5004 = vand.u32 %v5003, 4294901760
  %5005 = vmatpush1.msra.mxu0 %v5004
  %5006 = vmatprep.subr.mxu0 0.0
  %v5007 = vand.u32 %v41, 4294901760
  %v5008 = vsub.f32 %v41, %v5007
  %v5009 = vand.u32 %v5008, 4294901760
  %5010 = vmatpush1.msra.mxu0 %v5009
  %5011 = vmatprep.subr.mxu0 0.0
  %v5012 = vand.u32 %v42, 4294901760
  %v5013 = vsub.f32 %v42, %v5012
  %v5014 = vand.u32 %v5013, 4294901760
  %5015 = vmatpush1.msra.mxu0 %v5014
  %5016 = vmatprep.subr.mxu0 0.0
  %v5017 = vand.u32 %v43, 4294901760
  %v5018 = vsub.f32 %v43, %v5017
  %v5019 = vand.u32 %v5018, 4294901760
  %5020 = vmatpush1.msra.mxu0 %v5019
  %5021 = vmatprep.subr.mxu0 0.0
  %v5022 = vand.u32 %v44, 4294901760
  %v5023 = vsub.f32 %v44, %v5022
  %v5024 = vand.u32 %v5023, 4294901760
  %5025 = vmatpush1.msra.mxu0 %v5024
  %5026 = vmatprep.subr.mxu0 0.0
  %v5027 = vand.u32 %v45, 4294901760
  %v5028 = vsub.f32 %v45, %v5027
  %v5029 = vand.u32 %v5028, 4294901760
  %5030 = vmatpush1.msra.mxu0 %v5029
  %5031 = vmatprep.subr.mxu0 0.0
  %v5032 = vand.u32 %v46, 4294901760
  %v5033 = vsub.f32 %v46, %v5032
  %v5034 = vand.u32 %v5033, 4294901760
  %5035 = vmatpush1.msra.mxu0 %v5034
  %5036 = vmatprep.subr.mxu0 0.0
  %v5037 = vand.u32 %v47, 4294901760
  %v5038 = vsub.f32 %v47, %v5037
  %v5039 = vand.u32 %v5038, 4294901760
  %5040 = vmatpush1.msra.mxu0 %v5039
  %5041 = vmatprep.subr.mxu0 0.0
  %v5042 = vand.u32 %v48, 4294901760
  %v5043 = vsub.f32 %v48, %v5042
  %v5044 = vand.u32 %v5043, 4294901760
  %5045 = vmatpush1.msra.mxu0 %v5044
  %5046 = vmatprep.subr.mxu0 0.0
  %v5047 = vand.u32 %v49, 4294901760
  %v5048 = vsub.f32 %v49, %v5047
  %v5049 = vand.u32 %v5048, 4294901760
  %5050 = vmatpush1.msra.mxu0 %v5049
  %5051 = vmatprep.subr.mxu0 0.0
  %v5052 = vand.u32 %v50, 4294901760
  %v5053 = vsub.f32 %v50, %v5052
  %v5054 = vand.u32 %v5053, 4294901760
  %5055 = vmatpush1.msra.mxu0 %v5054
  %5056 = vmatprep.subr.mxu0 0.0
  %v5057 = vand.u32 %v51, 4294901760
  %v5058 = vsub.f32 %v51, %v5057
  %v5059 = vand.u32 %v5058, 4294901760
  %5060 = vmatpush1.msra.mxu0 %v5059
  %5061 = vmatprep.subr.mxu0 0.0
  %v5062 = vand.u32 %v52, 4294901760
  %v5063 = vsub.f32 %v52, %v5062
  %v5064 = vand.u32 %v5063, 4294901760
  %5065 = vmatpush1.msra.mxu0 %v5064
  %5066 = vmatprep.subr.mxu0 0.0
  %v5067 = vand.u32 %v53, 4294901760
  %v5068 = vsub.f32 %v53, %v5067
  %v5069 = vand.u32 %v5068, 4294901760
  %5070 = vmatpush1.msra.mxu0 %v5069
  %5071 = vmatprep.subr.mxu0 0.0
  %v5072 = vand.u32 %v54, 4294901760
  %v5073 = vsub.f32 %v54, %v5072
  %v5074 = vand.u32 %v5073, 4294901760
  %5075 = vmatpush1.msra.mxu0 %v5074
  %5076 = vmatprep.subr.mxu0 0.0
  %v5077 = vand.u32 %v55, 4294901760
  %v5078 = vsub.f32 %v55, %v5077
  %v5079 = vand.u32 %v5078, 4294901760
  %5080 = vmatpush1.msra.mxu0 %v5079
  %5081 = vmatprep.subr.mxu0 0.0
  %v5082 = vand.u32 %v56, 4294901760
  %v5083 = vsub.f32 %v56, %v5082
  %v5084 = vand.u32 %v5083, 4294901760
  %5085 = vmatpush1.msra.mxu0 %v5084
  %5086 = vmatprep.subr.mxu0 0.0
  %v5087 = vand.u32 %v57, 4294901760
  %v5088 = vsub.f32 %v57, %v5087
  %v5089 = vand.u32 %v5088, 4294901760
  %5090 = vmatpush1.msra.mxu0 %v5089
  %5091 = vmatprep.subr.mxu0 0.0
  %v5092 = vand.u32 %v58, 4294901760
  %v5093 = vsub.f32 %v58, %v5092
  %v5094 = vand.u32 %v5093, 4294901760
  %5095 = vmatpush1.msra.mxu0 %v5094
  %5096 = vmatprep.subr.mxu0 0.0
  %v5097 = vand.u32 %v59, 4294901760
  %v5098 = vsub.f32 %v59, %v5097
  %v5099 = vand.u32 %v5098, 4294901760
  %5100 = vmatpush1.msra.mxu0 %v5099
  %5101 = vmatprep.subr.mxu0 0.0
  %v5102 = vand.u32 %v60, 4294901760
  %v5103 = vsub.f32 %v60, %v5102
  %v5104 = vand.u32 %v5103, 4294901760
  %5105 = vmatpush1.msra.mxu0 %v5104
  %5106 = vmatprep.subr.mxu0 0.0
  %v5107 = vand.u32 %v61, 4294901760
  %v5108 = vsub.f32 %v61, %v5107
  %v5109 = vand.u32 %v5108, 4294901760
  %5110 = vmatpush1.msra.mxu0 %v5109
  %5111 = vmatprep.subr.mxu0 0.0
  %v5112 = vand.u32 %v62, 4294901760
  %v5113 = vsub.f32 %v62, %v5112
  %v5114 = vand.u32 %v5113, 4294901760
  %5115 = vmatpush1.msra.mxu0 %v5114
  %5116 = vmatprep.subr.mxu0 0.0
  %v5117 = vand.u32 %v63, 4294901760
  %v5118 = vsub.f32 %v63, %v5117
  %v5119 = vand.u32 %v5118, 4294901760
  %5120 = vmatpush1.msra.mxu0 %v5119
  %v5121 = vand.u32 %v4336, 4294901760
  %5122 = vmatprep.mubr.f32.mxu0 %v5121
  %v5123 = vand.u32 %v4328, 4294901760
  %5124 = vmatmul.mubr.f32.gmra.mrb[0].mxu0 %v5123
  %v5125 = vpop.f32.mrb[0].mxu0
  %v5126 = vadd.f32 %v4958, %v5125
  %v5127 = vpop.f32.mrb[0].mxu0
  %5128 = vdwg.mxu0
  %5129 = vmatprep.subr.mxu0 0.0
  %v5130 = vand.u32 %v32, 4294901760
  %5131 = vmatpush1.msra.mxu0 %v5130
  %5132 = vmatprep.subr.mxu0 0.0
  %v5133 = vand.u32 %v33, 4294901760
  %5134 = vmatpush1.msra.mxu0 %v5133
  %5135 = vmatprep.subr.mxu0 0.0
  %v5136 = vand.u32 %v34, 4294901760
  %5137 = vmatpush1.msra.mxu0 %v5136
  %5138 = vmatprep.subr.mxu0 0.0
  %v5139 = vand.u32 %v35, 4294901760
  %5140 = vmatpush1.msra.mxu0 %v5139
  %5141 = vmatprep.subr.mxu0 0.0
  %v5142 = vand.u32 %v36, 4294901760
  %5143 = vmatpush1.msra.mxu0 %v5142
  %5144 = vmatprep.subr.mxu0 0.0
  %v5145 = vand.u32 %v37, 4294901760
  %5146 = vmatpush1.msra.mxu0 %v5145
  %5147 = vmatprep.subr.mxu0 0.0
  %v5148 = vand.u32 %v38, 4294901760
  %5149 = vmatpush1.msra.mxu0 %v5148
  %5150 = vmatprep.subr.mxu0 0.0
  %v5151 = vand.u32 %v39, 4294901760
  %5152 = vmatpush1.msra.mxu0 %v5151
  %5153 = vmatprep.subr.mxu0 0.0
  %v5154 = vand.u32 %v40, 4294901760
  %5155 = vmatpush1.msra.mxu0 %v5154
  %5156 = vmatprep.subr.mxu0 0.0
  %v5157 = vand.u32 %v41, 4294901760
  %5158 = vmatpush1.msra.mxu0 %v5157
  %5159 = vmatprep.subr.mxu0 0.0
  %v5160 = vand.u32 %v42, 4294901760
  %5161 = vmatpush1.msra.mxu0 %v5160
  %5162 = vmatprep.subr.mxu0 0.0
  %v5163 = vand.u32 %v43, 4294901760
  %5164 = vmatpush1.msra.mxu0 %v5163
  %5165 = vmatprep.subr.mxu0 0.0
  %v5166 = vand.u32 %v44, 4294901760
  %5167 = vmatpush1.msra.mxu0 %v5166
  %5168 = vmatprep.subr.mxu0 0.0
  %v5169 = vand.u32 %v45, 4294901760
  %5170 = vmatpush1.msra.mxu0 %v5169
  %5171 = vmatprep.subr.mxu0 0.0
  %v5172 = vand.u32 %v46, 4294901760
  %5173 = vmatpush1.msra.mxu0 %v5172
  %5174 = vmatprep.subr.mxu0 0.0
  %v5175 = vand.u32 %v47, 4294901760
  %5176 = vmatpush1.msra.mxu0 %v5175
  %5177 = vmatprep.subr.mxu0 0.0
  %v5178 = vand.u32 %v48, 4294901760
  %5179 = vmatpush1.msra.mxu0 %v5178
  %5180 = vmatprep.subr.mxu0 0.0
  %v5181 = vand.u32 %v49, 4294901760
  %5182 = vmatpush1.msra.mxu0 %v5181
  %5183 = vmatprep.subr.mxu0 0.0
  %v5184 = vand.u32 %v50, 4294901760
  %5185 = vmatpush1.msra.mxu0 %v5184
  %5186 = vmatprep.subr.mxu0 0.0
  %v5187 = vand.u32 %v51, 4294901760
  %5188 = vmatpush1.msra.mxu0 %v5187
  %5189 = vmatprep.subr.mxu0 0.0
  %v5190 = vand.u32 %v52, 4294901760
  %5191 = vmatpush1.msra.mxu0 %v5190
  %5192 = vmatprep.subr.mxu0 0.0
  %v5193 = vand.u32 %v53, 4294901760
  %5194 = vmatpush1.msra.mxu0 %v5193
  %5195 = vmatprep.subr.mxu0 0.0
  %v5196 = vand.u32 %v54, 4294901760
  %5197 = vmatpush1.msra.mxu0 %v5196
  %5198 = vmatprep.subr.mxu0 0.0
  %v5199 = vand.u32 %v55, 4294901760
  %5200 = vmatpush1.msra.mxu0 %v5199
  %5201 = vmatprep.subr.mxu0 0.0
  %v5202 = vand.u32 %v56, 4294901760
  %5203 = vmatpush1.msra.mxu0 %v5202
  %5204 = vmatprep.subr.mxu0 0.0
  %v5205 = vand.u32 %v57, 4294901760
  %5206 = vmatpush1.msra.mxu0 %v5205
  %5207 = vmatprep.subr.mxu0 0.0
  %v5208 = vand.u32 %v58, 4294901760
  %5209 = vmatpush1.msra.mxu0 %v5208
  %5210 = vmatprep.subr.mxu0 0.0
  %v5211 = vand.u32 %v59, 4294901760
  %5212 = vmatpush1.msra.mxu0 %v5211
  %5213 = vmatprep.subr.mxu0 0.0
  %v5214 = vand.u32 %v60, 4294901760
  %5215 = vmatpush1.msra.mxu0 %v5214
  %5216 = vmatprep.subr.mxu0 0.0
  %v5217 = vand.u32 %v61, 4294901760
  %5218 = vmatpush1.msra.mxu0 %v5217
  %5219 = vmatprep.subr.mxu0 0.0
  %v5220 = vand.u32 %v62, 4294901760
  %5221 = vmatpush1.msra.mxu0 %v5220
  %5222 = vmatprep.subr.mxu0 0.0
  %v5223 = vand.u32 %v63, 4294901760
  %5224 = vmatpush1.msra.mxu0 %v5223
  %v5225 = vand.u32 %v4336, 4294901760
  %5226 = vmatprep.mubr.f32.mxu0 %v5225
  %v5227 = vand.u32 %v4328, 4294901760
  %5228 = vmatmul.mubr.f32.gmra.mrb[0].mxu0 %v5227
  %v5229 = vpop.f32.mrb[0].mxu0
  %v5230 = vadd.f32 %v5126, %v5229
  %v5231 = vpop.f32.mrb[0].mxu0
  %5232 = vdwg.mxu0
  %5233 = vmatprep.subr.mxu0 0.0
  %v5234 = vand.u32 %v64, 4294901760
  %5235 = vmatpush1.msra.mxu0 %v5234
  %5236 = vmatprep.subr.mxu0 0.0
  %v5237 = vand.u32 %v65, 4294901760
  %5238 = vmatpush1.msra.mxu0 %v5237
  %5239 = vmatprep.subr.mxu0 0.0
  %v5240 = vand.u32 %v66, 4294901760
  %5241 = vmatpush1.msra.mxu0 %v5240
  %5242 = vmatprep.subr.mxu0 0.0
  %v5243 = vand.u32 %v67, 4294901760
  %5244 = vmatpush1.msra.mxu0 %v5243
  %5245 = vmatprep.subr.mxu0 0.0
  %v5246 = vand.u32 %v68, 4294901760
  %5247 = vmatpush1.msra.mxu0 %v5246
  %5248 = vmatprep.subr.mxu0 0.0
  %v5249 = vand.u32 %v69, 4294901760
  %5250 = vmatpush1.msra.mxu0 %v5249
  %5251 = vmatprep.subr.mxu0 0.0
  %v5252 = vand.u32 %v70, 4294901760
  %5253 = vmatpush1.msra.mxu0 %v5252
  %5254 = vmatprep.subr.mxu0 0.0
  %v5255 = vand.u32 %v71, 4294901760
  %5256 = vmatpush1.msra.mxu0 %v5255
  %5257 = vmatprep.subr.mxu0 0.0
  %v5258 = vand.u32 %v72, 4294901760
  %5259 = vmatpush1.msra.mxu0 %v5258
  %5260 = vmatprep.subr.mxu0 0.0
  %v5261 = vand.u32 %v73, 4294901760
  %5262 = vmatpush1.msra.mxu0 %v5261
  %5263 = vmatprep.subr.mxu0 0.0
  %v5264 = vand.u32 %v74, 4294901760
  %5265 = vmatpush1.msra.mxu0 %v5264
  %5266 = vmatprep.subr.mxu0 0.0
  %v5267 = vand.u32 %v75, 4294901760
  %5268 = vmatpush1.msra.mxu0 %v5267
  %5269 = vmatprep.subr.mxu0 0.0
  %v5270 = vand.u32 %v76, 4294901760
  %5271 = vmatpush1.msra.mxu0 %v5270
  %5272 = vmatprep.subr.mxu0 0.0
  %v5273 = vand.u32 %v77, 4294901760
  %5274 = vmatpush1.msra.mxu0 %v5273
  %5275 = vmatprep.subr.mxu0 0.0
  %v5276 = vand.u32 %v78, 4294901760
  %5277 = vmatpush1.msra.mxu0 %v5276
  %5278 = vmatprep.subr.mxu0 0.0
  %v5279 = vand.u32 %v79, 4294901760
  %5280 = vmatpush1.msra.mxu0 %v5279
  %5281 = vmatprep.subr.mxu0 0.0
  %v5282 = vand.u32 %v80, 4294901760
  %5283 = vmatpush1.msra.mxu0 %v5282
  %5284 = vmatprep.subr.mxu0 0.0
  %v5285 = vand.u32 %v81, 4294901760
  %5286 = vmatpush1.msra.mxu0 %v5285
  %5287 = vmatprep.subr.mxu0 0.0
  %v5288 = vand.u32 %v82, 4294901760
  %5289 = vmatpush1.msra.mxu0 %v5288
  %5290 = vmatprep.subr.mxu0 0.0
  %v5291 = vand.u32 %v83, 4294901760
  %5292 = vmatpush1.msra.mxu0 %v5291
  %5293 = vmatprep.subr.mxu0 0.0
  %v5294 = vand.u32 %v84, 4294901760
  %5295 = vmatpush1.msra.mxu0 %v5294
  %5296 = vmatprep.subr.mxu0 0.0
  %v5297 = vand.u32 %v85, 4294901760
  %5298 = vmatpush1.msra.mxu0 %v5297
  %5299 = vmatprep.subr.mxu0 0.0
  %v5300 = vand.u32 %v86, 4294901760
  %5301 = vmatpush1.msra.mxu0 %v5300
  %5302 = vmatprep.subr.mxu0 0.0
  %v5303 = vand.u32 %v87, 4294901760
  %5304 = vmatpush1.msra.mxu0 %v5303
  %5305 = vmatprep.subr.mxu0 0.0
  %v5306 = vand.u32 %v88, 4294901760
  %5307 = vmatpush1.msra.mxu0 %v5306
  %5308 = vmatprep.subr.mxu0 0.0
  %v5309 = vand.u32 %v89, 4294901760
  %5310 = vmatpush1.msra.mxu0 %v5309
  %5311 = vmatprep.subr.mxu0 0.0
  %v5312 = vand.u32 %v90, 4294901760
  %5313 = vmatpush1.msra.mxu0 %v5312
  %5314 = vmatprep.subr.mxu0 0.0
  %v5315 = vand.u32 %v91, 4294901760
  %5316 = vmatpush1.msra.mxu0 %v5315
  %5317 = vmatprep.subr.mxu0 0.0
  %v5318 = vand.u32 %v92, 4294901760
  %5319 = vmatpush1.msra.mxu0 %v5318
  %5320 = vmatprep.subr.mxu0 0.0
  %v5321 = vand.u32 %v93, 4294901760
  %5322 = vmatpush1.msra.mxu0 %v5321
  %5323 = vmatprep.subr.mxu0 0.0
  %v5324 = vand.u32 %v94, 4294901760
  %5325 = vmatpush1.msra.mxu0 %v5324
  %5326 = vmatprep.subr.mxu0 0.0
  %v5327 = vand.u32 %v95, 4294901760
  %5328 = vmatpush1.msra.mxu0 %v5327
  %v5329 = vand.u32 %v4337, 4294901760
  %v5330 = vsub.f32 %v4337, %v5329
  %v5331 = vand.u32 %v5330, 4294901760
  %v5332 = vsub.f32 %v5330, %v5331
  %v5333 = vand.u32 %v5332, 4294901760
  %5334 = vmatprep.mubr.f32.mxu0 %v5333
  %v5335 = vand.u32 %v4335, 4294901760
  %v5336 = vsub.f32 %v4335, %v5335
  %v5337 = vand.u32 %v5336, 4294901760
  %v5338 = vsub.f32 %v5336, %v5337
  %v5339 = vand.u32 %v5338, 4294901760
  %5340 = vmatmul.mubr.f32.gmra.mrb[0].mxu0 %v5339
  %v5341 = vpop.f32.mrb[0].mxu0
  %v5342 = vadd.f32 %v5230, %v5341
  %v5343 = vpop.f32.mrb[0].mxu0
  %5344 = vdwg.mxu0
  %5345 = vmatprep.subr.mxu0 0.0
  %v5346 = vand.u32 %v64, 4294901760
  %v5347 = vsub.f32 %v64, %v5346
  %v5348 = vand.u32 %v5347, 4294901760
  %v5349 = vsub.f32 %v5347, %v5348
  %v5350 = vand.u32 %v5349, 4294901760
  %5351 = vmatpush1.msra.mxu0 %v5350
  %5352 = vmatprep.subr.mxu0 0.0
  %v5353 = vand.u32 %v65, 4294901760
  %v5354 = vsub.f32 %v65, %v5353
  %v5355 = vand.u32 %v5354, 4294901760
  %v5356 = vsub.f32 %v5354, %v5355
  %v5357 = vand.u32 %v5356, 4294901760
  %5358 = vmatpush1.msra.mxu0 %v5357
  %5359 = vmatprep.subr.mxu0 0.0
  %v5360 = vand.u32 %v66, 4294901760
  %v5361 = vsub.f32 %v66, %v5360
  %v5362 = vand.u32 %v5361, 4294901760
  %v5363 = vsub.f32 %v5361, %v5362
  %v5364 = vand.u32 %v5363, 4294901760
  %5365 = vmatpush1.msra.mxu0 %v5364
  %5366 = vmatprep.subr.mxu0 0.0
  %v5367 = vand.u32 %v67, 4294901760
  %v5368 = vsub.f32 %v67, %v5367
  %v5369 = vand.u32 %v5368, 4294901760
  %v5370 = vsub.f32 %v5368, %v5369
  %v5371 = vand.u32 %v5370, 4294901760
  %5372 = vmatpush1.msra.mxu0 %v5371
  %5373 = vmatprep.subr.mxu0 0.0
  %v5374 = vand.u32 %v68, 4294901760
  %v5375 = vsub.f32 %v68, %v5374
  %v5376 = vand.u32 %v5375, 4294901760
  %v5377 = vsub.f32 %v5375, %v5376
  %v5378 = vand.u32 %v5377, 4294901760
  %5379 = vmatpush1.msra.mxu0 %v5378
  %5380 = vmatprep.subr.mxu0 0.0
  %v5381 = vand.u32 %v69, 4294901760
  %v5382 = vsub.f32 %v69, %v5381
  %v5383 = vand.u32 %v5382, 4294901760
  %v5384 = vsub.f32 %v5382, %v5383
  %v5385 = vand.u32 %v5384, 4294901760
  %5386 = vmatpush1.msra.mxu0 %v5385
  %5387 = vmatprep.subr.mxu0 0.0
  %v5388 = vand.u32 %v70, 4294901760
  %v5389 = vsub.f32 %v70, %v5388
  %v5390 = vand.u32 %v5389, 4294901760
  %v5391 = vsub.f32 %v5389, %v5390
  %v5392 = vand.u32 %v5391, 4294901760
  %5393 = vmatpush1.msra.mxu0 %v5392
  %5394 = vmatprep.subr.mxu0 0.0
  %v5395 = vand.u32 %v71, 4294901760
  %v5396 = vsub.f32 %v71, %v5395
  %v5397 = vand.u32 %v5396, 4294901760
  %v5398 = vsub.f32 %v5396, %v5397
  %v5399 = vand.u32 %v5398, 4294901760
  %5400 = vmatpush1.msra.mxu0 %v5399
  %5401 = vmatprep.subr.mxu0 0.0
  %v5402 = vand.u32 %v72, 4294901760
  %v5403 = vsub.f32 %v72, %v5402
  %v5404 = vand.u32 %v5403, 4294901760
  %v5405 = vsub.f32 %v5403, %v5404
  %v5406 = vand.u32 %v5405, 4294901760
  %5407 = vmatpush1.msra.mxu0 %v5406
  %5408 = vmatprep.subr.mxu0 0.0
  %v5409 = vand.u32 %v73, 4294901760
  %v5410 = vsub.f32 %v73, %v5409
  %v5411 = vand.u32 %v5410, 4294901760
  %v5412 = vsub.f32 %v5410, %v5411
  %v5413 = vand.u32 %v5412, 4294901760
  %5414 = vmatpush1.msra.mxu0 %v5413
  %5415 = vmatprep.subr.mxu0 0.0
  %v5416 = vand.u32 %v74, 4294901760
  %v5417 = vsub.f32 %v74, %v5416
  %v5418 = vand.u32 %v5417, 4294901760
  %v5419 = vsub.f32 %v5417, %v5418
  %v5420 = vand.u32 %v5419, 4294901760
  %5421 = vmatpush1.msra.mxu0 %v5420
  %5422 = vmatprep.subr.mxu0 0.0
  %v5423 = vand.u32 %v75, 4294901760
  %v5424 = vsub.f32 %v75, %v5423
  %v5425 = vand.u32 %v5424, 4294901760
  %v5426 = vsub.f32 %v5424, %v5425
  %v5427 = vand.u32 %v5426, 4294901760
  %5428 = vmatpush1.msra.mxu0 %v5427
  %5429 = vmatprep.subr.mxu0 0.0
  %v5430 = vand.u32 %v76, 4294901760
  %v5431 = vsub.f32 %v76, %v5430
  %v5432 = vand.u32 %v5431, 4294901760
  %v5433 = vsub.f32 %v5431, %v5432
  %v5434 = vand.u32 %v5433, 4294901760
  %5435 = vmatpush1.msra.mxu0 %v5434
  %5436 = vmatprep.subr.mxu0 0.0
  %v5437 = vand.u32 %v77, 4294901760
  %v5438 = vsub.f32 %v77, %v5437
  %v5439 = vand.u32 %v5438, 4294901760
  %v5440 = vsub.f32 %v5438, %v5439
  %v5441 = vand.u32 %v5440, 4294901760
  %5442 = vmatpush1.msra.mxu0 %v5441
  %5443 = vmatprep.subr.mxu0 0.0
  %v5444 = vand.u32 %v78, 4294901760
  %v5445 = vsub.f32 %v78, %v5444
  %v5446 = vand.u32 %v5445, 4294901760
  %v5447 = vsub.f32 %v5445, %v5446
  %v5448 = vand.u32 %v5447, 4294901760
  %5449 = vmatpush1.msra.mxu0 %v5448
  %5450 = vmatprep.subr.mxu0 0.0
  %v5451 = vand.u32 %v79, 4294901760
  %v5452 = vsub.f32 %v79, %v5451
  %v5453 = vand.u32 %v5452, 4294901760
  %v5454 = vsub.f32 %v5452, %v5453
  %v5455 = vand.u32 %v5454, 4294901760
  %5456 = vmatpush1.msra.mxu0 %v5455
  %5457 = vmatprep.subr.mxu0 0.0
  %v5458 = vand.u32 %v80, 4294901760
  %v5459 = vsub.f32 %v80, %v5458
  %v5460 = vand.u32 %v5459, 4294901760
  %v5461 = vsub.f32 %v5459, %v5460
  %v5462 = vand.u32 %v5461, 4294901760
  %5463 = vmatpush1.msra.mxu0 %v5462
  %5464 = vmatprep.subr.mxu0 0.0
  %v5465 = vand.u32 %v81, 4294901760
  %v5466 = vsub.f32 %v81, %v5465
  %v5467 = vand.u32 %v5466, 4294901760
  %v5468 = vsub.f32 %v5466, %v5467
  %v5469 = vand.u32 %v5468, 4294901760
  %5470 = vmatpush1.msra.mxu0 %v5469
  %5471 = vmatprep.subr.mxu0 0.0
  %v5472 = vand.u32 %v82, 4294901760
  %v5473 = vsub.f32 %v82, %v5472
  %v5474 = vand.u32 %v5473, 4294901760
  %v5475 = vsub.f32 %v5473, %v5474
  %v5476 = vand.u32 %v5475, 4294901760
  %5477 = vmatpush1.msra.mxu0 %v5476
  %5478 = vmatprep.subr.mxu0 0.0
  %v5479 = vand.u32 %v83, 4294901760
  %v5480 = vsub.f32 %v83, %v5479
  %v5481 = vand.u32 %v5480, 4294901760
  %v5482 = vsub.f32 %v5480, %v5481
  %v5483 = vand.u32 %v5482, 4294901760
  %5484 = vmatpush1.msra.mxu0 %v5483
  %5485 = vmatprep.subr.mxu0 0.0
  %v5486 = vand.u32 %v84, 4294901760
  %v5487 = vsub.f32 %v84, %v5486
  %v5488 = vand.u32 %v5487, 4294901760
  %v5489 = vsub.f32 %v5487, %v5488
  %v5490 = vand.u32 %v5489, 4294901760
  %5491 = vmatpush1.msra.mxu0 %v5490
  %5492 = vmatprep.subr.mxu0 0.0
  %v5493 = vand.u32 %v85, 4294901760
  %v5494 = vsub.f32 %v85, %v5493
  %v5495 = vand.u32 %v5494, 4294901760
  %v5496 = vsub.f32 %v5494, %v5495
  %v5497 = vand.u32 %v5496, 4294901760
  %5498 = vmatpush1.msra.mxu0 %v5497
  %5499 = vmatprep.subr.mxu0 0.0
  %v5500 = vand.u32 %v86, 4294901760
  %v5501 = vsub.f32 %v86, %v5500
  %v5502 = vand.u32 %v5501, 4294901760
  %v5503 = vsub.f32 %v5501, %v5502
  %v5504 = vand.u32 %v5503, 4294901760
  %5505 = vmatpush1.msra.mxu0 %v5504
  %5506 = vmatprep.subr.mxu0 0.0
  %v5507 = vand.u32 %v87, 4294901760
  %v5508 = vsub.f32 %v87, %v5507
  %v5509 = vand.u32 %v5508, 4294901760
  %v5510 = vsub.f32 %v5508, %v5509
  %v5511 = vand.u32 %v5510, 4294901760
  %5512 = vmatpush1.msra.mxu0 %v5511
  %5513 = vmatprep.subr.mxu0 0.0
  %v5514 = vand.u32 %v88, 4294901760
  %v5515 = vsub.f32 %v88, %v5514
  %v5516 = vand.u32 %v5515, 4294901760
  %v5517 = vsub.f32 %v5515, %v5516
  %v5518 = vand.u32 %v5517, 4294901760
  %5519 = vmatpush1.msra.mxu0 %v5518
  %5520 = vmatprep.subr.mxu0 0.0
  %v5521 = vand.u32 %v89, 4294901760
  %v5522 = vsub.f32 %v89, %v5521
  %v5523 = vand.u32 %v5522, 4294901760
  %v5524 = vsub.f32 %v5522, %v5523
  %v5525 = vand.u32 %v5524, 4294901760
  %5526 = vmatpush1.msra.mxu0 %v5525
  %5527 = vmatprep.subr.mxu0 0.0
  %v5528 = vand.u32 %v90, 4294901760
  %v5529 = vsub.f32 %v90, %v5528
  %v5530 = vand.u32 %v5529, 4294901760
  %v5531 = vsub.f32 %v5529, %v5530
  %v5532 = vand.u32 %v5531, 4294901760
  %5533 = vmatpush1.msra.mxu0 %v5532
  %5534 = vmatprep.subr.mxu0 0.0
  %v5535 = vand.u32 %v91, 4294901760
  %v5536 = vsub.f32 %v91, %v5535
  %v5537 = vand.u32 %v5536, 4294901760
  %v5538 = vsub.f32 %v5536, %v5537
  %v5539 = vand.u32 %v5538, 4294901760
  %5540 = vmatpush1.msra.mxu0 %v5539
  %5541 = vmatprep.subr.mxu0 0.0
  %v5542 = vand.u32 %v92, 4294901760
  %v5543 = vsub.f32 %v92, %v5542
  %v5544 = vand.u32 %v5543, 4294901760
  %v5545 = vsub.f32 %v5543, %v5544
  %v5546 = vand.u32 %v5545, 4294901760
  %5547 = vmatpush1.msra.mxu0 %v5546
  %5548 = vmatprep.subr.mxu0 0.0
  %v5549 = vand.u32 %v93, 4294901760
  %v5550 = vsub.f32 %v93, %v5549
  %v5551 = vand.u32 %v5550, 4294901760
  %v5552 = vsub.f32 %v5550, %v5551
  %v5553 = vand.u32 %v5552, 4294901760
  %5554 = vmatpush1.msra.mxu0 %v5553
  %5555 = vmatprep.subr.mxu0 0.0
  %v5556 = vand.u32 %v94, 4294901760
  %v5557 = vsub.f32 %v94, %v5556
  %v5558 = vand.u32 %v5557, 4294901760
  %v5559 = vsub.f32 %v5557, %v5558
  %v5560 = vand.u32 %v5559, 4294901760
  %5561 = vmatpush1.msra.mxu0 %v5560
  %5562 = vmatprep.subr.mxu0 0.0
  %v5563 = vand.u32 %v95, 4294901760
  %v5564 = vsub.f32 %v95, %v5563
  %v5565 = vand.u32 %v5564, 4294901760
  %v5566 = vsub.f32 %v5564, %v5565
  %v5567 = vand.u32 %v5566, 4294901760
  %5568 = vmatpush1.msra.mxu0 %v5567
  %v5569 = vand.u32 %v4337, 4294901760
  %5570 = vmatprep.mubr.f32.mxu0 %v5569
  %v5571 = vand.u32 %v4335, 4294901760
  %5572 = vmatmul.mubr.f32.gmra.mrb[0].mxu0 %v5571
  %v5573 = vpop.f32.mrb[0].mxu0
  %v5574 = vadd.f32 %v5342, %v5573
  %v5575 = vpop.f32.mrb[0].mxu0
  %5576 = vdwg.mxu0
  %5577 = vmatprep.subr.mxu0 0.0
  %v5578 = vand.u32 %v64, 4294901760
  %v5579 = vsub.f32 %v64, %v5578
  %5580 = vmatpush1.msra.mxu0 %v5579
  %5581 = vmatprep.subr.mxu0 0.0
  %v5582 = vand.u32 %v65, 4294901760
  %v5583 = vsub.f32 %v65, %v5582
  %5584 = vmatpush1.msra.mxu0 %v5583
  %5585 = vmatprep.subr.mxu0 0.0
  %v5586 = vand.u32 %v66, 4294901760
  %v5587 = vsub.f32 %v66, %v5586
  %5588 = vmatpush1.msra.mxu0 %v5587
  %5589 = vmatprep.subr.mxu0 0.0
  %v5590 = vand.u32 %v67, 4294901760
  %v5591 = vsub.f32 %v67, %v5590
  %5592 = vmatpush1.msra.mxu0 %v5591
  %5593 = vmatprep.subr.mxu0 0.0
  %v5594 = vand.u32 %v68, 4294901760
  %v5595 = vsub.f32 %v68, %v5594
  %5596 = vmatpush1.msra.mxu0 %v5595
  %5597 = vmatprep.subr.mxu0 0.0
  %v5598 = vand.u32 %v69, 4294901760
  %v5599 = vsub.f32 %v69, %v5598
  %5600 = vmatpush1.msra.mxu0 %v5599
  %5601 = vmatprep.subr.mxu0 0.0
  %v5602 = vand.u32 %v70, 4294901760
  %v5603 = vsub.f32 %v70, %v5602
  %5604 = vmatpush1.msra.mxu0 %v5603
  %5605 = vmatprep.subr.mxu0 0.0
  %v5606 = vand.u32 %v71, 4294901760
  %v5607 = vsub.f32 %v71, %v5606
  %5608 = vmatpush1.msra.mxu0 %v5607
  %5609 = vmatprep.subr.mxu0 0.0
  %v5610 = vand.u32 %v72, 4294901760
  %v5611 = vsub.f32 %v72, %v5610
  %5612 = vmatpush1.msra.mxu0 %v5611
  %5613 = vmatprep.subr.mxu0 0.0
  %v5614 = vand.u32 %v73, 4294901760
  %v5615 = vsub.f32 %v73, %v5614
  %5616 = vmatpush1.msra.mxu0 %v5615
  %5617 = vmatprep.subr.mxu0 0.0
  %v5618 = vand.u32 %v74, 4294901760
  %v5619 = vsub.f32 %v74, %v5618
  %5620 = vmatpush1.msra.mxu0 %v5619
  %5621 = vmatprep.subr.mxu0 0.0
  %v5622 = vand.u32 %v75, 4294901760
  %v5623 = vsub.f32 %v75, %v5622
  %5624 = vmatpush1.msra.mxu0 %v5623
  %5625 = vmatprep.subr.mxu0 0.0
  %v5626 = vand.u32 %v76, 4294901760
  %v5627 = vsub.f32 %v76, %v5626
  %5628 = vmatpush1.msra.mxu0 %v5627
  %5629 = vmatprep.subr.mxu0 0.0
  %v5630 = vand.u32 %v77, 4294901760
  %v5631 = vsub.f32 %v77, %v5630
  %5632 = vmatpush1.msra.mxu0 %v5631
  %5633 = vmatprep.subr.mxu0 0.0
  %v5634 = vand.u32 %v78, 4294901760
  %v5635 = vsub.f32 %v78, %v5634
  %5636 = vmatpush1.msra.mxu0 %v5635
  %5637 = vmatprep.subr.mxu0 0.0
  %v5638 = vand.u32 %v79, 4294901760
  %v5639 = vsub.f32 %v79, %v5638
  %5640 = vmatpush1.msra.mxu0 %v5639
  %5641 = vmatprep.subr.mxu0 0.0
  %v5642 = vand.u32 %v80, 4294901760
  %v5643 = vsub.f32 %v80, %v5642
  %5644 = vmatpush1.msra.mxu0 %v5643
  %5645 = vmatprep.subr.mxu0 0.0
  %v5646 = vand.u32 %v81, 4294901760
  %v5647 = vsub.f32 %v81, %v5646
  %5648 = vmatpush1.msra.mxu0 %v5647
  %5649 = vmatprep.subr.mxu0 0.0
  %v5650 = vand.u32 %v82, 4294901760
  %v5651 = vsub.f32 %v82, %v5650
  %5652 = vmatpush1.msra.mxu0 %v5651
  %5653 = vmatprep.subr.mxu0 0.0
  %v5654 = vand.u32 %v83, 4294901760
  %v5655 = vsub.f32 %v83, %v5654
  %5656 = vmatpush1.msra.mxu0 %v5655
  %5657 = vmatprep.subr.mxu0 0.0
  %v5658 = vand.u32 %v84, 4294901760
  %v5659 = vsub.f32 %v84, %v5658
  %5660 = vmatpush1.msra.mxu0 %v5659
  %5661 = vmatprep.subr.mxu0 0.0
  %v5662 = vand.u32 %v85, 4294901760
  %v5663 = vsub.f32 %v85, %v5662
  %5664 = vmatpush1.msra.mxu0 %v5663
  %5665 = vmatprep.subr.mxu0 0.0
  %v5666 = vand.u32 %v86, 4294901760
  %v5667 = vsub.f32 %v86, %v5666
  %5668 = vmatpush1.msra.mxu0 %v5667
  %5669 = vmatprep.subr.mxu0 0.0
  %v5670 = vand.u32 %v87, 4294901760
  %v5671 = vsub.f32 %v87, %v5670
  %5672 = vmatpush1.msra.mxu0 %v5671
  %5673 = vmatprep.subr.mxu0 0.0
  %v5674 = vand.u32 %v88, 4294901760
  %v5675 = vsub.f32 %v88, %v5674
  %5676 = vmatpush1.msra.mxu0 %v5675
  %5677 = vmatprep.subr.mxu0 0.0
  %v5678 = vand.u32 %v89, 4294901760
  %v5679 = vsub.f32 %v89, %v5678
  %5680 = vmatpush1.msra.mxu0 %v5679
  %5681 = vmatprep.subr.mxu0 0.0
  %v5682 = vand.u32 %v90, 4294901760
  %v5683 = vsub.f32 %v90, %v5682
  %5684 = vmatpush1.msra.mxu0 %v5683
  %5685 = vmatprep.subr.mxu0 0.0
  %v5686 = vand.u32 %v91, 4294901760
  %v5687 = vsub.f32 %v91, %v5686
  %5688 = vmatpush1.msra.mxu0 %v5687
  %5689 = vmatprep.subr.mxu0 0.0
  %v5690 = vand.u32 %v92, 4294901760
  %v5691 = vsub.f32 %v92, %v5690
  %5692 = vmatpush1.msra.mxu0 %v5691
  %5693 = vmatprep.subr.mxu0 0.0
  %v5694 = vand.u32 %v93, 4294901760
  %v5695 = vsub.f32 %v93, %v5694
  %5696 = vmatpush1.msra.mxu0 %v5695
  %5697 = vmatprep.subr.mxu0 0.0
  %v5698 = vand.u32 %v94, 4294901760
  %v5699 = vsub.f32 %v94, %v5698
  %5700 = vmatpush1.msra.mxu0 %v5699
  %5701 = vmatprep.subr.mxu0 0.0
  %v5702 = vand.u32 %v95, 4294901760
  %v5703 = vsub.f32 %v95, %v5702
  %5704 = vmatpush1.msra.mxu0 %v5703
  %v5705 = vand.u32 %v4337, 4294901760
  %v5706 = vsub.f32 %v4337, %v5705
  %5707 = vmatprep.mubr.f32.mxu0 %v5706
  %v5708 = vand.u32 %v4335, 4294901760
  %v5709 = vsub.f32 %v4335, %v5708
  %5710 = vmatmul.mubr.f32.gmra.mrb[0].mxu0 %v5709
  %v5711 = vpop.f32.mrb[0].mxu0
  %v5712 = vadd.f32 %v5574, %v5711
  %v5713 = vpop.f32.mrb[0].mxu0
  %5714 = vdwg.mxu0
  %5715 = vmatprep.subr.mxu0 0.0
  %v5716 = vand.u32 %v64, 4294901760
  %5717 = vmatpush1.msra.mxu0 %v5716
  %5718 = vmatprep.subr.mxu0 0.0
  %v5719 = vand.u32 %v65, 4294901760
  %5720 = vmatpush1.msra.mxu0 %v5719
  %5721 = vmatprep.subr.mxu0 0.0
  %v5722 = vand.u32 %v66, 4294901760
  %5723 = vmatpush1.msra.mxu0 %v5722
  %5724 = vmatprep.subr.mxu0 0.0
  %v5725 = vand.u32 %v67, 4294901760
  %5726 = vmatpush1.msra.mxu0 %v5725
  %5727 = vmatprep.subr.mxu0 0.0
  %v5728 = vand.u32 %v68, 4294901760
  %5729 = vmatpush1.msra.mxu0 %v5728
  %5730 = vmatprep.subr.mxu0 0.0
  %v5731 = vand.u32 %v69, 4294901760
  %5732 = vmatpush1.msra.mxu0 %v5731
  %5733 = vmatprep.subr.mxu0 0.0
  %v5734 = vand.u32 %v70, 4294901760
  %5735 = vmatpush1.msra.mxu0 %v5734
  %5736 = vmatprep.subr.mxu0 0.0
  %v5737 = vand.u32 %v71, 4294901760
  %5738 = vmatpush1.msra.mxu0 %v5737
  %5739 = vmatprep.subr.mxu0 0.0
  %v5740 = vand.u32 %v72, 4294901760
  %5741 = vmatpush1.msra.mxu0 %v5740
  %5742 = vmatprep.subr.mxu0 0.0
  %v5743 = vand.u32 %v73, 4294901760
  %5744 = vmatpush1.msra.mxu0 %v5743
  %5745 = vmatprep.subr.mxu0 0.0
  %v5746 = vand.u32 %v74, 4294901760
  %5747 = vmatpush1.msra.mxu0 %v5746
  %5748 = vmatprep.subr.mxu0 0.0
  %v5749 = vand.u32 %v75, 4294901760
  %5750 = vmatpush1.msra.mxu0 %v5749
  %5751 = vmatprep.subr.mxu0 0.0
  %v5752 = vand.u32 %v76, 4294901760
  %5753 = vmatpush1.msra.mxu0 %v5752
  %5754 = vmatprep.subr.mxu0 0.0
  %v5755 = vand.u32 %v77, 4294901760
  %5756 = vmatpush1.msra.mxu0 %v5755
  %5757 = vmatprep.subr.mxu0 0.0
  %v5758 = vand.u32 %v78, 4294901760
  %5759 = vmatpush1.msra.mxu0 %v5758
  %5760 = vmatprep.subr.mxu0 0.0
  %v5761 = vand.u32 %v79, 4294901760
  %5762 = vmatpush1.msra.mxu0 %v5761
  %5763 = vmatprep.subr.mxu0 0.0
  %v5764 = vand.u32 %v80, 4294901760
  %5765 = vmatpush1.msra.mxu0 %v5764
  %5766 = vmatprep.subr.mxu0 0.0
  %v5767 = vand.u32 %v81, 4294901760
  %5768 = vmatpush1.msra.mxu0 %v5767
  %5769 = vmatprep.subr.mxu0 0.0
  %v5770 = vand.u32 %v82, 4294901760
  %5771 = vmatpush1.msra.mxu0 %v5770
  %5772 = vmatprep.subr.mxu0 0.0
  %v5773 = vand.u32 %v83, 4294901760
  %5774 = vmatpush1.msra.mxu0 %v5773
  %5775 = vmatprep.subr.mxu0 0.0
  %v5776 = vand.u32 %v84, 4294901760
  %5777 = vmatpush1.msra.mxu0 %v5776
  %5778 = vmatprep.subr.mxu0 0.0
  %v5779 = vand.u32 %v85, 4294901760
  %5780 = vmatpush1.msra.mxu0 %v5779
  %5781 = vmatprep.subr.mxu0 0.0
  %v5782 = vand.u32 %v86, 4294901760
  %5783 = vmatpush1.msra.mxu0 %v5782
  %5784 = vmatprep.subr.mxu0 0.0
  %v5785 = vand.u32 %v87, 4294901760
  %5786 = vmatpush1.msra.mxu0 %v5785
  %5787 = vmatprep.subr.mxu0 0.0
  %v5788 = vand.u32 %v88, 4294901760
  %5789 = vmatpush1.msra.mxu0 %v5788
  %5790 = vmatprep.subr.mxu0 0.0
  %v5791 = vand.u32 %v89, 4294901760
  %5792 = vmatpush1.msra.mxu0 %v5791
  %5793 = vmatprep.subr.mxu0 0.0
  %v5794 = vand.u32 %v90, 4294901760
  %5795 = vmatpush1.msra.mxu0 %v5794
  %5796 = vmatprep.subr.mxu0 0.0
  %v5797 = vand.u32 %v91, 4294901760
  %5798 = vmatpush1.msra.mxu0 %v5797
  %5799 = vmatprep.subr.mxu0 0.0
  %v5800 = vand.u32 %v92, 4294901760
  %5801 = vmatpush1.msra.mxu0 %v5800
  %5802 = vmatprep.subr.mxu0 0.0
  %v5803 = vand.u32 %v93, 4294901760
  %5804 = vmatpush1.msra.mxu0 %v5803
  %5805 = vmatprep.subr.mxu0 0.0
  %v5806 = vand.u32 %v94, 4294901760
  %5807 = vmatpush1.msra.mxu0 %v5806
  %5808 = vmatprep.subr.mxu0 0.0
  %v5809 = vand.u32 %v95, 4294901760
  %5810 = vmatpush1.msra.mxu0 %v5809
  %v5811 = vand.u32 %v4337, 4294901760
  %v5812 = vsub.f32 %v4337, %v5811
  %v5813 = vand.u32 %v5812, 4294901760
  %5814 = vmatprep.mubr.f32.mxu0 %v5813
  %v5815 = vand.u32 %v4335, 4294901760
  %v5816 = vsub.f32 %v4335, %v5815
  %v5817 = vand.u32 %v5816, 4294901760
  %5818 = vmatmul.mubr.f32.gmra.mrb[0].mxu0 %v5817
  %v5819 = vpop.f32.mrb[0].mxu0
  %v5820 = vadd.f32 %v5712, %v5819
  %v5821 = vpop.f32.mrb[0].mxu0
  %5822 = vdwg.mxu0
  %5823 = vmatprep.subr.mxu0 0.0
  %v5824 = vand.u32 %v64, 4294901760
  %v5825 = vsub.f32 %v64, %v5824
  %v5826 = vand.u32 %v5825, 4294901760
  %5827 = vmatpush1.msra.mxu0 %v5826
  %5828 = vmatprep.subr.mxu0 0.0
  %v5829 = vand.u32 %v65, 4294901760
  %v5830 = vsub.f32 %v65, %v5829
  %v5831 = vand.u32 %v5830, 4294901760
  %5832 = vmatpush1.msra.mxu0 %v5831
  %5833 = vmatprep.subr.mxu0 0.0
  %v5834 = vand.u32 %v66, 4294901760
  %v5835 = vsub.f32 %v66, %v5834
  %v5836 = vand.u32 %v5835, 4294901760
  %5837 = vmatpush1.msra.mxu0 %v5836
  %5838 = vmatprep.subr.mxu0 0.0
  %v5839 = vand.u32 %v67, 4294901760
  %v5840 = vsub.f32 %v67, %v5839
  %v5841 = vand.u32 %v5840, 4294901760
  %5842 = vmatpush1.msra.mxu0 %v5841
  %5843 = vmatprep.subr.mxu0 0.0
  %v5844 = vand.u32 %v68, 4294901760
  %v5845 = vsub.f32 %v68, %v5844
  %v5846 = vand.u32 %v5845, 4294901760
  %5847 = vmatpush1.msra.mxu0 %v5846
  %5848 = vmatprep.subr.mxu0 0.0
  %v5849 = vand.u32 %v69, 4294901760
  %v5850 = vsub.f32 %v69, %v5849
  %v5851 = vand.u32 %v5850, 4294901760
  %5852 = vmatpush1.msra.mxu0 %v5851
  %5853 = vmatprep.subr.mxu0 0.0
  %v5854 = vand.u32 %v70, 4294901760
  %v5855 = vsub.f32 %v70, %v5854
  %v5856 = vand.u32 %v5855, 4294901760
  %5857 = vmatpush1.msra.mxu0 %v5856
  %5858 = vmatprep.subr.mxu0 0.0
  %v5859 = vand.u32 %v71, 4294901760
  %v5860 = vsub.f32 %v71, %v5859
  %v5861 = vand.u32 %v5860, 4294901760
  %5862 = vmatpush1.msra.mxu0 %v5861
  %5863 = vmatprep.subr.mxu0 0.0
  %v5864 = vand.u32 %v72, 4294901760
  %v5865 = vsub.f32 %v72, %v5864
  %v5866 = vand.u32 %v5865, 4294901760
  %5867 = vmatpush1.msra.mxu0 %v5866
  %5868 = vmatprep.subr.mxu0 0.0
  %v5869 = vand.u32 %v73, 4294901760
  %v5870 = vsub.f32 %v73, %v5869
  %v5871 = vand.u32 %v5870, 4294901760
  %5872 = vmatpush1.msra.mxu0 %v5871
  %5873 = vmatprep.subr.mxu0 0.0
  %v5874 = vand.u32 %v74, 4294901760
  %v5875 = vsub.f32 %v74, %v5874
  %v5876 = vand.u32 %v5875, 4294901760
  %5877 = vmatpush1.msra.mxu0 %v5876
  %5878 = vmatprep.subr.mxu0 0.0
  %v5879 = vand.u32 %v75, 4294901760
  %v5880 = vsub.f32 %v75, %v5879
  %v5881 = vand.u32 %v5880, 4294901760
  %5882 = vmatpush1.msra.mxu0 %v5881
  %5883 = vmatprep.subr.mxu0 0.0
  %v5884 = vand.u32 %v76, 4294901760
  %v5885 = vsub.f32 %v76, %v5884
  %v5886 = vand.u32 %v5885, 4294901760
  %5887 = vmatpush1.msra.mxu0 %v5886
  %5888 = vmatprep.subr.mxu0 0.0
  %v5889 = vand.u32 %v77, 4294901760
  %v5890 = vsub.f32 %v77, %v5889
  %v5891 = vand.u32 %v5890, 4294901760
  %5892 = vmatpush1.msra.mxu0 %v5891
  %5893 = vmatprep.subr.mxu0 0.0
  %v5894 = vand.u32 %v78, 4294901760
  %v5895 = vsub.f32 %v78, %v5894
  %v5896 = vand.u32 %v5895, 4294901760
  %5897 = vmatpush1.msra.mxu0 %v5896
  %5898 = vmatprep.subr.mxu0 0.0
  %v5899 = vand.u32 %v79, 4294901760
  %v5900 = vsub.f32 %v79, %v5899
  %v5901 = vand.u32 %v5900, 4294901760
  %5902 = vmatpush1.msra.mxu0 %v5901
  %5903 = vmatprep.subr.mxu0 0.0
  %v5904 = vand.u32 %v80, 4294901760
  %v5905 = vsub.f32 %v80, %v5904
  %v5906 = vand.u32 %v5905, 4294901760
  %5907 = vmatpush1.msra.mxu0 %v5906
  %5908 = vmatprep.subr.mxu0 0.0
  %v5909 = vand.u32 %v81, 4294901760
  %v5910 = vsub.f32 %v81, %v5909
  %v5911 = vand.u32 %v5910, 4294901760
  %5912 = vmatpush1.msra.mxu0 %v5911
  %5913 = vmatprep.subr.mxu0 0.0
  %v5914 = vand.u32 %v82, 4294901760
  %v5915 = vsub.f32 %v82, %v5914
  %v5916 = vand.u32 %v5915, 4294901760
  %5917 = vmatpush1.msra.mxu0 %v5916
  %5918 = vmatprep.subr.mxu0 0.0
  %v5919 = vand.u32 %v83, 4294901760
  %v5920 = vsub.f32 %v83, %v5919
  %v5921 = vand.u32 %v5920, 4294901760
  %5922 = vmatpush1.msra.mxu0 %v5921
  %5923 = vmatprep.subr.mxu0 0.0
  %v5924 = vand.u32 %v84, 4294901760
  %v5925 = vsub.f32 %v84, %v5924
  %v5926 = vand.u32 %v5925, 4294901760
  %5927 = vmatpush1.msra.mxu0 %v5926
  %5928 = vmatprep.subr.mxu0 0.0
  %v5929 = vand.u32 %v85, 4294901760
  %v5930 = vsub.f32 %v85, %v5929
  %v5931 = vand.u32 %v5930, 4294901760
  %5932 = vmatpush1.msra.mxu0 %v5931
  %5933 = vmatprep.subr.mxu0 0.0
  %v5934 = vand.u32 %v86, 4294901760
  %v5935 = vsub.f32 %v86, %v5934
  %v5936 = vand.u32 %v5935, 4294901760
  %5937 = vmatpush1.msra.mxu0 %v5936
  %5938 = vmatprep.subr.mxu0 0.0
  %v5939 = vand.u32 %v87, 4294901760
  %v5940 = vsub.f32 %v87, %v5939
  %v5941 = vand.u32 %v5940, 4294901760
  %5942 = vmatpush1.msra.mxu0 %v5941
  %5943 = vmatprep.subr.mxu0 0.0
  %v5944 = vand.u32 %v88, 4294901760
  %v5945 = vsub.f32 %v88, %v5944
  %v5946 = vand.u32 %v5945, 4294901760
  %5947 = vmatpush1.msra.mxu0 %v5946
  %5948 = vmatprep.subr.mxu0 0.0
  %v5949 = vand.u32 %v89, 4294901760
  %v5950 = vsub.f32 %v89, %v5949
  %v5951 = vand.u32 %v5950, 4294901760
  %5952 = vmatpush1.msra.mxu0 %v5951
  %5953 = vmatprep.subr.mxu0 0.0
  %v5954 = vand.u32 %v90, 4294901760
  %v5955 = vsub.f32 %v90, %v5954
  %v5956 = vand.u32 %v5955, 4294901760
  %5957 = vmatpush1.msra.mxu0 %v5956
  %5958 = vmatprep.subr.mxu0 0.0
  %v5959 = vand.u32 %v91, 4294901760
  %v5960 = vsub.f32 %v91, %v5959
  %v5961 = vand.u32 %v5960, 4294901760
  %5962 = vmatpush1.msra.mxu0 %v5961
  %5963 = vmatprep.subr.mxu0 0.0
  %v5964 = vand.u32 %v92, 4294901760
  %v5965 = vsub.f32 %v92, %v5964
  %v5966 = vand.u32 %v5965, 4294901760
  %5967 = vmatpush1.msra.mxu0 %v5966
  %5968 = vmatprep.subr.mxu0 0.0
  %v5969 = vand.u32 %v93, 4294901760
  %v5970 = vsub.f32 %v93, %v5969
  %v5971 = vand.u32 %v5970, 4294901760
  %5972 = vmatpush1.msra.mxu0 %v5971
  %5973 = vmatprep.subr.mxu0 0.0
  %v5974 = vand.u32 %v94, 4294901760
  %v5975 = vsub.f32 %v94, %v5974
  %v5976 = vand.u32 %v5975, 4294901760
  %5977 = vmatpush1.msra.mxu0 %v5976
  %5978 = vmatprep.subr.mxu0 0.0
  %v5979 = vand.u32 %v95, 4294901760
  %v5980 = vsub.f32 %v95, %v5979
  %v5981 = vand.u32 %v5980, 4294901760
  %5982 = vmatpush1.msra.mxu0 %v5981
  %v5983 = vand.u32 %v4337, 4294901760
  %5984 = vmatprep.mubr.f32.mxu0 %v5983
  %v5985 = vand.u32 %v4335, 4294901760
  %5986 = vmatmul.mubr.f32.gmra.mrb[0].mxu0 %v5985
  %v5987 = vpop.f32.mrb[0].mxu0
  %v5988 = vadd.f32 %v5820, %v5987
  %v5989 = vpop.f32.mrb[0].mxu0
  %5990 = vdwg.mxu0
  %5991 = vmatprep.subr.mxu0 0.0
  %v5992 = vand.u32 %v64, 4294901760
  %5993 = vmatpush1.msra.mxu0 %v5992
  %5994 = vmatprep.subr.mxu0 0.0
  %v5995 = vand.u32 %v65, 4294901760
  %5996 = vmatpush1.msra.mxu0 %v5995
  %5997 = vmatprep.subr.mxu0 0.0
  %v5998 = vand.u32 %v66, 4294901760
  %5999 = vmatpush1.msra.mxu0 %v5998
  %6000 = vmatprep.subr.mxu0 0.0
  %v6001 = vand.u32 %v67, 4294901760
  %6002 = vmatpush1.msra.mxu0 %v6001
  %6003 = vmatprep.subr.mxu0 0.0
  %v6004 = vand.u32 %v68, 4294901760
  %6005 = vmatpush1.msra.mxu0 %v6004
  %6006 = vmatprep.subr.mxu0 0.0
  %v6007 = vand.u32 %v69, 4294901760
  %6008 = vmatpush1.msra.mxu0 %v6007
  %6009 = vmatprep.subr.mxu0 0.0
  %v6010 = vand.u32 %v70, 4294901760
  %6011 = vmatpush1.msra.mxu0 %v6010
  %6012 = vmatprep.subr.mxu0 0.0
  %v6013 = vand.u32 %v71, 4294901760
  %6014 = vmatpush1.msra.mxu0 %v6013
  %6015 = vmatprep.subr.mxu0 0.0
  %v6016 = vand.u32 %v72, 4294901760
  %6017 = vmatpush1.msra.mxu0 %v6016
  %6018 = vmatprep.subr.mxu0 0.0
  %v6019 = vand.u32 %v73, 4294901760
  %6020 = vmatpush1.msra.mxu0 %v6019
  %6021 = vmatprep.subr.mxu0 0.0
  %v6022 = vand.u32 %v74, 4294901760
  %6023 = vmatpush1.msra.mxu0 %v6022
  %6024 = vmatprep.subr.mxu0 0.0
  %v6025 = vand.u32 %v75, 4294901760
  %6026 = vmatpush1.msra.mxu0 %v6025
  %6027 = vmatprep.subr.mxu0 0.0
  %v6028 = vand.u32 %v76, 4294901760
  %6029 = vmatpush1.msra.mxu0 %v6028
  %6030 = vmatprep.subr.mxu0 0.0
  %v6031 = vand.u32 %v77, 4294901760
  %6032 = vmatpush1.msra.mxu0 %v6031
  %6033 = vmatprep.subr.mxu0 0.0
  %v6034 = vand.u32 %v78, 4294901760
  %6035 = vmatpush1.msra.mxu0 %v6034
  %6036 = vmatprep.subr.mxu0 0.0
  %v6037 = vand.u32 %v79, 4294901760
  %6038 = vmatpush1.msra.mxu0 %v6037
  %6039 = vmatprep.subr.mxu0 0.0
  %v6040 = vand.u32 %v80, 4294901760
  %6041 = vmatpush1.msra.mxu0 %v6040
  %6042 = vmatprep.subr.mxu0 0.0
  %v6043 = vand.u32 %v81, 4294901760
  %6044 = vmatpush1.msra.mxu0 %v6043
  %6045 = vmatprep.subr.mxu0 0.0
  %v6046 = vand.u32 %v82, 4294901760
  %6047 = vmatpush1.msra.mxu0 %v6046
  %6048 = vmatprep.subr.mxu0 0.0
  %v6049 = vand.u32 %v83, 4294901760
  %6050 = vmatpush1.msra.mxu0 %v6049
  %6051 = vmatprep.subr.mxu0 0.0
  %v6052 = vand.u32 %v84, 4294901760
  %6053 = vmatpush1.msra.mxu0 %v6052
  %6054 = vmatprep.subr.mxu0 0.0
  %v6055 = vand.u32 %v85, 4294901760
  %6056 = vmatpush1.msra.mxu0 %v6055
  %6057 = vmatprep.subr.mxu0 0.0
  %v6058 = vand.u32 %v86, 4294901760
  %6059 = vmatpush1.msra.mxu0 %v6058
  %6060 = vmatprep.subr.mxu0 0.0
  %v6061 = vand.u32 %v87, 4294901760
  %6062 = vmatpush1.msra.mxu0 %v6061
  %6063 = vmatprep.subr.mxu0 0.0
  %v6064 = vand.u32 %v88, 4294901760
  %6065 = vmatpush1.msra.mxu0 %v6064
  %6066 = vmatprep.subr.mxu0 0.0
  %v6067 = vand.u32 %v89, 4294901760
  %6068 = vmatpush1.msra.mxu0 %v6067
  %6069 = vmatprep.subr.mxu0 0.0
  %v6070 = vand.u32 %v90, 4294901760
  %6071 = vmatpush1.msra.mxu0 %v6070
  %6072 = vmatprep.subr.mxu0 0.0
  %v6073 = vand.u32 %v91, 4294901760
  %6074 = vmatpush1.msra.mxu0 %v6073
  %6075 = vmatprep.subr.mxu0 0.0
  %v6076 = vand.u32 %v92, 4294901760
  %6077 = vmatpush1.msra.mxu0 %v6076
  %6078 = vmatprep.subr.mxu0 0.0
  %v6079 = vand.u32 %v93, 4294901760
  %6080 = vmatpush1.msra.mxu0 %v6079
  %6081 = vmatprep.subr.mxu0 0.0
  %v6082 = vand.u32 %v94, 4294901760
  %6083 = vmatpush1.msra.mxu0 %v6082
  %6084 = vmatprep.subr.mxu0 0.0
  %v6085 = vand.u32 %v95, 4294901760
  %6086 = vmatpush1.msra.mxu0 %v6085
  %v6087 = vand.u32 %v4337, 4294901760
  %6088 = vmatprep.mubr.f32.mxu0 %v6087
  %v6089 = vand.u32 %v4335, 4294901760
  %6090 = vmatmul.mubr.f32.gmra.mrb[0].mxu0 %v6089
  %v6091 = vpop.f32.mrb[0].mxu0
  %v6092 = vadd.f32 %v5988, %v6091
  %v6093 = vpop.f32.mrb[0].mxu0
  %6094 = vdwg.mxu0
  %6095 = vmatprep.subr.mxu0 0.0
  %v6096 = vand.u32 %v96, 4294901760
  %6097 = vmatpush1.msra.mxu0 %v6096
  %6098 = vmatprep.subr.mxu0 0.0
  %v6099 = vand.u32 %v97, 4294901760
  %6100 = vmatpush1.msra.mxu0 %v6099
  %6101 = vmatprep.subr.mxu0 0.0
  %v6102 = vand.u32 %v98, 4294901760
  %6103 = vmatpush1.msra.mxu0 %v6102
  %6104 = vmatprep.subr.mxu0 0.0
  %v6105 = vand.u32 %v99, 4294901760
  %6106 = vmatpush1.msra.mxu0 %v6105
  %6107 = vmatprep.subr.mxu0 0.0
  %v6108 = vand.u32 %v100, 4294901760
  %6109 = vmatpush1.msra.mxu0 %v6108
  %6110 = vmatprep.subr.mxu0 0.0
  %v6111 = vand.u32 %v101, 4294901760
  %6112 = vmatpush1.msra.mxu0 %v6111
  %6113 = vmatprep.subr.mxu0 0.0
  %v6114 = vand.u32 %v102, 4294901760
  %6115 = vmatpush1.msra.mxu0 %v6114
  %6116 = vmatprep.subr.mxu0 0.0
  %v6117 = vand.u32 %v103, 4294901760
  %6118 = vmatpush1.msra.mxu0 %v6117
  %6119 = vmatprep.subr.mxu0 0.0
  %v6120 = vand.u32 %v104, 4294901760
  %6121 = vmatpush1.msra.mxu0 %v6120
  %6122 = vmatprep.subr.mxu0 0.0
  %v6123 = vand.u32 %v105, 4294901760
  %6124 = vmatpush1.msra.mxu0 %v6123
  %6125 = vmatprep.subr.mxu0 0.0
  %v6126 = vand.u32 %v106, 4294901760
  %6127 = vmatpush1.msra.mxu0 %v6126
  %6128 = vmatprep.subr.mxu0 0.0
  %v6129 = vand.u32 %v107, 4294901760
  %6130 = vmatpush1.msra.mxu0 %v6129
  %6131 = vmatprep.subr.mxu0 0.0
  %v6132 = vand.u32 %v108, 4294901760
  %6133 = vmatpush1.msra.mxu0 %v6132
  %6134 = vmatprep.subr.mxu0 0.0
  %v6135 = vand.u32 %v109, 4294901760
  %6136 = vmatpush1.msra.mxu0 %v6135
  %6137 = vmatprep.subr.mxu0 0.0
  %v6138 = vand.u32 %v110, 4294901760
  %6139 = vmatpush1.msra.mxu0 %v6138
  %6140 = vmatprep.subr.mxu0 0.0
  %v6141 = vand.u32 %v111, 4294901760
  %6142 = vmatpush1.msra.mxu0 %v6141
  %6143 = vmatprep.subr.mxu0 0.0
  %v6144 = vand.u32 %v112, 4294901760
  %6145 = vmatpush1.msra.mxu0 %v6144
  %6146 = vmatprep.subr.mxu0 0.0
  %v6147 = vand.u32 %v113, 4294901760
  %6148 = vmatpush1.msra.mxu0 %v6147
  %6149 = vmatprep.subr.mxu0 0.0
  %v6150 = vand.u32 %v114, 4294901760
  %6151 = vmatpush1.msra.mxu0 %v6150
  %6152 = vmatprep.subr.mxu0 0.0
  %v6153 = vand.u32 %v115, 4294901760
  %6154 = vmatpush1.msra.mxu0 %v6153
  %6155 = vmatprep.subr.mxu0 0.0
  %v6156 = vand.u32 %v116, 4294901760
  %6157 = vmatpush1.msra.mxu0 %v6156
  %6158 = vmatprep.subr.mxu0 0.0
  %v6159 = vand.u32 %v117, 4294901760
  %6160 = vmatpush1.msra.mxu0 %v6159
  %6161 = vmatprep.subr.mxu0 0.0
  %v6162 = vand.u32 %v118, 4294901760
  %6163 = vmatpush1.msra.mxu0 %v6162
  %6164 = vmatprep.subr.mxu0 0.0
  %v6165 = vand.u32 %v119, 4294901760
  %6166 = vmatpush1.msra.mxu0 %v6165
  %6167 = vmatprep.subr.mxu0 0.0
  %v6168 = vand.u32 %v120, 4294901760
  %6169 = vmatpush1.msra.mxu0 %v6168
  %6170 = vmatprep.subr.mxu0 0.0
  %v6171 = vand.u32 %v121, 4294901760
  %6172 = vmatpush1.msra.mxu0 %v6171
  %6173 = vmatprep.subr.mxu0 0.0
  %v6174 = vand.u32 %v122, 4294901760
  %6175 = vmatpush1.msra.mxu0 %v6174
  %6176 = vmatprep.subr.mxu0 0.0
  %v6177 = vand.u32 %v123, 4294901760
  %6178 = vmatpush1.msra.mxu0 %v6177
  %6179 = vmatprep.subr.mxu0 0.0
  %v6180 = vand.u32 %v124, 4294901760
  %6181 = vmatpush1.msra.mxu0 %v6180
  %6182 = vmatprep.subr.mxu0 0.0
  %v6183 = vand.u32 %v125, 4294901760
  %6184 = vmatpush1.msra.mxu0 %v6183
  %6185 = vmatprep.subr.mxu0 0.0
  %v6186 = vand.u32 %v126, 4294901760
  %6187 = vmatpush1.msra.mxu0 %v6186
  %6188 = vmatprep.subr.mxu0 0.0
  %v6189 = vand.u32 %v127, 4294901760
  %6190 = vmatpush1.msra.mxu0 %v6189
  %v6191 = vand.u32 %v4353, 4294901760
  %v6192 = vsub.f32 %v4353, %v6191
  %v6193 = vand.u32 %v6192, 4294901760
  %v6194 = vsub.f32 %v6192, %v6193
  %v6195 = vand.u32 %v6194, 4294901760
  %6196 = vmatprep.mubr.f32.mxu0 %v6195
  %v6197 = vand.u32 %v4345, 4294901760
  %v6198 = vsub.f32 %v4345, %v6197
  %v6199 = vand.u32 %v6198, 4294901760
  %v6200 = vsub.f32 %v6198, %v6199
  %v6201 = vand.u32 %v6200, 4294901760
  %6202 = vmatmul.mubr.f32.gmra.mrb[0].mxu0 %v6201
  %v6203 = vpop.f32.mrb[0].mxu0
  %v6204 = vadd.f32 %v6092, %v6203
  %v6205 = vpop.f32.mrb[0].mxu0
  %6206 = vdwg.mxu0
  %6207 = vmatprep.subr.mxu0 0.0
  %v6208 = vand.u32 %v96, 4294901760
  %v6209 = vsub.f32 %v96, %v6208
  %v6210 = vand.u32 %v6209, 4294901760
  %v6211 = vsub.f32 %v6209, %v6210
  %v6212 = vand.u32 %v6211, 4294901760
  %6213 = vmatpush1.msra.mxu0 %v6212
  %6214 = vmatprep.subr.mxu0 0.0
  %v6215 = vand.u32 %v97, 4294901760
  %v6216 = vsub.f32 %v97, %v6215
  %v6217 = vand.u32 %v6216, 4294901760
  %v6218 = vsub.f32 %v6216, %v6217
  %v6219 = vand.u32 %v6218, 4294901760
  %6220 = vmatpush1.msra.mxu0 %v6219
  %6221 = vmatprep.subr.mxu0 0.0
  %v6222 = vand.u32 %v98, 4294901760
  %v6223 = vsub.f32 %v98, %v6222
  %v6224 = vand.u32 %v6223, 4294901760
  %v6225 = vsub.f32 %v6223, %v6224
  %v6226 = vand.u32 %v6225, 4294901760
  %6227 = vmatpush1.msra.mxu0 %v6226
  %6228 = vmatprep.subr.mxu0 0.0
  %v6229 = vand.u32 %v99, 4294901760
  %v6230 = vsub.f32 %v99, %v6229
  %v6231 = vand.u32 %v6230, 4294901760
  %v6232 = vsub.f32 %v6230, %v6231
  %v6233 = vand.u32 %v6232, 4294901760
  %6234 = vmatpush1.msra.mxu0 %v6233
  %6235 = vmatprep.subr.mxu0 0.0
  %v6236 = vand.u32 %v100, 4294901760
  %v6237 = vsub.f32 %v100, %v6236
  %v6238 = vand.u32 %v6237, 4294901760
  %v6239 = vsub.f32 %v6237, %v6238
  %v6240 = vand.u32 %v6239, 4294901760
  %6241 = vmatpush1.msra.mxu0 %v6240
  %6242 = vmatprep.subr.mxu0 0.0
  %v6243 = vand.u32 %v101, 4294901760
  %v6244 = vsub.f32 %v101, %v6243
  %v6245 = vand.u32 %v6244, 4294901760
  %v6246 = vsub.f32 %v6244, %v6245
  %v6247 = vand.u32 %v6246, 4294901760
  %6248 = vmatpush1.msra.mxu0 %v6247
  %6249 = vmatprep.subr.mxu0 0.0
  %v6250 = vand.u32 %v102, 4294901760
  %v6251 = vsub.f32 %v102, %v6250
  %v6252 = vand.u32 %v6251, 4294901760
  %v6253 = vsub.f32 %v6251, %v6252
  %v6254 = vand.u32 %v6253, 4294901760
  %6255 = vmatpush1.msra.mxu0 %v6254
  %6256 = vmatprep.subr.mxu0 0.0
  %v6257 = vand.u32 %v103, 4294901760
  %v6258 = vsub.f32 %v103, %v6257
  %v6259 = vand.u32 %v6258, 4294901760
  %v6260 = vsub.f32 %v6258, %v6259
  %v6261 = vand.u32 %v6260, 4294901760
  %6262 = vmatpush1.msra.mxu0 %v6261
  %6263 = vmatprep.subr.mxu0 0.0
  %v6264 = vand.u32 %v104, 4294901760
  %v6265 = vsub.f32 %v104, %v6264
  %v6266 = vand.u32 %v6265, 4294901760
  %v6267 = vsub.f32 %v6265, %v6266
  %v6268 = vand.u32 %v6267, 4294901760
  %6269 = vmatpush1.msra.mxu0 %v6268
  %6270 = vmatprep.subr.mxu0 0.0
  %v6271 = vand.u32 %v105, 4294901760
  %v6272 = vsub.f32 %v105, %v6271
  %v6273 = vand.u32 %v6272, 4294901760
  %v6274 = vsub.f32 %v6272, %v6273
  %v6275 = vand.u32 %v6274, 4294901760
  %6276 = vmatpush1.msra.mxu0 %v6275
  %6277 = vmatprep.subr.mxu0 0.0
  %v6278 = vand.u32 %v106, 4294901760
  %v6279 = vsub.f32 %v106, %v6278
  %v6280 = vand.u32 %v6279, 4294901760
  %v6281 = vsub.f32 %v6279, %v6280
  %v6282 = vand.u32 %v6281, 4294901760
  %6283 = vmatpush1.msra.mxu0 %v6282
  %6284 = vmatprep.subr.mxu0 0.0
  %v6285 = vand.u32 %v107, 4294901760
  %v6286 = vsub.f32 %v107, %v6285
  %v6287 = vand.u32 %v6286, 4294901760
  %v6288 = vsub.f32 %v6286, %v6287
  %v6289 = vand.u32 %v6288, 4294901760
  %6290 = vmatpush1.msra.mxu0 %v6289
  %6291 = vmatprep.subr.mxu0 0.0
  %v6292 = vand.u32 %v108, 4294901760
  %v6293 = vsub.f32 %v108, %v6292
  %v6294 = vand.u32 %v6293, 4294901760
  %v6295 = vsub.f32 %v6293, %v6294
  %v6296 = vand.u32 %v6295, 4294901760
  %6297 = vmatpush1.msra.mxu0 %v6296
  %6298 = vmatprep.subr.mxu0 0.0
  %v6299 = vand.u32 %v109, 4294901760
  %v6300 = vsub.f32 %v109, %v6299
  %v6301 = vand.u32 %v6300, 4294901760
  %v6302 = vsub.f32 %v6300, %v6301
  %v6303 = vand.u32 %v6302, 4294901760
  %6304 = vmatpush1.msra.mxu0 %v6303
  %6305 = vmatprep.subr.mxu0 0.0
  %v6306 = vand.u32 %v110, 4294901760
  %v6307 = vsub.f32 %v110, %v6306
  %v6308 = vand.u32 %v6307, 4294901760
  %v6309 = vsub.f32 %v6307, %v6308
  %v6310 = vand.u32 %v6309, 4294901760
  %6311 = vmatpush1.msra.mxu0 %v6310
  %6312 = vmatprep.subr.mxu0 0.0
  %v6313 = vand.u32 %v111, 4294901760
  %v6314 = vsub.f32 %v111, %v6313
  %v6315 = vand.u32 %v6314, 4294901760
  %v6316 = vsub.f32 %v6314, %v6315
  %v6317 = vand.u32 %v6316, 4294901760
  %6318 = vmatpush1.msra.mxu0 %v6317
  %6319 = vmatprep.subr.mxu0 0.0
  %v6320 = vand.u32 %v112, 4294901760
  %v6321 = vsub.f32 %v112, %v6320
  %v6322 = vand.u32 %v6321, 4294901760
  %v6323 = vsub.f32 %v6321, %v6322
  %v6324 = vand.u32 %v6323, 4294901760
  %6325 = vmatpush1.msra.mxu0 %v6324
  %6326 = vmatprep.subr.mxu0 0.0
  %v6327 = vand.u32 %v113, 4294901760
  %v6328 = vsub.f32 %v113, %v6327
  %v6329 = vand.u32 %v6328, 4294901760
  %v6330 = vsub.f32 %v6328, %v6329
  %v6331 = vand.u32 %v6330, 4294901760
  %6332 = vmatpush1.msra.mxu0 %v6331
  %6333 = vmatprep.subr.mxu0 0.0
  %v6334 = vand.u32 %v114, 4294901760
  %v6335 = vsub.f32 %v114, %v6334
  %v6336 = vand.u32 %v6335, 4294901760
  %v6337 = vsub.f32 %v6335, %v6336
  %v6338 = vand.u32 %v6337, 4294901760
  %6339 = vmatpush1.msra.mxu0 %v6338
  %6340 = vmatprep.subr.mxu0 0.0
  %v6341 = vand.u32 %v115, 4294901760
  %v6342 = vsub.f32 %v115, %v6341
  %v6343 = vand.u32 %v6342, 4294901760
  %v6344 = vsub.f32 %v6342, %v6343
  %v6345 = vand.u32 %v6344, 4294901760
  %6346 = vmatpush1.msra.mxu0 %v6345
  %6347 = vmatprep.subr.mxu0 0.0
  %v6348 = vand.u32 %v116, 4294901760
  %v6349 = vsub.f32 %v116, %v6348
  %v6350 = vand.u32 %v6349, 4294901760
  %v6351 = vsub.f32 %v6349, %v6350
  %v6352 = vand.u32 %v6351, 4294901760
  %6353 = vmatpush1.msra.mxu0 %v6352
  %6354 = vmatprep.subr.mxu0 0.0
  %v6355 = vand.u32 %v117, 4294901760
  %v6356 = vsub.f32 %v117, %v6355
  %v6357 = vand.u32 %v6356, 4294901760
  %v6358 = vsub.f32 %v6356, %v6357
  %v6359 = vand.u32 %v6358, 4294901760
  %6360 = vmatpush1.msra.mxu0 %v6359
  %6361 = vmatprep.subr.mxu0 0.0
  %v6362 = vand.u32 %v118, 4294901760
  %v6363 = vsub.f32 %v118, %v6362
  %v6364 = vand.u32 %v6363, 4294901760
  %v6365 = vsub.f32 %v6363, %v6364
  %v6366 = vand.u32 %v6365, 4294901760
  %6367 = vmatpush1.msra.mxu0 %v6366
  %6368 = vmatprep.subr.mxu0 0.0
  %v6369 = vand.u32 %v119, 4294901760
  %v6370 = vsub.f32 %v119, %v6369
  %v6371 = vand.u32 %v6370, 4294901760
  %v6372 = vsub.f32 %v6370, %v6371
  %v6373 = vand.u32 %v6372, 4294901760
  %6374 = vmatpush1.msra.mxu0 %v6373
  %6375 = vmatprep.subr.mxu0 0.0
  %v6376 = vand.u32 %v120, 4294901760
  %v6377 = vsub.f32 %v120, %v6376
  %v6378 = vand.u32 %v6377, 4294901760
  %v6379 = vsub.f32 %v6377, %v6378
  %v6380 = vand.u32 %v6379, 4294901760
  %6381 = vmatpush1.msra.mxu0 %v6380
  %6382 = vmatprep.subr.mxu0 0.0
  %v6383 = vand.u32 %v121, 4294901760
  %v6384 = vsub.f32 %v121, %v6383
  %v6385 = vand.u32 %v6384, 4294901760
  %v6386 = vsub.f32 %v6384, %v6385
  %v6387 = vand.u32 %v6386, 4294901760
  %6388 = vmatpush1.msra.mxu0 %v6387
  %6389 = vmatprep.subr.mxu0 0.0
  %v6390 = vand.u32 %v122, 4294901760
  %v6391 = vsub.f32 %v122, %v6390
  %v6392 = vand.u32 %v6391, 4294901760
  %v6393 = vsub.f32 %v6391, %v6392
  %v6394 = vand.u32 %v6393, 4294901760
  %6395 = vmatpush1.msra.mxu0 %v6394
  %6396 = vmatprep.subr.mxu0 0.0
  %v6397 = vand.u32 %v123, 4294901760
  %v6398 = vsub.f32 %v123, %v6397
  %v6399 = vand.u32 %v6398, 4294901760
  %v6400 = vsub.f32 %v6398, %v6399
  %v6401 = vand.u32 %v6400, 4294901760
  %6402 = vmatpush1.msra.mxu0 %v6401
  %6403 = vmatprep.subr.mxu0 0.0
  %v6404 = vand.u32 %v124, 4294901760
  %v6405 = vsub.f32 %v124, %v6404
  %v6406 = vand.u32 %v6405, 4294901760
  %v6407 = vsub.f32 %v6405, %v6406
  %v6408 = vand.u32 %v6407, 4294901760
  %6409 = vmatpush1.msra.mxu0 %v6408
  %6410 = vmatprep.subr.mxu0 0.0
  %v6411 = vand.u32 %v125, 4294901760
  %v6412 = vsub.f32 %v125, %v6411
  %v6413 = vand.u32 %v6412, 4294901760
  %v6414 = vsub.f32 %v6412, %v6413
  %v6415 = vand.u32 %v6414, 4294901760
  %6416 = vmatpush1.msra.mxu0 %v6415
  %6417 = vmatprep.subr.mxu0 0.0
  %v6418 = vand.u32 %v126, 4294901760
  %v6419 = vsub.f32 %v126, %v6418
  %v6420 = vand.u32 %v6419, 4294901760
  %v6421 = vsub.f32 %v6419, %v6420
  %v6422 = vand.u32 %v6421, 4294901760
  %6423 = vmatpush1.msra.mxu0 %v6422
  %6424 = vmatprep.subr.mxu0 0.0
  %v6425 = vand.u32 %v127, 4294901760
  %v6426 = vsub.f32 %v127, %v6425
  %v6427 = vand.u32 %v6426, 4294901760
  %v6428 = vsub.f32 %v6426, %v6427
  %v6429 = vand.u32 %v6428, 4294901760
  %6430 = vmatpush1.msra.mxu0 %v6429
  %v6431 = vand.u32 %v4353, 4294901760
  %6432 = vmatprep.mubr.f32.mxu0 %v6431
  %v6433 = vand.u32 %v4345, 4294901760
  %6434 = vmatmul.mubr.f32.gmra.mrb[0].mxu0 %v6433
  %v6435 = vpop.f32.mrb[0].mxu0
  %v6436 = vadd.f32 %v6204, %v6435
  %v6437 = vpop.f32.mrb[0].mxu0
  %6438 = vdwg.mxu0
  %6439 = vmatprep.subr.mxu0 0.0
  %v6440 = vand.u32 %v96, 4294901760
  %v6441 = vsub.f32 %v96, %v6440
  %6442 = vmatpush1.msra.mxu0 %v6441
  %6443 = vmatprep.subr.mxu0 0.0
  %v6444 = vand.u32 %v97, 4294901760
  %v6445 = vsub.f32 %v97, %v6444
  %6446 = vmatpush1.msra.mxu0 %v6445
  %6447 = vmatprep.subr.mxu0 0.0
  %v6448 = vand.u32 %v98, 4294901760
  %v6449 = vsub.f32 %v98, %v6448
  %6450 = vmatpush1.msra.mxu0 %v6449
  %6451 = vmatprep.subr.mxu0 0.0
  %v6452 = vand.u32 %v99, 4294901760
  %v6453 = vsub.f32 %v99, %v6452
  %6454 = vmatpush1.msra.mxu0 %v6453
  %6455 = vmatprep.subr.mxu0 0.0
  %v6456 = vand.u32 %v100, 4294901760
  %v6457 = vsub.f32 %v100, %v6456
  %6458 = vmatpush1.msra.mxu0 %v6457
  %6459 = vmatprep.subr.mxu0 0.0
  %v6460 = vand.u32 %v101, 4294901760
  %v6461 = vsub.f32 %v101, %v6460
  %6462 = vmatpush1.msra.mxu0 %v6461
  %6463 = vmatprep.subr.mxu0 0.0
  %v6464 = vand.u32 %v102, 4294901760
  %v6465 = vsub.f32 %v102, %v6464
  %6466 = vmatpush1.msra.mxu0 %v6465
  %6467 = vmatprep.subr.mxu0 0.0
  %v6468 = vand.u32 %v103, 4294901760
  %v6469 = vsub.f32 %v103, %v6468
  %6470 = vmatpush1.msra.mxu0 %v6469
  %6471 = vmatprep.subr.mxu0 0.0
  %v6472 = vand.u32 %v104, 4294901760
  %v6473 = vsub.f32 %v104, %v6472
  %6474 = vmatpush1.msra.mxu0 %v6473
  %6475 = vmatprep.subr.mxu0 0.0
  %v6476 = vand.u32 %v105, 4294901760
  %v6477 = vsub.f32 %v105, %v6476
  %6478 = vmatpush1.msra.mxu0 %v6477
  %6479 = vmatprep.subr.mxu0 0.0
  %v6480 = vand.u32 %v106, 4294901760
  %v6481 = vsub.f32 %v106, %v6480
  %6482 = vmatpush1.msra.mxu0 %v6481
  %6483 = vmatprep.subr.mxu0 0.0
  %v6484 = vand.u32 %v107, 4294901760
  %v6485 = vsub.f32 %v107, %v6484
  %6486 = vmatpush1.msra.mxu0 %v6485
  %6487 = vmatprep.subr.mxu0 0.0
  %v6488 = vand.u32 %v108, 4294901760
  %v6489 = vsub.f32 %v108, %v6488
  %6490 = vmatpush1.msra.mxu0 %v6489
  %6491 = vmatprep.subr.mxu0 0.0
  %v6492 = vand.u32 %v109, 4294901760
  %v6493 = vsub.f32 %v109, %v6492
  %6494 = vmatpush1.msra.mxu0 %v6493
  %6495 = vmatprep.subr.mxu0 0.0
  %v6496 = vand.u32 %v110, 4294901760
  %v6497 = vsub.f32 %v110, %v6496
  %6498 = vmatpush1.msra.mxu0 %v6497
  %6499 = vmatprep.subr.mxu0 0.0
  %v6500 = vand.u32 %v111, 4294901760
  %v6501 = vsub.f32 %v111, %v6500
  %6502 = vmatpush1.msra.mxu0 %v6501
  %6503 = vmatprep.subr.mxu0 0.0
  %v6504 = vand.u32 %v112, 4294901760
  %v6505 = vsub.f32 %v112, %v6504
  %6506 = vmatpush1.msra.mxu0 %v6505
  %6507 = vmatprep.subr.mxu0 0.0
  %v6508 = vand.u32 %v113, 4294901760
  %v6509 = vsub.f32 %v113, %v6508
  %6510 = vmatpush1.msra.mxu0 %v6509
  %6511 = vmatprep.subr.mxu0 0.0
  %v6512 = vand.u32 %v114, 4294901760
  %v6513 = vsub.f32 %v114, %v6512
  %6514 = vmatpush1.msra.mxu0 %v6513
  %6515 = vmatprep.subr.mxu0 0.0
  %v6516 = vand.u32 %v115, 4294901760
  %v6517 = vsub.f32 %v115, %v6516
  %6518 = vmatpush1.msra.mxu0 %v6517
  %6519 = vmatprep.subr.mxu0 0.0
  %v6520 = vand.u32 %v116, 4294901760
  %v6521 = vsub.f32 %v116, %v6520
  %6522 = vmatpush1.msra.mxu0 %v6521
  %6523 = vmatprep.subr.mxu0 0.0
  %v6524 = vand.u32 %v117, 4294901760
  %v6525 = vsub.f32 %v117, %v6524
  %6526 = vmatpush1.msra.mxu0 %v6525
  %6527 = vmatprep.subr.mxu0 0.0
  %v6528 = vand.u32 %v118, 4294901760
  %v6529 = vsub.f32 %v118, %v6528
  %6530 = vmatpush1.msra.mxu0 %v6529
  %6531 = vmatprep.subr.mxu0 0.0
  %v6532 = vand.u32 %v119, 4294901760
  %v6533 = vsub.f32 %v119, %v6532
  %6534 = vmatpush1.msra.mxu0 %v6533
  %6535 = vmatprep.subr.mxu0 0.0
  %v6536 = vand.u32 %v120, 4294901760
  %v6537 = vsub.f32 %v120, %v6536
  %6538 = vmatpush1.msra.mxu0 %v6537
  %6539 = vmatprep.subr.mxu0 0.0
  %v6540 = vand.u32 %v121, 4294901760
  %v6541 = vsub.f32 %v121, %v6540
  %6542 = vmatpush1.msra.mxu0 %v6541
  %6543 = vmatprep.subr.mxu0 0.0
  %v6544 = vand.u32 %v122, 4294901760
  %v6545 = vsub.f32 %v122, %v6544
  %6546 = vmatpush1.msra.mxu0 %v6545
  %6547 = vmatprep.subr.mxu0 0.0
  %v6548 = vand.u32 %v123, 4294901760
  %v6549 = vsub.f32 %v123, %v6548
  %6550 = vmatpush1.msra.mxu0 %v6549
  %6551 = vmatprep.subr.mxu0 0.0
  %v6552 = vand.u32 %v124, 4294901760
  %v6553 = vsub.f32 %v124, %v6552
  %6554 = vmatpush1.msra.mxu0 %v6553
  %6555 = vmatprep.subr.mxu0 0.0
  %v6556 = vand.u32 %v125, 4294901760
  %v6557 = vsub.f32 %v125, %v6556
  %6558 = vmatpush1.msra.mxu0 %v6557
  %6559 = vmatprep.subr.mxu0 0.0
  %v6560 = vand.u32 %v126, 4294901760
  %v6561 = vsub.f32 %v126, %v6560
  %6562 = vmatpush1.msra.mxu0 %v6561
  %6563 = vmatprep.subr.mxu0 0.0
  %v6564 = vand.u32 %v127, 4294901760
  %v6565 = vsub.f32 %v127, %v6564
  %6566 = vmatpush1.msra.mxu0 %v6565
  %v6567 = vand.u32 %v4353, 4294901760
  %v6568 = vsub.f32 %v4353, %v6567
  %6569 = vmatprep.mubr.f32.mxu0 %v6568
  %v6570 = vand.u32 %v4345, 4294901760
  %v6571 = vsub.f32 %v4345, %v6570
  %6572 = vmatmul.mubr.f32.gmra.mrb[0].mxu0 %v6571
  %v6573 = vpop.f32.mrb[0].mxu0
  %v6574 = vadd.f32 %v6436, %v6573
  %v6575 = vpop.f32.mrb[0].mxu0
  %6576 = vdwg.mxu0
  %6577 = vmatprep.subr.mxu0 0.0
  %v6578 = vand.u32 %v96, 4294901760
  %6579 = vmatpush1.msra.mxu0 %v6578
  %6580 = vmatprep.subr.mxu0 0.0
  %v6581 = vand.u32 %v97, 4294901760
  %6582 = vmatpush1.msra.mxu0 %v6581
  %6583 = vmatprep.subr.mxu0 0.0
  %v6584 = vand.u32 %v98, 4294901760
  %6585 = vmatpush1.msra.mxu0 %v6584
  %6586 = vmatprep.subr.mxu0 0.0
  %v6587 = vand.u32 %v99, 4294901760
  %6588 = vmatpush1.msra.mxu0 %v6587
  %6589 = vmatprep.subr.mxu0 0.0
  %v6590 = vand.u32 %v100, 4294901760
  %6591 = vmatpush1.msra.mxu0 %v6590
  %6592 = vmatprep.subr.mxu0 0.0
  %v6593 = vand.u32 %v101, 4294901760
  %6594 = vmatpush1.msra.mxu0 %v6593
  %6595 = vmatprep.subr.mxu0 0.0
  %v6596 = vand.u32 %v102, 4294901760
  %6597 = vmatpush1.msra.mxu0 %v6596
  %6598 = vmatprep.subr.mxu0 0.0
  %v6599 = vand.u32 %v103, 4294901760
  %6600 = vmatpush1.msra.mxu0 %v6599
  %6601 = vmatprep.subr.mxu0 0.0
  %v6602 = vand.u32 %v104, 4294901760
  %6603 = vmatpush1.msra.mxu0 %v6602
  %6604 = vmatprep.subr.mxu0 0.0
  %v6605 = vand.u32 %v105, 4294901760
  %6606 = vmatpush1.msra.mxu0 %v6605
  %6607 = vmatprep.subr.mxu0 0.0
  %v6608 = vand.u32 %v106, 4294901760
  %6609 = vmatpush1.msra.mxu0 %v6608
  %6610 = vmatprep.subr.mxu0 0.0
  %v6611 = vand.u32 %v107, 4294901760
  %6612 = vmatpush1.msra.mxu0 %v6611
  %6613 = vmatprep.subr.mxu0 0.0
  %v6614 = vand.u32 %v108, 4294901760
  %6615 = vmatpush1.msra.mxu0 %v6614
  %6616 = vmatprep.subr.mxu0 0.0
  %v6617 = vand.u32 %v109, 4294901760
  %6618 = vmatpush1.msra.mxu0 %v6617
  %6619 = vmatprep.subr.mxu0 0.0
  %v6620 = vand.u32 %v110, 4294901760
  %6621 = vmatpush1.msra.mxu0 %v6620
  %6622 = vmatprep.subr.mxu0 0.0
  %v6623 = vand.u32 %v111, 4294901760
  %6624 = vmatpush1.msra.mxu0 %v6623
  %6625 = vmatprep.subr.mxu0 0.0
  %v6626 = vand.u32 %v112, 4294901760
  %6627 = vmatpush1.msra.mxu0 %v6626
  %6628 = vmatprep.subr.mxu0 0.0
  %v6629 = vand.u32 %v113, 4294901760
  %6630 = vmatpush1.msra.mxu0 %v6629
  %6631 = vmatprep.subr.mxu0 0.0
  %v6632 = vand.u32 %v114, 4294901760
  %6633 = vmatpush1.msra.mxu0 %v6632
  %6634 = vmatprep.subr.mxu0 0.0
  %v6635 = vand.u32 %v115, 4294901760
  %6636 = vmatpush1.msra.mxu0 %v6635
  %6637 = vmatprep.subr.mxu0 0.0
  %v6638 = vand.u32 %v116, 4294901760
  %6639 = vmatpush1.msra.mxu0 %v6638
  %6640 = vmatprep.subr.mxu0 0.0
  %v6641 = vand.u32 %v117, 4294901760
  %6642 = vmatpush1.msra.mxu0 %v6641
  %6643 = vmatprep.subr.mxu0 0.0
  %v6644 = vand.u32 %v118, 4294901760
  %6645 = vmatpush1.msra.mxu0 %v6644
  %6646 = vmatprep.subr.mxu0 0.0
  %v6647 = vand.u32 %v119, 4294901760
  %6648 = vmatpush1.msra.mxu0 %v6647
  %6649 = vmatprep.subr.mxu0 0.0
  %v6650 = vand.u32 %v120, 4294901760
  %6651 = vmatpush1.msra.mxu0 %v6650
  %6652 = vmatprep.subr.mxu0 0.0
  %v6653 = vand.u32 %v121, 4294901760
  %6654 = vmatpush1.msra.mxu0 %v6653
  %6655 = vmatprep.subr.mxu0 0.0
  %v6656 = vand.u32 %v122, 4294901760
  %6657 = vmatpush1.msra.mxu0 %v6656
  %6658 = vmatprep.subr.mxu0 0.0
  %v6659 = vand.u32 %v123, 4294901760
  %6660 = vmatpush1.msra.mxu0 %v6659
  %6661 = vmatprep.subr.mxu0 0.0
  %v6662 = vand.u32 %v124, 4294901760
  %6663 = vmatpush1.msra.mxu0 %v6662
  %6664 = vmatprep.subr.mxu0 0.0
  %v6665 = vand.u32 %v125, 4294901760
  %6666 = vmatpush1.msra.mxu0 %v6665
  %6667 = vmatprep.subr.mxu0 0.0
  %v6668 = vand.u32 %v126, 4294901760
  %6669 = vmatpush1.msra.mxu0 %v6668
  %6670 = vmatprep.subr.mxu0 0.0
  %v6671 = vand.u32 %v127, 4294901760
  %6672 = vmatpush1.msra.mxu0 %v6671
  %v6673 = vand.u32 %v4353, 4294901760
  %v6674 = vsub.f32 %v4353, %v6673
  %v6675 = vand.u32 %v6674, 4294901760
  %6676 = vmatprep.mubr.f32.mxu0 %v6675
  %v6677 = vand.u32 %v4345, 4294901760
  %v6678 = vsub.f32 %v4345, %v6677
  %v6679 = vand.u32 %v6678, 4294901760
  %6680 = vmatmul.mubr.f32.gmra.mrb[0].mxu0 %v6679
  %v6681 = vpop.f32.mrb[0].mxu0
  %v6682 = vadd.f32 %v6574, %v6681
  %v6683 = vpop.f32.mrb[0].mxu0
  %6684 = vdwg.mxu0
  %6685 = vmatprep.subr.mxu0 0.0
  %v6686 = vand.u32 %v96, 4294901760
  %v6687 = vsub.f32 %v96, %v6686
  %v6688 = vand.u32 %v6687, 4294901760
  %6689 = vmatpush1.msra.mxu0 %v6688
  %6690 = vmatprep.subr.mxu0 0.0
  %v6691 = vand.u32 %v97, 4294901760
  %v6692 = vsub.f32 %v97, %v6691
  %v6693 = vand.u32 %v6692, 4294901760
  %6694 = vmatpush1.msra.mxu0 %v6693
  %6695 = vmatprep.subr.mxu0 0.0
  %v6696 = vand.u32 %v98, 4294901760
  %v6697 = vsub.f32 %v98, %v6696
  %v6698 = vand.u32 %v6697, 4294901760
  %6699 = vmatpush1.msra.mxu0 %v6698
  %6700 = vmatprep.subr.mxu0 0.0
  %v6701 = vand.u32 %v99, 4294901760
  %v6702 = vsub.f32 %v99, %v6701
  %v6703 = vand.u32 %v6702, 4294901760
  %6704 = vmatpush1.msra.mxu0 %v6703
  %6705 = vmatprep.subr.mxu0 0.0
  %v6706 = vand.u32 %v100, 4294901760
  %v6707 = vsub.f32 %v100, %v6706
  %v6708 = vand.u32 %v6707, 4294901760
  %6709 = vmatpush1.msra.mxu0 %v6708
  %6710 = vmatprep.subr.mxu0 0.0
  %v6711 = vand.u32 %v101, 4294901760
  %v6712 = vsub.f32 %v101, %v6711
  %v6713 = vand.u32 %v6712, 4294901760
  %6714 = vmatpush1.msra.mxu0 %v6713
  %6715 = vmatprep.subr.mxu0 0.0
  %v6716 = vand.u32 %v102, 4294901760
  %v6717 = vsub.f32 %v102, %v6716
  %v6718 = vand.u32 %v6717, 4294901760
  %6719 = vmatpush1.msra.mxu0 %v6718
  %6720 = vmatprep.subr.mxu0 0.0
  %v6721 = vand.u32 %v103, 4294901760
  %v6722 = vsub.f32 %v103, %v6721
  %v6723 = vand.u32 %v6722, 4294901760
  %6724 = vmatpush1.msra.mxu0 %v6723
  %6725 = vmatprep.subr.mxu0 0.0
  %v6726 = vand.u32 %v104, 4294901760
  %v6727 = vsub.f32 %v104, %v6726
  %v6728 = vand.u32 %v6727, 4294901760
  %6729 = vmatpush1.msra.mxu0 %v6728
  %6730 = vmatprep.subr.mxu0 0.0
  %v6731 = vand.u32 %v105, 4294901760
  %v6732 = vsub.f32 %v105, %v6731
  %v6733 = vand.u32 %v6732, 4294901760
  %6734 = vmatpush1.msra.mxu0 %v6733
  %6735 = vmatprep.subr.mxu0 0.0
  %v6736 = vand.u32 %v106, 4294901760
  %v6737 = vsub.f32 %v106, %v6736
  %v6738 = vand.u32 %v6737, 4294901760
  %6739 = vmatpush1.msra.mxu0 %v6738
  %6740 = vmatprep.subr.mxu0 0.0
  %v6741 = vand.u32 %v107, 4294901760
  %v6742 = vsub.f32 %v107, %v6741
  %v6743 = vand.u32 %v6742, 4294901760
  %6744 = vmatpush1.msra.mxu0 %v6743
  %6745 = vmatprep.subr.mxu0 0.0
  %v6746 = vand.u32 %v108, 4294901760
  %v6747 = vsub.f32 %v108, %v6746
  %v6748 = vand.u32 %v6747, 4294901760
  %6749 = vmatpush1.msra.mxu0 %v6748
  %6750 = vmatprep.subr.mxu0 0.0
  %v6751 = vand.u32 %v109, 4294901760
  %v6752 = vsub.f32 %v109, %v6751
  %v6753 = vand.u32 %v6752, 4294901760
  %6754 = vmatpush1.msra.mxu0 %v6753
  %6755 = vmatprep.subr.mxu0 0.0
  %v6756 = vand.u32 %v110, 4294901760
  %v6757 = vsub.f32 %v110, %v6756
  %v6758 = vand.u32 %v6757, 4294901760
  %6759 = vmatpush1.msra.mxu0 %v6758
  %6760 = vmatprep.subr.mxu0 0.0
  %v6761 = vand.u32 %v111, 4294901760
  %v6762 = vsub.f32 %v111, %v6761
  %v6763 = vand.u32 %v6762, 4294901760
  %6764 = vmatpush1.msra.mxu0 %v6763
  %6765 = vmatprep.subr.mxu0 0.0
  %v6766 = vand.u32 %v112, 4294901760
  %v6767 = vsub.f32 %v112, %v6766
  %v6768 = vand.u32 %v6767, 4294901760
  %6769 = vmatpush1.msra.mxu0 %v6768
  %6770 = vmatprep.subr.mxu0 0.0
  %v6771 = vand.u32 %v113, 4294901760
  %v6772 = vsub.f32 %v113, %v6771
  %v6773 = vand.u32 %v6772, 4294901760
  %6774 = vmatpush1.msra.mxu0 %v6773
  %6775 = vmatprep.subr.mxu0 0.0
  %v6776 = vand.u32 %v114, 4294901760
  %v6777 = vsub.f32 %v114, %v6776
  %v6778 = vand.u32 %v6777, 4294901760
  %6779 = vmatpush1.msra.mxu0 %v6778
  %6780 = vmatprep.subr.mxu0 0.0
  %v6781 = vand.u32 %v115, 4294901760
  %v6782 = vsub.f32 %v115, %v6781
  %v6783 = vand.u32 %v6782, 4294901760
  %6784 = vmatpush1.msra.mxu0 %v6783
  %6785 = vmatprep.subr.mxu0 0.0
  %v6786 = vand.u32 %v116, 4294901760
  %v6787 = vsub.f32 %v116, %v6786
  %v6788 = vand.u32 %v6787, 4294901760
  %6789 = vmatpush1.msra.mxu0 %v6788
  %6790 = vmatprep.subr.mxu0 0.0
  %v6791 = vand.u32 %v117, 4294901760
  %v6792 = vsub.f32 %v117, %v6791
  %v6793 = vand.u32 %v6792, 4294901760
  %6794 = vmatpush1.msra.mxu0 %v6793
  %6795 = vmatprep.subr.mxu0 0.0
  %v6796 = vand.u32 %v118, 4294901760
  %v6797 = vsub.f32 %v118, %v6796
  %v6798 = vand.u32 %v6797, 4294901760
  %6799 = vmatpush1.msra.mxu0 %v6798
  %6800 = vmatprep.subr.mxu0 0.0
  %v6801 = vand.u32 %v119, 4294901760
  %v6802 = vsub.f32 %v119, %v6801
  %v6803 = vand.u32 %v6802, 4294901760
  %6804 = vmatpush1.msra.mxu0 %v6803
  %6805 = vmatprep.subr.mxu0 0.0
  %v6806 = vand.u32 %v120, 4294901760
  %v6807 = vsub.f32 %v120, %v6806
  %v6808 = vand.u32 %v6807, 4294901760
  %6809 = vmatpush1.msra.mxu0 %v6808
  %6810 = vmatprep.subr.mxu0 0.0
  %v6811 = vand.u32 %v121, 4294901760
  %v6812 = vsub.f32 %v121, %v6811
  %v6813 = vand.u32 %v6812, 4294901760
  %6814 = vmatpush1.msra.mxu0 %v6813
  %6815 = vmatprep.subr.mxu0 0.0
  %v6816 = vand.u32 %v122, 4294901760
  %v6817 = vsub.f32 %v122, %v6816
  %v6818 = vand.u32 %v6817, 4294901760
  %6819 = vmatpush1.msra.mxu0 %v6818
  %6820 = vmatprep.subr.mxu0 0.0
  %v6821 = vand.u32 %v123, 4294901760
  %v6822 = vsub.f32 %v123, %v6821
  %v6823 = vand.u32 %v6822, 4294901760
  %6824 = vmatpush1.msra.mxu0 %v6823
  %6825 = vmatprep.subr.mxu0 0.0
  %v6826 = vand.u32 %v124, 4294901760
  %v6827 = vsub.f32 %v124, %v6826
  %v6828 = vand.u32 %v6827, 4294901760
  %6829 = vmatpush1.msra.mxu0 %v6828
  %6830 = vmatprep.subr.mxu0 0.0
  %v6831 = vand.u32 %v125, 4294901760
  %v6832 = vsub.f32 %v125, %v6831
  %v6833 = vand.u32 %v6832, 4294901760
  %6834 = vmatpush1.msra.mxu0 %v6833
  %6835 = vmatprep.subr.mxu0 0.0
  %v6836 = vand.u32 %v126, 4294901760
  %v6837 = vsub.f32 %v126, %v6836
  %v6838 = vand.u32 %v6837, 4294901760
  %6839 = vmatpush1.msra.mxu0 %v6838
  %6840 = vmatprep.subr.mxu0 0.0
  %v6841 = vand.u32 %v127, 4294901760
  %v6842 = vsub.f32 %v127, %v6841
  %v6843 = vand.u32 %v6842, 4294901760
  %6844 = vmatpush1.msra.mxu0 %v6843
  %v6845 = vand.u32 %v4353, 4294901760
  %6846 = vmatprep.mubr.f32.mxu0 %v6845
  %v6847 = vand.u32 %v4345, 4294901760
  %6848 = vmatmul.mubr.f32.gmra.mrb[0].mxu0 %v6847
  %v6849 = vpop.f32.mrb[0].mxu0
  %v6850 = vadd.f32 %v6682, %v6849
  %v6851 = vpop.f32.mrb[0].mxu0
  %6852 = vdwg.mxu0
  %6853 = vmatprep.subr.mxu0 0.0
  %v6854 = vand.u32 %v96, 4294901760
  %6855 = vmatpush1.msra.mxu0 %v6854
  %6856 = vmatprep.subr.mxu0 0.0
  %v6857 = vand.u32 %v97, 4294901760
  %6858 = vmatpush1.msra.mxu0 %v6857
  %6859 = vmatprep.subr.mxu0 0.0
  %v6860 = vand.u32 %v98, 4294901760
  %6861 = vmatpush1.msra.mxu0 %v6860
  %6862 = vmatprep.subr.mxu0 0.0
  %v6863 = vand.u32 %v99, 4294901760
  %6864 = vmatpush1.msra.mxu0 %v6863
  %6865 = vmatprep.subr.mxu0 0.0
  %v6866 = vand.u32 %v100, 4294901760
  %6867 = vmatpush1.msra.mxu0 %v6866
  %6868 = vmatprep.subr.mxu0 0.0
  %v6869 = vand.u32 %v101, 4294901760
  %6870 = vmatpush1.msra.mxu0 %v6869
  %6871 = vmatprep.subr.mxu0 0.0
  %v6872 = vand.u32 %v102, 4294901760
  %6873 = vmatpush1.msra.mxu0 %v6872
  %6874 = vmatprep.subr.mxu0 0.0
  %v6875 = vand.u32 %v103, 4294901760
  %6876 = vmatpush1.msra.mxu0 %v6875
  %6877 = vmatprep.subr.mxu0 0.0
  %v6878 = vand.u32 %v104, 4294901760
  %6879 = vmatpush1.msra.mxu0 %v6878
  %6880 = vmatprep.subr.mxu0 0.0
  %v6881 = vand.u32 %v105, 4294901760
  %6882 = vmatpush1.msra.mxu0 %v6881
  %6883 = vmatprep.subr.mxu0 0.0
  %v6884 = vand.u32 %v106, 4294901760
  %6885 = vmatpush1.msra.mxu0 %v6884
  %6886 = vmatprep.subr.mxu0 0.0
  %v6887 = vand.u32 %v107, 4294901760
  %6888 = vmatpush1.msra.mxu0 %v6887
  %6889 = vmatprep.subr.mxu0 0.0
  %v6890 = vand.u32 %v108, 4294901760
  %6891 = vmatpush1.msra.mxu0 %v6890
  %6892 = vmatprep.subr.mxu0 0.0
  %v6893 = vand.u32 %v109, 4294901760
  %6894 = vmatpush1.msra.mxu0 %v6893
  %6895 = vmatprep.subr.mxu0 0.0
  %v6896 = vand.u32 %v110, 4294901760
  %6897 = vmatpush1.msra.mxu0 %v6896
  %6898 = vmatprep.subr.mxu0 0.0
  %v6899 = vand.u32 %v111, 4294901760
  %6900 = vmatpush1.msra.mxu0 %v6899
  %6901 = vmatprep.subr.mxu0 0.0
  %v6902 = vand.u32 %v112, 4294901760
  %6903 = vmatpush1.msra.mxu0 %v6902
  %6904 = vmatprep.subr.mxu0 0.0
  %v6905 = vand.u32 %v113, 4294901760
  %6906 = vmatpush1.msra.mxu0 %v6905
  %6907 = vmatprep.subr.mxu0 0.0
  %v6908 = vand.u32 %v114, 4294901760
  %6909 = vmatpush1.msra.mxu0 %v6908
  %6910 = vmatprep.subr.mxu0 0.0
  %v6911 = vand.u32 %v115, 4294901760
  %6912 = vmatpush1.msra.mxu0 %v6911
  %6913 = vmatprep.subr.mxu0 0.0
  %v6914 = vand.u32 %v116, 4294901760
  %6915 = vmatpush1.msra.mxu0 %v6914
  %6916 = vmatprep.subr.mxu0 0.0
  %v6917 = vand.u32 %v117, 4294901760
  %6918 = vmatpush1.msra.mxu0 %v6917
  %6919 = vmatprep.subr.mxu0 0.0
  %v6920 = vand.u32 %v118, 4294901760
  %6921 = vmatpush1.msra.mxu0 %v6920
  %6922 = vmatprep.subr.mxu0 0.0
  %v6923 = vand.u32 %v119, 4294901760
  %6924 = vmatpush1.msra.mxu0 %v6923
  %6925 = vmatprep.subr.mxu0 0.0
  %v6926 = vand.u32 %v120, 4294901760
  %6927 = vmatpush1.msra.mxu0 %v6926
  %6928 = vmatprep.subr.mxu0 0.0
  %v6929 = vand.u32 %v121, 4294901760
  %6930 = vmatpush1.msra.mxu0 %v6929
  %6931 = vmatprep.subr.mxu0 0.0
  %v6932 = vand.u32 %v122, 4294901760
  %6933 = vmatpush1.msra.mxu0 %v6932
  %6934 = vmatprep.subr.mxu0 0.0
  %v6935 = vand.u32 %v123, 4294901760
  %6936 = vmatpush1.msra.mxu0 %v6935
  %6937 = vmatprep.subr.mxu0 0.0
  %v6938 = vand.u32 %v124, 4294901760
  %6939 = vmatpush1.msra.mxu0 %v6938
  %6940 = vmatprep.subr.mxu0 0.0
  %v6941 = vand.u32 %v125, 4294901760
  %6942 = vmatpush1.msra.mxu0 %v6941
  %6943 = vmatprep.subr.mxu0 0.0
  %v6944 = vand.u32 %v126, 4294901760
  %6945 = vmatpush1.msra.mxu0 %v6944
  %6946 = vmatprep.subr.mxu0 0.0
  %v6947 = vand.u32 %v127, 4294901760
  %6948 = vmatpush1.msra.mxu0 %v6947
  %v6949 = vand.u32 %v4353, 4294901760
  %6950 = vmatprep.mubr.f32.mxu0 %v6949
  %v6951 = vand.u32 %v4345, 4294901760
  %6952 = vmatmul.mubr.f32.gmra.mrb[0].mxu0 %v6951
  %v6953 = vpop.f32.mrb[0].mxu0
  %v6954 = vadd.f32 %v6850, %v6953
  %v6955 = vpop.f32.mrb[0].mxu0
  %6956 = vdwg.mxu0
  %6957 = vmatprep.subr.mxu0 0.0
  %v6958 = vand.u32 %v128, 4294901760
  %6959 = vmatpush1.msra.mxu0 %v6958
  %6960 = vmatprep.subr.mxu0 0.0
  %v6961 = vand.u32 %v129, 4294901760
  %6962 = vmatpush1.msra.mxu0 %v6961
  %6963 = vmatprep.subr.mxu0 0.0
  %v6964 = vand.u32 %v130, 4294901760
  %6965 = vmatpush1.msra.mxu0 %v6964
  %6966 = vmatprep.subr.mxu0 0.0
  %v6967 = vand.u32 %v131, 4294901760
  %6968 = vmatpush1.msra.mxu0 %v6967
  %6969 = vmatprep.subr.mxu0 0.0
  %v6970 = vand.u32 %v132, 4294901760
  %6971 = vmatpush1.msra.mxu0 %v6970
  %6972 = vmatprep.subr.mxu0 0.0
  %v6973 = vand.u32 %v133, 4294901760
  %6974 = vmatpush1.msra.mxu0 %v6973
  %6975 = vmatprep.subr.mxu0 0.0
  %v6976 = vand.u32 %v134, 4294901760
  %6977 = vmatpush1.msra.mxu0 %v6976
  %6978 = vmatprep.subr.mxu0 0.0
  %v6979 = vand.u32 %v135, 4294901760
  %6980 = vmatpush1.msra.mxu0 %v6979
  %6981 = vmatprep.subr.mxu0 0.0
  %v6982 = vand.u32 %v136, 4294901760
  %6983 = vmatpush1.msra.mxu0 %v6982
  %6984 = vmatprep.subr.mxu0 0.0
  %v6985 = vand.u32 %v137, 4294901760
  %6986 = vmatpush1.msra.mxu0 %v6985
  %6987 = vmatprep.subr.mxu0 0.0
  %v6988 = vand.u32 %v138, 4294901760
  %6989 = vmatpush1.msra.mxu0 %v6988
  %6990 = vmatprep.subr.mxu0 0.0
  %v6991 = vand.u32 %v139, 4294901760
  %6992 = vmatpush1.msra.mxu0 %v6991
  %6993 = vmatprep.subr.mxu0 0.0
  %v6994 = vand.u32 %v140, 4294901760
  %6995 = vmatpush1.msra.mxu0 %v6994
  %6996 = vmatprep.subr.mxu0 0.0
  %v6997 = vand.u32 %v141, 4294901760
  %6998 = vmatpush1.msra.mxu0 %v6997
  %6999 = vmatprep.subr.mxu0 0.0
  %v7000 = vand.u32 %v142, 4294901760
  %7001 = vmatpush1.msra.mxu0 %v7000
  %7002 = vmatprep.subr.mxu0 0.0
  %v7003 = vand.u32 %v143, 4294901760
  %7004 = vmatpush1.msra.mxu0 %v7003
  %7005 = vmatprep.subr.mxu0 0.0
  %v7006 = vand.u32 %v144, 4294901760
  %7007 = vmatpush1.msra.mxu0 %v7006
  %7008 = vmatprep.subr.mxu0 0.0
  %v7009 = vand.u32 %v145, 4294901760
  %7010 = vmatpush1.msra.mxu0 %v7009
  %7011 = vmatprep.subr.mxu0 0.0
  %v7012 = vand.u32 %v146, 4294901760
  %7013 = vmatpush1.msra.mxu0 %v7012
  %7014 = vmatprep.subr.mxu0 0.0
  %v7015 = vand.u32 %v147, 4294901760
  %7016 = vmatpush1.msra.mxu0 %v7015
  %7017 = vmatprep.subr.mxu0 0.0
  %v7018 = vand.u32 %v148, 4294901760
  %7019 = vmatpush1.msra.mxu0 %v7018
  %7020 = vmatprep.subr.mxu0 0.0
  %v7021 = vand.u32 %v149, 4294901760
  %7022 = vmatpush1.msra.mxu0 %v7021
  %7023 = vmatprep.subr.mxu0 0.0
  %v7024 = vand.u32 %v150, 4294901760
  %7025 = vmatpush1.msra.mxu0 %v7024
  %7026 = vmatprep.subr.mxu0 0.0
  %v7027 = vand.u32 %v151, 4294901760
  %7028 = vmatpush1.msra.mxu0 %v7027
  %7029 = vmatprep.subr.mxu0 0.0
  %v7030 = vand.u32 %v152, 4294901760
  %7031 = vmatpush1.msra.mxu0 %v7030
  %7032 = vmatprep.subr.mxu0 0.0
  %v7033 = vand.u32 %v153, 4294901760
  %7034 = vmatpush1.msra.mxu0 %v7033
  %7035 = vmatprep.subr.mxu0 0.0
  %v7036 = vand.u32 %v154, 4294901760
  %7037 = vmatpush1.msra.mxu0 %v7036
  %7038 = vmatprep.subr.mxu0 0.0
  %v7039 = vand.u32 %v155, 4294901760
  %7040 = vmatpush1.msra.mxu0 %v7039
  %7041 = vmatprep.subr.mxu0 0.0
  %v7042 = vand.u32 %v156, 4294901760
  %7043 = vmatpush1.msra.mxu0 %v7042
  %7044 = vmatprep.subr.mxu0 0.0
  %v7045 = vand.u32 %v157, 4294901760
  %7046 = vmatpush1.msra.mxu0 %v7045
  %7047 = vmatprep.subr.mxu0 0.0
  %v7048 = vand.u32 %v158, 4294901760
  %7049 = vmatpush1.msra.mxu0 %v7048
  %7050 = vmatprep.subr.mxu0 0.0
  %v7051 = vand.u32 %v159, 4294901760
  %7052 = vmatpush1.msra.mxu0 %v7051
  %v7053 = vand.u32 %v4354, 4294901760
  %v7054 = vsub.f32 %v4354, %v7053
  %v7055 = vand.u32 %v7054, 4294901760
  %v7056 = vsub.f32 %v7054, %v7055
  %v7057 = vand.u32 %v7056, 4294901760
  %7058 = vmatprep.mubr.f32.mxu0 %v7057
  %v7059 = vand.u32 %v4352, 4294901760
  %v7060 = vsub.f32 %v4352, %v7059
  %v7061 = vand.u32 %v7060, 4294901760
  %v7062 = vsub.f32 %v7060, %v7061
  %v7063 = vand.u32 %v7062, 4294901760
  %7064 = vmatmul.mubr.f32.gmra.mrb[0].mxu0 %v7063
  %v7065 = vpop.f32.mrb[0].mxu0
  %v7066 = vadd.f32 %v6954, %v7065
  %v7067 = vpop.f32.mrb[0].mxu0
  %7068 = vdwg.mxu0
  %7069 = vmatprep.subr.mxu0 0.0
  %v7070 = vand.u32 %v128, 4294901760
  %v7071 = vsub.f32 %v128, %v7070
  %v7072 = vand.u32 %v7071, 4294901760
  %v7073 = vsub.f32 %v7071, %v7072
  %v7074 = vand.u32 %v7073, 4294901760
  %7075 = vmatpush1.msra.mxu0 %v7074
  %7076 = vmatprep.subr.mxu0 0.0
  %v7077 = vand.u32 %v129, 4294901760
  %v7078 = vsub.f32 %v129, %v7077
  %v7079 = vand.u32 %v7078, 4294901760
  %v7080 = vsub.f32 %v7078, %v7079
  %v7081 = vand.u32 %v7080, 4294901760
  %7082 = vmatpush1.msra.mxu0 %v7081
  %7083 = vmatprep.subr.mxu0 0.0
  %v7084 = vand.u32 %v130, 4294901760
  %v7085 = vsub.f32 %v130, %v7084
  %v7086 = vand.u32 %v7085, 4294901760
  %v7087 = vsub.f32 %v7085, %v7086
  %v7088 = vand.u32 %v7087, 4294901760
  %7089 = vmatpush1.msra.mxu0 %v7088
  %7090 = vmatprep.subr.mxu0 0.0
  %v7091 = vand.u32 %v131, 4294901760
  %v7092 = vsub.f32 %v131, %v7091
  %v7093 = vand.u32 %v7092, 4294901760
  %v7094 = vsub.f32 %v7092, %v7093
  %v7095 = vand.u32 %v7094, 4294901760
  %7096 = vmatpush1.msra.mxu0 %v7095
  %7097 = vmatprep.subr.mxu0 0.0
  %v7098 = vand.u32 %v132, 4294901760
  %v7099 = vsub.f32 %v132, %v7098
  %v7100 = vand.u32 %v7099, 4294901760
  %v7101 = vsub.f32 %v7099, %v7100
  %v7102 = vand.u32 %v7101, 4294901760
  %7103 = vmatpush1.msra.mxu0 %v7102
  %7104 = vmatprep.subr.mxu0 0.0
  %v7105 = vand.u32 %v133, 4294901760
  %v7106 = vsub.f32 %v133, %v7105
  %v7107 = vand.u32 %v7106, 4294901760
  %v7108 = vsub.f32 %v7106, %v7107
  %v7109 = vand.u32 %v7108, 4294901760
  %7110 = vmatpush1.msra.mxu0 %v7109
  %7111 = vmatprep.subr.mxu0 0.0
  %v7112 = vand.u32 %v134, 4294901760
  %v7113 = vsub.f32 %v134, %v7112
  %v7114 = vand.u32 %v7113, 4294901760
  %v7115 = vsub.f32 %v7113, %v7114
  %v7116 = vand.u32 %v7115, 4294901760
  %7117 = vmatpush1.msra.mxu0 %v7116
  %7118 = vmatprep.subr.mxu0 0.0
  %v7119 = vand.u32 %v135, 4294901760
  %v7120 = vsub.f32 %v135, %v7119
  %v7121 = vand.u32 %v7120, 4294901760
  %v7122 = vsub.f32 %v7120, %v7121
  %v7123 = vand.u32 %v7122, 4294901760
  %7124 = vmatpush1.msra.mxu0 %v7123
  %7125 = vmatprep.subr.mxu0 0.0
  %v7126 = vand.u32 %v136, 4294901760
  %v7127 = vsub.f32 %v136, %v7126
  %v7128 = vand.u32 %v7127, 4294901760
  %v7129 = vsub.f32 %v7127, %v7128
  %v7130 = vand.u32 %v7129, 4294901760
  %7131 = vmatpush1.msra.mxu0 %v7130
  %7132 = vmatprep.subr.mxu0 0.0
  %v7133 = vand.u32 %v137, 4294901760
  %v7134 = vsub.f32 %v137, %v7133
  %v7135 = vand.u32 %v7134, 4294901760
  %v7136 = vsub.f32 %v7134, %v7135
  %v7137 = vand.u32 %v7136, 4294901760
  %7138 = vmatpush1.msra.mxu0 %v7137
  %7139 = vmatprep.subr.mxu0 0.0
  %v7140 = vand.u32 %v138, 4294901760
  %v7141 = vsub.f32 %v138, %v7140
  %v7142 = vand.u32 %v7141, 4294901760
  %v7143 = vsub.f32 %v7141, %v7142
  %v7144 = vand.u32 %v7143, 4294901760
  %7145 = vmatpush1.msra.mxu0 %v7144
  %7146 = vmatprep.subr.mxu0 0.0
  %v7147 = vand.u32 %v139, 4294901760
  %v7148 = vsub.f32 %v139, %v7147
  %v7149 = vand.u32 %v7148, 4294901760
  %v7150 = vsub.f32 %v7148, %v7149
  %v7151 = vand.u32 %v7150, 4294901760
  %7152 = vmatpush1.msra.mxu0 %v7151
  %7153 = vmatprep.subr.mxu0 0.0
  %v7154 = vand.u32 %v140, 4294901760
  %v7155 = vsub.f32 %v140, %v7154
  %v7156 = vand.u32 %v7155, 4294901760
  %v7157 = vsub.f32 %v7155, %v7156
  %v7158 = vand.u32 %v7157, 4294901760
  %7159 = vmatpush1.msra.mxu0 %v7158
  %7160 = vmatprep.subr.mxu0 0.0
  %v7161 = vand.u32 %v141, 4294901760
  %v7162 = vsub.f32 %v141, %v7161
  %v7163 = vand.u32 %v7162, 4294901760
  %v7164 = vsub.f32 %v7162, %v7163
  %v7165 = vand.u32 %v7164, 4294901760
  %7166 = vmatpush1.msra.mxu0 %v7165
  %7167 = vmatprep.subr.mxu0 0.0
  %v7168 = vand.u32 %v142, 4294901760
  %v7169 = vsub.f32 %v142, %v7168
  %v7170 = vand.u32 %v7169, 4294901760
  %v7171 = vsub.f32 %v7169, %v7170
  %v7172 = vand.u32 %v7171, 4294901760
  %7173 = vmatpush1.msra.mxu0 %v7172
  %7174 = vmatprep.subr.mxu0 0.0
  %v7175 = vand.u32 %v143, 4294901760
  %v7176 = vsub.f32 %v143, %v7175
  %v7177 = vand.u32 %v7176, 4294901760
  %v7178 = vsub.f32 %v7176, %v7177
  %v7179 = vand.u32 %v7178, 4294901760
  %7180 = vmatpush1.msra.mxu0 %v7179
  %7181 = vmatprep.subr.mxu0 0.0
  %v7182 = vand.u32 %v144, 4294901760
  %v7183 = vsub.f32 %v144, %v7182
  %v7184 = vand.u32 %v7183, 4294901760
  %v7185 = vsub.f32 %v7183, %v7184
  %v7186 = vand.u32 %v7185, 4294901760
  %7187 = vmatpush1.msra.mxu0 %v7186
  %7188 = vmatprep.subr.mxu0 0.0
  %v7189 = vand.u32 %v145, 4294901760
  %v7190 = vsub.f32 %v145, %v7189
  %v7191 = vand.u32 %v7190, 4294901760
  %v7192 = vsub.f32 %v7190, %v7191
  %v7193 = vand.u32 %v7192, 4294901760
  %7194 = vmatpush1.msra.mxu0 %v7193
  %7195 = vmatprep.subr.mxu0 0.0
  %v7196 = vand.u32 %v146, 4294901760
  %v7197 = vsub.f32 %v146, %v7196
  %v7198 = vand.u32 %v7197, 4294901760
  %v7199 = vsub.f32 %v7197, %v7198
  %v7200 = vand.u32 %v7199, 4294901760
  %7201 = vmatpush1.msra.mxu0 %v7200
  %7202 = vmatprep.subr.mxu0 0.0
  %v7203 = vand.u32 %v147, 4294901760
  %v7204 = vsub.f32 %v147, %v7203
  %v7205 = vand.u32 %v7204, 4294901760
  %v7206 = vsub.f32 %v7204, %v7205
  %v7207 = vand.u32 %v7206, 4294901760
  %7208 = vmatpush1.msra.mxu0 %v7207
  %7209 = vmatprep.subr.mxu0 0.0
  %v7210 = vand.u32 %v148, 4294901760
  %v7211 = vsub.f32 %v148, %v7210
  %v7212 = vand.u32 %v7211, 4294901760
  %v7213 = vsub.f32 %v7211, %v7212
  %v7214 = vand.u32 %v7213, 4294901760
  %7215 = vmatpush1.msra.mxu0 %v7214
  %7216 = vmatprep.subr.mxu0 0.0
  %v7217 = vand.u32 %v149, 4294901760
  %v7218 = vsub.f32 %v149, %v7217
  %v7219 = vand.u32 %v7218, 4294901760
  %v7220 = vsub.f32 %v7218, %v7219
  %v7221 = vand.u32 %v7220, 4294901760
  %7222 = vmatpush1.msra.mxu0 %v7221
  %7223 = vmatprep.subr.mxu0 0.0
  %v7224 = vand.u32 %v150, 4294901760
  %v7225 = vsub.f32 %v150, %v7224
  %v7226 = vand.u32 %v7225, 4294901760
  %v7227 = vsub.f32 %v7225, %v7226
  %v7228 = vand.u32 %v7227, 4294901760
  %7229 = vmatpush1.msra.mxu0 %v7228
  %7230 = vmatprep.subr.mxu0 0.0
  %v7231 = vand.u32 %v151, 4294901760
  %v7232 = vsub.f32 %v151, %v7231
  %v7233 = vand.u32 %v7232, 4294901760
  %v7234 = vsub.f32 %v7232, %v7233
  %v7235 = vand.u32 %v7234, 4294901760
  %7236 = vmatpush1.msra.mxu0 %v7235
  %7237 = vmatprep.subr.mxu0 0.0
  %v7238 = vand.u32 %v152, 4294901760
  %v7239 = vsub.f32 %v152, %v7238
  %v7240 = vand.u32 %v7239, 4294901760
  %v7241 = vsub.f32 %v7239, %v7240
  %v7242 = vand.u32 %v7241, 4294901760
  %7243 = vmatpush1.msra.mxu0 %v7242
  %7244 = vmatprep.subr.mxu0 0.0
  %v7245 = vand.u32 %v153, 4294901760
  %v7246 = vsub.f32 %v153, %v7245
  %v7247 = vand.u32 %v7246, 4294901760
  %v7248 = vsub.f32 %v7246, %v7247
  %v7249 = vand.u32 %v7248, 4294901760
  %7250 = vmatpush1.msra.mxu0 %v7249
  %7251 = vmatprep.subr.mxu0 0.0
  %v7252 = vand.u32 %v154, 4294901760
  %v7253 = vsub.f32 %v154, %v7252
  %v7254 = vand.u32 %v7253, 4294901760
  %v7255 = vsub.f32 %v7253, %v7254
  %v7256 = vand.u32 %v7255, 4294901760
  %7257 = vmatpush1.msra.mxu0 %v7256
  %7258 = vmatprep.subr.mxu0 0.0
  %v7259 = vand.u32 %v155, 4294901760
  %v7260 = vsub.f32 %v155, %v7259
  %v7261 = vand.u32 %v7260, 4294901760
  %v7262 = vsub.f32 %v7260, %v7261
  %v7263 = vand.u32 %v7262, 4294901760
  %7264 = vmatpush1.msra.mxu0 %v7263
  %7265 = vmatprep.subr.mxu0 0.0
  %v7266 = vand.u32 %v156, 4294901760
  %v7267 = vsub.f32 %v156, %v7266
  %v7268 = vand.u32 %v7267, 4294901760
  %v7269 = vsub.f32 %v7267, %v7268
  %v7270 = vand.u32 %v7269, 4294901760
  %7271 = vmatpush1.msra.mxu0 %v7270
  %7272 = vmatprep.subr.mxu0 0.0
  %v7273 = vand.u32 %v157, 4294901760
  %v7274 = vsub.f32 %v157, %v7273
  %v7275 = vand.u32 %v7274, 4294901760
  %v7276 = vsub.f32 %v7274, %v7275
  %v7277 = vand.u32 %v7276, 4294901760
  %7278 = vmatpush1.msra.mxu0 %v7277
  %7279 = vmatprep.subr.mxu0 0.0
  %v7280 = vand.u32 %v158, 4294901760
  %v7281 = vsub.f32 %v158, %v7280
  %v7282 = vand.u32 %v7281, 4294901760
  %v7283 = vsub.f32 %v7281, %v7282
  %v7284 = vand.u32 %v7283, 4294901760
  %7285 = vmatpush1.msra.mxu0 %v7284
  %7286 = vmatprep.subr.mxu0 0.0
  %v7287 = vand.u32 %v159, 4294901760
  %v7288 = vsub.f32 %v159, %v7287
  %v7289 = vand.u32 %v7288, 4294901760
  %v7290 = vsub.f32 %v7288, %v7289
  %v7291 = vand.u32 %v7290, 4294901760
  %7292 = vmatpush1.msra.mxu0 %v7291
  %v7293 = vand.u32 %v4354, 4294901760
  %7294 = vmatprep.mubr.f32.mxu0 %v7293
  %v7295 = vand.u32 %v4352, 4294901760
  %7296 = vmatmul.mubr.f32.gmra.mrb[0].mxu0 %v7295
  %v7297 = vpop.f32.mrb[0].mxu0
  %v7298 = vadd.f32 %v7066, %v7297
  %v7299 = vpop.f32.mrb[0].mxu0
  %7300 = vdwg.mxu0
  %7301 = vmatprep.subr.mxu0 0.0
  %v7302 = vand.u32 %v128, 4294901760
  %v7303 = vsub.f32 %v128, %v7302
  %7304 = vmatpush1.msra.mxu0 %v7303
  %7305 = vmatprep.subr.mxu0 0.0
  %v7306 = vand.u32 %v129, 4294901760
  %v7307 = vsub.f32 %v129, %v7306
  %7308 = vmatpush1.msra.mxu0 %v7307
  %7309 = vmatprep.subr.mxu0 0.0
  %v7310 = vand.u32 %v130, 4294901760
  %v7311 = vsub.f32 %v130, %v7310
  %7312 = vmatpush1.msra.mxu0 %v7311
  %7313 = vmatprep.subr.mxu0 0.0
  %v7314 = vand.u32 %v131, 4294901760
  %v7315 = vsub.f32 %v131, %v7314
  %7316 = vmatpush1.msra.mxu0 %v7315
  %7317 = vmatprep.subr.mxu0 0.0
  %v7318 = vand.u32 %v132, 4294901760
  %v7319 = vsub.f32 %v132, %v7318
  %7320 = vmatpush1.msra.mxu0 %v7319
  %7321 = vmatprep.subr.mxu0 0.0
  %v7322 = vand.u32 %v133, 4294901760
  %v7323 = vsub.f32 %v133, %v7322
  %7324 = vmatpush1.msra.mxu0 %v7323
  %7325 = vmatprep.subr.mxu0 0.0
  %v7326 = vand.u32 %v134, 4294901760
  %v7327 = vsub.f32 %v134, %v7326
  %7328 = vmatpush1.msra.mxu0 %v7327
  %7329 = vmatprep.subr.mxu0 0.0
  %v7330 = vand.u32 %v135, 4294901760
  %v7331 = vsub.f32 %v135, %v7330
  %7332 = vmatpush1.msra.mxu0 %v7331
  %7333 = vmatprep.subr.mxu0 0.0
  %v7334 = vand.u32 %v136, 4294901760
  %v7335 = vsub.f32 %v136, %v7334
  %7336 = vmatpush1.msra.mxu0 %v7335
  %7337 = vmatprep.subr.mxu0 0.0
  %v7338 = vand.u32 %v137, 4294901760
  %v7339 = vsub.f32 %v137, %v7338
  %7340 = vmatpush1.msra.mxu0 %v7339
  %7341 = vmatprep.subr.mxu0 0.0
  %v7342 = vand.u32 %v138, 4294901760
  %v7343 = vsub.f32 %v138, %v7342
  %7344 = vmatpush1.msra.mxu0 %v7343
  %7345 = vmatprep.subr.mxu0 0.0
  %v7346 = vand.u32 %v139, 4294901760
  %v7347 = vsub.f32 %v139, %v7346
  %7348 = vmatpush1.msra.mxu0 %v7347
  %7349 = vmatprep.subr.mxu0 0.0
  %v7350 = vand.u32 %v140, 4294901760
  %v7351 = vsub.f32 %v140, %v7350
  %7352 = vmatpush1.msra.mxu0 %v7351
  %7353 = vmatprep.subr.mxu0 0.0
  %v7354 = vand.u32 %v141, 4294901760
  %v7355 = vsub.f32 %v141, %v7354
  %7356 = vmatpush1.msra.mxu0 %v7355
  %7357 = vmatprep.subr.mxu0 0.0
  %v7358 = vand.u32 %v142, 4294901760
  %v7359 = vsub.f32 %v142, %v7358
  %7360 = vmatpush1.msra.mxu0 %v7359
  %7361 = vmatprep.subr.mxu0 0.0
  %v7362 = vand.u32 %v143, 4294901760
  %v7363 = vsub.f32 %v143, %v7362
  %7364 = vmatpush1.msra.mxu0 %v7363
  %7365 = vmatprep.subr.mxu0 0.0
  %v7366 = vand.u32 %v144, 4294901760
  %v7367 = vsub.f32 %v144, %v7366
  %7368 = vmatpush1.msra.mxu0 %v7367
  %7369 = vmatprep.subr.mxu0 0.0
  %v7370 = vand.u32 %v145, 4294901760
  %v7371 = vsub.f32 %v145, %v7370
  %7372 = vmatpush1.msra.mxu0 %v7371
  %7373 = vmatprep.subr.mxu0 0.0
  %v7374 = vand.u32 %v146, 4294901760
  %v7375 = vsub.f32 %v146, %v7374
  %7376 = vmatpush1.msra.mxu0 %v7375
  %7377 = vmatprep.subr.mxu0 0.0
  %v7378 = vand.u32 %v147, 4294901760
  %v7379 = vsub.f32 %v147, %v7378
  %7380 = vmatpush1.msra.mxu0 %v7379
  %7381 = vmatprep.subr.mxu0 0.0
  %v7382 = vand.u32 %v148, 4294901760
  %v7383 = vsub.f32 %v148, %v7382
  %7384 = vmatpush1.msra.mxu0 %v7383
  %7385 = vmatprep.subr.mxu0 0.0
  %v7386 = vand.u32 %v149, 4294901760
  %v7387 = vsub.f32 %v149, %v7386
  %7388 = vmatpush1.msra.mxu0 %v7387
  %7389 = vmatprep.subr.mxu0 0.0
  %v7390 = vand.u32 %v150, 4294901760
  %v7391 = vsub.f32 %v150, %v7390
  %7392 = vmatpush1.msra.mxu0 %v7391
  %7393 = vmatprep.subr.mxu0 0.0
  %v7394 = vand.u32 %v151, 4294901760
  %v7395 = vsub.f32 %v151, %v7394
  %7396 = vmatpush1.msra.mxu0 %v7395
  %7397 = vmatprep.subr.mxu0 0.0
  %v7398 = vand.u32 %v152, 4294901760
  %v7399 = vsub.f32 %v152, %v7398
  %7400 = vmatpush1.msra.mxu0 %v7399
  %7401 = vmatprep.subr.mxu0 0.0
  %v7402 = vand.u32 %v153, 4294901760
  %v7403 = vsub.f32 %v153, %v7402
  %7404 = vmatpush1.msra.mxu0 %v7403
  %7405 = vmatprep.subr.mxu0 0.0
  %v7406 = vand.u32 %v154, 4294901760
  %v7407 = vsub.f32 %v154, %v7406
  %7408 = vmatpush1.msra.mxu0 %v7407
  %7409 = vmatprep.subr.mxu0 0.0
  %v7410 = vand.u32 %v155, 4294901760
  %v7411 = vsub.f32 %v155, %v7410
  %7412 = vmatpush1.msra.mxu0 %v7411
  %7413 = vmatprep.subr.mxu0 0.0
  %v7414 = vand.u32 %v156, 4294901760
  %v7415 = vsub.f32 %v156, %v7414
  %7416 = vmatpush1.msra.mxu0 %v7415
  %7417 = vmatprep.subr.mxu0 0.0
  %v7418 = vand.u32 %v157, 4294901760
  %v7419 = vsub.f32 %v157, %v7418
  %7420 = vmatpush1.msra.mxu0 %v7419
  %7421 = vmatprep.subr.mxu0 0.0
  %v7422 = vand.u32 %v158, 4294901760
  %v7423 = vsub.f32 %v158, %v7422
  %7424 = vmatpush1.msra.mxu0 %v7423
  %7425 = vmatprep.subr.mxu0 0.0
  %v7426 = vand.u32 %v159, 4294901760
  %v7427 = vsub.f32 %v159, %v7426
  %7428 = vmatpush1.msra.mxu0 %v7427
  %v7429 = vand.u32 %v4354, 4294901760
  %v7430 = vsub.f32 %v4354, %v7429
  %7431 = vmatprep.mubr.f32.mxu0 %v7430
  %v7432 = vand.u32 %v4352, 4294901760
  %v7433 = vsub.f32 %v4352, %v7432
  %7434 = vmatmul.mubr.f32.gmra.mrb[0].mxu0 %v7433
  %v7435 = vpop.f32.mrb[0].mxu0
  %v7436 = vadd.f32 %v7298, %v7435
  %v7437 = vpop.f32.mrb[0].mxu0
  %7438 = vdwg.mxu0
  %7439 = vmatprep.subr.mxu0 0.0
  %v7440 = vand.u32 %v128, 4294901760
  %7441 = vmatpush1.msra.mxu0 %v7440
  %7442 = vmatprep.subr.mxu0 0.0
  %v7443 = vand.u32 %v129, 4294901760
  %7444 = vmatpush1.msra.mxu0 %v7443
  %7445 = vmatprep.subr.mxu0 0.0
  %v7446 = vand.u32 %v130, 4294901760
  %7447 = vmatpush1.msra.mxu0 %v7446
  %7448 = vmatprep.subr.mxu0 0.0
  %v7449 = vand.u32 %v131, 4294901760
  %7450 = vmatpush1.msra.mxu0 %v7449
  %7451 = vmatprep.subr.mxu0 0.0
  %v7452 = vand.u32 %v132, 4294901760
  %7453 = vmatpush1.msra.mxu0 %v7452
  %7454 = vmatprep.subr.mxu0 0.0
  %v7455 = vand.u32 %v133, 4294901760
  %7456 = vmatpush1.msra.mxu0 %v7455
  %7457 = vmatprep.subr.mxu0 0.0
  %v7458 = vand.u32 %v134, 4294901760
  %7459 = vmatpush1.msra.mxu0 %v7458
  %7460 = vmatprep.subr.mxu0 0.0
  %v7461 = vand.u32 %v135, 4294901760
  %7462 = vmatpush1.msra.mxu0 %v7461
  %7463 = vmatprep.subr.mxu0 0.0
  %v7464 = vand.u32 %v136, 4294901760
  %7465 = vmatpush1.msra.mxu0 %v7464
  %7466 = vmatprep.subr.mxu0 0.0
  %v7467 = vand.u32 %v137, 4294901760
  %7468 = vmatpush1.msra.mxu0 %v7467
  %7469 = vmatprep.subr.mxu0 0.0
  %v7470 = vand.u32 %v138, 4294901760
  %7471 = vmatpush1.msra.mxu0 %v7470
  %7472 = vmatprep.subr.mxu0 0.0
  %v7473 = vand.u32 %v139, 4294901760
  %7474 = vmatpush1.msra.mxu0 %v7473
  %7475 = vmatprep.subr.mxu0 0.0
  %v7476 = vand.u32 %v140, 4294901760
  %7477 = vmatpush1.msra.mxu0 %v7476
  %7478 = vmatprep.subr.mxu0 0.0
  %v7479 = vand.u32 %v141, 4294901760
  %7480 = vmatpush1.msra.mxu0 %v7479
  %7481 = vmatprep.subr.mxu0 0.0
  %v7482 = vand.u32 %v142, 4294901760
  %7483 = vmatpush1.msra.mxu0 %v7482
  %7484 = vmatprep.subr.mxu0 0.0
  %v7485 = vand.u32 %v143, 4294901760
  %7486 = vmatpush1.msra.mxu0 %v7485
  %7487 = vmatprep.subr.mxu0 0.0
  %v7488 = vand.u32 %v144, 4294901760
  %7489 = vmatpush1.msra.mxu0 %v7488
  %7490 = vmatprep.subr.mxu0 0.0
  %v7491 = vand.u32 %v145, 4294901760
  %7492 = vmatpush1.msra.mxu0 %v7491
  %7493 = vmatprep.subr.mxu0 0.0
  %v7494 = vand.u32 %v146, 4294901760
  %7495 = vmatpush1.msra.mxu0 %v7494
  %7496 = vmatprep.subr.mxu0 0.0
  %v7497 = vand.u32 %v147, 4294901760
  %7498 = vmatpush1.msra.mxu0 %v7497
  %7499 = vmatprep.subr.mxu0 0.0
  %v7500 = vand.u32 %v148, 4294901760
  %7501 = vmatpush1.msra.mxu0 %v7500
  %7502 = vmatprep.subr.mxu0 0.0
  %v7503 = vand.u32 %v149, 4294901760
  %7504 = vmatpush1.msra.mxu0 %v7503
  %7505 = vmatprep.subr.mxu0 0.0
  %v7506 = vand.u32 %v150, 4294901760
  %7507 = vmatpush1.msra.mxu0 %v7506
  %7508 = vmatprep.subr.mxu0 0.0
  %v7509 = vand.u32 %v151, 4294901760
  %7510 = vmatpush1.msra.mxu0 %v7509
  %7511 = vmatprep.subr.mxu0 0.0
  %v7512 = vand.u32 %v152, 4294901760
  %7513 = vmatpush1.msra.mxu0 %v7512
  %7514 = vmatprep.subr.mxu0 0.0
  %v7515 = vand.u32 %v153, 4294901760
  %7516 = vmatpush1.msra.mxu0 %v7515
  %7517 = vmatprep.subr.mxu0 0.0
  %v7518 = vand.u32 %v154, 4294901760
  %7519 = vmatpush1.msra.mxu0 %v7518
  %7520 = vmatprep.subr.mxu0 0.0
  %v7521 = vand.u32 %v155, 4294901760
  %7522 = vmatpush1.msra.mxu0 %v7521
  %7523 = vmatprep.subr.mxu0 0.0
  %v7524 = vand.u32 %v156, 4294901760
  %7525 = vmatpush1.msra.mxu0 %v7524
  %7526 = vmatprep.subr.mxu0 0.0
  %v7527 = vand.u32 %v157, 4294901760
  %7528 = vmatpush1.msra.mxu0 %v7527
  %7529 = vmatprep.subr.mxu0 0.0
  %v7530 = vand.u32 %v158, 4294901760
  %7531 = vmatpush1.msra.mxu0 %v7530
  %7532 = vmatprep.subr.mxu0 0.0
  %v7533 = vand.u32 %v159, 4294901760
  %7534 = vmatpush1.msra.mxu0 %v7533
  %v7535 = vand.u32 %v4354, 4294901760
  %v7536 = vsub.f32 %v4354, %v7535
  %v7537 = vand.u32 %v7536, 4294901760
  %7538 = vmatprep.mubr.f32.mxu0 %v7537
  %v7539 = vand.u32 %v4352, 4294901760
  %v7540 = vsub.f32 %v4352, %v7539
  %v7541 = vand.u32 %v7540, 4294901760
  %7542 = vmatmul.mubr.f32.gmra.mrb[0].mxu0 %v7541
  %v7543 = vpop.f32.mrb[0].mxu0
  %v7544 = vadd.f32 %v7436, %v7543
  %v7545 = vpop.f32.mrb[0].mxu0
  %7546 = vdwg.mxu0
  %7547 = vmatprep.subr.mxu0 0.0
  %v7548 = vand.u32 %v128, 4294901760
  %v7549 = vsub.f32 %v128, %v7548
  %v7550 = vand.u32 %v7549, 4294901760
  %7551 = vmatpush1.msra.mxu0 %v7550
  %7552 = vmatprep.subr.mxu0 0.0
  %v7553 = vand.u32 %v129, 4294901760
  %v7554 = vsub.f32 %v129, %v7553
  %v7555 = vand.u32 %v7554, 4294901760
  %7556 = vmatpush1.msra.mxu0 %v7555
  %7557 = vmatprep.subr.mxu0 0.0
  %v7558 = vand.u32 %v130, 4294901760
  %v7559 = vsub.f32 %v130, %v7558
  %v7560 = vand.u32 %v7559, 4294901760
  %7561 = vmatpush1.msra.mxu0 %v7560
  %7562 = vmatprep.subr.mxu0 0.0
  %v7563 = vand.u32 %v131, 4294901760
  %v7564 = vsub.f32 %v131, %v7563
  %v7565 = vand.u32 %v7564, 4294901760
  %7566 = vmatpush1.msra.mxu0 %v7565
  %7567 = vmatprep.subr.mxu0 0.0
  %v7568 = vand.u32 %v132, 4294901760
  %v7569 = vsub.f32 %v132, %v7568
  %v7570 = vand.u32 %v7569, 4294901760
  %7571 = vmatpush1.msra.mxu0 %v7570
  %7572 = vmatprep.subr.mxu0 0.0
  %v7573 = vand.u32 %v133, 4294901760
  %v7574 = vsub.f32 %v133, %v7573
  %v7575 = vand.u32 %v7574, 4294901760
  %7576 = vmatpush1.msra.mxu0 %v7575
  %7577 = vmatprep.subr.mxu0 0.0
  %v7578 = vand.u32 %v134, 4294901760
  %v7579 = vsub.f32 %v134, %v7578
  %v7580 = vand.u32 %v7579, 4294901760
  %7581 = vmatpush1.msra.mxu0 %v7580
  %7582 = vmatprep.subr.mxu0 0.0
  %v7583 = vand.u32 %v135, 4294901760
  %v7584 = vsub.f32 %v135, %v7583
  %v7585 = vand.u32 %v7584, 4294901760
  %7586 = vmatpush1.msra.mxu0 %v7585
  %7587 = vmatprep.subr.mxu0 0.0
  %v7588 = vand.u32 %v136, 4294901760
  %v7589 = vsub.f32 %v136, %v7588
  %v7590 = vand.u32 %v7589, 4294901760
  %7591 = vmatpush1.msra.mxu0 %v7590
  %7592 = vmatprep.subr.mxu0 0.0
  %v7593 = vand.u32 %v137, 4294901760
  %v7594 = vsub.f32 %v137, %v7593
  %v7595 = vand.u32 %v7594, 4294901760
  %7596 = vmatpush1.msra.mxu0 %v7595
  %7597 = vmatprep.subr.mxu0 0.0
  %v7598 = vand.u32 %v138, 4294901760
  %v7599 = vsub.f32 %v138, %v7598
  %v7600 = vand.u32 %v7599, 4294901760
  %7601 = vmatpush1.msra.mxu0 %v7600
  %7602 = vmatprep.subr.mxu0 0.0
  %v7603 = vand.u32 %v139, 4294901760
  %v7604 = vsub.f32 %v139, %v7603
  %v7605 = vand.u32 %v7604, 4294901760
  %7606 = vmatpush1.msra.mxu0 %v7605
  %7607 = vmatprep.subr.mxu0 0.0
  %v7608 = vand.u32 %v140, 4294901760
  %v7609 = vsub.f32 %v140, %v7608
  %v7610 = vand.u32 %v7609, 4294901760
  %7611 = vmatpush1.msra.mxu0 %v7610
  %7612 = vmatprep.subr.mxu0 0.0
  %v7613 = vand.u32 %v141, 4294901760
  %v7614 = vsub.f32 %v141, %v7613
  %v7615 = vand.u32 %v7614, 4294901760
  %7616 = vmatpush1.msra.mxu0 %v7615
  %7617 = vmatprep.subr.mxu0 0.0
  %v7618 = vand.u32 %v142, 4294901760
  %v7619 = vsub.f32 %v142, %v7618
  %v7620 = vand.u32 %v7619, 4294901760
  %7621 = vmatpush1.msra.mxu0 %v7620
  %7622 = vmatprep.subr.mxu0 0.0
  %v7623 = vand.u32 %v143, 4294901760
  %v7624 = vsub.f32 %v143, %v7623
  %v7625 = vand.u32 %v7624, 4294901760
  %7626 = vmatpush1.msra.mxu0 %v7625
  %7627 = vmatprep.subr.mxu0 0.0
  %v7628 = vand.u32 %v144, 4294901760
  %v7629 = vsub.f32 %v144, %v7628
  %v7630 = vand.u32 %v7629, 4294901760
  %7631 = vmatpush1.msra.mxu0 %v7630
  %7632 = vmatprep.subr.mxu0 0.0
  %v7633 = vand.u32 %v145, 4294901760
  %v7634 = vsub.f32 %v145, %v7633
  %v7635 = vand.u32 %v7634, 4294901760
  %7636 = vmatpush1.msra.mxu0 %v7635
  %7637 = vmatprep.subr.mxu0 0.0
  %v7638 = vand.u32 %v146, 4294901760
  %v7639 = vsub.f32 %v146, %v7638
  %v7640 = vand.u32 %v7639, 4294901760
  %7641 = vmatpush1.msra.mxu0 %v7640
  %7642 = vmatprep.subr.mxu0 0.0
  %v7643 = vand.u32 %v147, 4294901760
  %v7644 = vsub.f32 %v147, %v7643
  %v7645 = vand.u32 %v7644, 4294901760
  %7646 = vmatpush1.msra.mxu0 %v7645
  %7647 = vmatprep.subr.mxu0 0.0
  %v7648 = vand.u32 %v148, 4294901760
  %v7649 = vsub.f32 %v148, %v7648
  %v7650 = vand.u32 %v7649, 4294901760
  %7651 = vmatpush1.msra.mxu0 %v7650
  %7652 = vmatprep.subr.mxu0 0.0
  %v7653 = vand.u32 %v149, 4294901760
  %v7654 = vsub.f32 %v149, %v7653
  %v7655 = vand.u32 %v7654, 4294901760
  %7656 = vmatpush1.msra.mxu0 %v7655
  %7657 = vmatprep.subr.mxu0 0.0
  %v7658 = vand.u32 %v150, 4294901760
  %v7659 = vsub.f32 %v150, %v7658
  %v7660 = vand.u32 %v7659, 4294901760
  %7661 = vmatpush1.msra.mxu0 %v7660
  %7662 = vmatprep.subr.mxu0 0.0
  %v7663 = vand.u32 %v151, 4294901760
  %v7664 = vsub.f32 %v151, %v7663
  %v7665 = vand.u32 %v7664, 4294901760
  %7666 = vmatpush1.msra.mxu0 %v7665
  %7667 = vmatprep.subr.mxu0 0.0
  %v7668 = vand.u32 %v152, 4294901760
  %v7669 = vsub.f32 %v152, %v7668
  %v7670 = vand.u32 %v7669, 4294901760
  %7671 = vmatpush1.msra.mxu0 %v7670
  %7672 = vmatprep.subr.mxu0 0.0
  %v7673 = vand.u32 %v153, 4294901760
  %v7674 = vsub.f32 %v153, %v7673
  %v7675 = vand.u32 %v7674, 4294901760
  %7676 = vmatpush1.msra.mxu0 %v7675
  %7677 = vmatprep.subr.mxu0 0.0
  %v7678 = vand.u32 %v154, 4294901760
  %v7679 = vsub.f32 %v154, %v7678
  %v7680 = vand.u32 %v7679, 4294901760
  %7681 = vmatpush1.msra.mxu0 %v7680
  %7682 = vmatprep.subr.mxu0 0.0
  %v7683 = vand.u32 %v155, 4294901760
  %v7684 = vsub.f32 %v155, %v7683
  %v7685 = vand.u32 %v7684, 4294901760
  %7686 = vmatpush1.msra.mxu0 %v7685
  %7687 = vmatprep.subr.mxu0 0.0
  %v7688 = vand.u32 %v156, 4294901760
  %v7689 = vsub.f32 %v156, %v7688
  %v7690 = vand.u32 %v7689, 4294901760
  %7691 = vmatpush1.msra.mxu0 %v7690
  %7692 = vmatprep.subr.mxu0 0.0
  %v7693 = vand.u32 %v157, 4294901760
  %v7694 = vsub.f32 %v157, %v7693
  %v7695 = vand.u32 %v7694, 4294901760
  %7696 = vmatpush1.msra.mxu0 %v7695
  %7697 = vmatprep.subr.mxu0 0.0
  %v7698 = vand.u32 %v158, 4294901760
  %v7699 = vsub.f32 %v158, %v7698
  %v7700 = vand.u32 %v7699, 4294901760
  %7701 = vmatpush1.msra.mxu0 %v7700
  %7702 = vmatprep.subr.mxu0 0.0
  %v7703 = vand.u32 %v159, 4294901760
  %v7704 = vsub.f32 %v159, %v7703
  %v7705 = vand.u32 %v7704, 4294901760
  %7706 = vmatpush1.msra.mxu0 %v7705
  %v7707 = vand.u32 %v4354, 4294901760
  %7708 = vmatprep.mubr.f32.mxu0 %v7707
  %v7709 = vand.u32 %v4352, 4294901760
  %7710 = vmatmul.mubr.f32.gmra.mrb[0].mxu0 %v7709
  %v7711 = vpop.f32.mrb[0].mxu0
  %v7712 = vadd.f32 %v7544, %v7711
  %v7713 = vpop.f32.mrb[0].mxu0
  %7714 = vdwg.mxu0
  %7715 = vmatprep.subr.mxu0 0.0
  %v7716 = vand.u32 %v128, 4294901760
  %7717 = vmatpush1.msra.mxu0 %v7716
  %7718 = vmatprep.subr.mxu0 0.0
  %v7719 = vand.u32 %v129, 4294901760
  %7720 = vmatpush1.msra.mxu0 %v7719
  %7721 = vmatprep.subr.mxu0 0.0
  %v7722 = vand.u32 %v130, 4294901760
  %7723 = vmatpush1.msra.mxu0 %v7722
  %7724 = vmatprep.subr.mxu0 0.0
  %v7725 = vand.u32 %v131, 4294901760
  %7726 = vmatpush1.msra.mxu0 %v7725
  %7727 = vmatprep.subr.mxu0 0.0
  %v7728 = vand.u32 %v132, 4294901760
  %7729 = vmatpush1.msra.mxu0 %v7728
  %7730 = vmatprep.subr.mxu0 0.0
  %v7731 = vand.u32 %v133, 4294901760
  %7732 = vmatpush1.msra.mxu0 %v7731
  %7733 = vmatprep.subr.mxu0 0.0
  %v7734 = vand.u32 %v134, 4294901760
  %7735 = vmatpush1.msra.mxu0 %v7734
  %7736 = vmatprep.subr.mxu0 0.0
  %v7737 = vand.u32 %v135, 4294901760
  %7738 = vmatpush1.msra.mxu0 %v7737
  %7739 = vmatprep.subr.mxu0 0.0
  %v7740 = vand.u32 %v136, 4294901760
  %7741 = vmatpush1.msra.mxu0 %v7740
  %7742 = vmatprep.subr.mxu0 0.0
  %v7743 = vand.u32 %v137, 4294901760
  %7744 = vmatpush1.msra.mxu0 %v7743
  %7745 = vmatprep.subr.mxu0 0.0
  %v7746 = vand.u32 %v138, 4294901760
  %7747 = vmatpush1.msra.mxu0 %v7746
  %7748 = vmatprep.subr.mxu0 0.0
  %v7749 = vand.u32 %v139, 4294901760
  %7750 = vmatpush1.msra.mxu0 %v7749
  %7751 = vmatprep.subr.mxu0 0.0
  %v7752 = vand.u32 %v140, 4294901760
  %7753 = vmatpush1.msra.mxu0 %v7752
  %7754 = vmatprep.subr.mxu0 0.0
  %v7755 = vand.u32 %v141, 4294901760
  %7756 = vmatpush1.msra.mxu0 %v7755
  %7757 = vmatprep.subr.mxu0 0.0
  %v7758 = vand.u32 %v142, 4294901760
  %7759 = vmatpush1.msra.mxu0 %v7758
  %7760 = vmatprep.subr.mxu0 0.0
  %v7761 = vand.u32 %v143, 4294901760
  %7762 = vmatpush1.msra.mxu0 %v7761
  %7763 = vmatprep.subr.mxu0 0.0
  %v7764 = vand.u32 %v144, 4294901760
  %7765 = vmatpush1.msra.mxu0 %v7764
  %7766 = vmatprep.subr.mxu0 0.0
  %v7767 = vand.u32 %v145, 4294901760
  %7768 = vmatpush1.msra.mxu0 %v7767
  %7769 = vmatprep.subr.mxu0 0.0
  %v7770 = vand.u32 %v146, 4294901760
  %7771 = vmatpush1.msra.mxu0 %v7770
  %7772 = vmatprep.subr.mxu0 0.0
  %v7773 = vand.u32 %v147, 4294901760
  %7774 = vmatpush1.msra.mxu0 %v7773
  %7775 = vmatprep.subr.mxu0 0.0
  %v7776 = vand.u32 %v148, 4294901760
  %7777 = vmatpush1.msra.mxu0 %v7776
  %7778 = vmatprep.subr.mxu0 0.0
  %v7779 = vand.u32 %v149, 4294901760
  %7780 = vmatpush1.msra.mxu0 %v7779
  %7781 = vmatprep.subr.mxu0 0.0
  %v7782 = vand.u32 %v150, 4294901760
  %7783 = vmatpush1.msra.mxu0 %v7782
  %7784 = vmatprep.subr.mxu0 0.0
  %v7785 = vand.u32 %v151, 4294901760
  %7786 = vmatpush1.msra.mxu0 %v7785
  %7787 = vmatprep.subr.mxu0 0.0
  %v7788 = vand.u32 %v152, 4294901760
  %7789 = vmatpush1.msra.mxu0 %v7788
  %7790 = vmatprep.subr.mxu0 0.0
  %v7791 = vand.u32 %v153, 4294901760
  %7792 = vmatpush1.msra.mxu0 %v7791
  %7793 = vmatprep.subr.mxu0 0.0
  %v7794 = vand.u32 %v154, 4294901760
  %7795 = vmatpush1.msra.mxu0 %v7794
  %7796 = vmatprep.subr.mxu0 0.0
  %v7797 = vand.u32 %v155, 4294901760
  %7798 = vmatpush1.msra.mxu0 %v7797
  %7799 = vmatprep.subr.mxu0 0.0
  %v7800 = vand.u32 %v156, 4294901760
  %7801 = vmatpush1.msra.mxu0 %v7800
  %7802 = vmatprep.subr.mxu0 0.0
  %v7803 = vand.u32 %v157, 4294901760
  %7804 = vmatpush1.msra.mxu0 %v7803
  %7805 = vmatprep.subr.mxu0 0.0
  %v7806 = vand.u32 %v158, 4294901760
  %7807 = vmatpush1.msra.mxu0 %v7806
  %7808 = vmatprep.subr.mxu0 0.0
  %v7809 = vand.u32 %v159, 4294901760
  %7810 = vmatpush1.msra.mxu0 %v7809
  %v7811 = vand.u32 %v4354, 4294901760
  %7812 = vmatprep.mubr.f32.mxu0 %v7811
  %v7813 = vand.u32 %v4352, 4294901760
  %7814 = vmatmul.mubr.f32.gmra.mrb[0].mxu0 %v7813
  %v7815 = vpop.f32.mrb[0].mxu0
  %v7816 = vadd.f32 %v7712, %v7815
  %v7817 = vpop.f32.mrb[0].mxu0
  %7818 = vdwg.mxu0
  %7819 = vmatprep.subr.mxu0 0.0
  %v7820 = vand.u32 %v160, 4294901760
  %7821 = vmatpush1.msra.mxu0 %v7820
  %7822 = vmatprep.subr.mxu0 0.0
  %v7823 = vand.u32 %v161, 4294901760
  %7824 = vmatpush1.msra.mxu0 %v7823
  %7825 = vmatprep.subr.mxu0 0.0
  %v7826 = vand.u32 %v162, 4294901760
  %7827 = vmatpush1.msra.mxu0 %v7826
  %7828 = vmatprep.subr.mxu0 0.0
  %v7829 = vand.u32 %v163, 4294901760
  %7830 = vmatpush1.msra.mxu0 %v7829
  %7831 = vmatprep.subr.mxu0 0.0
  %v7832 = vand.u32 %v164, 4294901760
  %7833 = vmatpush1.msra.mxu0 %v7832
  %7834 = vmatprep.subr.mxu0 0.0
  %v7835 = vand.u32 %v165, 4294901760
  %7836 = vmatpush1.msra.mxu0 %v7835
  %7837 = vmatprep.subr.mxu0 0.0
  %v7838 = vand.u32 %v166, 4294901760
  %7839 = vmatpush1.msra.mxu0 %v7838
  %7840 = vmatprep.subr.mxu0 0.0
  %v7841 = vand.u32 %v167, 4294901760
  %7842 = vmatpush1.msra.mxu0 %v7841
  %7843 = vmatprep.subr.mxu0 0.0
  %v7844 = vand.u32 %v168, 4294901760
  %7845 = vmatpush1.msra.mxu0 %v7844
  %7846 = vmatprep.subr.mxu0 0.0
  %v7847 = vand.u32 %v169, 4294901760
  %7848 = vmatpush1.msra.mxu0 %v7847
  %7849 = vmatprep.subr.mxu0 0.0
  %v7850 = vand.u32 %v170, 4294901760
  %7851 = vmatpush1.msra.mxu0 %v7850
  %7852 = vmatprep.subr.mxu0 0.0
  %v7853 = vand.u32 %v171, 4294901760
  %7854 = vmatpush1.msra.mxu0 %v7853
  %7855 = vmatprep.subr.mxu0 0.0
  %v7856 = vand.u32 %v172, 4294901760
  %7857 = vmatpush1.msra.mxu0 %v7856
  %7858 = vmatprep.subr.mxu0 0.0
  %v7859 = vand.u32 %v173, 4294901760
  %7860 = vmatpush1.msra.mxu0 %v7859
  %7861 = vmatprep.subr.mxu0 0.0
  %v7862 = vand.u32 %v174, 4294901760
  %7863 = vmatpush1.msra.mxu0 %v7862
  %7864 = vmatprep.subr.mxu0 0.0
  %v7865 = vand.u32 %v175, 4294901760
  %7866 = vmatpush1.msra.mxu0 %v7865
  %7867 = vmatprep.subr.mxu0 0.0
  %7868 = vmatpush1.msra.mxu0 0.0
  %7869 = vmatprep.subr.mxu0 0.0
  %7870 = vmatpush1.msra.mxu0 0.0
  %7871 = vmatprep.subr.mxu0 0.0
  %7872 = vmatpush1.msra.mxu0 0.0
  %7873 = vmatprep.subr.mxu0 0.0
  %7874 = vmatpush1.msra.mxu0 0.0
  %7875 = vmatprep.subr.mxu0 0.0
  %7876 = vmatpush1.msra.mxu0 0.0
  %7877 = vmatprep.subr.mxu0 0.0
  %7878 = vmatpush1.msra.mxu0 0.0
  %7879 = vmatprep.subr.mxu0 0.0
  %7880 = vmatpush1.msra.mxu0 0.0
  %7881 = vmatprep.subr.mxu0 0.0
  %7882 = vmatpush1.msra.mxu0 0.0
  %7883 = vmatprep.subr.mxu0 0.0
  %7884 = vmatpush1.msra.mxu0 0.0
  %7885 = vmatprep.subr.mxu0 0.0
  %7886 = vmatpush1.msra.mxu0 0.0
  %7887 = vmatprep.subr.mxu0 0.0
  %7888 = vmatpush1.msra.mxu0 0.0
  %7889 = vmatprep.subr.mxu0 0.0
  %7890 = vmatpush1.msra.mxu0 0.0
  %7891 = vmatprep.subr.mxu0 0.0
  %7892 = vmatpush1.msra.mxu0 0.0
  %7893 = vmatprep.subr.mxu0 0.0
  %7894 = vmatpush1.msra.mxu0 0.0
  %7895 = vmatprep.subr.mxu0 0.0
  %7896 = vmatpush1.msra.mxu0 0.0
  %7897 = vmatprep.subr.mxu0 0.0
  %7898 = vmatpush1.msra.mxu0 0.0
  %7899 = vmatprep.mubr.f32.mxu0 0.0
  %v7900 = vand.u32 %v4361, 4294901760
  %v7901 = vsub.f32 %v4361, %v7900
  %v7902 = vand.u32 %v7901, 4294901760
  %v7903 = vsub.f32 %v7901, %v7902
  %v7904 = vand.u32 %v7903, 4294901760
  %7905 = vmatmul.mubr.f32.gmra.mrb[0].mxu0 %v7904
  %v7906 = vpop.f32.mrb[0].mxu0
  %v7907 = vadd.f32 %v7816, %v7906
  %v7908 = vpop.f32.mrb[0].mxu0
  %7909 = vdwg.mxu0
  %7910 = vmatprep.subr.mxu0 0.0
  %v7911 = vand.u32 %v160, 4294901760
  %v7912 = vsub.f32 %v160, %v7911
  %v7913 = vand.u32 %v7912, 4294901760
  %v7914 = vsub.f32 %v7912, %v7913
  %v7915 = vand.u32 %v7914, 4294901760
  %7916 = vmatpush1.msra.mxu0 %v7915
  %7917 = vmatprep.subr.mxu0 0.0
  %v7918 = vand.u32 %v161, 4294901760
  %v7919 = vsub.f32 %v161, %v7918
  %v7920 = vand.u32 %v7919, 4294901760
  %v7921 = vsub.f32 %v7919, %v7920
  %v7922 = vand.u32 %v7921, 4294901760
  %7923 = vmatpush1.msra.mxu0 %v7922
  %7924 = vmatprep.subr.mxu0 0.0
  %v7925 = vand.u32 %v162, 4294901760
  %v7926 = vsub.f32 %v162, %v7925
  %v7927 = vand.u32 %v7926, 4294901760
  %v7928 = vsub.f32 %v7926, %v7927
  %v7929 = vand.u32 %v7928, 4294901760
  %7930 = vmatpush1.msra.mxu0 %v7929
  %7931 = vmatprep.subr.mxu0 0.0
  %v7932 = vand.u32 %v163, 4294901760
  %v7933 = vsub.f32 %v163, %v7932
  %v7934 = vand.u32 %v7933, 4294901760
  %v7935 = vsub.f32 %v7933, %v7934
  %v7936 = vand.u32 %v7935, 4294901760
  %7937 = vmatpush1.msra.mxu0 %v7936
  %7938 = vmatprep.subr.mxu0 0.0
  %v7939 = vand.u32 %v164, 4294901760
  %v7940 = vsub.f32 %v164, %v7939
  %v7941 = vand.u32 %v7940, 4294901760
  %v7942 = vsub.f32 %v7940, %v7941
  %v7943 = vand.u32 %v7942, 4294901760
  %7944 = vmatpush1.msra.mxu0 %v7943
  %7945 = vmatprep.subr.mxu0 0.0
  %v7946 = vand.u32 %v165, 4294901760
  %v7947 = vsub.f32 %v165, %v7946
  %v7948 = vand.u32 %v7947, 4294901760
  %v7949 = vsub.f32 %v7947, %v7948
  %v7950 = vand.u32 %v7949, 4294901760
  %7951 = vmatpush1.msra.mxu0 %v7950
  %7952 = vmatprep.subr.mxu0 0.0
  %v7953 = vand.u32 %v166, 4294901760
  %v7954 = vsub.f32 %v166, %v7953
  %v7955 = vand.u32 %v7954, 4294901760
  %v7956 = vsub.f32 %v7954, %v7955
  %v7957 = vand.u32 %v7956, 4294901760
  %7958 = vmatpush1.msra.mxu0 %v7957
  %7959 = vmatprep.subr.mxu0 0.0
  %v7960 = vand.u32 %v167, 4294901760
  %v7961 = vsub.f32 %v167, %v7960
  %v7962 = vand.u32 %v7961, 4294901760
  %v7963 = vsub.f32 %v7961, %v7962
  %v7964 = vand.u32 %v7963, 4294901760
  %7965 = vmatpush1.msra.mxu0 %v7964
  %7966 = vmatprep.subr.mxu0 0.0
  %v7967 = vand.u32 %v168, 4294901760
  %v7968 = vsub.f32 %v168, %v7967
  %v7969 = vand.u32 %v7968, 4294901760
  %v7970 = vsub.f32 %v7968, %v7969
  %v7971 = vand.u32 %v7970, 4294901760
  %7972 = vmatpush1.msra.mxu0 %v7971
  %7973 = vmatprep.subr.mxu0 0.0
  %v7974 = vand.u32 %v169, 4294901760
  %v7975 = vsub.f32 %v169, %v7974
  %v7976 = vand.u32 %v7975, 4294901760
  %v7977 = vsub.f32 %v7975, %v7976
  %v7978 = vand.u32 %v7977, 4294901760
  %7979 = vmatpush1.msra.mxu0 %v7978
  %7980 = vmatprep.subr.mxu0 0.0
  %v7981 = vand.u32 %v170, 4294901760
  %v7982 = vsub.f32 %v170, %v7981
  %v7983 = vand.u32 %v7982, 4294901760
  %v7984 = vsub.f32 %v7982, %v7983
  %v7985 = vand.u32 %v7984, 4294901760
  %7986 = vmatpush1.msra.mxu0 %v7985
  %7987 = vmatprep.subr.mxu0 0.0
  %v7988 = vand.u32 %v171, 4294901760
  %v7989 = vsub.f32 %v171, %v7988
  %v7990 = vand.u32 %v7989, 4294901760
  %v7991 = vsub.f32 %v7989, %v7990
  %v7992 = vand.u32 %v7991, 4294901760
  %7993 = vmatpush1.msra.mxu0 %v7992
  %7994 = vmatprep.subr.mxu0 0.0
  %v7995 = vand.u32 %v172, 4294901760
  %v7996 = vsub.f32 %v172, %v7995
  %v7997 = vand.u32 %v7996, 4294901760
  %v7998 = vsub.f32 %v7996, %v7997
  %v7999 = vand.u32 %v7998, 4294901760
  %8000 = vmatpush1.msra.mxu0 %v7999
  %8001 = vmatprep.subr.mxu0 0.0
  %v8002 = vand.u32 %v173, 4294901760
  %v8003 = vsub.f32 %v173, %v8002
  %v8004 = vand.u32 %v8003, 4294901760
  %v8005 = vsub.f32 %v8003, %v8004
  %v8006 = vand.u32 %v8005, 4294901760
  %8007 = vmatpush1.msra.mxu0 %v8006
  %8008 = vmatprep.subr.mxu0 0.0
  %v8009 = vand.u32 %v174, 4294901760
  %v8010 = vsub.f32 %v174, %v8009
  %v8011 = vand.u32 %v8010, 4294901760
  %v8012 = vsub.f32 %v8010, %v8011
  %v8013 = vand.u32 %v8012, 4294901760
  %8014 = vmatpush1.msra.mxu0 %v8013
  %8015 = vmatprep.subr.mxu0 0.0
  %v8016 = vand.u32 %v175, 4294901760
  %v8017 = vsub.f32 %v175, %v8016
  %v8018 = vand.u32 %v8017, 4294901760
  %v8019 = vsub.f32 %v8017, %v8018
  %v8020 = vand.u32 %v8019, 4294901760
  %8021 = vmatpush1.msra.mxu0 %v8020
  %8022 = vmatprep.subr.mxu0 0.0
  %8023 = vmatpush1.msra.mxu0 0.0
  %8024 = vmatprep.subr.mxu0 0.0
  %8025 = vmatpush1.msra.mxu0 0.0
  %8026 = vmatprep.subr.mxu0 0.0
  %8027 = vmatpush1.msra.mxu0 0.0
  %8028 = vmatprep.subr.mxu0 0.0
  %8029 = vmatpush1.msra.mxu0 0.0
  %8030 = vmatprep.subr.mxu0 0.0
  %8031 = vmatpush1.msra.mxu0 0.0
  %8032 = vmatprep.subr.mxu0 0.0
  %8033 = vmatpush1.msra.mxu0 0.0
  %8034 = vmatprep.subr.mxu0 0.0
  %8035 = vmatpush1.msra.mxu0 0.0
  %8036 = vmatprep.subr.mxu0 0.0
  %8037 = vmatpush1.msra.mxu0 0.0
  %8038 = vmatprep.subr.mxu0 0.0
  %8039 = vmatpush1.msra.mxu0 0.0
  %8040 = vmatprep.subr.mxu0 0.0
  %8041 = vmatpush1.msra.mxu0 0.0
  %8042 = vmatprep.subr.mxu0 0.0
  %8043 = vmatpush1.msra.mxu0 0.0
  %8044 = vmatprep.subr.mxu0 0.0
  %8045 = vmatpush1.msra.mxu0 0.0
  %8046 = vmatprep.subr.mxu0 0.0
  %8047 = vmatpush1.msra.mxu0 0.0
  %8048 = vmatprep.subr.mxu0 0.0
  %8049 = vmatpush1.msra.mxu0 0.0
  %8050 = vmatprep.subr.mxu0 0.0
  %8051 = vmatpush1.msra.mxu0 0.0
  %8052 = vmatprep.subr.mxu0 0.0
  %8053 = vmatpush1.msra.mxu0 0.0
  %8054 = vmatprep.mubr.f32.mxu0 0.0
  %v8055 = vand.u32 %v4361, 4294901760
  %8056 = vmatmul.mubr.f32.gmra.mrb[0].mxu0 %v8055
  %v8057 = vpop.f32.mrb[0].mxu0
  %v8058 = vadd.f32 %v7907, %v8057
  %v8059 = vpop.f32.mrb[0].mxu0
  %8060 = vdwg.mxu0
  %8061 = vmatprep.subr.mxu0 0.0
  %v8062 = vand.u32 %v160, 4294901760
  %v8063 = vsub.f32 %v160, %v8062
  %8064 = vmatpush1.msra.mxu0 %v8063
  %8065 = vmatprep.subr.mxu0 0.0
  %v8066 = vand.u32 %v161, 4294901760
  %v8067 = vsub.f32 %v161, %v8066
  %8068 = vmatpush1.msra.mxu0 %v8067
  %8069 = vmatprep.subr.mxu0 0.0
  %v8070 = vand.u32 %v162, 4294901760
  %v8071 = vsub.f32 %v162, %v8070
  %8072 = vmatpush1.msra.mxu0 %v8071
  %8073 = vmatprep.subr.mxu0 0.0
  %v8074 = vand.u32 %v163, 4294901760
  %v8075 = vsub.f32 %v163, %v8074
  %8076 = vmatpush1.msra.mxu0 %v8075
  %8077 = vmatprep.subr.mxu0 0.0
  %v8078 = vand.u32 %v164, 4294901760
  %v8079 = vsub.f32 %v164, %v8078
  %8080 = vmatpush1.msra.mxu0 %v8079
  %8081 = vmatprep.subr.mxu0 0.0
  %v8082 = vand.u32 %v165, 4294901760
  %v8083 = vsub.f32 %v165, %v8082
  %8084 = vmatpush1.msra.mxu0 %v8083
  %8085 = vmatprep.subr.mxu0 0.0
  %v8086 = vand.u32 %v166, 4294901760
  %v8087 = vsub.f32 %v166, %v8086
  %8088 = vmatpush1.msra.mxu0 %v8087
  %8089 = vmatprep.subr.mxu0 0.0
  %v8090 = vand.u32 %v167, 4294901760
  %v8091 = vsub.f32 %v167, %v8090
  %8092 = vmatpush1.msra.mxu0 %v8091
  %8093 = vmatprep.subr.mxu0 0.0
  %v8094 = vand.u32 %v168, 4294901760
  %v8095 = vsub.f32 %v168, %v8094
  %8096 = vmatpush1.msra.mxu0 %v8095
  %8097 = vmatprep.subr.mxu0 0.0
  %v8098 = vand.u32 %v169, 4294901760
  %v8099 = vsub.f32 %v169, %v8098
  %8100 = vmatpush1.msra.mxu0 %v8099
  %8101 = vmatprep.subr.mxu0 0.0
  %v8102 = vand.u32 %v170, 4294901760
  %v8103 = vsub.f32 %v170, %v8102
  %8104 = vmatpush1.msra.mxu0 %v8103
  %8105 = vmatprep.subr.mxu0 0.0
  %v8106 = vand.u32 %v171, 4294901760
  %v8107 = vsub.f32 %v171, %v8106
  %8108 = vmatpush1.msra.mxu0 %v8107
  %8109 = vmatprep.subr.mxu0 0.0
  %v8110 = vand.u32 %v172, 4294901760
  %v8111 = vsub.f32 %v172, %v8110
  %8112 = vmatpush1.msra.mxu0 %v8111
  %8113 = vmatprep.subr.mxu0 0.0
  %v8114 = vand.u32 %v173, 4294901760
  %v8115 = vsub.f32 %v173, %v8114
  %8116 = vmatpush1.msra.mxu0 %v8115
  %8117 = vmatprep.subr.mxu0 0.0
  %v8118 = vand.u32 %v174, 4294901760
  %v8119 = vsub.f32 %v174, %v8118
  %8120 = vmatpush1.msra.mxu0 %v8119
  %8121 = vmatprep.subr.mxu0 0.0
  %v8122 = vand.u32 %v175, 4294901760
  %v8123 = vsub.f32 %v175, %v8122
  %8124 = vmatpush1.msra.mxu0 %v8123
  %8125 = vmatprep.subr.mxu0 0.0
  %8126 = vmatpush1.msra.mxu0 0.0
  %8127 = vmatprep.subr.mxu0 0.0
  %8128 = vmatpush1.msra.mxu0 0.0
  %8129 = vmatprep.subr.mxu0 0.0
  %8130 = vmatpush1.msra.mxu0 0.0
  %8131 = vmatprep.subr.mxu0 0.0
  %8132 = vmatpush1.msra.mxu0 0.0
  %8133 = vmatprep.subr.mxu0 0.0
  %8134 = vmatpush1.msra.mxu0 0.0
  %8135 = vmatprep.subr.mxu0 0.0
  %8136 = vmatpush1.msra.mxu0 0.0
  %8137 = vmatprep.subr.mxu0 0.0
  %8138 = vmatpush1.msra.mxu0 0.0
  %8139 = vmatprep.subr.mxu0 0.0
  %8140 = vmatpush1.msra.mxu0 0.0
  %8141 = vmatprep.subr.mxu0 0.0
  %8142 = vmatpush1.msra.mxu0 0.0
  %8143 = vmatprep.subr.mxu0 0.0
  %8144 = vmatpush1.msra.mxu0 0.0
  %8145 = vmatprep.subr.mxu0 0.0
  %8146 = vmatpush1.msra.mxu0 0.0
  %8147 = vmatprep.subr.mxu0 0.0
  %8148 = vmatpush1.msra.mxu0 0.0
  %8149 = vmatprep.subr.mxu0 0.0
  %8150 = vmatpush1.msra.mxu0 0.0
  %8151 = vmatprep.subr.mxu0 0.0
  %8152 = vmatpush1.msra.mxu0 0.0
  %8153 = vmatprep.subr.mxu0 0.0
  %8154 = vmatpush1.msra.mxu0 0.0
  %8155 = vmatprep.subr.mxu0 0.0
  %8156 = vmatpush1.msra.mxu0 0.0
  %8157 = vmatprep.mubr.f32.mxu0 0.0
  %v8158 = vand.u32 %v4361, 4294901760
  %v8159 = vsub.f32 %v4361, %v8158
  %8160 = vmatmul.mubr.f32.gmra.mrb[0].mxu0 %v8159
  %v8161 = vpop.f32.mrb[0].mxu0
  %v8162 = vadd.f32 %v8058, %v8161
  %v8163 = vpop.f32.mrb[0].mxu0
  %8164 = vdwg.mxu0
  %8165 = vmatprep.subr.mxu0 0.0
  %v8166 = vand.u32 %v160, 4294901760
  %8167 = vmatpush1.msra.mxu0 %v8166
  %8168 = vmatprep.subr.mxu0 0.0
  %v8169 = vand.u32 %v161, 4294901760
  %8170 = vmatpush1.msra.mxu0 %v8169
  %8171 = vmatprep.subr.mxu0 0.0
  %v8172 = vand.u32 %v162, 4294901760
  %8173 = vmatpush1.msra.mxu0 %v8172
  %8174 = vmatprep.subr.mxu0 0.0
  %v8175 = vand.u32 %v163, 4294901760
  %8176 = vmatpush1.msra.mxu0 %v8175
  %8177 = vmatprep.subr.mxu0 0.0
  %v8178 = vand.u32 %v164, 4294901760
  %8179 = vmatpush1.msra.mxu0 %v8178
  %8180 = vmatprep.subr.mxu0 0.0
  %v8181 = vand.u32 %v165, 4294901760
  %8182 = vmatpush1.msra.mxu0 %v8181
  %8183 = vmatprep.subr.mxu0 0.0
  %v8184 = vand.u32 %v166, 4294901760
  %8185 = vmatpush1.msra.mxu0 %v8184
  %8186 = vmatprep.subr.mxu0 0.0
  %v8187 = vand.u32 %v167, 4294901760
  %8188 = vmatpush1.msra.mxu0 %v8187
  %8189 = vmatprep.subr.mxu0 0.0
  %v8190 = vand.u32 %v168, 4294901760
  %8191 = vmatpush1.msra.mxu0 %v8190
  %8192 = vmatprep.subr.mxu0 0.0
  %v8193 = vand.u32 %v169, 4294901760
  %8194 = vmatpush1.msra.mxu0 %v8193
  %8195 = vmatprep.subr.mxu0 0.0
  %v8196 = vand.u32 %v170, 4294901760
  %8197 = vmatpush1.msra.mxu0 %v8196
  %8198 = vmatprep.subr.mxu0 0.0
  %v8199 = vand.u32 %v171, 4294901760
  %8200 = vmatpush1.msra.mxu0 %v8199
  %8201 = vmatprep.subr.mxu0 0.0
  %v8202 = vand.u32 %v172, 4294901760
  %8203 = vmatpush1.msra.mxu0 %v8202
  %8204 = vmatprep.subr.mxu0 0.0
  %v8205 = vand.u32 %v173, 4294901760
  %8206 = vmatpush1.msra.mxu0 %v8205
  %8207 = vmatprep.subr.mxu0 0.0
  %v8208 = vand.u32 %v174, 4294901760
  %8209 = vmatpush1.msra.mxu0 %v8208
  %8210 = vmatprep.subr.mxu0 0.0
  %v8211 = vand.u32 %v175, 4294901760
  %8212 = vmatpush1.msra.mxu0 %v8211
  %8213 = vmatprep.subr.mxu0 0.0
  %8214 = vmatpush1.msra.mxu0 0.0
  %8215 = vmatprep.subr.mxu0 0.0
  %8216 = vmatpush1.msra.mxu0 0.0
  %8217 = vmatprep.subr.mxu0 0.0
  %8218 = vmatpush1.msra.mxu0 0.0
  %8219 = vmatprep.subr.mxu0 0.0
  %8220 = vmatpush1.msra.mxu0 0.0
  %8221 = vmatprep.subr.mxu0 0.0
  %8222 = vmatpush1.msra.mxu0 0.0
  %8223 = vmatprep.subr.mxu0 0.0
  %8224 = vmatpush1.msra.mxu0 0.0
  %8225 = vmatprep.subr.mxu0 0.0
  %8226 = vmatpush1.msra.mxu0 0.0
  %8227 = vmatprep.subr.mxu0 0.0
  %8228 = vmatpush1.msra.mxu0 0.0
  %8229 = vmatprep.subr.mxu0 0.0
  %8230 = vmatpush1.msra.mxu0 0.0
  %8231 = vmatprep.subr.mxu0 0.0
  %8232 = vmatpush1.msra.mxu0 0.0
  %8233 = vmatprep.subr.mxu0 0.0
  %8234 = vmatpush1.msra.mxu0 0.0
  %8235 = vmatprep.subr.mxu0 0.0
  %8236 = vmatpush1.msra.mxu0 0.0
  %8237 = vmatprep.subr.mxu0 0.0
  %8238 = vmatpush1.msra.mxu0 0.0
  %8239 = vmatprep.subr.mxu0 0.0
  %8240 = vmatpush1.msra.mxu0 0.0
  %8241 = vmatprep.subr.mxu0 0.0
  %8242 = vmatpush1.msra.mxu0 0.0
  %8243 = vmatprep.subr.mxu0 0.0
  %8244 = vmatpush1.msra.mxu0 0.0
  %8245 = vmatprep.mubr.f32.mxu0 0.0
  %v8246 = vand.u32 %v4361, 4294901760
  %v8247 = vsub.f32 %v4361, %v8246
  %v8248 = vand.u32 %v8247, 4294901760
  %8249 = vmatmul.mubr.f32.gmra.mrb[0].mxu0 %v8248
  %v8250 = vpop.f32.mrb[0].mxu0
  %v8251 = vadd.f32 %v8162, %v8250
  %v8252 = vpop.f32.mrb[0].mxu0
  %8253 = vdwg.mxu0
  %8254 = vmatprep.subr.mxu0 0.0
  %v8255 = vand.u32 %v160, 4294901760
  %v8256 = vsub.f32 %v160, %v8255
  %v8257 = vand.u32 %v8256, 4294901760
  %8258 = vmatpush1.msra.mxu0 %v8257
  %8259 = vmatprep.subr.mxu0 0.0
  %v8260 = vand.u32 %v161, 4294901760
  %v8261 = vsub.f32 %v161, %v8260
  %v8262 = vand.u32 %v8261, 4294901760
  %8263 = vmatpush1.msra.mxu0 %v8262
  %8264 = vmatprep.subr.mxu0 0.0
  %v8265 = vand.u32 %v162, 4294901760
  %v8266 = vsub.f32 %v162, %v8265
  %v8267 = vand.u32 %v8266, 4294901760
  %8268 = vmatpush1.msra.mxu0 %v8267
  %8269 = vmatprep.subr.mxu0 0.0
  %v8270 = vand.u32 %v163, 4294901760
  %v8271 = vsub.f32 %v163, %v8270
  %v8272 = vand.u32 %v8271, 4294901760
  %8273 = vmatpush1.msra.mxu0 %v8272
  %8274 = vmatprep.subr.mxu0 0.0
  %v8275 = vand.u32 %v164, 4294901760
  %v8276 = vsub.f32 %v164, %v8275
  %v8277 = vand.u32 %v8276, 4294901760
  %8278 = vmatpush1.msra.mxu0 %v8277
  %8279 = vmatprep.subr.mxu0 0.0
  %v8280 = vand.u32 %v165, 4294901760
  %v8281 = vsub.f32 %v165, %v8280
  %v8282 = vand.u32 %v8281, 4294901760
  %8283 = vmatpush1.msra.mxu0 %v8282
  %8284 = vmatprep.subr.mxu0 0.0
  %v8285 = vand.u32 %v166, 4294901760
  %v8286 = vsub.f32 %v166, %v8285
  %v8287 = vand.u32 %v8286, 4294901760
  %8288 = vmatpush1.msra.mxu0 %v8287
  %8289 = vmatprep.subr.mxu0 0.0
  %v8290 = vand.u32 %v167, 4294901760
  %v8291 = vsub.f32 %v167, %v8290
  %v8292 = vand.u32 %v8291, 4294901760
  %8293 = vmatpush1.msra.mxu0 %v8292
  %8294 = vmatprep.subr.mxu0 0.0
  %v8295 = vand.u32 %v168, 4294901760
  %v8296 = vsub.f32 %v168, %v8295
  %v8297 = vand.u32 %v8296, 4294901760
  %8298 = vmatpush1.msra.mxu0 %v8297
  %8299 = vmatprep.subr.mxu0 0.0
  %v8300 = vand.u32 %v169, 4294901760
  %v8301 = vsub.f32 %v169, %v8300
  %v8302 = vand.u32 %v8301, 4294901760
  %8303 = vmatpush1.msra.mxu0 %v8302
  %8304 = vmatprep.subr.mxu0 0.0
  %v8305 = vand.u32 %v170, 4294901760
  %v8306 = vsub.f32 %v170, %v8305
  %v8307 = vand.u32 %v8306, 4294901760
  %8308 = vmatpush1.msra.mxu0 %v8307
  %8309 = vmatprep.subr.mxu0 0.0
  %v8310 = vand.u32 %v171, 4294901760
  %v8311 = vsub.f32 %v171, %v8310
  %v8312 = vand.u32 %v8311, 4294901760
  %8313 = vmatpush1.msra.mxu0 %v8312
  %8314 = vmatprep.subr.mxu0 0.0
  %v8315 = vand.u32 %v172, 4294901760
  %v8316 = vsub.f32 %v172, %v8315
  %v8317 = vand.u32 %v8316, 4294901760
  %8318 = vmatpush1.msra.mxu0 %v8317
  %8319 = vmatprep.subr.mxu0 0.0
  %v8320 = vand.u32 %v173, 4294901760
  %v8321 = vsub.f32 %v173, %v8320
  %v8322 = vand.u32 %v8321, 4294901760
  %8323 = vmatpush1.msra.mxu0 %v8322
  %8324 = vmatprep.subr.mxu0 0.0
  %v8325 = vand.u32 %v174, 4294901760
  %v8326 = vsub.f32 %v174, %v8325
  %v8327 = vand.u32 %v8326, 4294901760
  %8328 = vmatpush1.msra.mxu0 %v8327
  %8329 = vmatprep.subr.mxu0 0.0
  %v8330 = vand.u32 %v175, 4294901760
  %v8331 = vsub.f32 %v175, %v8330
  %v8332 = vand.u32 %v8331, 4294901760
  %8333 = vmatpush1.msra.mxu0 %v8332
  %8334 = vmatprep.subr.mxu0 0.0
  %8335 = vmatpush1.msra.mxu0 0.0
  %8336 = vmatprep.subr.mxu0 0.0
  %8337 = vmatpush1.msra.mxu0 0.0
  %8338 = vmatprep.subr.mxu0 0.0
  %8339 = vmatpush1.msra.mxu0 0.0
  %8340 = vmatprep.subr.mxu0 0.0
  %8341 = vmatpush1.msra.mxu0 0.0
  %8342 = vmatprep.subr.mxu0 0.0
  %8343 = vmatpush1.msra.mxu0 0.0
  %8344 = vmatprep.subr.mxu0 0.0
  %8345 = vmatpush1.msra.mxu0 0.0
  %8346 = vmatprep.subr.mxu0 0.0
  %8347 = vmatpush1.msra.mxu0 0.0
  %8348 = vmatprep.subr.mxu0 0.0
  %8349 = vmatpush1.msra.mxu0 0.0
  %8350 = vmatprep.subr.mxu0 0.0
  %8351 = vmatpush1.msra.mxu0 0.0
  %8352 = vmatprep.subr.mxu0 0.0
  %8353 = vmatpush1.msra.mxu0 0.0
  %8354 = vmatprep.subr.mxu0 0.0
  %8355 = vmatpush1.msra.mxu0 0.0
  %8356 = vmatprep.subr.mxu0 0.0
  %8357 = vmatpush1.msra.mxu0 0.0
  %8358 = vmatprep.subr.mxu0 0.0
  %8359 = vmatpush1.msra.mxu0 0.0
  %8360 = vmatprep.subr.mxu0 0.0
  %8361 = vmatpush1.msra.mxu0 0.0
  %8362 = vmatprep.subr.mxu0 0.0
  %8363 = vmatpush1.msra.mxu0 0.0
  %8364 = vmatprep.subr.mxu0 0.0
  %8365 = vmatpush1.msra.mxu0 0.0
  %8366 = vmatprep.mubr.f32.mxu0 0.0
  %v8367 = vand.u32 %v4361, 4294901760
  %8368 = vmatmul.mubr.f32.gmra.mrb[0].mxu0 %v8367
  %v8369 = vpop.f32.mrb[0].mxu0
  %v8370 = vadd.f32 %v8251, %v8369
  %v8371 = vpop.f32.mrb[0].mxu0
  %8372 = vdwg.mxu0
  %8373 = vmatprep.subr.mxu0 0.0
  %v8374 = vand.u32 %v160, 4294901760
  %8375 = vmatpush1.msra.mxu0 %v8374
  %8376 = vmatprep.subr.mxu0 0.0
  %v8377 = vand.u32 %v161, 4294901760
  %8378 = vmatpush1.msra.mxu0 %v8377
  %8379 = vmatprep.subr.mxu0 0.0
  %v8380 = vand.u32 %v162, 4294901760
  %8381 = vmatpush1.msra.mxu0 %v8380
  %8382 = vmatprep.subr.mxu0 0.0
  %v8383 = vand.u32 %v163, 4294901760
  %8384 = vmatpush1.msra.mxu0 %v8383
  %8385 = vmatprep.subr.mxu0 0.0
  %v8386 = vand.u32 %v164, 4294901760
  %8387 = vmatpush1.msra.mxu0 %v8386
  %8388 = vmatprep.subr.mxu0 0.0
  %v8389 = vand.u32 %v165, 4294901760
  %8390 = vmatpush1.msra.mxu0 %v8389
  %8391 = vmatprep.subr.mxu0 0.0
  %v8392 = vand.u32 %v166, 4294901760
  %8393 = vmatpush1.msra.mxu0 %v8392
  %8394 = vmatprep.subr.mxu0 0.0
  %v8395 = vand.u32 %v167, 4294901760
  %8396 = vmatpush1.msra.mxu0 %v8395
  %8397 = vmatprep.subr.mxu0 0.0
  %v8398 = vand.u32 %v168, 4294901760
  %8399 = vmatpush1.msra.mxu0 %v8398
  %8400 = vmatprep.subr.mxu0 0.0
  %v8401 = vand.u32 %v169, 4294901760
  %8402 = vmatpush1.msra.mxu0 %v8401
  %8403 = vmatprep.subr.mxu0 0.0
  %v8404 = vand.u32 %v170, 4294901760
  %8405 = vmatpush1.msra.mxu0 %v8404
  %8406 = vmatprep.subr.mxu0 0.0
  %v8407 = vand.u32 %v171, 4294901760
  %8408 = vmatpush1.msra.mxu0 %v8407
  %8409 = vmatprep.subr.mxu0 0.0
  %v8410 = vand.u32 %v172, 4294901760
  %8411 = vmatpush1.msra.mxu0 %v8410
  %8412 = vmatprep.subr.mxu0 0.0
  %v8413 = vand.u32 %v173, 4294901760
  %8414 = vmatpush1.msra.mxu0 %v8413
  %8415 = vmatprep.subr.mxu0 0.0
  %v8416 = vand.u32 %v174, 4294901760
  %8417 = vmatpush1.msra.mxu0 %v8416
  %8418 = vmatprep.subr.mxu0 0.0
  %v8419 = vand.u32 %v175, 4294901760
  %8420 = vmatpush1.msra.mxu0 %v8419
  %8421 = vmatprep.subr.mxu0 0.0
  %8422 = vmatpush1.msra.mxu0 0.0
  %8423 = vmatprep.subr.mxu0 0.0
  %8424 = vmatpush1.msra.mxu0 0.0
  %8425 = vmatprep.subr.mxu0 0.0
  %8426 = vmatpush1.msra.mxu0 0.0
  %8427 = vmatprep.subr.mxu0 0.0
  %8428 = vmatpush1.msra.mxu0 0.0
  %8429 = vmatprep.subr.mxu0 0.0
  %8430 = vmatpush1.msra.mxu0 0.0
  %8431 = vmatprep.subr.mxu0 0.0
  %8432 = vmatpush1.msra.mxu0 0.0
  %8433 = vmatprep.subr.mxu0 0.0
  %8434 = vmatpush1.msra.mxu0 0.0
  %8435 = vmatprep.subr.mxu0 0.0
  %8436 = vmatpush1.msra.mxu0 0.0
  %8437 = vmatprep.subr.mxu0 0.0
  %8438 = vmatpush1.msra.mxu0 0.0
  %8439 = vmatprep.subr.mxu0 0.0
  %8440 = vmatpush1.msra.mxu0 0.0
  %8441 = vmatprep.subr.mxu0 0.0
  %8442 = vmatpush1.msra.mxu0 0.0
  %8443 = vmatprep.subr.mxu0 0.0
  %8444 = vmatpush1.msra.mxu0 0.0
  %8445 = vmatprep.subr.mxu0 0.0
  %8446 = vmatpush1.msra.mxu0 0.0
  %8447 = vmatprep.subr.mxu0 0.0
  %8448 = vmatpush1.msra.mxu0 0.0
  %8449 = vmatprep.subr.mxu0 0.0
  %8450 = vmatpush1.msra.mxu0 0.0
  %8451 = vmatprep.subr.mxu0 0.0
  %8452 = vmatpush1.msra.mxu0 0.0
  %8453 = vmatprep.mubr.f32.mxu0 0.0
  %v8454 = vand.u32 %v4361, 4294901760
  %8455 = vmatmul.mubr.f32.gmra.mrb[0].mxu0 %v8454
  %v8456 = vpop.f32.mrb[0].mxu0
  %v8457 = vadd.f32 %v8370, %v8456
  %v8458 = vpop.f32.mrb[0].mxu0
  %8459 = vdwg.mxu0
  %v8460 = vmin.f32 %v4315, %v8457
  %vm8461 = vcmask 779264
  %v8462 = vsel %vm8461, %v8460, 0.0
  %8463 = vadd.xlane.f32.xlu0 %v8462
  %v8464 = vpop.xlane.xlu0 %8463
  %v8465 = vrot.slane %v8464, 4
  %v8466 = vadd.f32 %v8464, %v8465
  %v8467 = vrot.slane %v8466, 2
  %v8468 = vadd.f32 %v8466, %v8467
  %v8469 = vrot.slane %v8468, 1
  %v8470 = vadd.f32 %v8468, %v8469
  %s8471 = vtos %v8470
  %v8472 = vstv %s8471
  %8473 = vst [vmem:[%s3] sm:$0x1] %v8472
  // Predicated region
  $region14: #{phase_loss_nac.1} parent=0 // pred_check
    _
  $region15: #{phase_loss_nac.1} parent=0 // pred_check_branch
    %8475 = sbr.rel (0) target = $region17
  $region16: #{phase_loss_nac.1} parent=0 // pred_region
    _
  $region17: #{phase_loss_nac.1} parent=0 // pred_fallthru
    _
  // Predicated region
  $region18: #{phase_loss_nac.1} parent=0 // pred_check
    _
  $region19: #{phase_loss_nac.1} parent=0 // pred_check_branch
    %8477 = sbr.rel (0) target = $region21
  $region20: #{phase_loss_nac.1} parent=0 // pred_region
    _
  $region21: #{phase_loss_nac.1} parent=0 // pred_fallthru
    _

</llo_original>
